<compile_context>
chip_gen: v5e
topology: v5e:2x2
jax: 0.10.0
libtpu: 0.0.40
codegen_flags: <defaults>
</compile_context>

<pallas_src>
import jax
import jax.numpy as jnp
from jax import lax
from jax.experimental import pallas as pl
from jax.experimental.pallas import tpu as pltpu

# ----- config mirroring the PyTorch module -----------------------------------
CFG_CNN = [(1, 32, 1, 1, 3), (32, 32, 1, 1, 3)]   # (in, out, stride, pad, k)
CFG_FC = [128, 10]
CFG_KERNEL = [28, 14, 7]
DECAY = 0.2
THRESH = 0.5

C1 = CFG_CNN[0][1]          # 32 conv1 output channels
C2 = CFG_CNN[1][1]          # 32 conv2 output channels
H1 = CFG_KERNEL[0]          # 28
H2 = CFG_KERNEL[1]          # 14
H3 = CFG_KERNEL[2]          # 7
L1 = H1 * C1                # 896 lanes  (layer-1 rows:  lane = w*32 + c)
L2 = H2 * C2                # 448 lanes  (layer-2 rows:  lane = w*32 + c)
NFC1 = CFG_FC[0]            # 128
NOUT = 128                  # fc2 width padded to a full lane vector (logical 10)


# ----- the fused kernel -------------------------------------------------------
def _make_kernel(bt, time_window):
    """Build the fused SCNN kernel for a batch tile of `bt` images."""
    inv_t = 1.0 / float(time_window)

    def kernel(img_ref, rand_ref, m1_ref, b1_ref, m2_ref, b2_ref,
               wf1_ref, bf1_ref, wf2_ref, bf2_ref,
               out_ref,
               xp1, c1_mem, c1_spk, xp2, c2_mem, c2_spk,
               h1_mem, h1_spk, h2_mem, h2_spk, h2_sum):
        t = pl.program_id(1)

        # Fresh LIF state (and zero conv-input borders) per batch tile.
        @pl.when(t == 0)
        def _init():
            xp1[...] = jnp.zeros_like(xp1)
            xp2[...] = jnp.zeros_like(xp2)
            c1_mem[...] = jnp.zeros_like(c1_mem)
            c1_spk[...] = jnp.zeros_like(c1_spk)
            c2_mem[...] = jnp.zeros_like(c2_mem)
            c2_spk[...] = jnp.zeros_like(c2_spk)
            h1_mem[...] = jnp.zeros_like(h1_mem)
            h1_spk[...] = jnp.zeros_like(h1_spk)
            h2_mem[...] = jnp.zeros_like(h2_mem)
            h2_spk[...] = jnp.zeros_like(h2_spk)
            h2_sum[...] = jnp.zeros_like(h2_sum)

        # ---- Bernoulli rate coding: x = (input > U[0,1)).float() -----------
        # Stored into the h-padded conv1 input scratch (rows 1..28; rows 0 and
        # 29 stay zero == conv padding).
        xp1[pl.ds(1, H1), :, :] = (img_ref[...] > rand_ref[0]).astype(jnp.float32)

        def lif_row(mem_ref, spk_ref, r, pre):
            mem = mem_ref[r] * DECAY * (1.0 - spk_ref[r]) + pre
            spk = (mem > THRESH).astype(jnp.float32)
            mem_ref[r] = mem
            spk_ref[r] = spk
            return spk

        # ---- conv1 (3x3, pad 1) as 3 row-shifted matmuls + LIF --------------
        def conv1_row(h):
            acc = jnp.dot(xp1[h], m1_ref[0], preferred_element_type=jnp.float32)
            acc += jnp.dot(xp1[h + 1], m1_ref[1], preferred_element_type=jnp.float32)
            acc += jnp.dot(xp1[h + 2], m1_ref[2], preferred_element_type=jnp.float32)
            return acc + b1_ref[...]

        # 2x2 avg-pool: the row-pair sum is done here; the column-pair sum and
        # the 1/4 factor are folded into the conv2 band matrices (m2).
        def body1(ip, carry):
            s_even = lif_row(c1_mem, c1_spk, 2 * ip, conv1_row(2 * ip))
            s_odd = lif_row(c1_mem, c1_spk, 2 * ip + 1, conv1_row(2 * ip + 1))
            xp2[ip + 1] = s_even + s_odd
            return carry

        lax.fori_loop(0, H2, body1, 0)

        # ---- conv2 (+ folded pool1) + LIF, fc1 (+ folded pool2 & NCHW view) -
        def body2(i, h1_acc):
            acc = jnp.dot(xp2[i], m2_ref[0], preferred_element_type=jnp.float32)
            acc += jnp.dot(xp2[i + 1], m2_ref[1], preferred_element_type=jnp.float32)
            acc += jnp.dot(xp2[i + 2], m2_ref[2], preferred_element_type=jnp.float32)
            spk = lif_row(c2_mem, c2_spk, i, acc + b2_ref[...])
            return h1_acc + jnp.dot(spk, wf1_ref[i],
                                    preferred_element_type=jnp.float32)

        h1_pre = lax.fori_loop(0, H2, body2,
                               jnp.zeros((bt, NFC1), jnp.float32)) + bf1_ref[...]

        # ---- fc1 LIF ---------------------------------------------------------
        h1m = h1_mem[...] * DECAY * (1.0 - h1_spk[...]) + h1_pre
        h1s = (h1m > THRESH).astype(jnp.float32)
        h1_mem[...] = h1m
        h1_spk[...] = h1s

        # ---- fc2 LIF + running spike sum ------------------------------------
        h2_pre = jnp.dot(h1s, wf2_ref[...],
                         preferred_element_type=jnp.float32) + bf2_ref[...]
        h2m = h2_mem[...] * DECAY * (1.0 - h2_spk[...]) + h2_pre
        h2s = (h2m > THRESH).astype(jnp.float32)
        h2_mem[...] = h2m
        h2_spk[...] = h2s
        h2_sum[...] = h2_sum[...] + h2s

        @pl.when(t == time_window - 1)
        def _finish():
            out_ref[...] = h2_sum[...] * inv_t

    return kernel


# ----- host-side weight folding (done once, outside the kernel) ---------------
def fold_params(p):
    f32 = jnp.float32
    w1, b1 = p["conv1_w"], p["conv1_b"]        # (32,1,3,3), (32,)
    w2, b2 = p["conv2_w"], p["conv2_b"]        # (32,32,3,3), (32,)
    wf1, bf1 = p["fc1_w"], p["fc1_b"]          # (128,1568), (128,)
    wf2, bf2 = p["fc2_w"], p["fc2_b"]          # (10,128), (10,)

    # conv1 band matrices: M1[dy, w_in, j*32+co] = w1[co,0,dy, w_in-j+1]
    w1_t = jnp.transpose(w1[:, 0], (1, 2, 0))                 # (dy, dx, co)
    wi = jnp.arange(H1)[:, None]
    jj = jnp.arange(H1)[None, :]
    dx = wi - jj + 1
    m1 = w1_t[:, jnp.clip(dx, 0, 2), :]                       # (3,28,28,32)
    m1 = jnp.where(((dx >= 0) & (dx <= 2))[None, :, :, None], m1, 0.0)
    m1 = m1.reshape(3, H1, L1).astype(f32)

    # conv2 band matrices with the 1st 2x2 avg-pool folded in:
    #   M2[dy, w*32+ci, j*32+co] = 0.25 * w2[co,ci,dy, w//2 - j + 1]
    w2_t = jnp.transpose(w2, (2, 3, 1, 0))                    # (dy, dx, ci, co)
    ww = jnp.arange(H1)[:, None]
    j2 = jnp.arange(H2)[None, :]
    dx2 = ww // 2 - j2 + 1
    m2 = w2_t[:, jnp.clip(dx2, 0, 2), :, :]                   # (3,28,14,32,32)
    m2 = jnp.where(((dx2 >= 0) & (dx2 <= 2))[None, :, :, None, None], m2, 0.0)
    m2 = (0.25 * jnp.transpose(m2, (0, 1, 3, 2, 4))).reshape(3, L1, L2).astype(f32)

    # fc1 with the 2nd 2x2 avg-pool and the torch NCHW .view() flatten folded:
    #   WF1[i, j*32+co, n] = 0.25 * wf1[n, co*49 + (i//2)*7 + (j//2)]
    wf1_r = wf1.reshape(NFC1, C2, H3, H3)                     # (n, co, i2, j2)
    half = jnp.arange(H2) // 2
    wf1_f = wf1_r[:, :, half, :][:, :, :, half]               # (n, co, 14, 14)
    wf1_f = (0.25 * jnp.transpose(wf1_f, (2, 3, 1, 0))).reshape(H2, L2, NFC1)

    # fc2 zero-padded to 128 output lanes (lane-dense stores); padded columns
    # stay at 0 membrane / 0 spikes and are sliced off on the host.
    wf2_p = jnp.zeros((NFC1, NOUT), f32).at[:, :CFG_FC[1]].set(wf2.T)
    bf2_p = jnp.zeros((1, NOUT), f32).at[0, :CFG_FC[1]].set(bf2)

    return dict(
        m1=m1, b1=jnp.tile(b1, H1)[None, :].astype(f32),
        m2=m2, b2=jnp.tile(b2, H2)[None, :].astype(f32),
        wf1=wf1_f.astype(f32), bf1=bf1[None, :].astype(f32),
        wf2=wf2_p, bf2=bf2_p,
    )


# ----- forward pass -----------------------------------------------------------
def scnn_forward(params, images, key, time_window=20, batch_tile=None):
    b = images.shape[0]
    bt = batch_tile if batch_tile is not None else (b if b <= 64 else 64)
    assert b % bt == 0, "batch must be divisible by the batch tile"
    nb = b // bt
    assert nb == 1 or bt % 8 == 0, "a tiled batch needs a multiple-of-8 tile"

    folded = fold_params(params)

    # (B,1,28,28) -> (28, B, 28): rows = image row, sublanes = batch, lanes = w
    img = jnp.transpose(images[:, 0].astype(jnp.float32), (1, 0, 2))
    # Per-step Bernoulli thresholds, streamed one timestep per grid step.
    rand = jax.random.uniform(key, (time_window, H1, b, H1), jnp.float32)

    kernel = _make_kernel(bt, time_window)

    grid_spec = pltpu.PrefetchScalarGridSpec(
        num_scalar_prefetch=0,
        grid=(nb, time_window),
        in_specs=[
            pl.BlockSpec((H1, bt, H1), lambda i, t: (0, i, 0)),        # img
            pl.BlockSpec((1, H1, bt, H1), lambda i, t: (t, 0, i, 0)),  # rand
            pl.BlockSpec((3, H1, L1), lambda i, t: (0, 0, 0)),         # m1
            pl.BlockSpec((1, L1), lambda i, t: (0, 0)),                # b1
            pl.BlockSpec((3, L1, L2), lambda i, t: (0, 0, 0)),         # m2
            pl.BlockSpec((1, L2), lambda i, t: (0, 0)),                # b2
            pl.BlockSpec((H2, L2, NFC1), lambda i, t: (0, 0, 0)),      # wf1
            pl.BlockSpec((1, NFC1), lambda i, t: (0, 0)),              # bf1
            pl.BlockSpec((NFC1, NOUT), lambda i, t: (0, 0)),           # wf2
            pl.BlockSpec((1, NOUT), lambda i, t: (0, 0)),              # bf2
        ],
        out_specs=pl.BlockSpec((bt, NOUT), lambda i, t: (i, 0)),
        scratch_shapes=[
            pltpu.VMEM((H1 + 2, bt, H1), jnp.float32),   # xp1: padded spikes
            pltpu.VMEM((H1, bt, L1), jnp.float32),       # c1_mem
            pltpu.VMEM((H1, bt, L1), jnp.float32),       # c1_spike
            pltpu.VMEM((H2 + 2, bt, L1), jnp.float32),   # xp2: padded row-pair sums
            pltpu.VMEM((H2, bt, L2), jnp.float32),       # c2_mem
            pltpu.VMEM((H2, bt, L2), jnp.float32),       # c2_spike
            pltpu.VMEM((bt, NFC1), jnp.float32),         # h1_mem
            pltpu.VMEM((bt, NFC1), jnp.float32),         # h1_spike
            pltpu.VMEM((bt, NOUT), jnp.float32),         # h2_mem
            pltpu.VMEM((bt, NOUT), jnp.float32),         # h2_spike
            pltpu.VMEM((bt, NOUT), jnp.float32),         # h2_sumspike
        ],
    )

    out = pl.pallas_call(
        kernel,
        grid_spec=grid_spec,
        out_shape=jax.ShapeDtypeStruct((b, NOUT), jnp.float32),
        compiler_params=pltpu.CompilerParams(
            dimension_semantics=("parallel", "arbitrary"),
            vmem_limit_bytes=48 * 1024 * 1024,
        ),
    )(img, rand, folded["m1"], folded["b1"], folded["m2"], folded["b2"],
      folded["wf1"], folded["bf1"], folded["wf2"], folded["bf2"])

    return out[:, :CFG_FC[1]]


# ----- parameters (deterministic, PyTorch-default-style uniform init) ---------
def init_params(key):
    ks = jax.random.split(key, 8)

    def u(k, shape, fan_in):
        bound = 1.0 / (fan_in ** 0.5)
        return jax.random.uniform(k, shape, jnp.float32, -bound, bound)

    cin1, cout1, _, _, k1 = CFG_CNN[0]
    cin2, cout2, _, _, k2 = CFG_CNN[1]
    fin_fc1 = CFG_KERNEL[-1] * CFG_KERNEL[-1] * CFG_CNN[-1][1]

    return {
        "conv1_w": u(ks[0], (cout1, cin1, k1, k1), cin1 * k1 * k1),
        "conv1_b": u(ks[1], (cout1,), cin1 * k1 * k1),
        "conv2_w": u(ks[2], (cout2, cin2, k2, k2), cin2 * k2 * k2),
        "conv2_b": u(ks[3], (cout2,), cin2 * k2 * k2),
        "fc1_w": u(ks[4], (CFG_FC[0], fin_fc1), fin_fc1),
        "fc1_b": u(ks[5], (CFG_FC[0],), fin_fc1),
        "fc2_w": u(ks[6], (CFG_FC[1], CFG_FC[0]), CFG_FC[0]),
        "fc2_b": u(ks[7], (CFG_FC[1],), CFG_FC[0]),
    }


# ----- demo -------------------------------------------------------------------
if __name__ == "__main__":
    B = 2
    TIME_WINDOW = 20

    root = jax.random.PRNGKey(0)
    kparam, kimg, knoise = jax.random.split(root, 3)
    params = init_params(kparam)
    # MNIST-like input (B, 1, 28, 28), values in [0, 1)
    images = jax.random.uniform(kimg, (B, 1, 28, 28), jnp.float32)

    fwd = jax.jit(scnn_forward, static_argnames=("time_window", "batch_tile"))
    out = fwd(params, images, knoise, time_window=TIME_WINDOW)
    out = jax.block_until_ready(out)

    assert out.shape == (B, CFG_FC[1]) and out.dtype == jnp.float32
    assert bool(jnp.all(jnp.isfinite(out)))
    assert bool(jnp.all((out >= 0.0) & (out <= 1.0)))
    # outputs are spike counts / time_window -> exact multiples of 1/T
    q = out * TIME_WINDOW
    assert bool(jnp.max(jnp.abs(q - jnp.round(q))) < 1e-3)
    print("KERNEL_OK")
</pallas_src>

<mosaic_0001>
module attributes {stable_mosaic.version = 11 : i64} {
  func.func @kernel(%arg0: i32, %arg1: i32, %arg2: memref<28x2x28xf32, #tpu.memory_space<vmem>>, %arg3: memref<1x28x2x28xf32, #tpu.memory_space<vmem>>, %arg4: memref<3x28x896xf32, #tpu.memory_space<vmem>>, %arg5: memref<1x896xf32, #tpu.memory_space<vmem>>, %arg6: memref<3x896x448xf32, #tpu.memory_space<vmem>>, %arg7: memref<1x448xf32, #tpu.memory_space<vmem>>, %arg8: memref<14x448x128xf32, #tpu.memory_space<vmem>>, %arg9: memref<1x128xf32, #tpu.memory_space<vmem>>, %arg10: memref<128x128xf32, #tpu.memory_space<vmem>>, %arg11: memref<1x128xf32, #tpu.memory_space<vmem>>, %arg12: memref<2x128xf32, #tpu.memory_space<vmem>>, %arg13: memref<30x2x28xf32, #tpu.memory_space<vmem>>, %arg14: memref<28x2x896xf32, #tpu.memory_space<vmem>>, %arg15: memref<28x2x896xf32, #tpu.memory_space<vmem>>, %arg16: memref<16x2x896xf32, #tpu.memory_space<vmem>>, %arg17: memref<14x2x448xf32, #tpu.memory_space<vmem>>, %arg18: memref<14x2x448xf32, #tpu.memory_space<vmem>>, %arg19: memref<2x128xf32, #tpu.memory_space<vmem>>, %arg20: memref<2x128xf32, #tpu.memory_space<vmem>>, %arg21: memref<2x128xf32, #tpu.memory_space<vmem>>, %arg22: memref<2x128xf32, #tpu.memory_space<vmem>>, %arg23: memref<2x128xf32, #tpu.memory_space<vmem>>) attributes {dimension_semantics = [#tpu.dimension_semantics<parallel>, #tpu.dimension_semantics<arbitrary>], iteration_bounds = array<i64: 1, 20>, scalar_prefetch = 0 : i64, scratch_operands = 11 : i64, tpu.core_type = #tpu.core_type<tc>, window_params = [{transform_indices = @transform_0, window_bounds = array<i64: 28, 2, 28>}, {transform_indices = @transform_1, window_bounds = array<i64: 1, 28, 2, 28>}, {pipeline_mode = #tpu.pipeline_mode<synchronous>, transform_indices = @transform_2, window_bounds = array<i64: 3, 28, 896>}, {pipeline_mode = #tpu.pipeline_mode<synchronous>, transform_indices = @transform_3, window_bounds = array<i64: 1, 896>}, {pipeline_mode = #tpu.pipeline_mode<synchronous>, transform_indices = @transform_4, window_bounds = array<i64: 3, 896, 448>}, {pipeline_mode = #tpu.pipeline_mode<synchronous>, transform_indices = @transform_5, window_bounds = array<i64: 1, 448>}, {pipeline_mode = #tpu.pipeline_mode<synchronous>, transform_indices = @transform_6, window_bounds = array<i64: 14, 448, 128>}, {pipeline_mode = #tpu.pipeline_mode<synchronous>, transform_indices = @transform_7, window_bounds = array<i64: 1, 128>}, {pipeline_mode = #tpu.pipeline_mode<synchronous>, transform_indices = @transform_8, window_bounds = array<i64: 128, 128>}, {pipeline_mode = #tpu.pipeline_mode<synchronous>, transform_indices = @transform_9, window_bounds = array<i64: 1, 128>}, {transform_indices = @transform_10, window_bounds = array<i64: 2, 128>}]} {
    %c0_i32 = arith.constant 0 : i32
    %0 = arith.cmpi eq, %arg1, %c0_i32 : i32
    %1 = arith.extui %0 : i1 to i32
    %c0_i32_0 = arith.constant 0 : i32
    %2 = arith.cmpi ne, %1, %c0_i32_0 : i32
    scf.if %2 {
      %cst_49 = arith.constant 0.000000e+00 : f32
      %56 = vector.broadcast %cst_49 : f32 to vector<30x2x28xf32>
      %c0_50 = arith.constant 0 : index
      %c0_51 = arith.constant 0 : index
      %c0_52 = arith.constant 0 : index
      %57 = vector.load %arg13[%c0_50, %c0_51, %c0_52] : memref<30x2x28xf32, #tpu.memory_space<vmem>>, vector<30x2x28xf32>
      tpu.vector_store %arg13[%c0_50, %c0_51, %c0_52], %56 {strides = array<i32>} : memref<30x2x28xf32, #tpu.memory_space<vmem>>, vector<30x2x28xf32>,
      %cst_53 = arith.constant 0.000000e+00 : f32
      %58 = vector.broadcast %cst_53 : f32 to vector<16x2x896xf32>
      %c0_54 = arith.constant 0 : index
      %c0_55 = arith.constant 0 : index
      %c0_56 = arith.constant 0 : index
      %59 = vector.load %arg16[%c0_54, %c0_55, %c0_56] : memref<16x2x896xf32, #tpu.memory_space<vmem>>, vector<16x2x896xf32>
      tpu.vector_store %arg16[%c0_54, %c0_55, %c0_56], %58 {strides = array<i32>} : memref<16x2x896xf32, #tpu.memory_space<vmem>>, vector<16x2x896xf32>,
      %cst_57 = arith.constant 0.000000e+00 : f32
      %60 = vector.broadcast %cst_57 : f32 to vector<28x2x896xf32>
      %c0_58 = arith.constant 0 : index
      %c0_59 = arith.constant 0 : index
      %c0_60 = arith.constant 0 : index
      %61 = vector.load %arg14[%c0_58, %c0_59, %c0_60] : memref<28x2x896xf32, #tpu.memory_space<vmem>>, vector<28x2x896xf32>
      tpu.vector_store %arg14[%c0_58, %c0_59, %c0_60], %60 {strides = array<i32>} : memref<28x2x896xf32, #tpu.memory_space<vmem>>, vector<28x2x896xf32>,
      %cst_61 = arith.constant 0.000000e+00 : f32
      %62 = vector.broadcast %cst_61 : f32 to vector<28x2x896xf32>
      %c0_62 = arith.constant 0 : index
      %c0_63 = arith.constant 0 : index
      %c0_64 = arith.constant 0 : index
      %63 = vector.load %arg15[%c0_62, %c0_63, %c0_64] : memref<28x2x896xf32, #tpu.memory_space<vmem>>, vector<28x2x896xf32>
      tpu.vector_store %arg15[%c0_62, %c0_63, %c0_64], %62 {strides = array<i32>} : memref<28x2x896xf32, #tpu.memory_space<vmem>>, vector<28x2x896xf32>,
      %cst_65 = arith.constant 0.000000e+00 : f32
      %64 = vector.broadcast %cst_65 : f32 to vector<14x2x448xf32>
      %c0_66 = arith.constant 0 : index
      %c0_67 = arith.constant 0 : index
      %c0_68 = arith.constant 0 : index
      %65 = vector.load %arg17[%c0_66, %c0_67, %c0_68] : memref<14x2x448xf32, #tpu.memory_space<vmem>>, vector<14x2x448xf32>
      tpu.vector_store %arg17[%c0_66, %c0_67, %c0_68], %64 {strides = array<i32>} : memref<14x2x448xf32, #tpu.memory_space<vmem>>, vector<14x2x448xf32>,
      %cst_69 = arith.constant 0.000000e+00 : f32
      %66 = vector.broadcast %cst_69 : f32 to vector<14x2x448xf32>
      %c0_70 = arith.constant 0 : index
      %c0_71 = arith.constant 0 : index
      %c0_72 = arith.constant 0 : index
      %67 = vector.load %arg18[%c0_70, %c0_71, %c0_72] : memref<14x2x448xf32, #tpu.memory_space<vmem>>, vector<14x2x448xf32>
      tpu.vector_store %arg18[%c0_70, %c0_71, %c0_72], %66 {strides = array<i32>} : memref<14x2x448xf32, #tpu.memory_space<vmem>>, vector<14x2x448xf32>,
      %cst_73 = arith.constant 0.000000e+00 : f32
      %68 = vector.broadcast %cst_73 : f32 to vector<2x128xf32>
      %c0_74 = arith.constant 0 : index
      %c0_75 = arith.constant 0 : index
      %69 = vector.load %arg19[%c0_74, %c0_75] : memref<2x128xf32, #tpu.memory_space<vmem>>, vector<2x128xf32>
      tpu.vector_store %arg19[%c0_74, %c0_75], %68 {strides = array<i32>} : memref<2x128xf32, #tpu.memory_space<vmem>>, vector<2x128xf32>,
      %cst_76 = arith.constant 0.000000e+00 : f32
      %70 = vector.broadcast %cst_76 : f32 to vector<2x128xf32>
      %c0_77 = arith.constant 0 : index
      %c0_78 = arith.constant 0 : index
      %71 = vector.load %arg20[%c0_77, %c0_78] : memref<2x128xf32, #tpu.memory_space<vmem>>, vector<2x128xf32>
      tpu.vector_store %arg20[%c0_77, %c0_78], %70 {strides = array<i32>} : memref<2x128xf32, #tpu.memory_space<vmem>>, vector<2x128xf32>,
      %cst_79 = arith.constant 0.000000e+00 : f32
      %72 = vector.broadcast %cst_79 : f32 to vector<2x128xf32>
      %c0_80 = arith.constant 0 : index
      %c0_81 = arith.constant 0 : index
      %73 = vector.load %arg21[%c0_80, %c0_81] : memref<2x128xf32, #tpu.memory_space<vmem>>, vector<2x128xf32>
      tpu.vector_store %arg21[%c0_80, %c0_81], %72 {strides = array<i32>} : memref<2x128xf32, #tpu.memory_space<vmem>>, vector<2x128xf32>,
      %cst_82 = arith.constant 0.000000e+00 : f32
      %74 = vector.broadcast %cst_82 : f32 to vector<2x128xf32>
      %c0_83 = arith.constant 0 : index
      %c0_84 = arith.constant 0 : index
      %75 = vector.load %arg22[%c0_83, %c0_84] : memref<2x128xf32, #tpu.memory_space<vmem>>, vector<2x128xf32>
      tpu.vector_store %arg22[%c0_83, %c0_84], %74 {strides = array<i32>} : memref<2x128xf32, #tpu.memory_space<vmem>>, vector<2x128xf32>,
      %cst_85 = arith.constant 0.000000e+00 : f32
      %76 = vector.broadcast %cst_85 : f32 to vector<2x128xf32>
      %c0_86 = arith.constant 0 : index
      %c0_87 = arith.constant 0 : index
      %77 = vector.load %arg23[%c0_86, %c0_87] : memref<2x128xf32, #tpu.memory_space<vmem>>, vector<2x128xf32>
      tpu.vector_store %arg23[%c0_86, %c0_87], %76 {strides = array<i32>} : memref<2x128xf32, #tpu.memory_space<vmem>>, vector<2x128xf32>,
    } else {
    }
    %c0 = arith.constant 0 : index
    %c0_1 = arith.constant 0 : index
    %c0_2 = arith.constant 0 : index
    %3 = vector.load %arg2[%c0, %c0_1, %c0_2] : memref<28x2x28xf32, #tpu.memory_space<vmem>>, vector<28x2x28xf32>
    %c0_3 = arith.constant 0 : index
    %c0_4 = arith.constant 0 : index
    %c0_5 = arith.constant 0 : index
    %c0_6 = arith.constant 0 : index
    %4 = vector.load %arg3[%c0_3, %c0_4, %c0_5, %c0_6] : memref<1x28x2x28xf32, #tpu.memory_space<vmem>>, vector<1x28x2x28xf32>
    %5 = vector.shape_cast %4 : vector<1x28x2x28xf32> to vector<28x2x28xf32>
    %6 = arith.cmpf ogt, %3, %5 : vector<28x2x28xf32>
    %7 = arith.extui %6 : vector<28x2x28xi1> to vector<28x2x28xi32>
    %8 = arith.sitofp %7 : vector<28x2x28xi32> to vector<28x2x28xf32>
    %c1 = arith.constant 1 : index
    %c0_7 = arith.constant 0 : index
    %c0_8 = arith.constant 0 : index
    %9 = vector.load %arg13[%c1, %c0_7, %c0_8] : memref<30x2x28xf32, #tpu.memory_space<vmem>>, vector<28x2x28xf32>
    tpu.vector_store %arg13[%c1, %c0_7, %c0_8], %8 {strides = array<i32>} : memref<30x2x28xf32, #tpu.memory_space<vmem>>, vector<28x2x28xf32>,
    %c0_i32_9 = arith.constant 0 : i32
    %c14_i32 = arith.constant 14 : i32
    %10 = arith.addi %c0_i32_9, %c14_i32 : i32
    %c1_i32 = arith.constant 1 : i32
    scf.for %arg24 = %c0_i32_9 to %10 step %c1_i32  : i32 {
      %c2_i32 = arith.constant 2 : i32
      %56 = arith.muli %c2_i32, %arg24 : i32
      %c2_i32_49 = arith.constant 2 : i32
      %57 = arith.muli %c2_i32_49, %arg24 : i32
      %58 = arith.index_cast %57 : i32 to index
      %c0_50 = arith.constant 0 : index
      %c0_51 = arith.constant 0 : index
      %59 = vector.load %arg13[%58, %c0_50, %c0_51] : memref<30x2x28xf32, #tpu.memory_space<vmem>>, vector<1x2x28xf32>
      %60 = vector.shape_cast %59 : vector<1x2x28xf32> to vector<2x28xf32>
      %c0_52 = arith.constant 0 : index
      %c0_53 = arith.constant 0 : index
      %c0_54 = arith.constant 0 : index
      %61 = vector.load %arg4[%c0_52, %c0_53, %c0_54] : memref<3x28x896xf32, #tpu.memory_space<vmem>>, vector<1x28x896xf32>
      %62 = vector.shape_cast %61 : vector<1x28x896xf32> to vector<28x896xf32>
      %cst_55 = arith.constant dense<0.000000e+00> : vector<2x896xf32>
      %63 = tpu.matmul %60, %62, %cst_55 {dimension_numbers = #tpu.dot_dimension_numbers<[1], [0], [0], [1], [0, 0, 1, 1], [], []>} : vector<2x28xf32>, vector<28x896xf32>, vector<2x896xf32> -> vector<2x896xf32>
      %c1_i32_56 = arith.constant 1 : i32
      %64 = arith.addi %57, %c1_i32_56 : i32
      %65 = arith.index_cast %64 : i32 to index
      %c0_57 = arith.constant 0 : index
      %c0_58 = arith.constant 0 : index
      %66 = vector.load %arg13[%65, %c0_57, %c0_58] : memref<30x2x28xf32, #tpu.memory_space<vmem>>, vector<1x2x28xf32>
      %67 = vector.shape_cast %66 : vector<1x2x28xf32> to vector<2x28xf32>
      %c1_59 = arith.constant 1 : index
      %c0_60 = arith.constant 0 : index
      %c0_61 = arith.constant 0 : index
      %68 = vector.load %arg4[%c1_59, %c0_60, %c0_61] : memref<3x28x896xf32, #tpu.memory_space<vmem>>, vector<1x28x896xf32>
      %69 = vector.shape_cast %68 : vector<1x28x896xf32> to vector<28x896xf32>
      %cst_62 = arith.constant dense<0.000000e+00> : vector<2x896xf32>
      %70 = tpu.matmul %67, %69, %cst_62 {dimension_numbers = #tpu.dot_dimension_numbers<[1], [0], [0], [1], [0, 0, 1, 1], [], []>} : vector<2x28xf32>, vector<28x896xf32>, vector<2x896xf32> -> vector<2x896xf32>
      %71 = arith.addf %63, %70 : vector<2x896xf32>
      %c2_i32_63 = arith.constant 2 : i32
      %72 = arith.addi %57, %c2_i32_63 : i32
      %73 = arith.index_cast %72 : i32 to index
      %c0_64 = arith.constant 0 : index
      %c0_65 = arith.constant 0 : index
      %74 = vector.load %arg13[%73, %c0_64, %c0_65] : memref<30x2x28xf32, #tpu.memory_space<vmem>>, vector<1x2x28xf32>
      %75 = vector.shape_cast %74 : vector<1x2x28xf32> to vector<2x28xf32>
      %c2 = arith.constant 2 : index
      %c0_66 = arith.constant 0 : index
      %c0_67 = arith.constant 0 : index
      %76 = vector.load %arg4[%c2, %c0_66, %c0_67] : memref<3x28x896xf32, #tpu.memory_space<vmem>>, vector<1x28x896xf32>
      %77 = vector.shape_cast %76 : vector<1x28x896xf32> to vector<28x896xf32>
      %cst_68 = arith.constant dense<0.000000e+00> : vector<2x896xf32>
      %78 = tpu.matmul %75, %77, %cst_68 {dimension_numbers = #tpu.dot_dimension_numbers<[1], [0], [0], [1], [0, 0, 1, 1], [], []>} : vector<2x28xf32>, vector<28x896xf32>, vector<2x896xf32> -> vector<2x896xf32>
      %79 = arith.addf %71, %78 : vector<2x896xf32>
      %c0_69 = arith.constant 0 : index
      %c0_70 = arith.constant 0 : index
      %80 = vector.load %arg5[%c0_69, %c0_70] : memref<1x896xf32, #tpu.memory_space<vmem>>, vector<1x896xf32>
      %81 = vector.broadcast %80 : vector<1x896xf32> to vector<2x896xf32>
      %82 = arith.addf %79, %81 : vector<2x896xf32>
      %83 = arith.index_cast %56 : i32 to index
      %c0_71 = arith.constant 0 : index
      %c0_72 = arith.constant 0 : index
      %84 = vector.load %arg14[%83, %c0_71, %c0_72] : memref<28x2x896xf32, #tpu.memory_space<vmem>>, vector<1x2x896xf32>
      %85 = vector.shape_cast %84 : vector<1x2x896xf32> to vector<2x896xf32>
      %cst_73 = arith.constant 2.000000e-01 : f32
      %86 = vector.broadcast %cst_73 : f32 to vector<2x896xf32>
      %87 = arith.mulf %85, %86 : vector<2x896xf32>
      %88 = arith.index_cast %56 : i32 to index
      %c0_74 = arith.constant 0 : index
      %c0_75 = arith.constant 0 : index
      %89 = vector.load %arg15[%88, %c0_74, %c0_75] : memref<28x2x896xf32, #tpu.memory_space<vmem>>, vector<1x2x896xf32>
      %90 = vector.shape_cast %89 : vector<1x2x896xf32> to vector<2x896xf32>
      %cst_76 = arith.constant 1.000000e+00 : f32
      %91 = vector.broadcast %cst_76 : f32 to vector<2x896xf32>
      %92 = arith.subf %91, %90 : vector<2x896xf32>
      %93 = arith.mulf %87, %92 : vector<2x896xf32>
      %94 = arith.addf %93, %82 : vector<2x896xf32>
      %cst_77 = arith.constant 5.000000e-01 : f32
      %95 = vector.broadcast %cst_77 : f32 to vector<2x896xf32>
      %96 = arith.cmpf ogt, %94, %95 : vector<2x896xf32>
      %97 = arith.extui %96 : vector<2x896xi1> to vector<2x896xi32>
      %98 = arith.sitofp %97 : vector<2x896xi32> to vector<2x896xf32>
      %99 = arith.index_cast %56 : i32 to index
      %c0_78 = arith.constant 0 : index
      %c0_79 = arith.constant 0 : index
      %100 = vector.load %arg14[%99, %c0_78, %c0_79] : memref<28x2x896xf32, #tpu.memory_space<vmem>>, vector<1x2x896xf32>
      %101 = vector.shape_cast %100 : vector<1x2x896xf32> to vector<2x896xf32>
      %102 = vector.shape_cast %94 : vector<2x896xf32> to vector<1x2x896xf32>
      tpu.vector_store %arg14[%99, %c0_78, %c0_79], %102 {strides = array<i32>} : memref<28x2x896xf32, #tpu.memory_space<vmem>>, vector<1x2x896xf32>,
      %103 = arith.index_cast %56 : i32 to index
      %c0_80 = arith.constant 0 : index
      %c0_81 = arith.constant 0 : index
      %104 = vector.load %arg15[%103, %c0_80, %c0_81] : memref<28x2x896xf32, #tpu.memory_space<vmem>>, vector<1x2x896xf32>
      %105 = vector.shape_cast %104 : vector<1x2x896xf32> to vector<2x896xf32>
      %106 = vector.shape_cast %98 : vector<2x896xf32> to vector<1x2x896xf32>
      tpu.vector_store %arg15[%103, %c0_80, %c0_81], %106 {strides = array<i32>} : memref<28x2x896xf32, #tpu.memory_space<vmem>>, vector<1x2x896xf32>,
      %c2_i32_82 = arith.constant 2 : i32
      %107 = arith.muli %c2_i32_82, %arg24 : i32
      %c1_i32_83 = arith.constant 1 : i32
      %108 = arith.addi %107, %c1_i32_83 : i32
      %c2_i32_84 = arith.constant 2 : i32
      %109 = arith.muli %c2_i32_84, %arg24 : i32
      %c1_i32_85 = arith.constant 1 : i32
      %110 = arith.addi %109, %c1_i32_85 : i32
      %111 = arith.index_cast %110 : i32 to index
      %c0_86 = arith.constant 0 : index
      %c0_87 = arith.constant 0 : index
      %112 = vector.load %arg13[%111, %c0_86, %c0_87] : memref<30x2x28xf32, #tpu.memory_space<vmem>>, vector<1x2x28xf32>
      %113 = vector.shape_cast %112 : vector<1x2x28xf32> to vector<2x28xf32>
      %c0_88 = arith.constant 0 : index
      %c0_89 = arith.constant 0 : index
      %c0_90 = arith.constant 0 : index
      %114 = vector.load %arg4[%c0_88, %c0_89, %c0_90] : memref<3x28x896xf32, #tpu.memory_space<vmem>>, vector<1x28x896xf32>
      %115 = vector.shape_cast %114 : vector<1x28x896xf32> to vector<28x896xf32>
      %cst_91 = arith.constant dense<0.000000e+00> : vector<2x896xf32>
      %116 = tpu.matmul %113, %115, %cst_91 {dimension_numbers = #tpu.dot_dimension_numbers<[1], [0], [0], [1], [0, 0, 1, 1], [], []>} : vector<2x28xf32>, vector<28x896xf32>, vector<2x896xf32> -> vector<2x896xf32>
      %c1_i32_92 = arith.constant 1 : i32
      %117 = arith.addi %110, %c1_i32_92 : i32
      %118 = arith.index_cast %117 : i32 to index
      %c0_93 = arith.constant 0 : index
      %c0_94 = arith.constant 0 : index
      %119 = vector.load %arg13[%118, %c0_93, %c0_94] : memref<30x2x28xf32, #tpu.memory_space<vmem>>, vector<1x2x28xf32>
      %120 = vector.shape_cast %119 : vector<1x2x28xf32> to vector<2x28xf32>
      %c1_95 = arith.constant 1 : index
      %c0_96 = arith.constant 0 : index
      %c0_97 = arith.constant 0 : index
      %121 = vector.load %arg4[%c1_95, %c0_96, %c0_97] : memref<3x28x896xf32, #tpu.memory_space<vmem>>, vector<1x28x896xf32>
      %122 = vector.shape_cast %121 : vector<1x28x896xf32> to vector<28x896xf32>
      %cst_98 = arith.constant dense<0.000000e+00> : vector<2x896xf32>
      %123 = tpu.matmul %120, %122, %cst_98 {dimension_numbers = #tpu.dot_dimension_numbers<[1], [0], [0], [1], [0, 0, 1, 1], [], []>} : vector<2x28xf32>, vector<28x896xf32>, vector<2x896xf32> -> vector<2x896xf32>
      %124 = arith.addf %116, %123 : vector<2x896xf32>
      %c2_i32_99 = arith.constant 2 : i32
      %125 = arith.addi %110, %c2_i32_99 : i32
      %126 = arith.index_cast %125 : i32 to index
      %c0_100 = arith.constant 0 : index
      %c0_101 = arith.constant 0 : index
      %127 = vector.load %arg13[%126, %c0_100, %c0_101] : memref<30x2x28xf32, #tpu.memory_space<vmem>>, vector<1x2x28xf32>
      %128 = vector.shape_cast %127 : vector<1x2x28xf32> to vector<2x28xf32>
      %c2_102 = arith.constant 2 : index
      %c0_103 = arith.constant 0 : index
      %c0_104 = arith.constant 0 : index
      %129 = vector.load %arg4[%c2_102, %c0_103, %c0_104] : memref<3x28x896xf32, #tpu.memory_space<vmem>>, vector<1x28x896xf32>
      %130 = vector.shape_cast %129 : vector<1x28x896xf32> to vector<28x896xf32>
      %cst_105 = arith.constant dense<0.000000e+00> : vector<2x896xf32>
      %131 = tpu.matmul %128, %130, %cst_105 {dimension_numbers = #tpu.dot_dimension_numbers<[1], [0], [0], [1], [0, 0, 1, 1], [], []>} : vector<2x28xf32>, vector<28x896xf32>, vector<2x896xf32> -> vector<2x896xf32>
      %132 = arith.addf %124, %131 : vector<2x896xf32>
      %c0_106 = arith.constant 0 : index
      %c0_107 = arith.constant 0 : index
      %133 = vector.load %arg5[%c0_106, %c0_107] : memref<1x896xf32, #tpu.memory_space<vmem>>, vector<1x896xf32>
      %134 = vector.broadcast %133 : vector<1x896xf32> to vector<2x896xf32>
      %135 = arith.addf %132, %134 : vector<2x896xf32>
      %136 = arith.index_cast %108 : i32 to index
      %c0_108 = arith.constant 0 : index
      %c0_109 = arith.constant 0 : index
      %137 = vector.load %arg14[%136, %c0_108, %c0_109] : memref<28x2x896xf32, #tpu.memory_space<vmem>>, vector<1x2x896xf32>
      %138 = vector.shape_cast %137 : vector<1x2x896xf32> to vector<2x896xf32>
      %cst_110 = arith.constant 2.000000e-01 : f32
      %139 = vector.broadcast %cst_110 : f32 to vector<2x896xf32>
      %140 = arith.mulf %138, %139 : vector<2x896xf32>
      %141 = arith.index_cast %108 : i32 to index
      %c0_111 = arith.constant 0 : index
      %c0_112 = arith.constant 0 : index
      %142 = vector.load %arg15[%141, %c0_111, %c0_112] : memref<28x2x896xf32, #tpu.memory_space<vmem>>, vector<1x2x896xf32>
      %143 = vector.shape_cast %142 : vector<1x2x896xf32> to vector<2x896xf32>
      %cst_113 = arith.constant 1.000000e+00 : f32
      %144 = vector.broadcast %cst_113 : f32 to vector<2x896xf32>
      %145 = arith.subf %144, %143 : vector<2x896xf32>
      %146 = arith.mulf %140, %145 : vector<2x896xf32>
      %147 = arith.addf %146, %135 : vector<2x896xf32>
      %cst_114 = arith.constant 5.000000e-01 : f32
      %148 = vector.broadcast %cst_114 : f32 to vector<2x896xf32>
      %149 = arith.cmpf ogt, %147, %148 : vector<2x896xf32>
      %150 = arith.extui %149 : vector<2x896xi1> to vector<2x896xi32>
      %151 = arith.sitofp %150 : vector<2x896xi32> to vector<2x896xf32>
      %152 = arith.index_cast %108 : i32 to index
      %c0_115 = arith.constant 0 : index
      %c0_116 = arith.constant 0 : index
      %153 = vector.load %arg14[%152, %c0_115, %c0_116] : memref<28x2x896xf32, #tpu.memory_space<vmem>>, vector<1x2x896xf32>
      %154 = vector.shape_cast %153 : vector<1x2x896xf32> to vector<2x896xf32>
      %155 = vector.shape_cast %147 : vector<2x896xf32> to vector<1x2x896xf32>
      tpu.vector_store %arg14[%152, %c0_115, %c0_116], %155 {strides = array<i32>} : memref<28x2x896xf32, #tpu.memory_space<vmem>>, vector<1x2x896xf32>,
      %156 = arith.index_cast %108 : i32 to index
      %c0_117 = arith.constant 0 : index
      %c0_118 = arith.constant 0 : index
      %157 = vector.load %arg15[%156, %c0_117, %c0_118] : memref<28x2x896xf32, #tpu.memory_space<vmem>>, vector<1x2x896xf32>
      %158 = vector.shape_cast %157 : vector<1x2x896xf32> to vector<2x896xf32>
      %159 = vector.shape_cast %151 : vector<2x896xf32> to vector<1x2x896xf32>
      tpu.vector_store %arg15[%156, %c0_117, %c0_118], %159 {strides = array<i32>} : memref<28x2x896xf32, #tpu.memory_space<vmem>>, vector<1x2x896xf32>,
      %160 = arith.addf %98, %151 : vector<2x896xf32>
      %c1_i32_119 = arith.constant 1 : i32
      %161 = arith.addi %arg24, %c1_i32_119 : i32
      %162 = arith.index_cast %161 : i32 to index
      %c0_120 = arith.constant 0 : index
      %c0_121 = arith.constant 0 : index
      %163 = vector.load %arg16[%162, %c0_120, %c0_121] : memref<16x2x896xf32, #tpu.memory_space<vmem>>, vector<1x2x896xf32>
      %164 = vector.shape_cast %163 : vector<1x2x896xf32> to vector<2x896xf32>
      %165 = vector.shape_cast %160 : vector<2x896xf32> to vector<1x2x896xf32>
      tpu.vector_store %arg16[%162, %c0_120, %c0_121], %165 {strides = array<i32>} : memref<16x2x896xf32, #tpu.memory_space<vmem>>, vector<1x2x896xf32>,
    }
    %c14_i32_10 = arith.constant 14 : i32
    %cst = arith.constant 0.000000e+00 : f32
    %11 = vector.broadcast %cst : f32 to vector<2x128xf32>
    %c0_i32_11 = arith.constant 0 : i32
    %c14_i32_12 = arith.constant 14 : i32
    %12 = arith.addi %c0_i32_11, %c14_i32_12 : i32
    %c1_i32_13 = arith.constant 1 : i32
    %13 = scf.for %arg24 = %c0_i32_11 to %12 step %c1_i32_13 iter_args(%arg25 = %11) -> (vector<2x128xf32>)  : i32 {
      %56 = arith.index_cast %arg24 : i32 to index
      %c0_49 = arith.constant 0 : index
      %c0_50 = arith.constant 0 : index
      %57 = vector.load %arg16[%56, %c0_49, %c0_50] : memref<16x2x896xf32, #tpu.memory_space<vmem>>, vector<1x2x896xf32>
      %58 = vector.shape_cast %57 : vector<1x2x896xf32> to vector<2x896xf32>
      %c0_51 = arith.constant 0 : index
      %c0_52 = arith.constant 0 : index
      %c0_53 = arith.constant 0 : index
      %59 = vector.load %arg6[%c0_51, %c0_52, %c0_53] : memref<3x896x448xf32, #tpu.memory_space<vmem>>, vector<1x896x448xf32>
      %60 = vector.shape_cast %59 : vector<1x896x448xf32> to vector<896x448xf32>
      %cst_54 = arith.constant dense<0.000000e+00> : vector<2x448xf32>
      %61 = tpu.matmul %58, %60, %cst_54 {dimension_numbers = #tpu.dot_dimension_numbers<[1], [0], [0], [1], [0, 0, 1, 1], [], []>} : vector<2x896xf32>, vector<896x448xf32>, vector<2x448xf32> -> vector<2x448xf32>
      %c1_i32_55 = arith.constant 1 : i32
      %62 = arith.addi %arg24, %c1_i32_55 : i32
      %63 = arith.index_cast %62 : i32 to index
      %c0_56 = arith.constant 0 : index
      %c0_57 = arith.constant 0 : index
      %64 = vector.load %arg16[%63, %c0_56, %c0_57] : memref<16x2x896xf32, #tpu.memory_space<vmem>>, vector<1x2x896xf32>
      %65 = vector.shape_cast %64 : vector<1x2x896xf32> to vector<2x896xf32>
      %c1_58 = arith.constant 1 : index
      %c0_59 = arith.constant 0 : index
      %c0_60 = arith.constant 0 : index
      %66 = vector.load %arg6[%c1_58, %c0_59, %c0_60] : memref<3x896x448xf32, #tpu.memory_space<vmem>>, vector<1x896x448xf32>
      %67 = vector.shape_cast %66 : vector<1x896x448xf32> to vector<896x448xf32>
      %cst_61 = arith.constant dense<0.000000e+00> : vector<2x448xf32>
      %68 = tpu.matmul %65, %67, %cst_61 {dimension_numbers = #tpu.dot_dimension_numbers<[1], [0], [0], [1], [0, 0, 1, 1], [], []>} : vector<2x896xf32>, vector<896x448xf32>, vector<2x448xf32> -> vector<2x448xf32>
      %69 = arith.addf %61, %68 : vector<2x448xf32>
      %c2_i32 = arith.constant 2 : i32
      %70 = arith.addi %arg24, %c2_i32 : i32
      %71 = arith.index_cast %70 : i32 to index
      %c0_62 = arith.constant 0 : index
      %c0_63 = arith.constant 0 : index
      %72 = vector.load %arg16[%71, %c0_62, %c0_63] : memref<16x2x896xf32, #tpu.memory_space<vmem>>, vector<1x2x896xf32>
      %73 = vector.shape_cast %72 : vector<1x2x896xf32> to vector<2x896xf32>
      %c2 = arith.constant 2 : index
      %c0_64 = arith.constant 0 : index
      %c0_65 = arith.constant 0 : index
      %74 = vector.load %arg6[%c2, %c0_64, %c0_65] : memref<3x896x448xf32, #tpu.memory_space<vmem>>, vector<1x896x448xf32>
      %75 = vector.shape_cast %74 : vector<1x896x448xf32> to vector<896x448xf32>
      %cst_66 = arith.constant dense<0.000000e+00> : vector<2x448xf32>
      %76 = tpu.matmul %73, %75, %cst_66 {dimension_numbers = #tpu.dot_dimension_numbers<[1], [0], [0], [1], [0, 0, 1, 1], [], []>} : vector<2x896xf32>, vector<896x448xf32>, vector<2x448xf32> -> vector<2x448xf32>
      %77 = arith.addf %69, %76 : vector<2x448xf32>
      %c0_67 = arith.constant 0 : index
      %c0_68 = arith.constant 0 : index
      %78 = vector.load %arg7[%c0_67, %c0_68] : memref<1x448xf32, #tpu.memory_space<vmem>>, vector<1x448xf32>
      %79 = vector.broadcast %78 : vector<1x448xf32> to vector<2x448xf32>
      %80 = arith.addf %77, %79 : vector<2x448xf32>
      %81 = arith.index_cast %arg24 : i32 to index
      %c0_69 = arith.constant 0 : index
      %c0_70 = arith.constant 0 : index
      %82 = vector.load %arg17[%81, %c0_69, %c0_70] : memref<14x2x448xf32, #tpu.memory_space<vmem>>, vector<1x2x448xf32>
      %83 = vector.shape_cast %82 : vector<1x2x448xf32> to vector<2x448xf32>
      %cst_71 = arith.constant 2.000000e-01 : f32
      %84 = vector.broadcast %cst_71 : f32 to vector<2x448xf32>
      %85 = arith.mulf %83, %84 : vector<2x448xf32>
      %86 = arith.index_cast %arg24 : i32 to index
      %c0_72 = arith.constant 0 : index
      %c0_73 = arith.constant 0 : index
      %87 = vector.load %arg18[%86, %c0_72, %c0_73] : memref<14x2x448xf32, #tpu.memory_space<vmem>>, vector<1x2x448xf32>
      %88 = vector.shape_cast %87 : vector<1x2x448xf32> to vector<2x448xf32>
      %cst_74 = arith.constant 1.000000e+00 : f32
      %89 = vector.broadcast %cst_74 : f32 to vector<2x448xf32>
      %90 = arith.subf %89, %88 : vector<2x448xf32>
      %91 = arith.mulf %85, %90 : vector<2x448xf32>
      %92 = arith.addf %91, %80 : vector<2x448xf32>
      %cst_75 = arith.constant 5.000000e-01 : f32
      %93 = vector.broadcast %cst_75 : f32 to vector<2x448xf32>
      %94 = arith.cmpf ogt, %92, %93 : vector<2x448xf32>
      %95 = arith.extui %94 : vector<2x448xi1> to vector<2x448xi32>
      %96 = arith.sitofp %95 : vector<2x448xi32> to vector<2x448xf32>
      %97 = arith.index_cast %arg24 : i32 to index
      %c0_76 = arith.constant 0 : index
      %c0_77 = arith.constant 0 : index
      %98 = vector.load %arg17[%97, %c0_76, %c0_77] : memref<14x2x448xf32, #tpu.memory_space<vmem>>, vector<1x2x448xf32>
      %99 = vector.shape_cast %98 : vector<1x2x448xf32> to vector<2x448xf32>
      %100 = vector.shape_cast %92 : vector<2x448xf32> to vector<1x2x448xf32>
      tpu.vector_store %arg17[%97, %c0_76, %c0_77], %100 {strides = array<i32>} : memref<14x2x448xf32, #tpu.memory_space<vmem>>, vector<1x2x448xf32>,
      %101 = arith.index_cast %arg24 : i32 to index
      %c0_78 = arith.constant 0 : index
      %c0_79 = arith.constant 0 : index
      %102 = vector.load %arg18[%101, %c0_78, %c0_79] : memref<14x2x448xf32, #tpu.memory_space<vmem>>, vector<1x2x448xf32>
      %103 = vector.shape_cast %102 : vector<1x2x448xf32> to vector<2x448xf32>
      %104 = vector.shape_cast %96 : vector<2x448xf32> to vector<1x2x448xf32>
      tpu.vector_store %arg18[%101, %c0_78, %c0_79], %104 {strides = array<i32>} : memref<14x2x448xf32, #tpu.memory_space<vmem>>, vector<1x2x448xf32>,
      %105 = arith.index_cast %arg24 : i32 to index
      %c0_80 = arith.constant 0 : index
      %c0_81 = arith.constant 0 : index
      %106 = vector.load %arg8[%105, %c0_80, %c0_81] : memref<14x448x128xf32, #tpu.memory_space<vmem>>, vector<1x448x128xf32>
      %107 = vector.shape_cast %106 : vector<1x448x128xf32> to vector<448x128xf32>
      %cst_82 = arith.constant dense<0.000000e+00> : vector<2x128xf32>
      %108 = tpu.matmul %96, %107, %cst_82 {dimension_numbers = #tpu.dot_dimension_numbers<[1], [0], [0], [1], [0, 0, 1, 1], [], []>} : vector<2x448xf32>, vector<448x128xf32>, vector<2x128xf32> -> vector<2x128xf32>
      %109 = arith.addf %arg25, %108 : vector<2x128xf32>
      scf.yield %109 : vector<2x128xf32>
    }
    %c14_i32_14 = arith.constant 14 : i32
    %c0_15 = arith.constant 0 : index
    %c0_16 = arith.constant 0 : index
    %14 = vector.load %arg9[%c0_15, %c0_16] : memref<1x128xf32, #tpu.memory_space<vmem>>, vector<1x128xf32>
    %15 = vector.broadcast %14 : vector<1x128xf32> to vector<2x128xf32>
    %16 = arith.addf %13, %15 : vector<2x128xf32>
    %c0_17 = arith.constant 0 : index
    %c0_18 = arith.constant 0 : index
    %17 = vector.load %arg19[%c0_17, %c0_18] : memref<2x128xf32, #tpu.memory_space<vmem>>, vector<2x128xf32>
    %cst_19 = arith.constant 2.000000e-01 : f32
    %18 = vector.broadcast %cst_19 : f32 to vector<2x128xf32>
    %19 = arith.mulf %17, %18 : vector<2x128xf32>
    %c0_20 = arith.constant 0 : index
    %c0_21 = arith.constant 0 : index
    %20 = vector.load %arg20[%c0_20, %c0_21] : memref<2x128xf32, #tpu.memory_space<vmem>>, vector<2x128xf32>
    %cst_22 = arith.constant 1.000000e+00 : f32
    %21 = vector.broadcast %cst_22 : f32 to vector<2x128xf32>
    %22 = arith.subf %21, %20 : vector<2x128xf32>
    %23 = arith.mulf %19, %22 : vector<2x128xf32>
    %24 = arith.addf %23, %16 : vector<2x128xf32>
    %cst_23 = arith.constant 5.000000e-01 : f32
    %25 = vector.broadcast %cst_23 : f32 to vector<2x128xf32>
    %26 = arith.cmpf ogt, %24, %25 : vector<2x128xf32>
    %27 = arith.extui %26 : vector<2x128xi1> to vector<2x128xi32>
    %28 = arith.sitofp %27 : vector<2x128xi32> to vector<2x128xf32>
    %c0_24 = arith.constant 0 : index
    %c0_25 = arith.constant 0 : index
    %29 = vector.load %arg19[%c0_24, %c0_25] : memref<2x128xf32, #tpu.memory_space<vmem>>, vector<2x128xf32>
    tpu.vector_store %arg19[%c0_24, %c0_25], %24 {strides = array<i32>} : memref<2x128xf32, #tpu.memory_space<vmem>>, vector<2x128xf32>,
    %c0_26 = arith.constant 0 : index
    %c0_27 = arith.constant 0 : index
    %30 = vector.load %arg20[%c0_26, %c0_27] : memref<2x128xf32, #tpu.memory_space<vmem>>, vector<2x128xf32>
    tpu.vector_store %arg20[%c0_26, %c0_27], %28 {strides = array<i32>} : memref<2x128xf32, #tpu.memory_space<vmem>>, vector<2x128xf32>,
    %c0_28 = arith.constant 0 : index
    %c0_29 = arith.constant 0 : index
    %31 = vector.load %arg10[%c0_28, %c0_29] : memref<128x128xf32, #tpu.memory_space<vmem>>, vector<128x128xf32>
    %cst_30 = arith.constant dense<0.000000e+00> : vector<2x128xf32>
    %32 = tpu.matmul %28, %31, %cst_30 {dimension_numbers = #tpu.dot_dimension_numbers<[1], [0], [0], [1], [0, 0, 1, 1], [], []>} : vector<2x128xf32>, vector<128x128xf32>, vector<2x128xf32> -> vector<2x128xf32>
    %c0_31 = arith.constant 0 : index
    %c0_32 = arith.constant 0 : index
    %33 = vector.load %arg11[%c0_31, %c0_32] : memref<1x128xf32, #tpu.memory_space<vmem>>, vector<1x128xf32>
    %34 = vector.broadcast %33 : vector<1x128xf32> to vector<2x128xf32>
    %35 = arith.addf %32, %34 : vector<2x128xf32>
    %c0_33 = arith.constant 0 : index
    %c0_34 = arith.constant 0 : index
    %36 = vector.load %arg21[%c0_33, %c0_34] : memref<2x128xf32, #tpu.memory_space<vmem>>, vector<2x128xf32>
    %cst_35 = arith.constant 2.000000e-01 : f32
    %37 = vector.broadcast %cst_35 : f32 to vector<2x128xf32>
    %38 = arith.mulf %36, %37 : vector<2x128xf32>
    %c0_36 = arith.constant 0 : index
    %c0_37 = arith.constant 0 : index
    %39 = vector.load %arg22[%c0_36, %c0_37] : memref<2x128xf32, #tpu.memory_space<vmem>>, vector<2x128xf32>
    %cst_38 = arith.constant 1.000000e+00 : f32
    %40 = vector.broadcast %cst_38 : f32 to vector<2x128xf32>
    %41 = arith.subf %40, %39 : vector<2x128xf32>
    %42 = arith.mulf %38, %41 : vector<2x128xf32>
    %43 = arith.addf %42, %35 : vector<2x128xf32>
    %cst_39 = arith.constant 5.000000e-01 : f32
    %44 = vector.broadcast %cst_39 : f32 to vector<2x128xf32>
    %45 = arith.cmpf ogt, %43, %44 : vector<2x128xf32>
    %46 = arith.extui %45 : vector<2x128xi1> to vector<2x128xi32>
    %47 = arith.sitofp %46 : vector<2x128xi32> to vector<2x128xf32>
    %c0_40 = arith.constant 0 : index
    %c0_41 = arith.constant 0 : index
    %48 = vector.load %arg21[%c0_40, %c0_41] : memref<2x128xf32, #tpu.memory_space<vmem>>, vector<2x128xf32>
    tpu.vector_store %arg21[%c0_40, %c0_41], %43 {strides = array<i32>} : memref<2x128xf32, #tpu.memory_space<vmem>>, vector<2x128xf32>,
    %c0_42 = arith.constant 0 : index
    %c0_43 = arith.constant 0 : index
    %49 = vector.load %arg22[%c0_42, %c0_43] : memref<2x128xf32, #tpu.memory_space<vmem>>, vector<2x128xf32>
    tpu.vector_store %arg22[%c0_42, %c0_43], %47 {strides = array<i32>} : memref<2x128xf32, #tpu.memory_space<vmem>>, vector<2x128xf32>,
    %c0_44 = arith.constant 0 : index
    %c0_45 = arith.constant 0 : index
    %50 = vector.load %arg23[%c0_44, %c0_45] : memref<2x128xf32, #tpu.memory_space<vmem>>, vector<2x128xf32>
    %51 = arith.addf %50, %47 : vector<2x128xf32>
    %c0_46 = arith.constant 0 : index
    %c0_47 = arith.constant 0 : index
    %52 = vector.load %arg23[%c0_46, %c0_47] : memref<2x128xf32, #tpu.memory_space<vmem>>, vector<2x128xf32>
    tpu.vector_store %arg23[%c0_46, %c0_47], %51 {strides = array<i32>} : memref<2x128xf32, #tpu.memory_space<vmem>>, vector<2x128xf32>,
    %c19_i32 = arith.constant 19 : i32
    %53 = arith.cmpi eq, %arg1, %c19_i32 : i32
    %54 = arith.extui %53 : i1 to i32
    %c0_i32_48 = arith.constant 0 : i32
    %55 = arith.cmpi ne, %54, %c0_i32_48 : i32
    scf.if %55 {
      %c0_49 = arith.constant 0 : index
      %c0_50 = arith.constant 0 : index
      %56 = vector.load %arg23[%c0_49, %c0_50] : memref<2x128xf32, #tpu.memory_space<vmem>>, vector<2x128xf32>
      %cst_51 = arith.constant 5.000000e-02 : f32
      %57 = vector.broadcast %cst_51 : f32 to vector<2x128xf32>
      %58 = arith.mulf %56, %57 : vector<2x128xf32>
      %c0_52 = arith.constant 0 : index
      %c0_53 = arith.constant 0 : index
      %59 = vector.load %arg12[%c0_52, %c0_53] : memref<2x128xf32, #tpu.memory_space<vmem>>, vector<2x128xf32>
      tpu.vector_store %arg12[%c0_52, %c0_53], %58 {strides = array<i32>} : memref<2x128xf32, #tpu.memory_space<vmem>>, vector<2x128xf32>,
    } else {
    }
    return
  }
  func.func @transform_0(%arg0: i32, %arg1: i32) -> (i32, i32, i32) {
    %c0_i32 = arith.constant 0 : i32
    %c0_i32_0 = arith.constant 0 : i32
    %c0_i32_1 = arith.constant 0 : i32
    return %c0_i32, %arg0, %c0_i32_0 : i32, i32, i32
  }
  func.func @transform_1(%arg0: i32, %arg1: i32) -> (i32, i32, i32, i32) {
    %c0_i32 = arith.constant 0 : i32
    %c0_i32_0 = arith.constant 0 : i32
    %c0_i32_1 = arith.constant 0 : i32
    return %arg1, %c0_i32, %arg0, %c0_i32_0 : i32, i32, i32, i32
  }
  func.func @transform_2(%arg0: i32, %arg1: i32) -> (i32, i32, i32) {
    %c0_i32 = arith.constant 0 : i32
    %c0_i32_0 = arith.constant 0 : i32
    %c0_i32_1 = arith.constant 0 : i32
    %c0_i32_2 = arith.constant 0 : i32
    return %c0_i32, %c0_i32_0, %c0_i32_1 : i32, i32, i32
  }
  func.func @transform_3(%arg0: i32, %arg1: i32) -> (i32, i32) {
    %c0_i32 = arith.constant 0 : i32
    %c0_i32_0 = arith.constant 0 : i32
    %c0_i32_1 = arith.constant 0 : i32
    return %c0_i32, %c0_i32_0 : i32, i32
  }
  func.func @transform_4(%arg0: i32, %arg1: i32) -> (i32, i32, i32) {
    %c0_i32 = arith.constant 0 : i32
    %c0_i32_0 = arith.constant 0 : i32
    %c0_i32_1 = arith.constant 0 : i32
    %c0_i32_2 = arith.constant 0 : i32
    return %c0_i32, %c0_i32_0, %c0_i32_1 : i32, i32, i32
  }
  func.func @transform_5(%arg0: i32, %arg1: i32) -> (i32, i32) {
    %c0_i32 = arith.constant 0 : i32
    %c0_i32_0 = arith.constant 0 : i32
    %c0_i32_1 = arith.constant 0 : i32
    return %c0_i32, %c0_i32_0 : i32, i32
  }
  func.func @transform_6(%arg0: i32, %arg1: i32) -> (i32, i32, i32) {
    %c0_i32 = arith.constant 0 : i32
    %c0_i32_0 = arith.constant 0 : i32
    %c0_i32_1 = arith.constant 0 : i32
    %c0_i32_2 = arith.constant 0 : i32
    return %c0_i32, %c0_i32_0, %c0_i32_1 : i32, i32, i32
  }
  func.func @transform_7(%arg0: i32, %arg1: i32) -> (i32, i32) {
    %c0_i32 = arith.constant 0 : i32
    %c0_i32_0 = arith.constant 0 : i32
    %c0_i32_1 = arith.constant 0 : i32
    return %c0_i32, %c0_i32_0 : i32, i32
  }
  func.func @transform_8(%arg0: i32, %arg1: i32) -> (i32, i32) {
    %c0_i32 = arith.constant 0 : i32
    %c0_i32_0 = arith.constant 0 : i32
    %c0_i32_1 = arith.constant 0 : i32
    return %c0_i32, %c0_i32_0 : i32, i32
  }
  func.func @transform_9(%arg0: i32, %arg1: i32) -> (i32, i32) {
    %c0_i32 = arith.constant 0 : i32
    %c0_i32_0 = arith.constant 0 : i32
    %c0_i32_1 = arith.constant 0 : i32
    return %c0_i32, %c0_i32_0 : i32, i32
  }
  func.func @transform_10(%arg0: i32, %arg1: i32) -> (i32, i32) {
    %c0_i32 = arith.constant 0 : i32
    %c0_i32_0 = arith.constant 0 : i32
    return %arg0, %c0_i32 : i32, i32
  }
}

</mosaic_0001>

<llo_original>
// kernel: tile.13
$region0: #{tile.13}
  #allocation0 [shape = 's32[1]{0}', space=sflag, size = 0x4, scoped, tag = 'scoped memory for tile.13']
  %s0 = inlined_call_operand.vmem [shape: f32[32], index: 0, kind: input, shape index: {}]
  %s1 = inlined_call_operand.vmem [shape: f32[28,32], index: 1, kind: output, shape index: {}]
  // Predicated region
  $region2: #{tile.13} parent=0 // pred_check
    _
  $region3: #{tile.13} parent=0 // pred_check_branch
    %3 = sbr.rel (0) target = $region5
  $region4: #{tile.13} parent=0 // pred_region
    _
  $region5: #{tile.13} parent=0 // pred_fallthru
    _
  %v4 = vld [vmem:[%s0] ss:$0 sm:$0xff]
  %5 = vst [vmem:[%s1] sm:$0xff] %v4
  %s6 = scalar_lea.vmem %s1, 8
  %7 = vst [vmem:[%s6] sm:$0xff] %v4
  %s8 = scalar_lea.vmem %s1, 16
  %9 = vst [vmem:[%s8] sm:$0xff] %v4
  %s10 = scalar_lea.vmem %s1, 24
  %11 = vst [vmem:[%s10] sm:$0xff] %v4

// kernel: tile.14
$region0: #{tile.14}
  %s0 = inlined_call_operand.vmem [shape: f32[28,32], index: 0, kind: input, shape index: {}]
  %s1 = inlined_call_operand.vmem [shape: f32[1,896], index: 1, kind: output, shape index: {}]
  $region1: #{tile.14} parent=0
    #allocation0 [shape = 'u8[28672]{0}', space=vmem, size = 0x7000, scoped, tag = 'scoped mem for output reshape']
    %v2 = vld [vmem:[%s0] ss:$4 sm:$0x7f]
    %vm3 = vcmask 261120
    %4 = vst.msk [vmem:[#allocation0] ss:$8 sm:$0xf] %vm3, %v2
    %5 = vst.msk [vmem:[#allocation0] ss:$8 sm:$0x70] %vm3, %v2
    %s6 = scalar_lea.vmem %s0, 3
    %v7 = vld [vmem:[%s6] ss:$4 sm:$0x7f]
    %8 = vrot.lane.b32.xlu0 %v7, 96
    %v9 = vpop.permute.xlu0 %8
    %vm10 = vcmask 1048320
    %11 = vst.msk [vmem:[#allocation0] ss:$8 sm:$0xf] %vm10, %v9
    %12 = vst.msk [vmem:[#allocation0] ss:$8 sm:$0x70] %vm10, %v9
    %s13 = scalar_lea.vmem %s0, 2
    %v14 = vld [vmem:[%s13] ss:$4 sm:$0x7f]
    %15 = vrot.lane.b32.xlu0 %v14, 64
    %v16 = vpop.permute.xlu0 %15
    %vm17 = vcmask 785920
    %18 = vst.msk [vmem:[#allocation0] ss:$8 sm:$0xf] %vm17, %v16
    %19 = vst.msk [vmem:[#allocation0] ss:$8 sm:$0x70] %vm17, %v16
    %s20 = scalar_lea.vmem %s0, 1
    %v21 = vld [vmem:[%s20] ss:$4 sm:$0x7f]
    %22 = vrot.lane.b32.xlu0 %v21, 32
    %v23 = vpop.permute.xlu0 %22
    %vm24 = vcmask 523520
    %25 = vst.msk [vmem:[#allocation0] ss:$8 sm:$0xf] %vm24, %v23
    %26 = vst.msk [vmem:[#allocation0] ss:$8 sm:$0x70] %vm24, %v23
    %s28 = ssub.s32 2, 1
    %v29 = vld [vmem:[#allocation0] sm:%s28]
    %s31 = ssub.s32 2, 1
    %32 = vst [vmem:[%s1] sm:%s31] %v29
    %s33 = scalar_lea.vmem [#allocation0], 8
    %v34 = vld [vmem:[%s33] sm:%s28]
    %s36 = ssub.s32 2, 1
    %s37 = scalar_lea.vmem %s1, 1
    %38 = vst [vmem:[%s37] sm:%s36] %v34
    %s39 = scalar_lea.vmem [#allocation0], 16
    %v40 = vld [vmem:[%s39] sm:%s28]
    %s42 = ssub.s32 2, 1
    %s43 = scalar_lea.vmem %s1, 2
    %44 = vst [vmem:[%s43] sm:%s42] %v40
    %s45 = scalar_lea.vmem [#allocation0], 24
    %v46 = vld [vmem:[%s45] sm:%s28]
    %s48 = ssub.s32 2, 1
    %s49 = scalar_lea.vmem %s1, 3
    %50 = vst [vmem:[%s49] sm:%s48] %v46
    %s51 = scalar_lea.vmem [#allocation0], 32
    %v52 = vld [vmem:[%s51] sm:%s28]
    %s54 = ssub.s32 2, 1
    %s55 = scalar_lea.vmem %s1, 4
    %56 = vst [vmem:[%s55] sm:%s54] %v52
    %s57 = scalar_lea.vmem [#allocation0], 40
    %v58 = vld [vmem:[%s57] sm:%s28]
    %s60 = ssub.s32 2, 1
    %s61 = scalar_lea.vmem %s1, 5
    %62 = vst [vmem:[%s61] sm:%s60] %v58
    %s63 = scalar_lea.vmem [#allocation0], 48
    %v64 = vld [vmem:[%s63] sm:%s28]
    %s66 = ssub.s32 2, 1
    %s67 = scalar_lea.vmem %s1, 6
    %68 = vst [vmem:[%s67] sm:%s66] %v64

// kernel: tile.18
$region0: #{tile.18}
  #allocation0 [shape = 's32[1]{0}', space=sflag, size = 0x4, scoped, tag = 'scoped memory for tile.18']
  %s0 = inlined_call_operand.vmem [shape: f32[32], index: 0, kind: input, shape index: {}]
  %s1 = inlined_call_operand.vmem [shape: f32[14,32], index: 1, kind: output, shape index: {}]
  // Predicated region
  $region2: #{tile.18} parent=0 // pred_check
    _
  $region3: #{tile.18} parent=0 // pred_check_branch
    %3 = sbr.rel (0) target = $region5
  $region4: #{tile.18} parent=0 // pred_region
    _
  $region5: #{tile.18} parent=0 // pred_fallthru
    _
  %v4 = vld [vmem:[%s0] ss:$0 sm:$0xff]
  %5 = vst [vmem:[%s1] sm:$0xff] %v4
  %s6 = scalar_lea.vmem %s1, 8
  %7 = vst [vmem:[%s6] sm:$0xff] %v4

// kernel: tile.19
$region0: #{tile.19}
  %s0 = inlined_call_operand.vmem [shape: f32[14,32], index: 0, kind: input, shape index: {}]
  %s1 = inlined_call_operand.vmem [shape: f32[1,448], index: 1, kind: output, shape index: {}]
  $region1: #{tile.19} parent=0
    #allocation0 [shape = 'u8[16384]{0}', space=vmem, size = 0x4000, scoped, tag = 'scoped mem for output reshape']
    %v2 = vld [vmem:[%s0] ss:$4 sm:$0xf]
    %vm3 = vcmask 261120
    %4 = vst.msk [vmem:[#allocation0] ss:$8 sm:$0xf] %vm3, %v2
    %s5 = scalar_lea.vmem %s0, 3
    %v6 = vld [vmem:[%s5] ss:$4 sm:$0x7]
    %7 = vrot.lane.b32.xlu0 %v6, 96
    %v8 = vpop.permute.xlu0 %7
    %vm9 = vcmask 1048320
    %10 = vst.msk [vmem:[#allocation0] ss:$8 sm:$0x7] %vm9, %v8
    %s11 = scalar_lea.vmem %s0, 2
    %v12 = vld [vmem:[%s11] ss:$4 sm:$0x7]
    %13 = vrot.lane.b32.xlu0 %v12, 64
    %v14 = vpop.permute.xlu0 %13
    %vm15 = vcmask 785920
    %16 = vst.msk [vmem:[#allocation0] ss:$8 sm:$0x7] %vm15, %v14
    %s17 = scalar_lea.vmem %s0, 1
    %v18 = vld [vmem:[%s17] ss:$4 sm:$0xf]
    %19 = vrot.lane.b32.xlu0 %v18, 32
    %v20 = vpop.permute.xlu0 %19
    %vm21 = vcmask 523520
    %22 = vst.msk [vmem:[#allocation0] ss:$8 sm:$0xf] %vm21, %v20
    %s24 = ssub.s32 2, 1
    %v25 = vld [vmem:[#allocation0] sm:%s24]
    %s27 = ssub.s32 2, 1
    %28 = vst [vmem:[%s1] sm:%s27] %v25
    %s29 = scalar_lea.vmem [#allocation0], 8
    %v30 = vld [vmem:[%s29] sm:%s24]
    %s32 = ssub.s32 2, 1
    %s33 = scalar_lea.vmem %s1, 1
    %34 = vst [vmem:[%s33] sm:%s32] %v30
    %s35 = scalar_lea.vmem [#allocation0], 16
    %v36 = vld [vmem:[%s35] sm:%s24]
    %s38 = ssub.s32 2, 1
    %s39 = scalar_lea.vmem %s1, 2
    %40 = vst [vmem:[%s39] sm:%s38] %v36
    %s41 = scalar_lea.vmem [#allocation0], 24
    %v42 = vld [vmem:[%s41] sm:%s24]
    %s44 = ssub.s32 2, 1
    %s45 = scalar_lea.vmem %s1, 3
    %46 = vst [vmem:[%s45] sm:%s44] %v42

// kernel: scnn_forward.1
$region0: #{scnn_forward.1}
  #allocation0 [shape = 'u32[]', space=smem, size = 0x4, offset = 0x4, fixed_abs, tag = 'smem constant byte address 0x4 - core index']
  #allocation1 [shape = 'u32[72,128]{1,0:T(1,128)}', space=vmem, size = 0x9000, scoped, tag = 'internal scratch']
  #allocation2 [shape = 'f32[30,2,28]{2,1,0:T(2,128)}', space=vmem, size = 0x7800, scoped, tag = 'scratch operand']
  #allocation3 [shape = 'f32[28,2,896]{2,1,0:T(2,128)}', space=vmem, size = 0x31000, scoped, tag = 'scratch operand']
  #allocation4 [shape = 'f32[28,2,896]{2,1,0:T(2,128)}', space=vmem, size = 0x31000, scoped, tag = 'scratch operand']
  #allocation5 [shape = 'f32[16,2,896]{2,1,0:T(2,128)}', space=vmem, size = 0x1c000, scoped, tag = 'scratch operand']
  #allocation6 [shape = 'f32[14,2,448]{2,1,0:T(2,128)}', space=vmem, size = 0xe000, scoped, tag = 'scratch operand']
  #allocation7 [shape = 'f32[14,2,448]{2,1,0:T(2,128)}', space=vmem, size = 0xe000, scoped, tag = 'scratch operand']
  #allocation8 [shape = 'f32[2,128]{1,0:T(2,128)}', space=vmem, size = 0x400, scoped, tag = 'scratch operand']
  #allocation9 [shape = 'f32[2,128]{1,0:T(2,128)}', space=vmem, size = 0x400, scoped, tag = 'scratch operand']
  #allocation10 [shape = 'f32[2,128]{1,0:T(2,128)}', space=vmem, size = 0x400, scoped, tag = 'scratch operand']
  #allocation11 [shape = 'f32[2,128]{1,0:T(2,128)}', space=vmem, size = 0x400, scoped, tag = 'scratch operand']
  #allocation12 [shape = 'f32[2,128]{1,0:T(2,128)}', space=vmem, size = 0x400, scoped, tag = 'scratch operand']
  %s0 = inlined_call_operand.vmem [shape: f32[28,2,28], index: 0, kind: input, shape index: {}]
  %s1 = inlined_call_operand.vmem [shape: f32[20,28,2,28], index: 1, kind: input, shape index: {}]
  %s2 = inlined_call_operand.vmem [shape: f32[3,28,896], index: 2, kind: input, shape index: {}]
  %s3 = inlined_call_operand.vmem [shape: f32[1,896], index: 3, kind: input, shape index: {}]
  %s4 = inlined_call_operand.vmem [shape: f32[3,896,448], index: 4, kind: input, shape index: {}]
  %s5 = inlined_call_operand.vmem [shape: f32[1,448], index: 5, kind: input, shape index: {}]
  %s6 = inlined_call_operand.vmem [shape: f32[14,448,128], index: 6, kind: input, shape index: {}]
  %s7 = inlined_call_operand.vmem [shape: f32[1,128], index: 7, kind: input, shape index: {}]
  %s8 = inlined_call_operand.vmem [shape: f32[128,128], index: 8, kind: input, shape index: {}]
  %s9 = inlined_call_operand.vmem [shape: f32[1,128], index: 9, kind: input, shape index: {}]
  %s10 = inlined_call_operand.hbm [shape: f32[2,128], index: 10, kind: output, shape index: {}]
  %s11 = sld [smem:[#allocation0]]
  $region95: #{scnn_forward.1} parent=0
    _
  %s13 = ssub.s32 1, %s11
  %s14 = scalar_select 0, %s13, %s11
  $region1: #{scnn_forward.1} parent=0
    #allocation13 [shape = 'u8[1024]{0}', space=vmem, size = 0x400, scoped, tag = 'output window, operand 0, single buffered']
    #allocation14 [shape = 's32[2]{0}', space=sflag, size = 0x8, scoped, tag = 'scoped memory for scnn_forward.1']
    %15 = vsyncpa [#allocation14], 0
    loop: start=0, step=1, limit=22
    $region2: #{scnn_forward.1} parent=1 // loop_pre_header
      _
    $region3: #{scnn_forward.1} parent=1 // loop_header
      %s17 = sphi 0, %s21
      %p18 = scmp.ge.s32.totalorder %s17, 22
      %s24 = sphi 0, %s36
      %s25 = sphi 0, %s32
      %s26 = sphi 0, %s24
      %s27 = sphi 0, %s25
      %s28 = sphi 0, %s26
      %s29 = sphi 0, %s27
      %s39 = sphi 0, %s41
      %s42 = sphi 0, %s39
      %s43 = sphi 0, %s42
      %s59 = sphi 0, %s43
      %s67 = sphi 0, %s69
      %s70 = sphi 0, %s67
      %s71 = sphi 0, %s70
      %s87 = sphi 0, %s71
      %s91 = sphi 0, %s91
      %s93 = sphi 0, %s91
      %s94 = sphi 0, %s93
      %s108 = sphi 0, %s94
      %s112 = sphi 0, %s112
      %s114 = sphi 0, %s112
      %s115 = sphi 0, %s114
      %s129 = sphi 0, %s115
      %s133 = sphi 0, %s133
      %s135 = sphi 0, %s133
      %s136 = sphi 0, %s135
      %s150 = sphi 0, %s136
      %s154 = sphi 0, %s154
      %s156 = sphi 0, %s154
      %s157 = sphi 0, %s156
      %s171 = sphi 0, %s157
      %s175 = sphi 0, %s175
      %s177 = sphi 0, %s175
      %s178 = sphi 0, %s177
      %s192 = sphi 0, %s178
      %s196 = sphi 0, %s196
      %s198 = sphi 0, %s196
      %s199 = sphi 0, %s198
      %s213 = sphi 0, %s199
      %s217 = sphi 0, %s217
      %s219 = sphi 0, %s217
      %s220 = sphi 0, %s219
      %s234 = sphi 0, %s220
      %s238 = sphi 0, %s238
      %s240 = sphi 0, %s238
      %s241 = sphi 0, %s240
      %s255 = sphi 0, %s241
      %s261 = sphi 0, %s263
      %s264 = sphi 0, %s261
      %s265 = sphi 0, %s264
      %s281 = sphi 0, %s265
    $region4: #{scnn_forward.1} parent=1 // loop_header_branch
      %20 = sbr.rel (%p18) target = $region8
    $region5: #{scnn_forward.1} parent=1 // loop_body
      %s22 = ssub.s32 %s17, 1
      %s23 = ssub.s32 %s17, 2
      %s30 = sadd.s32 1, %s25
      %p31 = scmp.ge.s32.totalorder %s30, 20
      %s32 = scalar_select %p31, 0, %s30
      %s33 = sadd.s32 1, %s24
      %s34 = scalar_select %p31, %s33, %s24
      %p35 = scmp.ge.s32.totalorder %s34, 1
      %s36 = scalar_select %p35, 0, %s34
      %s37 = ssub.s32 %s24, %s36
      %p38 = scmp.eq.s32.totalorder %s37, 0
      %s40 = sadd.s32 %s39, 1
      %s41 = scalar_select %p38, %s39, %s40
      %p44 = pneg %p38
      %p45 = scmp.eq.s32.totalorder %s17, 19
      %p46 = por %p44, %p45
      %p47 = scmp.ne.s32.totalorder %s39, %s42
      %p48 = scmp.eq.s32.totalorder %s17, 0
      %p49 = por %p47, %p48
      %p50 = scmp.ne.s32.totalorder %s39, %s42
      %p51 = scmp.eq.s32.totalorder %s22, 19
      %p52 = por %p50, %p51
      %p53 = scmp.ne.s32.totalorder %s42, %s43
      %p54 = scmp.eq.s32.totalorder %s22, 0
      %p55 = por %p53, %p54
      %p56 = scmp.ne.s32.totalorder %s42, %s43
      %p57 = scmp.eq.s32.totalorder %s23, 19
      %p58 = por %p56, %p57
      %p60 = scmp.ne.s32.totalorder %s43, %s59
      %p61 = scmp.eq.s32.totalorder %s23, 0
      %p62 = por %p60, %p61
      %s63 = ssub.s32 %s25, %s32
      %s64 = ssub.s32 %s24, %s36
      %s65 = sor.u32 %s63, %s64
      %p66 = scmp.eq.s32.totalorder %s65, 0
      %s68 = sadd.s32 %s67, 1
      %s69 = scalar_select %p66, %s67, %s68
      %p72 = pneg %p66
      %p73 = scmp.eq.s32.totalorder %s17, 19
      %p74 = por %p72, %p73
      %p75 = scmp.ne.s32.totalorder %s67, %s70
      %p76 = scmp.eq.s32.totalorder %s17, 0
      %p77 = por %p75, %p76
      %p78 = scmp.ne.s32.totalorder %s67, %s70
      %p79 = scmp.eq.s32.totalorder %s22, 19
      %p80 = por %p78, %p79
      %p81 = scmp.ne.s32.totalorder %s70, %s71
      %p82 = scmp.eq.s32.totalorder %s22, 0
      %p83 = por %p81, %p82
      %p84 = scmp.ne.s32.totalorder %s70, %s71
      %p85 = scmp.eq.s32.totalorder %s23, 19
      %p86 = por %p84, %p85
      %p88 = scmp.ne.s32.totalorder %s71, %s87
      %p89 = scmp.eq.s32.totalorder %s23, 0
      %p90 = por %p88, %p89
      %s92 = sadd.s32 %s91, 1
      %p95 = scmp.eq.s32.totalorder %s17, 19
      %p96 = scmp.ne.s32.totalorder %s91, %s93
      %p97 = scmp.eq.s32.totalorder %s17, 0
      %p98 = por %p96, %p97
      %p99 = scmp.ne.s32.totalorder %s91, %s93
      %p100 = scmp.eq.s32.totalorder %s22, 19
      %p101 = por %p99, %p100
      %p102 = scmp.ne.s32.totalorder %s93, %s94
      %p103 = scmp.eq.s32.totalorder %s22, 0
      %p104 = por %p102, %p103
      %p105 = scmp.ne.s32.totalorder %s93, %s94
      %p106 = scmp.eq.s32.totalorder %s23, 19
      %p107 = por %p105, %p106
      %p109 = scmp.ne.s32.totalorder %s94, %s108
      %p110 = scmp.eq.s32.totalorder %s23, 0
      %p111 = por %p109, %p110
      %s113 = sadd.s32 %s112, 1
      %p116 = scmp.eq.s32.totalorder %s17, 19
      %p117 = scmp.ne.s32.totalorder %s112, %s114
      %p118 = scmp.eq.s32.totalorder %s17, 0
      %p119 = por %p117, %p118
      %p120 = scmp.ne.s32.totalorder %s112, %s114
      %p121 = scmp.eq.s32.totalorder %s22, 19
      %p122 = por %p120, %p121
      %p123 = scmp.ne.s32.totalorder %s114, %s115
      %p124 = scmp.eq.s32.totalorder %s22, 0
      %p125 = por %p123, %p124
      %p126 = scmp.ne.s32.totalorder %s114, %s115
      %p127 = scmp.eq.s32.totalorder %s23, 19
      %p128 = por %p126, %p127
      %p130 = scmp.ne.s32.totalorder %s115, %s129
      %p131 = scmp.eq.s32.totalorder %s23, 0
      %p132 = por %p130, %p131
      %s134 = sadd.s32 %s133, 1
      %p137 = scmp.eq.s32.totalorder %s17, 19
      %p138 = scmp.ne.s32.totalorder %s133, %s135
      %p139 = scmp.eq.s32.totalorder %s17, 0
      %p140 = por %p138, %p139
      %p141 = scmp.ne.s32.totalorder %s133, %s135
      %p142 = scmp.eq.s32.totalorder %s22, 19
      %p143 = por %p141, %p142
      %p144 = scmp.ne.s32.totalorder %s135, %s136
      %p145 = scmp.eq.s32.totalorder %s22, 0
      %p146 = por %p144, %p145
      %p147 = scmp.ne.s32.totalorder %s135, %s136
      %p148 = scmp.eq.s32.totalorder %s23, 19
      %p149 = por %p147, %p148
      %p151 = scmp.ne.s32.totalorder %s136, %s150
      %p152 = scmp.eq.s32.totalorder %s23, 0
      %p153 = por %p151, %p152
      %s155 = sadd.s32 %s154, 1
      %p158 = scmp.eq.s32.totalorder %s17, 19
      %p159 = scmp.ne.s32.totalorder %s154, %s156
      %p160 = scmp.eq.s32.totalorder %s17, 0
      %p161 = por %p159, %p160
      %p162 = scmp.ne.s32.totalorder %s154, %s156
      %p163 = scmp.eq.s32.totalorder %s22, 19
      %p164 = por %p162, %p163
      %p165 = scmp.ne.s32.totalorder %s156, %s157
      %p166 = scmp.eq.s32.totalorder %s22, 0
      %p167 = por %p165, %p166
      %p168 = scmp.ne.s32.totalorder %s156, %s157
      %p169 = scmp.eq.s32.totalorder %s23, 19
      %p170 = por %p168, %p169
      %p172 = scmp.ne.s32.totalorder %s157, %s171
      %p173 = scmp.eq.s32.totalorder %s23, 0
      %p174 = por %p172, %p173
      %s176 = sadd.s32 %s175, 1
      %p179 = scmp.eq.s32.totalorder %s17, 19
      %p180 = scmp.ne.s32.totalorder %s175, %s177
      %p181 = scmp.eq.s32.totalorder %s17, 0
      %p182 = por %p180, %p181
      %p183 = scmp.ne.s32.totalorder %s175, %s177
      %p184 = scmp.eq.s32.totalorder %s22, 19
      %p185 = por %p183, %p184
      %p186 = scmp.ne.s32.totalorder %s177, %s178
      %p187 = scmp.eq.s32.totalorder %s22, 0
      %p188 = por %p186, %p187
      %p189 = scmp.ne.s32.totalorder %s177, %s178
      %p190 = scmp.eq.s32.totalorder %s23, 19
      %p191 = por %p189, %p190
      %p193 = scmp.ne.s32.totalorder %s178, %s192
      %p194 = scmp.eq.s32.totalorder %s23, 0
      %p195 = por %p193, %p194
      %s197 = sadd.s32 %s196, 1
      %p200 = scmp.eq.s32.totalorder %s17, 19
      %p201 = scmp.ne.s32.totalorder %s196, %s198
      %p202 = scmp.eq.s32.totalorder %s17, 0
      %p203 = por %p201, %p202
      %p204 = scmp.ne.s32.totalorder %s196, %s198
      %p205 = scmp.eq.s32.totalorder %s22, 19
      %p206 = por %p204, %p205
      %p207 = scmp.ne.s32.totalorder %s198, %s199
      %p208 = scmp.eq.s32.totalorder %s22, 0
      %p209 = por %p207, %p208
      %p210 = scmp.ne.s32.totalorder %s198, %s199
      %p211 = scmp.eq.s32.totalorder %s23, 19
      %p212 = por %p210, %p211
      %p214 = scmp.ne.s32.totalorder %s199, %s213
      %p215 = scmp.eq.s32.totalorder %s23, 0
      %p216 = por %p214, %p215
      %s218 = sadd.s32 %s217, 1
      %p221 = scmp.eq.s32.totalorder %s17, 19
      %p222 = scmp.ne.s32.totalorder %s217, %s219
      %p223 = scmp.eq.s32.totalorder %s17, 0
      %p224 = por %p222, %p223
      %p225 = scmp.ne.s32.totalorder %s217, %s219
      %p226 = scmp.eq.s32.totalorder %s22, 19
      %p227 = por %p225, %p226
      %p228 = scmp.ne.s32.totalorder %s219, %s220
      %p229 = scmp.eq.s32.totalorder %s22, 0
      %p230 = por %p228, %p229
      %p231 = scmp.ne.s32.totalorder %s219, %s220
      %p232 = scmp.eq.s32.totalorder %s23, 19
      %p233 = por %p231, %p232
      %p235 = scmp.ne.s32.totalorder %s220, %s234
      %p236 = scmp.eq.s32.totalorder %s23, 0
      %p237 = por %p235, %p236
      %s239 = sadd.s32 %s238, 1
      %p242 = scmp.eq.s32.totalorder %s17, 19
      %p243 = scmp.ne.s32.totalorder %s238, %s240
      %p244 = scmp.eq.s32.totalorder %s17, 0
      %p245 = por %p243, %p244
      %p246 = scmp.ne.s32.totalorder %s238, %s240
      %p247 = scmp.eq.s32.totalorder %s22, 19
      %p248 = por %p246, %p247
      %p249 = scmp.ne.s32.totalorder %s240, %s241
      %p250 = scmp.eq.s32.totalorder %s22, 0
      %p251 = por %p249, %p250
      %p252 = scmp.ne.s32.totalorder %s240, %s241
      %p253 = scmp.eq.s32.totalorder %s23, 19
      %p254 = por %p252, %p253
      %p256 = scmp.ne.s32.totalorder %s241, %s255
      %p257 = scmp.eq.s32.totalorder %s23, 0
      %p258 = por %p256, %p257
      %s259 = ssub.s32 %s24, %s36
      %p260 = scmp.eq.s32.totalorder %s259, 0
      %s262 = sadd.s32 %s261, 1
      %s263 = scalar_select %p260, %s261, %s262
      %p266 = pneg %p260
      %p267 = scmp.eq.s32.totalorder %s17, 19
      %p268 = por %p266, %p267
      %p269 = scmp.ne.s32.totalorder %s261, %s264
      %p270 = scmp.eq.s32.totalorder %s17, 0
      %p271 = por %p269, %p270
      %p272 = scmp.ne.s32.totalorder %s261, %s264
      %p273 = scmp.eq.s32.totalorder %s22, 19
      %p274 = por %p272, %p273
      %p275 = scmp.ne.s32.totalorder %s264, %s265
      %p276 = scmp.eq.s32.totalorder %s22, 0
      %p277 = por %p275, %p276
      %p278 = scmp.ne.s32.totalorder %s264, %s265
      %p279 = scmp.eq.s32.totalorder %s23, 19
      %p280 = por %p278, %p279
      %p282 = scmp.ne.s32.totalorder %s265, %s281
      %p283 = scmp.eq.s32.totalorder %s23, 0
      %p284 = por %p282, %p283
      %p285 = scmp.le.s32.totalorder 1, %s17
      %p286 = scmp.lt.s32.totalorder %s17, 21
      %p287 = pnand %p285, %p286
      %p288 = pneg %p287
      // Predicated region
      $region9: #{scnn_forward.1} parent=5 // pred_check
        _
      $region10: #{scnn_forward.1} parent=5 // pred_check_branch
        %290 = sbr.rel (%p287) target = $region12
      $region11: #{scnn_forward.1} parent=5 // pred_region
        %s291 = ssub.s32 %s17, 1
        // Predicated region
        $region13: #{scnn_forward.1} parent=11 // pred_check
          %p292 = pneg %p55
        $region14: #{scnn_forward.1} parent=11 // pred_check_branch
          %294 = sbr.rel (%p292) target = $region16
        $region15: #{scnn_forward.1} parent=11 // pred_region
          %p295 = scmp.lt.s32.totalorder %s26, 0
          %s296 = scalar_select %p295, %s26, 0
          %s297 = smul.addr %s296, 2
          %s298 = scalar_lea.vmem %s0, %s297
        $region16: #{scnn_forward.1} parent=11 // pred_fallthru
          _
        // Predicated region
        $region17: #{scnn_forward.1} parent=11 // pred_check
          %p299 = pneg %p104
        $region18: #{scnn_forward.1} parent=11 // pred_check_branch
          %301 = sbr.rel (%p299) target = $region20
        $region19: #{scnn_forward.1} parent=11 // pred_region
          _
        $region20: #{scnn_forward.1} parent=11 // pred_fallthru
          _
        // Predicated region
        $region21: #{scnn_forward.1} parent=11 // pred_check
          %p302 = pneg %p125
        $region22: #{scnn_forward.1} parent=11 // pred_check_branch
          %304 = sbr.rel (%p302) target = $region24
        $region23: #{scnn_forward.1} parent=11 // pred_region
          _
        $region24: #{scnn_forward.1} parent=11 // pred_fallthru
          _
        // Predicated region
        $region25: #{scnn_forward.1} parent=11 // pred_check
          %p305 = pneg %p146
        $region26: #{scnn_forward.1} parent=11 // pred_check_branch
          %307 = sbr.rel (%p305) target = $region28
        $region27: #{scnn_forward.1} parent=11 // pred_region
          _
        $region28: #{scnn_forward.1} parent=11 // pred_fallthru
          _
        // Predicated region
        $region29: #{scnn_forward.1} parent=11 // pred_check
          %p308 = pneg %p167
        $region30: #{scnn_forward.1} parent=11 // pred_check_branch
          %310 = sbr.rel (%p308) target = $region32
        $region31: #{scnn_forward.1} parent=11 // pred_region
          _
        $region32: #{scnn_forward.1} parent=11 // pred_fallthru
          _
        // Predicated region
        $region33: #{scnn_forward.1} parent=11 // pred_check
          %p311 = pneg %p188
        $region34: #{scnn_forward.1} parent=11 // pred_check_branch
          %313 = sbr.rel (%p311) target = $region36
        $region35: #{scnn_forward.1} parent=11 // pred_region
          _
        $region36: #{scnn_forward.1} parent=11 // pred_fallthru
          _
        // Predicated region
        $region37: #{scnn_forward.1} parent=11 // pred_check
          %p314 = pneg %p209
        $region38: #{scnn_forward.1} parent=11 // pred_check_branch
          %316 = sbr.rel (%p314) target = $region40
        $region39: #{scnn_forward.1} parent=11 // pred_region
          _
        $region40: #{scnn_forward.1} parent=11 // pred_fallthru
          _
        // Predicated region
        $region41: #{scnn_forward.1} parent=11 // pred_check
          %p317 = pneg %p230
        $region42: #{scnn_forward.1} parent=11 // pred_check_branch
          %319 = sbr.rel (%p317) target = $region44
        $region43: #{scnn_forward.1} parent=11 // pred_region
          _
        $region44: #{scnn_forward.1} parent=11 // pred_fallthru
          _
        // Predicated region
        $region45: #{scnn_forward.1} parent=11 // pred_check
          %p320 = pneg %p251
        $region46: #{scnn_forward.1} parent=11 // pred_check_branch
          %322 = sbr.rel (%p320) target = $region48
        $region47: #{scnn_forward.1} parent=11 // pred_region
          _
        $region48: #{scnn_forward.1} parent=11 // pred_fallthru
          _
      $region12: #{scnn_forward.1} parent=5 // pred_fallthru
        _
      %p323 = scmp.lt.s32.totalorder %s17, 20
      // Predicated region
      $region49: #{scnn_forward.1} parent=5 // pred_check
        %p324 = pneg %p323
      $region50: #{scnn_forward.1} parent=5 // pred_check_branch
        %326 = sbr.rel (%p324) target = $region52
      $region51: #{scnn_forward.1} parent=5 // pred_region
        // Predicated region
        $region53: #{scnn_forward.1} parent=51 // pred_check
          %p327 = pneg %p77
        $region54: #{scnn_forward.1} parent=51 // pred_check_branch
          %329 = sbr.rel (%p327) target = $region56
        $region55: #{scnn_forward.1} parent=51 // pred_region
          %p330 = scmp.lt.s32.totalorder %s25, 19
          %s331 = scalar_select %p330, %s25, 19
          %p332 = scmp.lt.s32.totalorder %s24, 0
          %s333 = scalar_select %p332, %s24, 0
          %s334 = smul.addr %s331, 28
          %s335 = sadd.s32 %s333, %s334
          %s336 = smul.addr %s335, 2
          %s337 = scalar_lea.vmem %s1, %s336
        $region56: #{scnn_forward.1} parent=51 // pred_fallthru
          _
      $region52: #{scnn_forward.1} parent=5 // pred_fallthru
        _
      %p338 = scmp.le.s32.totalorder 1, %s17
      %p339 = scmp.lt.s32.totalorder %s17, 21
      %p340 = pnand %p338, %p339
      %p341 = pneg %p340
      // Predicated region
      $region57: #{scnn_forward.1} parent=5 // pred_check
        _
      $region58: #{scnn_forward.1} parent=5 // pred_check_branch
        %343 = sbr.rel (%p340) target = $region60
      $region59: #{scnn_forward.1} parent=5 // pred_region
        %s344 = ssub.s32 %s17, 1
        %p345 = scmp.lt.s32.totalorder %s26, 0
        %s346 = scalar_select %p345, %s26, 0
        %s347 = smul.addr %s346, 2
        %s348 = scalar_lea.vmem %s0, %s347
        %p349 = pneg %p55
        %p350 = pneg %p52
        %p351 = scmp.lt.s32.totalorder %s27, 19
        %s352 = scalar_select %p351, %s27, 19
        %p353 = scmp.lt.s32.totalorder %s26, 0
        %s354 = scalar_select %p353, %s26, 0
        %s355 = smul.addr %s352, 28
        %s356 = sadd.s32 %s354, %s355
        %s357 = smul.addr %s356, 2
        %s358 = scalar_lea.vmem %s1, %s357
        %p359 = pneg %p83
        %p360 = pneg %p80
        %p361 = pneg %p104
        %p362 = pneg %p101
        %p363 = pneg %p125
        %p364 = pneg %p122
        %p365 = pneg %p146
        %p366 = pneg %p143
        %p367 = pneg %p167
        %p368 = pneg %p164
        %p369 = pneg %p188
        %p370 = pneg %p185
        %p371 = pneg %p209
        %p372 = pneg %p206
        %p373 = pneg %p230
        %p374 = pneg %p227
        %p375 = pneg %p251
        %p376 = pneg %p248
        %p377 = pneg %p277
        %p378 = pneg %p274
        %p379 = scmp.lt.s32.totalorder %s26, 0
        %s380 = scalar_select %p379, %s26, 0
        %s381 = smul.addr %s380, 2
        %s382 = scalar_lea.vmem %s0, %s381
        %p383 = scmp.lt.s32.totalorder %s27, 19
        %s384 = scalar_select %p383, %s27, 19
        %p385 = scmp.lt.s32.totalorder %s26, 0
        %s386 = scalar_select %p385, %s26, 0
        %s387 = smul.addr %s384, 28
        %s388 = sadd.s32 %s386, %s387
        %s389 = smul.addr %s388, 2
        %s390 = scalar_lea.vmem %s1, %s389
        %p391 = scmp.eq.s32.totalorder %s27, 0
        // Predicated region
        $region61: #{scnn_forward.1} parent=59 // pred_check
          %p392 = pneg %p391
        $region62: #{scnn_forward.1} parent=59 // pred_check_branch
          %394 = sbr.rel (%p392) target = $region64
        $region63: #{scnn_forward.1} parent=59 // pred_region
          %vm395 = vcmask 222208
          %396 = vst.msk [vmem:[#allocation2] sm:$0x3] %vm395, 0.0
          %397 = vst.msk [vmem:[#allocation2 + $0x2] sm:$0x3] %vm395, 0.0
          %398 = vst.msk [vmem:[#allocation2 + $0x4] sm:$0x3] %vm395, 0.0
          %399 = vst.msk [vmem:[#allocation2 + $0x6] sm:$0x3] %vm395, 0.0
          %400 = vst.msk [vmem:[#allocation2 + $0x8] sm:$0x3] %vm395, 0.0
          %401 = vst.msk [vmem:[#allocation2 + $0xa] sm:$0x3] %vm395, 0.0
          %402 = vst.msk [vmem:[#allocation2 + $0xc] sm:$0x3] %vm395, 0.0
          %403 = vst.msk [vmem:[#allocation2 + $0xe] sm:$0x3] %vm395, 0.0
          %404 = vst.msk [vmem:[#allocation2 + $0x10] sm:$0x3] %vm395, 0.0
          %405 = vst.msk [vmem:[#allocation2 + $0x12] sm:$0x3] %vm395, 0.0
          %406 = vst.msk [vmem:[#allocation2 + $0x14] sm:$0x3] %vm395, 0.0
          %407 = vst.msk [vmem:[#allocation2 + $0x16] sm:$0x3] %vm395, 0.0
          %408 = vst.msk [vmem:[#allocation2 + $0x18] sm:$0x3] %vm395, 0.0
          %409 = vst.msk [vmem:[#allocation2 + $0x1a] sm:$0x3] %vm395, 0.0
          %410 = vst.msk [vmem:[#allocation2 + $0x1c] sm:$0x3] %vm395, 0.0
          %411 = vst.msk [vmem:[#allocation2 + $0x1e] sm:$0x3] %vm395, 0.0
          %412 = vst.msk [vmem:[#allocation2 + $0x20] sm:$0x3] %vm395, 0.0
          %413 = vst.msk [vmem:[#allocation2 + $0x22] sm:$0x3] %vm395, 0.0
          %414 = vst.msk [vmem:[#allocation2 + $0x24] sm:$0x3] %vm395, 0.0
          %415 = vst.msk [vmem:[#allocation2 + $0x26] sm:$0x3] %vm395, 0.0
          %416 = vst.msk [vmem:[#allocation2 + $0x28] sm:$0x3] %vm395, 0.0
          %417 = vst.msk [vmem:[#allocation2 + $0x2a] sm:$0x3] %vm395, 0.0
          %418 = vst.msk [vmem:[#allocation2 + $0x2c] sm:$0x3] %vm395, 0.0
          %419 = vst.msk [vmem:[#allocation2 + $0x2e] sm:$0x3] %vm395, 0.0
          %420 = vst.msk [vmem:[#allocation2 + $0x30] sm:$0x3] %vm395, 0.0
          %421 = vst.msk [vmem:[#allocation2 + $0x32] sm:$0x3] %vm395, 0.0
          %422 = vst.msk [vmem:[#allocation2 + $0x34] sm:$0x3] %vm395, 0.0
          %423 = vst.msk [vmem:[#allocation2 + $0x36] sm:$0x3] %vm395, 0.0
          %424 = vst.msk [vmem:[#allocation2 + $0x38] sm:$0x3] %vm395, 0.0
          %425 = vst.msk [vmem:[#allocation2 + $0x3a] sm:$0x3] %vm395, 0.0
          %426 = vst [vmem:[#allocation5] sm:$0xff] 0.0
          %427 = vst [vmem:[#allocation5 + $0x8] sm:$0x3f] 0.0
          %428 = vst [vmem:[#allocation5 + $0xe] sm:$0xff] 0.0
          %429 = vst [vmem:[#allocation5 + $0x16] sm:$0x3f] 0.0
          %430 = vst [vmem:[#allocation5 + $0x1c] sm:$0xff] 0.0
          %431 = vst [vmem:[#allocation5 + $0x24] sm:$0x3f] 0.0
          %432 = vst [vmem:[#allocation5 + $0x2a] sm:$0xff] 0.0
          %433 = vst [vmem:[#allocation5 + $0x32] sm:$0x3f] 0.0
          %434 = vst [vmem:[#allocation5 + $0x38] sm:$0xff] 0.0
          %435 = vst [vmem:[#allocation5 + $0x40] sm:$0x3f] 0.0
          %436 = vst [vmem:[#allocation5 + $0x46] sm:$0xff] 0.0
          %437 = vst [vmem:[#allocation5 + $0x4e] sm:$0x3f] 0.0
          %438 = vst [vmem:[#allocation5 + $0x54] sm:$0xff] 0.0
          %439 = vst [vmem:[#allocation5 + $0x5c] sm:$0x3f] 0.0
          %440 = vst [vmem:[#allocation5 + $0x62] sm:$0xff] 0.0
          %441 = vst [vmem:[#allocation5 + $0x6a] sm:$0x3f] 0.0
          %442 = vst [vmem:[#allocation5 + $0x70] sm:$0xff] 0.0
          %443 = vst [vmem:[#allocation5 + $0x78] sm:$0x3f] 0.0
          %444 = vst [vmem:[#allocation5 + $0x7e] sm:$0xff] 0.0
          %445 = vst [vmem:[#allocation5 + $0x86] sm:$0x3f] 0.0
          %446 = vst [vmem:[#allocation5 + $0x8c] sm:$0xff] 0.0
          %447 = vst [vmem:[#allocation5 + $0x94] sm:$0x3f] 0.0
          %448 = vst [vmem:[#allocation5 + $0x9a] sm:$0xff] 0.0
          %449 = vst [vmem:[#allocation5 + $0xa2] sm:$0x3f] 0.0
          %450 = vst [vmem:[#allocation5 + $0xa8] sm:$0xff] 0.0
          %451 = vst [vmem:[#allocation5 + $0xb0] sm:$0x3f] 0.0
          %452 = vst [vmem:[#allocation5 + $0xb6] sm:$0xff] 0.0
          %453 = vst [vmem:[#allocation5 + $0xbe] sm:$0x3f] 0.0
          %454 = vst [vmem:[#allocation5 + $0xc4] sm:$0xff] 0.0
          %455 = vst [vmem:[#allocation5 + $0xcc] sm:$0x3f] 0.0
          %456 = vst [vmem:[#allocation5 + $0xd2] sm:$0xff] 0.0
          %457 = vst [vmem:[#allocation5 + $0xda] sm:$0x3f] 0.0
          %458 = vst [vmem:[#allocation3] sm:$0xff] 0.0
          %459 = vst [vmem:[#allocation3 + $0x8] sm:$0x3f] 0.0
          %460 = vst [vmem:[#allocation3 + $0xe] sm:$0xff] 0.0
          %461 = vst [vmem:[#allocation3 + $0x16] sm:$0x3f] 0.0
          %462 = vst [vmem:[#allocation3 + $0x1c] sm:$0xff] 0.0
          %463 = vst [vmem:[#allocation3 + $0x24] sm:$0x3f] 0.0
          %464 = vst [vmem:[#allocation3 + $0x2a] sm:$0xff] 0.0
          %465 = vst [vmem:[#allocation3 + $0x32] sm:$0x3f] 0.0
          %466 = vst [vmem:[#allocation3 + $0x38] sm:$0xff] 0.0
          %467 = vst [vmem:[#allocation3 + $0x40] sm:$0x3f] 0.0
          %468 = vst [vmem:[#allocation3 + $0x46] sm:$0xff] 0.0
          %469 = vst [vmem:[#allocation3 + $0x4e] sm:$0x3f] 0.0
          %470 = vst [vmem:[#allocation3 + $0x54] sm:$0xff] 0.0
          %471 = vst [vmem:[#allocation3 + $0x5c] sm:$0x3f] 0.0
          %472 = vst [vmem:[#allocation3 + $0x62] sm:$0xff] 0.0
          %473 = vst [vmem:[#allocation3 + $0x6a] sm:$0x3f] 0.0
          %474 = vst [vmem:[#allocation3 + $0x70] sm:$0xff] 0.0
          %475 = vst [vmem:[#allocation3 + $0x78] sm:$0x3f] 0.0
          %476 = vst [vmem:[#allocation3 + $0x7e] sm:$0xff] 0.0
          %477 = vst [vmem:[#allocation3 + $0x86] sm:$0x3f] 0.0
          %478 = vst [vmem:[#allocation3 + $0x8c] sm:$0xff] 0.0
          %479 = vst [vmem:[#allocation3 + $0x94] sm:$0x3f] 0.0
          %480 = vst [vmem:[#allocation3 + $0x9a] sm:$0xff] 0.0
          %481 = vst [vmem:[#allocation3 + $0xa2] sm:$0x3f] 0.0
          %482 = vst [vmem:[#allocation3 + $0xa8] sm:$0xff] 0.0
          %483 = vst [vmem:[#allocation3 + $0xb0] sm:$0x3f] 0.0
          %484 = vst [vmem:[#allocation3 + $0xb6] sm:$0xff] 0.0
          %485 = vst [vmem:[#allocation3 + $0xbe] sm:$0x3f] 0.0
          %486 = vst [vmem:[#allocation3 + $0xc4] sm:$0xff] 0.0
          %487 = vst [vmem:[#allocation3 + $0xcc] sm:$0x3f] 0.0
          %488 = vst [vmem:[#allocation3 + $0xd2] sm:$0xff] 0.0
          %489 = vst [vmem:[#allocation3 + $0xda] sm:$0x3f] 0.0
          %490 = vst [vmem:[#allocation3 + $0xe0] sm:$0xff] 0.0
          %491 = vst [vmem:[#allocation3 + $0xe8] sm:$0x3f] 0.0
          %492 = vst [vmem:[#allocation3 + $0xee] sm:$0xff] 0.0
          %493 = vst [vmem:[#allocation3 + $0xf6] sm:$0x3f] 0.0
          %494 = vst [vmem:[#allocation3 + $0xfc] sm:$0xff] 0.0
          %495 = vst [vmem:[#allocation3 + $0x104] sm:$0x3f] 0.0
          %496 = vst [vmem:[#allocation3 + $0x10a] sm:$0xff] 0.0
          %497 = vst [vmem:[#allocation3 + $0x112] sm:$0x3f] 0.0
          %498 = vst [vmem:[#allocation3 + $0x118] sm:$0xff] 0.0
          %499 = vst [vmem:[#allocation3 + $0x120] sm:$0x3f] 0.0
          %500 = vst [vmem:[#allocation3 + $0x126] sm:$0xff] 0.0
          %501 = vst [vmem:[#allocation3 + $0x12e] sm:$0x3f] 0.0
          %502 = vst [vmem:[#allocation3 + $0x134] sm:$0xff] 0.0
          %503 = vst [vmem:[#allocation3 + $0x13c] sm:$0x3f] 0.0
          %504 = vst [vmem:[#allocation3 + $0x142] sm:$0xff] 0.0
          %505 = vst [vmem:[#allocation3 + $0x14a] sm:$0x3f] 0.0
          %506 = vst [vmem:[#allocation3 + $0x150] sm:$0xff] 0.0
          %507 = vst [vmem:[#allocation3 + $0x158] sm:$0x3f] 0.0
          %508 = vst [vmem:[#allocation3 + $0x15e] sm:$0xff] 0.0
          %509 = vst [vmem:[#allocation3 + $0x166] sm:$0x3f] 0.0
          %510 = vst [vmem:[#allocation3 + $0x16c] sm:$0xff] 0.0
          %511 = vst [vmem:[#allocation3 + $0x174] sm:$0x3f] 0.0
          %512 = vst [vmem:[#allocation3 + $0x17a] sm:$0xff] 0.0
          %513 = vst [vmem:[#allocation3 + $0x182] sm:$0x3f] 0.0
          %514 = vst [vmem:[#allocation4] sm:$0xff] 0.0
          %515 = vst [vmem:[#allocation4 + $0x8] sm:$0x3f] 0.0
          %516 = vst [vmem:[#allocation4 + $0xe] sm:$0xff] 0.0
          %517 = vst [vmem:[#allocation4 + $0x16] sm:$0x3f] 0.0
          %518 = vst [vmem:[#allocation4 + $0x1c] sm:$0xff] 0.0
          %519 = vst [vmem:[#allocation4 + $0x24] sm:$0x3f] 0.0
          %520 = vst [vmem:[#allocation4 + $0x2a] sm:$0xff] 0.0
          %521 = vst [vmem:[#allocation4 + $0x32] sm:$0x3f] 0.0
          %522 = vst [vmem:[#allocation4 + $0x38] sm:$0xff] 0.0
          %523 = vst [vmem:[#allocation4 + $0x40] sm:$0x3f] 0.0
          %524 = vst [vmem:[#allocation4 + $0x46] sm:$0xff] 0.0
          %525 = vst [vmem:[#allocation4 + $0x4e] sm:$0x3f] 0.0
          %526 = vst [vmem:[#allocation4 + $0x54] sm:$0xff] 0.0
          %527 = vst [vmem:[#allocation4 + $0x5c] sm:$0x3f] 0.0
          %528 = vst [vmem:[#allocation4 + $0x62] sm:$0xff] 0.0
          %529 = vst [vmem:[#allocation4 + $0x6a] sm:$0x3f] 0.0
          %530 = vst [vmem:[#allocation4 + $0x70] sm:$0xff] 0.0
          %531 = vst [vmem:[#allocation4 + $0x78] sm:$0x3f] 0.0
          %532 = vst [vmem:[#allocation4 + $0x7e] sm:$0xff] 0.0
          %533 = vst [vmem:[#allocation4 + $0x86] sm:$0x3f] 0.0
          %534 = vst [vmem:[#allocation4 + $0x8c] sm:$0xff] 0.0
          %535 = vst [vmem:[#allocation4 + $0x94] sm:$0x3f] 0.0
          %536 = vst [vmem:[#allocation4 + $0x9a] sm:$0xff] 0.0
          %537 = vst [vmem:[#allocation4 + $0xa2] sm:$0x3f] 0.0
          %538 = vst [vmem:[#allocation4 + $0xa8] sm:$0xff] 0.0
          %539 = vst [vmem:[#allocation4 + $0xb0] sm:$0x3f] 0.0
          %540 = vst [vmem:[#allocation4 + $0xb6] sm:$0xff] 0.0
          %541 = vst [vmem:[#allocation4 + $0xbe] sm:$0x3f] 0.0
          %542 = vst [vmem:[#allocation4 + $0xc4] sm:$0xff] 0.0
          %543 = vst [vmem:[#allocation4 + $0xcc] sm:$0x3f] 0.0
          %544 = vst [vmem:[#allocation4 + $0xd2] sm:$0xff] 0.0
          %545 = vst [vmem:[#allocation4 + $0xda] sm:$0x3f] 0.0
          %546 = vst [vmem:[#allocation4 + $0xe0] sm:$0xff] 0.0
          %547 = vst [vmem:[#allocation4 + $0xe8] sm:$0x3f] 0.0
          %548 = vst [vmem:[#allocation4 + $0xee] sm:$0xff] 0.0
          %549 = vst [vmem:[#allocation4 + $0xf6] sm:$0x3f] 0.0
          %550 = vst [vmem:[#allocation4 + $0xfc] sm:$0xff] 0.0
          %551 = vst [vmem:[#allocation4 + $0x104] sm:$0x3f] 0.0
          %552 = vst [vmem:[#allocation4 + $0x10a] sm:$0xff] 0.0
          %553 = vst [vmem:[#allocation4 + $0x112] sm:$0x3f] 0.0
          %554 = vst [vmem:[#allocation4 + $0x118] sm:$0xff] 0.0
          %555 = vst [vmem:[#allocation4 + $0x120] sm:$0x3f] 0.0
          %556 = vst [vmem:[#allocation4 + $0x126] sm:$0xff] 0.0
          %557 = vst [vmem:[#allocation4 + $0x12e] sm:$0x3f] 0.0
          %558 = vst [vmem:[#allocation4 + $0x134] sm:$0xff] 0.0
          %559 = vst [vmem:[#allocation4 + $0x13c] sm:$0x3f] 0.0
          %560 = vst [vmem:[#allocation4 + $0x142] sm:$0xff] 0.0
          %561 = vst [vmem:[#allocation4 + $0x14a] sm:$0x3f] 0.0
          %562 = vst [vmem:[#allocation4 + $0x150] sm:$0xff] 0.0
          %563 = vst [vmem:[#allocation4 + $0x158] sm:$0x3f] 0.0
          %564 = vst [vmem:[#allocation4 + $0x15e] sm:$0xff] 0.0
          %565 = vst [vmem:[#allocation4 + $0x166] sm:$0x3f] 0.0
          %566 = vst [vmem:[#allocation4 + $0x16c] sm:$0xff] 0.0
          %567 = vst [vmem:[#allocation4 + $0x174] sm:$0x3f] 0.0
          %568 = vst [vmem:[#allocation4 + $0x17a] sm:$0xff] 0.0
          %569 = vst [vmem:[#allocation4 + $0x182] sm:$0x3f] 0.0
          %vm570 = vcmask 1041408
          %vm571 = vcmask 1043458
          %vm572 = vmor %vm571, %vm570
          %vm573 = vcmask 1045508
          %vm574 = vmor %vm573, %vm572
          %vm575 = vcmask 523270
          %vm576 = vmor %vm575, %vm574
          %577 = vst.msk [vmem:[#allocation6] sm:$0xff] %vm576, 0.0
          %578 = vst.msk [vmem:[#allocation6 + $0x8] sm:$0xff] %vm576, 0.0
          %579 = vst.msk [vmem:[#allocation6 + $0x10] sm:$0xff] %vm576, 0.0
          %580 = vst.msk [vmem:[#allocation6 + $0x18] sm:$0xff] %vm576, 0.0
          %581 = vst.msk [vmem:[#allocation6 + $0x20] sm:$0xff] %vm576, 0.0
          %582 = vst.msk [vmem:[#allocation6 + $0x28] sm:$0xff] %vm576, 0.0
          %583 = vst.msk [vmem:[#allocation6 + $0x30] sm:$0xff] %vm576, 0.0
          %584 = vst.msk [vmem:[#allocation6 + $0x38] sm:$0xff] %vm576, 0.0
          %585 = vst.msk [vmem:[#allocation6 + $0x40] sm:$0xff] %vm576, 0.0
          %586 = vst.msk [vmem:[#allocation6 + $0x48] sm:$0xff] %vm576, 0.0
          %587 = vst.msk [vmem:[#allocation6 + $0x50] sm:$0xff] %vm576, 0.0
          %588 = vst.msk [vmem:[#allocation6 + $0x58] sm:$0xff] %vm576, 0.0
          %589 = vst.msk [vmem:[#allocation6 + $0x60] sm:$0xff] %vm576, 0.0
          %590 = vst.msk [vmem:[#allocation6 + $0x68] sm:$0xff] %vm576, 0.0
          %591 = vst.msk [vmem:[#allocation7] sm:$0xff] %vm576, 0.0
          %592 = vst.msk [vmem:[#allocation7 + $0x8] sm:$0xff] %vm576, 0.0
          %593 = vst.msk [vmem:[#allocation7 + $0x10] sm:$0xff] %vm576, 0.0
          %594 = vst.msk [vmem:[#allocation7 + $0x18] sm:$0xff] %vm576, 0.0
          %595 = vst.msk [vmem:[#allocation7 + $0x20] sm:$0xff] %vm576, 0.0
          %596 = vst.msk [vmem:[#allocation7 + $0x28] sm:$0xff] %vm576, 0.0
          %597 = vst.msk [vmem:[#allocation7 + $0x30] sm:$0xff] %vm576, 0.0
          %598 = vst.msk [vmem:[#allocation7 + $0x38] sm:$0xff] %vm576, 0.0
          %599 = vst.msk [vmem:[#allocation7 + $0x40] sm:$0xff] %vm576, 0.0
          %600 = vst.msk [vmem:[#allocation7 + $0x48] sm:$0xff] %vm576, 0.0
          %601 = vst.msk [vmem:[#allocation7 + $0x50] sm:$0xff] %vm576, 0.0
          %602 = vst.msk [vmem:[#allocation7 + $0x58] sm:$0xff] %vm576, 0.0
          %603 = vst.msk [vmem:[#allocation7 + $0x60] sm:$0xff] %vm576, 0.0
          %604 = vst.msk [vmem:[#allocation7 + $0x68] sm:$0xff] %vm576, 0.0
          %605 = vst [vmem:[#allocation8] sm:$0x3] 0.0
          %606 = vst [vmem:[#allocation9] sm:$0x3] 0.0
          %607 = vst [vmem:[#allocation10] sm:$0x3] 0.0
          %608 = vst [vmem:[#allocation11] sm:$0x3] 0.0
          %609 = vst [vmem:[#allocation12] sm:$0x3] 0.0
        $region64: #{scnn_forward.1} parent=59 // pred_fallthru
          _
        %v610 = vld [vmem:[%s382] sm:$0x3]
        %v611 = vld [vmem:[%s382 + $0x2] sm:$0x3]
        %v612 = vld [vmem:[%s382 + $0x4] sm:$0x3]
        %v613 = vld [vmem:[%s382 + $0x6] sm:$0x3]
        %v614 = vld [vmem:[%s382 + $0x8] sm:$0x3]
        %v615 = vld [vmem:[%s382 + $0xa] sm:$0x3]
        %v616 = vld [vmem:[%s382 + $0xc] sm:$0x3]
        %v617 = vld [vmem:[%s382 + $0xe] sm:$0x3]
        %v618 = vld [vmem:[%s382 + $0x10] sm:$0x3]
        %v619 = vld [vmem:[%s382 + $0x12] sm:$0x3]
        %v620 = vld [vmem:[%s382 + $0x14] sm:$0x3]
        %v621 = vld [vmem:[%s382 + $0x16] sm:$0x3]
        %v622 = vld [vmem:[%s382 + $0x18] sm:$0x3]
        %v623 = vld [vmem:[%s382 + $0x1a] sm:$0x3]
        %v624 = vld [vmem:[%s382 + $0x1c] sm:$0x3]
        %v625 = vld [vmem:[%s382 + $0x1e] sm:$0x3]
        %v626 = vld [vmem:[%s382 + $0x20] sm:$0x3]
        %v627 = vld [vmem:[%s382 + $0x22] sm:$0x3]
        %v628 = vld [vmem:[%s382 + $0x24] sm:$0x3]
        %v629 = vld [vmem:[%s382 + $0x26] sm:$0x3]
        %v630 = vld [vmem:[%s382 + $0x28] sm:$0x3]
        %v631 = vld [vmem:[%s382 + $0x2a] sm:$0x3]
        %v632 = vld [vmem:[%s382 + $0x2c] sm:$0x3]
        %v633 = vld [vmem:[%s382 + $0x2e] sm:$0x3]
        %v634 = vld [vmem:[%s382 + $0x30] sm:$0x3]
        %v635 = vld [vmem:[%s382 + $0x32] sm:$0x3]
        %v636 = vld [vmem:[%s382 + $0x34] sm:$0x3]
        %v637 = vld [vmem:[%s382 + $0x36] sm:$0x3]
        %v638 = vld [vmem:[%s390] sm:$0x3]
        %v639 = vld [vmem:[%s390 + $0x2] sm:$0x3]
        %v640 = vld [vmem:[%s390 + $0x4] sm:$0x3]
        %v641 = vld [vmem:[%s390 + $0x6] sm:$0x3]
        %v642 = vld [vmem:[%s390 + $0x8] sm:$0x3]
        %v643 = vld [vmem:[%s390 + $0xa] sm:$0x3]
        %v644 = vld [vmem:[%s390 + $0xc] sm:$0x3]
        %v645 = vld [vmem:[%s390 + $0xe] sm:$0x3]
        %v646 = vld [vmem:[%s390 + $0x10] sm:$0x3]
        %v647 = vld [vmem:[%s390 + $0x12] sm:$0x3]
        %v648 = vld [vmem:[%s390 + $0x14] sm:$0x3]
        %v649 = vld [vmem:[%s390 + $0x16] sm:$0x3]
        %v650 = vld [vmem:[%s390 + $0x18] sm:$0x3]
        %v651 = vld [vmem:[%s390 + $0x1a] sm:$0x3]
        %v652 = vld [vmem:[%s390 + $0x1c] sm:$0x3]
        %v653 = vld [vmem:[%s390 + $0x1e] sm:$0x3]
        %v654 = vld [vmem:[%s390 + $0x20] sm:$0x3]
        %v655 = vld [vmem:[%s390 + $0x22] sm:$0x3]
        %v656 = vld [vmem:[%s390 + $0x24] sm:$0x3]
        %v657 = vld [vmem:[%s390 + $0x26] sm:$0x3]
        %v658 = vld [vmem:[%s390 + $0x28] sm:$0x3]
        %v659 = vld [vmem:[%s390 + $0x2a] sm:$0x3]
        %v660 = vld [vmem:[%s390 + $0x2c] sm:$0x3]
        %v661 = vld [vmem:[%s390 + $0x2e] sm:$0x3]
        %v662 = vld [vmem:[%s390 + $0x30] sm:$0x3]
        %v663 = vld [vmem:[%s390 + $0x32] sm:$0x3]
        %v664 = vld [vmem:[%s390 + $0x34] sm:$0x3]
        %v665 = vld [vmem:[%s390 + $0x36] sm:$0x3]
        %vm666 = vcmp.gt.f32.partialorder %v610, %v638
        %vm667 = vcmp.gt.f32.partialorder %v611, %v639
        %vm668 = vcmp.gt.f32.partialorder %v612, %v640
        %vm669 = vcmp.gt.f32.partialorder %v613, %v641
        %vm670 = vcmp.gt.f32.partialorder %v614, %v642
        %vm671 = vcmp.gt.f32.partialorder %v615, %v643
        %vm672 = vcmp.gt.f32.partialorder %v616, %v644
        %vm673 = vcmp.gt.f32.partialorder %v617, %v645
        %vm674 = vcmp.gt.f32.partialorder %v618, %v646
        %vm675 = vcmp.gt.f32.partialorder %v619, %v647
        %vm676 = vcmp.gt.f32.partialorder %v620, %v648
        %vm677 = vcmp.gt.f32.partialorder %v621, %v649
        %vm678 = vcmp.gt.f32.partialorder %v622, %v650
        %vm679 = vcmp.gt.f32.partialorder %v623, %v651
        %vm680 = vcmp.gt.f32.partialorder %v624, %v652
        %vm681 = vcmp.gt.f32.partialorder %v625, %v653
        %vm682 = vcmp.gt.f32.partialorder %v626, %v654
        %vm683 = vcmp.gt.f32.partialorder %v627, %v655
        %vm684 = vcmp.gt.f32.partialorder %v628, %v656
        %vm685 = vcmp.gt.f32.partialorder %v629, %v657
        %vm686 = vcmp.gt.f32.partialorder %v630, %v658
        %vm687 = vcmp.gt.f32.partialorder %v631, %v659
        %vm688 = vcmp.gt.f32.partialorder %v632, %v660
        %vm689 = vcmp.gt.f32.partialorder %v633, %v661
        %vm690 = vcmp.gt.f32.partialorder %v634, %v662
        %vm691 = vcmp.gt.f32.partialorder %v635, %v663
        %vm692 = vcmp.gt.f32.partialorder %v636, %v664
        %vm693 = vcmp.gt.f32.partialorder %v637, %v665
        %v694 = vsel %vm666, 1, 0
        %v695 = vsel %vm667, 1, 0
        %v696 = vsel %vm668, 1, 0
        %v697 = vsel %vm669, 1, 0
        %v698 = vsel %vm670, 1, 0
        %v699 = vsel %vm671, 1, 0
        %v700 = vsel %vm672, 1, 0
        %v701 = vsel %vm673, 1, 0
        %v702 = vsel %vm674, 1, 0
        %v703 = vsel %vm675, 1, 0
        %v704 = vsel %vm676, 1, 0
        %v705 = vsel %vm677, 1, 0
        %v706 = vsel %vm678, 1, 0
        %v707 = vsel %vm679, 1, 0
        %v708 = vsel %vm680, 1, 0
        %v709 = vsel %vm681, 1, 0
        %v710 = vsel %vm682, 1, 0
        %v711 = vsel %vm683, 1, 0
        %v712 = vsel %vm684, 1, 0
        %v713 = vsel %vm685, 1, 0
        %v714 = vsel %vm686, 1, 0
        %v715 = vsel %vm687, 1, 0
        %v716 = vsel %vm688, 1, 0
        %v717 = vsel %vm689, 1, 0
        %v718 = vsel %vm690, 1, 0
        %v719 = vsel %vm691, 1, 0
        %v720 = vsel %vm692, 1, 0
        %v721 = vsel %vm693, 1, 0
        %v722 = vcvt.s32.f32 %v694
        %v723 = vcvt.s32.f32 %v695
        %v724 = vcvt.s32.f32 %v696
        %v725 = vcvt.s32.f32 %v697
        %v726 = vcvt.s32.f32 %v698
        %v727 = vcvt.s32.f32 %v699
        %v728 = vcvt.s32.f32 %v700
        %v729 = vcvt.s32.f32 %v701
        %v730 = vcvt.s32.f32 %v702
        %v731 = vcvt.s32.f32 %v703
        %v732 = vcvt.s32.f32 %v704
        %v733 = vcvt.s32.f32 %v705
        %v734 = vcvt.s32.f32 %v706
        %v735 = vcvt.s32.f32 %v707
        %v736 = vcvt.s32.f32 %v708
        %v737 = vcvt.s32.f32 %v709
        %v738 = vcvt.s32.f32 %v710
        %v739 = vcvt.s32.f32 %v711
        %v740 = vcvt.s32.f32 %v712
        %v741 = vcvt.s32.f32 %v713
        %v742 = vcvt.s32.f32 %v714
        %v743 = vcvt.s32.f32 %v715
        %v744 = vcvt.s32.f32 %v716
        %v745 = vcvt.s32.f32 %v717
        %v746 = vcvt.s32.f32 %v718
        %v747 = vcvt.s32.f32 %v719
        %v748 = vcvt.s32.f32 %v720
        %v749 = vcvt.s32.f32 %v721
        %s750 = scalar_lea.vmem [#allocation2], 2
        %vm751 = vcmask 222208
        %752 = vst.msk [vmem:[%s750] sm:$0x3] %vm751, %v722
        %753 = vst.msk [vmem:[%s750 + $0x2] sm:$0x3] %vm751, %v723
        %754 = vst.msk [vmem:[%s750 + $0x4] sm:$0x3] %vm751, %v724
        %755 = vst.msk [vmem:[%s750 + $0x6] sm:$0x3] %vm751, %v725
        %756 = vst.msk [vmem:[%s750 + $0x8] sm:$0x3] %vm751, %v726
        %757 = vst.msk [vmem:[%s750 + $0xa] sm:$0x3] %vm751, %v727
        %758 = vst.msk [vmem:[%s750 + $0xc] sm:$0x3] %vm751, %v728
        %759 = vst.msk [vmem:[%s750 + $0xe] sm:$0x3] %vm751, %v729
        %760 = vst.msk [vmem:[%s750 + $0x10] sm:$0x3] %vm751, %v730
        %761 = vst.msk [vmem:[%s750 + $0x12] sm:$0x3] %vm751, %v731
        %762 = vst.msk [vmem:[%s750 + $0x14] sm:$0x3] %vm751, %v732
        %763 = vst.msk [vmem:[%s750 + $0x16] sm:$0x3] %vm751, %v733
        %764 = vst.msk [vmem:[%s750 + $0x18] sm:$0x3] %vm751, %v734
        %765 = vst.msk [vmem:[%s750 + $0x1a] sm:$0x3] %vm751, %v735
        %766 = vst.msk [vmem:[%s750 + $0x1c] sm:$0x3] %vm751, %v736
        %767 = vst.msk [vmem:[%s750 + $0x1e] sm:$0x3] %vm751, %v737
        %768 = vst.msk [vmem:[%s750 + $0x20] sm:$0x3] %vm751, %v738
        %769 = vst.msk [vmem:[%s750 + $0x22] sm:$0x3] %vm751, %v739
        %770 = vst.msk [vmem:[%s750 + $0x24] sm:$0x3] %vm751, %v740
        %771 = vst.msk [vmem:[%s750 + $0x26] sm:$0x3] %vm751, %v741
        %772 = vst.msk [vmem:[%s750 + $0x28] sm:$0x3] %vm751, %v742
        %773 = vst.msk [vmem:[%s750 + $0x2a] sm:$0x3] %vm751, %v743
        %774 = vst.msk [vmem:[%s750 + $0x2c] sm:$0x3] %vm751, %v744
        %775 = vst.msk [vmem:[%s750 + $0x2e] sm:$0x3] %vm751, %v745
        %776 = vst.msk [vmem:[%s750 + $0x30] sm:$0x3] %vm751, %v746
        %777 = vst.msk [vmem:[%s750 + $0x32] sm:$0x3] %vm751, %v747
        %778 = vst.msk [vmem:[%s750 + $0x34] sm:$0x3] %vm751, %v748
        %779 = vst.msk [vmem:[%s750 + $0x36] sm:$0x3] %vm751, %v749
        loop: start=0, step=1, limit=14
        $region65: #{scnn_forward.1} parent=59 // loop_pre_header
          _
        $region66: #{scnn_forward.1} parent=59 // loop_header
          %s781 = sphi 0, %s785
          %p782 = scmp.ge.s32.totalorder %s781, 14
        $region67: #{scnn_forward.1} parent=59 // loop_header_branch
          %784 = sbr.rel (%p782) target = $region71
        $region68: #{scnn_forward.1} parent=59 // loop_body
          %s786 = smul.u32 %s781, 2
          %s787 = smul.u32 %s786, 2
          %s788 = scalar_lea.vmem [#allocation2], %s787
          %v789 = vld [vmem:[%s788] sm:$0x3]
          %v790 = vld [vmem:[%s2] sm:$0xff]
          %v791 = vld [vmem:[%s2 + $0x8] sm:$0xff]
          %v792 = vld [vmem:[%s2 + $0x10] sm:$0xff]
          %v793 = vld [vmem:[%s2 + $0x18] sm:$0xff]
          %v794 = vld [vmem:[%s2 + $0x20] sm:$0xff]
          %v795 = vld [vmem:[%s2 + $0x28] sm:$0xff]
          %v796 = vld [vmem:[%s2 + $0x30] sm:$0xff]
          %v797 = vld [vmem:[%s2 + $0x38] sm:$0xff]
          %v798 = vld [vmem:[%s2 + $0x40] sm:$0xff]
          %v799 = vld [vmem:[%s2 + $0x48] sm:$0xff]
          %v800 = vld [vmem:[%s2 + $0x50] sm:$0xff]
          %v801 = vld [vmem:[%s2 + $0x58] sm:$0xff]
          %v802 = vld [vmem:[%s2 + $0x60] sm:$0xff]
          %v803 = vld [vmem:[%s2 + $0x68] sm:$0xff]
          %v804 = vld [vmem:[%s2 + $0x70] sm:$0xff]
          %v805 = vld [vmem:[%s2 + $0x78] sm:$0xff]
          %v806 = vld [vmem:[%s2 + $0x80] sm:$0xff]
          %v807 = vld [vmem:[%s2 + $0x88] sm:$0xff]
          %v808 = vld [vmem:[%s2 + $0x90] sm:$0xff]
          %v809 = vld [vmem:[%s2 + $0x98] sm:$0xff]
          %v810 = vld [vmem:[%s2 + $0xa0] sm:$0xff]
          %v811 = vld [vmem:[%s2 + $0xa8] sm:$0xf]
          %v812 = vld [vmem:[%s2 + $0xb0] sm:$0xf]
          %v813 = vld [vmem:[%s2 + $0xb8] sm:$0xf]
          %v814 = vld [vmem:[%s2 + $0xc0] sm:$0xf]
          %v815 = vld [vmem:[%s2 + $0xc8] sm:$0xf]
          %v816 = vld [vmem:[%s2 + $0xd0] sm:$0xf]
          %v817 = vld [vmem:[%s2 + $0xd8] sm:$0xf]
          %s818 = sadd.s32 %s786, 1
          %s819 = smul.u32 %s818, 2
          %s820 = scalar_lea.vmem [#allocation2], %s819
          %v821 = vld [vmem:[%s820] sm:$0x3]
          %s822 = scalar_lea.vmem %s2, 224
          %v823 = vld [vmem:[%s822] sm:$0xff]
          %v824 = vld [vmem:[%s822 + $0x8] sm:$0xff]
          %v825 = vld [vmem:[%s822 + $0x10] sm:$0xff]
          %v826 = vld [vmem:[%s822 + $0x18] sm:$0xff]
          %v827 = vld [vmem:[%s822 + $0x20] sm:$0xff]
          %v828 = vld [vmem:[%s822 + $0x28] sm:$0xff]
          %v829 = vld [vmem:[%s822 + $0x30] sm:$0xff]
          %v830 = vld [vmem:[%s822 + $0x38] sm:$0xff]
          %v831 = vld [vmem:[%s822 + $0x40] sm:$0xff]
          %v832 = vld [vmem:[%s822 + $0x48] sm:$0xff]
          %v833 = vld [vmem:[%s822 + $0x50] sm:$0xff]
          %v834 = vld [vmem:[%s822 + $0x58] sm:$0xff]
          %v835 = vld [vmem:[%s822 + $0x60] sm:$0xff]
          %v836 = vld [vmem:[%s822 + $0x68] sm:$0xff]
          %v837 = vld [vmem:[%s822 + $0x70] sm:$0xff]
          %v838 = vld [vmem:[%s822 + $0x78] sm:$0xff]
          %v839 = vld [vmem:[%s822 + $0x80] sm:$0xff]
          %v840 = vld [vmem:[%s822 + $0x88] sm:$0xff]
          %v841 = vld [vmem:[%s822 + $0x90] sm:$0xff]
          %v842 = vld [vmem:[%s822 + $0x98] sm:$0xff]
          %v843 = vld [vmem:[%s822 + $0xa0] sm:$0xff]
          %v844 = vld [vmem:[%s822 + $0xa8] sm:$0xf]
          %v845 = vld [vmem:[%s822 + $0xb0] sm:$0xf]
          %v846 = vld [vmem:[%s822 + $0xb8] sm:$0xf]
          %v847 = vld [vmem:[%s822 + $0xc0] sm:$0xf]
          %v848 = vld [vmem:[%s822 + $0xc8] sm:$0xf]
          %v849 = vld [vmem:[%s822 + $0xd0] sm:$0xf]
          %v850 = vld [vmem:[%s822 + $0xd8] sm:$0xf]
          %vm851 = vcmask 228352
          %v853 = vsel %vm851, %v821, 0
          %vm855 = vcmask 1043456
          %v857 = vsel %vm855, %v844, 0
          %v860 = vsel %vm855, %v845, 0
          %v863 = vsel %vm855, %v846, 0
          %v866 = vsel %vm855, %v847, 0
          %v869 = vsel %vm855, %v848, 0
          %v872 = vsel %vm855, %v849, 0
          %v875 = vsel %vm855, %v850, 0
          %877 = vmatpush.msra.mxu0 0.0
          %878 = vmatpush.msra.mxu0 0.0
          %879 = vmatpush.msra.mxu0 0.0
          %880 = vmatpush.msra.mxu0 0.0
          %881 = vmatpush.msra.mxu0 0.0
          %882 = vmatpush.msra.mxu0 0.0
          %883 = vmatpush.msra.mxu0 0.0
          %884 = vmatpush.msra.mxu0 0.0
          %885 = vmatpush.msra.mxu0 0.0
          %886 = vmatpush.msra.mxu0 0.0
          %887 = vmatpush.msra.mxu0 0.0
          %888 = vmatpush.msra.mxu0 0.0
          %889 = vmatpush.msra.mxu0 %v857
          %890 = vmatpush.msra.mxu0 %v837
          %891 = vmatpush.msra.mxu0 %v830
          %892 = vmatpush.msra.mxu0 %v823
          %893 = vmatmul.f32.gmra.mxu0 %v853
          %v894 = vpop.f32.mrf.mxu0
          %v895 = vadd.f32 0.0, %v894
          %896 = vdwg.mxu0
          %897 = vmatpush.msra.mxu0 0.0
          %898 = vmatpush.msra.mxu0 0.0
          %899 = vmatpush.msra.mxu0 0.0
          %900 = vmatpush.msra.mxu0 0.0
          %901 = vmatpush.msra.mxu0 0.0
          %902 = vmatpush.msra.mxu0 0.0
          %903 = vmatpush.msra.mxu0 0.0
          %904 = vmatpush.msra.mxu0 0.0
          %905 = vmatpush.msra.mxu0 0.0
          %906 = vmatpush.msra.mxu0 0.0
          %907 = vmatpush.msra.mxu0 0.0
          %908 = vmatpush.msra.mxu0 0.0
          %909 = vmatpush.msra.mxu0 %v860
          %910 = vmatpush.msra.mxu0 %v838
          %911 = vmatpush.msra.mxu0 %v831
          %912 = vmatpush.msra.mxu0 %v824
          %913 = vmatmul.f32.gmra.mxu0 %v853
          %v914 = vpop.f32.mrf.mxu0
          %v915 = vadd.f32 0.0, %v914
          %916 = vdwg.mxu0
          %917 = vmatpush.msra.mxu0 0.0
          %918 = vmatpush.msra.mxu0 0.0
          %919 = vmatpush.msra.mxu0 0.0
          %920 = vmatpush.msra.mxu0 0.0
          %921 = vmatpush.msra.mxu0 0.0
          %922 = vmatpush.msra.mxu0 0.0
          %923 = vmatpush.msra.mxu0 0.0
          %924 = vmatpush.msra.mxu0 0.0
          %925 = vmatpush.msra.mxu0 0.0
          %926 = vmatpush.msra.mxu0 0.0
          %927 = vmatpush.msra.mxu0 0.0
          %928 = vmatpush.msra.mxu0 0.0
          %929 = vmatpush.msra.mxu0 %v863
          %930 = vmatpush.msra.mxu0 %v839
          %931 = vmatpush.msra.mxu0 %v832
          %932 = vmatpush.msra.mxu0 %v825
          %933 = vmatmul.f32.gmra.mxu0 %v853
          %v934 = vpop.f32.mrf.mxu0
          %v935 = vadd.f32 0.0, %v934
          %936 = vdwg.mxu0
          %937 = vmatpush.msra.mxu0 0.0
          %938 = vmatpush.msra.mxu0 0.0
          %939 = vmatpush.msra.mxu0 0.0
          %940 = vmatpush.msra.mxu0 0.0
          %941 = vmatpush.msra.mxu0 0.0
          %942 = vmatpush.msra.mxu0 0.0
          %943 = vmatpush.msra.mxu0 0.0
          %944 = vmatpush.msra.mxu0 0.0
          %945 = vmatpush.msra.mxu0 0.0
          %946 = vmatpush.msra.mxu0 0.0
          %947 = vmatpush.msra.mxu0 0.0
          %948 = vmatpush.msra.mxu0 0.0
          %949 = vmatpush.msra.mxu0 %v866
          %950 = vmatpush.msra.mxu0 %v840
          %951 = vmatpush.msra.mxu0 %v833
          %952 = vmatpush.msra.mxu0 %v826
          %953 = vmatmul.f32.gmra.mxu0 %v853
          %v954 = vpop.f32.mrf.mxu0
          %v955 = vadd.f32 0.0, %v954
          %956 = vdwg.mxu0
          %957 = vmatpush.msra.mxu0 0.0
          %958 = vmatpush.msra.mxu0 0.0
          %959 = vmatpush.msra.mxu0 0.0
          %960 = vmatpush.msra.mxu0 0.0
          %961 = vmatpush.msra.mxu0 0.0
          %962 = vmatpush.msra.mxu0 0.0
          %963 = vmatpush.msra.mxu0 0.0
          %964 = vmatpush.msra.mxu0 0.0
          %965 = vmatpush.msra.mxu0 0.0
          %966 = vmatpush.msra.mxu0 0.0
          %967 = vmatpush.msra.mxu0 0.0
          %968 = vmatpush.msra.mxu0 0.0
          %969 = vmatpush.msra.mxu0 %v869
          %970 = vmatpush.msra.mxu0 %v841
          %971 = vmatpush.msra.mxu0 %v834
          %972 = vmatpush.msra.mxu0 %v827
          %973 = vmatmul.f32.gmra.mxu0 %v853
          %v974 = vpop.f32.mrf.mxu0
          %v975 = vadd.f32 0.0, %v974
          %976 = vdwg.mxu0
          %977 = vmatpush.msra.mxu0 0.0
          %978 = vmatpush.msra.mxu0 0.0
          %979 = vmatpush.msra.mxu0 0.0
          %980 = vmatpush.msra.mxu0 0.0
          %981 = vmatpush.msra.mxu0 0.0
          %982 = vmatpush.msra.mxu0 0.0
          %983 = vmatpush.msra.mxu0 0.0
          %984 = vmatpush.msra.mxu0 0.0
          %985 = vmatpush.msra.mxu0 0.0
          %986 = vmatpush.msra.mxu0 0.0
          %987 = vmatpush.msra.mxu0 0.0
          %988 = vmatpush.msra.mxu0 0.0
          %989 = vmatpush.msra.mxu0 %v872
          %990 = vmatpush.msra.mxu0 %v842
          %991 = vmatpush.msra.mxu0 %v835
          %992 = vmatpush.msra.mxu0 %v828
          %993 = vmatmul.f32.gmra.mxu0 %v853
          %v994 = vpop.f32.mrf.mxu0
          %v995 = vadd.f32 0.0, %v994
          %996 = vdwg.mxu0
          %997 = vmatpush.msra.mxu0 0.0
          %998 = vmatpush.msra.mxu0 0.0
          %999 = vmatpush.msra.mxu0 0.0
          %1000 = vmatpush.msra.mxu0 0.0
          %1001 = vmatpush.msra.mxu0 0.0
          %1002 = vmatpush.msra.mxu0 0.0
          %1003 = vmatpush.msra.mxu0 0.0
          %1004 = vmatpush.msra.mxu0 0.0
          %1005 = vmatpush.msra.mxu0 0.0
          %1006 = vmatpush.msra.mxu0 0.0
          %1007 = vmatpush.msra.mxu0 0.0
          %1008 = vmatpush.msra.mxu0 0.0
          %1009 = vmatpush.msra.mxu0 %v875
          %1010 = vmatpush.msra.mxu0 %v843
          %1011 = vmatpush.msra.mxu0 %v836
          %1012 = vmatpush.msra.mxu0 %v829
          %1013 = vmatmul.f32.gmra.mxu0 %v853
          %v1014 = vpop.f32.mrf.mxu0
          %v1015 = vadd.f32 0.0, %v1014
          %1016 = vdwg.mxu0
          %v1018 = vsel %vm851, %v789, 0
          %v1021 = vsel %vm855, %v811, 0
          %v1024 = vsel %vm855, %v812, 0
          %v1027 = vsel %vm855, %v813, 0
          %v1030 = vsel %vm855, %v814, 0
          %v1033 = vsel %vm855, %v815, 0
          %v1036 = vsel %vm855, %v816, 0
          %v1039 = vsel %vm855, %v817, 0
          %1041 = vmatpush.msra.mxu0 0.0
          %1042 = vmatpush.msra.mxu0 0.0
          %1043 = vmatpush.msra.mxu0 0.0
          %1044 = vmatpush.msra.mxu0 0.0
          %1045 = vmatpush.msra.mxu0 0.0
          %1046 = vmatpush.msra.mxu0 0.0
          %1047 = vmatpush.msra.mxu0 0.0
          %1048 = vmatpush.msra.mxu0 0.0
          %1049 = vmatpush.msra.mxu0 0.0
          %1050 = vmatpush.msra.mxu0 0.0
          %1051 = vmatpush.msra.mxu0 0.0
          %1052 = vmatpush.msra.mxu0 0.0
          %1053 = vmatpush.msra.mxu0 %v1021
          %1054 = vmatpush.msra.mxu0 %v804
          %1055 = vmatpush.msra.mxu0 %v797
          %1056 = vmatpush.msra.mxu0 %v790
          %1057 = vmatmul.f32.gmra.mxu0 %v1018
          %v1058 = vpop.f32.mrf.mxu0
          %v1059 = vadd.f32 %v895, %v1058
          %1060 = vdwg.mxu0
          %1061 = vmatpush.msra.mxu0 0.0
          %1062 = vmatpush.msra.mxu0 0.0
          %1063 = vmatpush.msra.mxu0 0.0
          %1064 = vmatpush.msra.mxu0 0.0
          %1065 = vmatpush.msra.mxu0 0.0
          %1066 = vmatpush.msra.mxu0 0.0
          %1067 = vmatpush.msra.mxu0 0.0
          %1068 = vmatpush.msra.mxu0 0.0
          %1069 = vmatpush.msra.mxu0 0.0
          %1070 = vmatpush.msra.mxu0 0.0
          %1071 = vmatpush.msra.mxu0 0.0
          %1072 = vmatpush.msra.mxu0 0.0
          %1073 = vmatpush.msra.mxu0 %v1024
          %1074 = vmatpush.msra.mxu0 %v805
          %1075 = vmatpush.msra.mxu0 %v798
          %1076 = vmatpush.msra.mxu0 %v791
          %1077 = vmatmul.f32.gmra.mxu0 %v1018
          %v1078 = vpop.f32.mrf.mxu0
          %v1079 = vadd.f32 %v915, %v1078
          %1080 = vdwg.mxu0
          %1081 = vmatpush.msra.mxu0 0.0
          %1082 = vmatpush.msra.mxu0 0.0
          %1083 = vmatpush.msra.mxu0 0.0
          %1084 = vmatpush.msra.mxu0 0.0
          %1085 = vmatpush.msra.mxu0 0.0
          %1086 = vmatpush.msra.mxu0 0.0
          %1087 = vmatpush.msra.mxu0 0.0
          %1088 = vmatpush.msra.mxu0 0.0
          %1089 = vmatpush.msra.mxu0 0.0
          %1090 = vmatpush.msra.mxu0 0.0
          %1091 = vmatpush.msra.mxu0 0.0
          %1092 = vmatpush.msra.mxu0 0.0
          %1093 = vmatpush.msra.mxu0 %v1027
          %1094 = vmatpush.msra.mxu0 %v806
          %1095 = vmatpush.msra.mxu0 %v799
          %1096 = vmatpush.msra.mxu0 %v792
          %1097 = vmatmul.f32.gmra.mxu0 %v1018
          %v1098 = vpop.f32.mrf.mxu0
          %v1099 = vadd.f32 %v935, %v1098
          %1100 = vdwg.mxu0
          %1101 = vmatpush.msra.mxu0 0.0
          %1102 = vmatpush.msra.mxu0 0.0
          %1103 = vmatpush.msra.mxu0 0.0
          %1104 = vmatpush.msra.mxu0 0.0
          %1105 = vmatpush.msra.mxu0 0.0
          %1106 = vmatpush.msra.mxu0 0.0
          %1107 = vmatpush.msra.mxu0 0.0
          %1108 = vmatpush.msra.mxu0 0.0
          %1109 = vmatpush.msra.mxu0 0.0
          %1110 = vmatpush.msra.mxu0 0.0
          %1111 = vmatpush.msra.mxu0 0.0
          %1112 = vmatpush.msra.mxu0 0.0
          %1113 = vmatpush.msra.mxu0 %v1030
          %1114 = vmatpush.msra.mxu0 %v807
          %1115 = vmatpush.msra.mxu0 %v800
          %1116 = vmatpush.msra.mxu0 %v793
          %1117 = vmatmul.f32.gmra.mxu0 %v1018
          %v1118 = vpop.f32.mrf.mxu0
          %v1119 = vadd.f32 %v955, %v1118
          %1120 = vdwg.mxu0
          %1121 = vmatpush.msra.mxu0 0.0
          %1122 = vmatpush.msra.mxu0 0.0
          %1123 = vmatpush.msra.mxu0 0.0
          %1124 = vmatpush.msra.mxu0 0.0
          %1125 = vmatpush.msra.mxu0 0.0
          %1126 = vmatpush.msra.mxu0 0.0
          %1127 = vmatpush.msra.mxu0 0.0
          %1128 = vmatpush.msra.mxu0 0.0
          %1129 = vmatpush.msra.mxu0 0.0
          %1130 = vmatpush.msra.mxu0 0.0
          %1131 = vmatpush.msra.mxu0 0.0
          %1132 = vmatpush.msra.mxu0 0.0
          %1133 = vmatpush.msra.mxu0 %v1033
          %1134 = vmatpush.msra.mxu0 %v808
          %1135 = vmatpush.msra.mxu0 %v801
          %1136 = vmatpush.msra.mxu0 %v794
          %1137 = vmatmul.f32.gmra.mxu0 %v1018
          %v1138 = vpop.f32.mrf.mxu0
          %v1139 = vadd.f32 %v975, %v1138
          %1140 = vdwg.mxu0
          %1141 = vmatpush.msra.mxu0 0.0
          %1142 = vmatpush.msra.mxu0 0.0
          %1143 = vmatpush.msra.mxu0 0.0
          %1144 = vmatpush.msra.mxu0 0.0
          %1145 = vmatpush.msra.mxu0 0.0
          %1146 = vmatpush.msra.mxu0 0.0
          %1147 = vmatpush.msra.mxu0 0.0
          %1148 = vmatpush.msra.mxu0 0.0
          %1149 = vmatpush.msra.mxu0 0.0
          %1150 = vmatpush.msra.mxu0 0.0
          %1151 = vmatpush.msra.mxu0 0.0
          %1152 = vmatpush.msra.mxu0 0.0
          %1153 = vmatpush.msra.mxu0 %v1036
          %1154 = vmatpush.msra.mxu0 %v809
          %1155 = vmatpush.msra.mxu0 %v802
          %1156 = vmatpush.msra.mxu0 %v795
          %1157 = vmatmul.f32.gmra.mxu0 %v1018
          %v1158 = vpop.f32.mrf.mxu0
          %v1159 = vadd.f32 %v995, %v1158
          %1160 = vdwg.mxu0
          %1161 = vmatpush.msra.mxu0 0.0
          %1162 = vmatpush.msra.mxu0 0.0
          %1163 = vmatpush.msra.mxu0 0.0
          %1164 = vmatpush.msra.mxu0 0.0
          %1165 = vmatpush.msra.mxu0 0.0
          %1166 = vmatpush.msra.mxu0 0.0
          %1167 = vmatpush.msra.mxu0 0.0
          %1168 = vmatpush.msra.mxu0 0.0
          %1169 = vmatpush.msra.mxu0 0.0
          %1170 = vmatpush.msra.mxu0 0.0
          %1171 = vmatpush.msra.mxu0 0.0
          %1172 = vmatpush.msra.mxu0 0.0
          %1173 = vmatpush.msra.mxu0 %v1039
          %1174 = vmatpush.msra.mxu0 %v810
          %1175 = vmatpush.msra.mxu0 %v803
          %1176 = vmatpush.msra.mxu0 %v796
          %1177 = vmatmul.f32.gmra.mxu0 %v1018
          %v1178 = vpop.f32.mrf.mxu0
          %v1179 = vadd.f32 %v1015, %v1178
          %1180 = vdwg.mxu0
          %s1181 = sadd.s32 %s786, 2
          %s1182 = smul.u32 %s1181, 2
          %s1183 = scalar_lea.vmem [#allocation2], %s1182
          %v1184 = vld [vmem:[%s1183] sm:$0x3]
          %s1185 = scalar_lea.vmem %s2, 448
          %v1186 = vld [vmem:[%s1185] sm:$0xff]
          %v1187 = vld [vmem:[%s1185 + $0x8] sm:$0xff]
          %v1188 = vld [vmem:[%s1185 + $0x10] sm:$0xff]
          %v1189 = vld [vmem:[%s1185 + $0x18] sm:$0xff]
          %v1190 = vld [vmem:[%s1185 + $0x20] sm:$0xff]
          %v1191 = vld [vmem:[%s1185 + $0x28] sm:$0xff]
          %v1192 = vld [vmem:[%s1185 + $0x30] sm:$0xff]
          %v1193 = vld [vmem:[%s1185 + $0x38] sm:$0xff]
          %v1194 = vld [vmem:[%s1185 + $0x40] sm:$0xff]
          %v1195 = vld [vmem:[%s1185 + $0x48] sm:$0xff]
          %v1196 = vld [vmem:[%s1185 + $0x50] sm:$0xff]
          %v1197 = vld [vmem:[%s1185 + $0x58] sm:$0xff]
          %v1198 = vld [vmem:[%s1185 + $0x60] sm:$0xff]
          %v1199 = vld [vmem:[%s1185 + $0x68] sm:$0xff]
          %v1200 = vld [vmem:[%s1185 + $0x70] sm:$0xff]
          %v1201 = vld [vmem:[%s1185 + $0x78] sm:$0xff]
          %v1202 = vld [vmem:[%s1185 + $0x80] sm:$0xff]
          %v1203 = vld [vmem:[%s1185 + $0x88] sm:$0xff]
          %v1204 = vld [vmem:[%s1185 + $0x90] sm:$0xff]
          %v1205 = vld [vmem:[%s1185 + $0x98] sm:$0xff]
          %v1206 = vld [vmem:[%s1185 + $0xa0] sm:$0xff]
          %v1207 = vld [vmem:[%s1185 + $0xa8] sm:$0xf]
          %v1208 = vld [vmem:[%s1185 + $0xb0] sm:$0xf]
          %v1209 = vld [vmem:[%s1185 + $0xb8] sm:$0xf]
          %v1210 = vld [vmem:[%s1185 + $0xc0] sm:$0xf]
          %v1211 = vld [vmem:[%s1185 + $0xc8] sm:$0xf]
          %v1212 = vld [vmem:[%s1185 + $0xd0] sm:$0xf]
          %v1213 = vld [vmem:[%s1185 + $0xd8] sm:$0xf]
          %v1215 = vsel %vm851, %v1184, 0
          %v1218 = vsel %vm855, %v1207, 0
          %v1221 = vsel %vm855, %v1208, 0
          %v1224 = vsel %vm855, %v1209, 0
          %v1227 = vsel %vm855, %v1210, 0
          %v1230 = vsel %vm855, %v1211, 0
          %v1233 = vsel %vm855, %v1212, 0
          %v1236 = vsel %vm855, %v1213, 0
          %1238 = vmatpush.msra.mxu0 0.0
          %1239 = vmatpush.msra.mxu0 0.0
          %1240 = vmatpush.msra.mxu0 0.0
          %1241 = vmatpush.msra.mxu0 0.0
          %1242 = vmatpush.msra.mxu0 0.0
          %1243 = vmatpush.msra.mxu0 0.0
          %1244 = vmatpush.msra.mxu0 0.0
          %1245 = vmatpush.msra.mxu0 0.0
          %1246 = vmatpush.msra.mxu0 0.0
          %1247 = vmatpush.msra.mxu0 0.0
          %1248 = vmatpush.msra.mxu0 0.0
          %1249 = vmatpush.msra.mxu0 0.0
          %1250 = vmatpush.msra.mxu0 %v1218
          %1251 = vmatpush.msra.mxu0 %v1200
          %1252 = vmatpush.msra.mxu0 %v1193
          %1253 = vmatpush.msra.mxu0 %v1186
          %1254 = vmatmul.f32.gmra.mxu0 %v1215
          %v1255 = vpop.f32.mrf.mxu0
          %v1256 = vadd.f32 0.0, %v1255
          %1257 = vdwg.mxu0
          %1258 = vmatpush.msra.mxu0 0.0
          %1259 = vmatpush.msra.mxu0 0.0
          %1260 = vmatpush.msra.mxu0 0.0
          %1261 = vmatpush.msra.mxu0 0.0
          %1262 = vmatpush.msra.mxu0 0.0
          %1263 = vmatpush.msra.mxu0 0.0
          %1264 = vmatpush.msra.mxu0 0.0
          %1265 = vmatpush.msra.mxu0 0.0
          %1266 = vmatpush.msra.mxu0 0.0
          %1267 = vmatpush.msra.mxu0 0.0
          %1268 = vmatpush.msra.mxu0 0.0
          %1269 = vmatpush.msra.mxu0 0.0
          %1270 = vmatpush.msra.mxu0 %v1221
          %1271 = vmatpush.msra.mxu0 %v1201
          %1272 = vmatpush.msra.mxu0 %v1194
          %1273 = vmatpush.msra.mxu0 %v1187
          %1274 = vmatmul.f32.gmra.mxu0 %v1215
          %v1275 = vpop.f32.mrf.mxu0
          %v1276 = vadd.f32 0.0, %v1275
          %1277 = vdwg.mxu0
          %1278 = vmatpush.msra.mxu0 0.0
          %1279 = vmatpush.msra.mxu0 0.0
          %1280 = vmatpush.msra.mxu0 0.0
          %1281 = vmatpush.msra.mxu0 0.0
          %1282 = vmatpush.msra.mxu0 0.0
          %1283 = vmatpush.msra.mxu0 0.0
          %1284 = vmatpush.msra.mxu0 0.0
          %1285 = vmatpush.msra.mxu0 0.0
          %1286 = vmatpush.msra.mxu0 0.0
          %1287 = vmatpush.msra.mxu0 0.0
          %1288 = vmatpush.msra.mxu0 0.0
          %1289 = vmatpush.msra.mxu0 0.0
          %1290 = vmatpush.msra.mxu0 %v1224
          %1291 = vmatpush.msra.mxu0 %v1202
          %1292 = vmatpush.msra.mxu0 %v1195
          %1293 = vmatpush.msra.mxu0 %v1188
          %1294 = vmatmul.f32.gmra.mxu0 %v1215
          %v1295 = vpop.f32.mrf.mxu0
          %v1296 = vadd.f32 0.0, %v1295
          %1297 = vdwg.mxu0
          %1298 = vmatpush.msra.mxu0 0.0
          %1299 = vmatpush.msra.mxu0 0.0
          %1300 = vmatpush.msra.mxu0 0.0
          %1301 = vmatpush.msra.mxu0 0.0
          %1302 = vmatpush.msra.mxu0 0.0
          %1303 = vmatpush.msra.mxu0 0.0
          %1304 = vmatpush.msra.mxu0 0.0
          %1305 = vmatpush.msra.mxu0 0.0
          %1306 = vmatpush.msra.mxu0 0.0
          %1307 = vmatpush.msra.mxu0 0.0
          %1308 = vmatpush.msra.mxu0 0.0
          %1309 = vmatpush.msra.mxu0 0.0
          %1310 = vmatpush.msra.mxu0 %v1227
          %1311 = vmatpush.msra.mxu0 %v1203
          %1312 = vmatpush.msra.mxu0 %v1196
          %1313 = vmatpush.msra.mxu0 %v1189
          %1314 = vmatmul.f32.gmra.mxu0 %v1215
          %v1315 = vpop.f32.mrf.mxu0
          %v1316 = vadd.f32 0.0, %v1315
          %1317 = vdwg.mxu0
          %1318 = vmatpush.msra.mxu0 0.0
          %1319 = vmatpush.msra.mxu0 0.0
          %1320 = vmatpush.msra.mxu0 0.0
          %1321 = vmatpush.msra.mxu0 0.0
          %1322 = vmatpush.msra.mxu0 0.0
          %1323 = vmatpush.msra.mxu0 0.0
          %1324 = vmatpush.msra.mxu0 0.0
          %1325 = vmatpush.msra.mxu0 0.0
          %1326 = vmatpush.msra.mxu0 0.0
          %1327 = vmatpush.msra.mxu0 0.0
          %1328 = vmatpush.msra.mxu0 0.0
          %1329 = vmatpush.msra.mxu0 0.0
          %1330 = vmatpush.msra.mxu0 %v1230
          %1331 = vmatpush.msra.mxu0 %v1204
          %1332 = vmatpush.msra.mxu0 %v1197
          %1333 = vmatpush.msra.mxu0 %v1190
          %1334 = vmatmul.f32.gmra.mxu0 %v1215
          %v1335 = vpop.f32.mrf.mxu0
          %v1336 = vadd.f32 0.0, %v1335
          %1337 = vdwg.mxu0
          %1338 = vmatpush.msra.mxu0 0.0
          %1339 = vmatpush.msra.mxu0 0.0
          %1340 = vmatpush.msra.mxu0 0.0
          %1341 = vmatpush.msra.mxu0 0.0
          %1342 = vmatpush.msra.mxu0 0.0
          %1343 = vmatpush.msra.mxu0 0.0
          %1344 = vmatpush.msra.mxu0 0.0
          %1345 = vmatpush.msra.mxu0 0.0
          %1346 = vmatpush.msra.mxu0 0.0
          %1347 = vmatpush.msra.mxu0 0.0
          %1348 = vmatpush.msra.mxu0 0.0
          %1349 = vmatpush.msra.mxu0 0.0
          %1350 = vmatpush.msra.mxu0 %v1233
          %1351 = vmatpush.msra.mxu0 %v1205
          %1352 = vmatpush.msra.mxu0 %v1198
          %1353 = vmatpush.msra.mxu0 %v1191
          %1354 = vmatmul.f32.gmra.mxu0 %v1215
          %v1355 = vpop.f32.mrf.mxu0
          %v1356 = vadd.f32 0.0, %v1355
          %1357 = vdwg.mxu0
          %1358 = vmatpush.msra.mxu0 0.0
          %1359 = vmatpush.msra.mxu0 0.0
          %1360 = vmatpush.msra.mxu0 0.0
          %1361 = vmatpush.msra.mxu0 0.0
          %1362 = vmatpush.msra.mxu0 0.0
          %1363 = vmatpush.msra.mxu0 0.0
          %1364 = vmatpush.msra.mxu0 0.0
          %1365 = vmatpush.msra.mxu0 0.0
          %1366 = vmatpush.msra.mxu0 0.0
          %1367 = vmatpush.msra.mxu0 0.0
          %1368 = vmatpush.msra.mxu0 0.0
          %1369 = vmatpush.msra.mxu0 0.0
          %1370 = vmatpush.msra.mxu0 %v1236
          %1371 = vmatpush.msra.mxu0 %v1206
          %1372 = vmatpush.msra.mxu0 %v1199
          %1373 = vmatpush.msra.mxu0 %v1192
          %1374 = vmatmul.f32.gmra.mxu0 %v1215
          %v1375 = vpop.f32.mrf.mxu0
          %v1376 = vadd.f32 0.0, %v1375
          %1377 = vdwg.mxu0
          %v1378 = vadd.f32 %v1059, %v1256
          %v1379 = vadd.f32 %v1079, %v1276
          %v1380 = vadd.f32 %v1099, %v1296
          %v1381 = vadd.f32 %v1119, %v1316
          %v1382 = vadd.f32 %v1139, %v1336
          %v1383 = vadd.f32 %v1159, %v1356
          %v1384 = vadd.f32 %v1179, %v1376
          %v1385 = vld [vmem:[%s3] sm:$0xff]
          %v1387 = vperm.slane %v1385, 0
          %v1388 = vperm.slane %v1385, 1
          %v1389 = vperm.slane %v1385, 2
          %v1390 = vperm.slane %v1385, 3
          %v1391 = vperm.slane %v1385, 4
          %v1392 = vperm.slane %v1385, 5
          %v1393 = vperm.slane %v1385, 6
          %v1401 = vadd.f32 %v1378, %v1387
          %v1402 = vadd.f32 %v1379, %v1388
          %v1403 = vadd.f32 %v1380, %v1389
          %v1404 = vadd.f32 %v1381, %v1390
          %v1405 = vadd.f32 %v1382, %v1391
          %v1406 = vadd.f32 %v1383, %v1392
          %v1407 = vadd.f32 %v1384, %v1393
          %s1408 = smul.u32 %s786, 7
          %s1409 = smul.addr %s1408, 2
          %s1410 = scalar_lea.vmem [#allocation3], %s1409
          %v1411 = vld [vmem:[%s1410] sm:$0xff]
          %v1412 = vld [vmem:[%s1410 + $0x8] sm:$0x3f]
          %v1413 = vmul.f32 %v1411, 0.2
          %v1414 = vmul.f32 %v1412, 0.2
          %s1415 = smul.addr %s1408, 2
          %s1416 = scalar_lea.vmem [#allocation4], %s1415
          %v1417 = vld [vmem:[%s1416] sm:$0xff]
          %v1418 = vld [vmem:[%s1416 + $0x8] sm:$0x3f]
          %v1419 = vsub.f32 1.0, %v1417
          %v1420 = vsub.f32 1.0, %v1418
          %v1421 = vmul.f32 %v1413, %v1419
          %v1422 = vmul.f32 %v1414, %v1420
          %v1430 = vrot.slane %v1402, 6
          %v1431 = vrot.slane %v1403, 4
          %v1432 = vrot.slane %v1404, 2
          %v1433 = vrot.slane %v1406, 6
          %v1434 = vrot.slane %v1407, 4
          %vm1435 = vcmask 1041408
          %v1436 = vsel %vm1435, %v1401, %v1430
          %vm1437 = vcmask 1045508
          %v1438 = vsel %vm1437, %v1431, %v1432
          %v1439 = vsel %vm855, %v1436, %v1438
          %v1440 = vsel %vm1435, %v1405, %v1433
          %v1441 = vsel %vm855, %v1440, %v1434
          %v1444 = vadd.f32 %v1421, %v1439
          %v1445 = vadd.f32 %v1422, %v1441
          %vm1446 = vcmp.gt.f32.partialorder %v1444, 0.5
          %vm1447 = vcmp.gt.f32.partialorder %v1445, 0.5
          %v1448 = vsel %vm1446, 1, 0
          %v1449 = vsel %vm1447, 1, 0
          %v1450 = vcvt.s32.f32 %v1448
          %v1451 = vcvt.s32.f32 %v1449
          %1452 = vst [vmem:[%s1410] sm:$0xff] %v1444
          %1453 = vst [vmem:[%s1410 + $0x8] sm:$0x3f] %v1445
          %1454 = vst [vmem:[%s1416] sm:$0xff] %v1450
          %1455 = vst [vmem:[%s1416 + $0x8] sm:$0x3f] %v1451
          %v1456 = vld [vmem:[%s820] sm:$0x3]
          %v1457 = vld [vmem:[%s2] sm:$0xff]
          %v1458 = vld [vmem:[%s2 + $0x8] sm:$0xff]
          %v1459 = vld [vmem:[%s2 + $0x10] sm:$0xff]
          %v1460 = vld [vmem:[%s2 + $0x18] sm:$0xff]
          %v1461 = vld [vmem:[%s2 + $0x20] sm:$0xff]
          %v1462 = vld [vmem:[%s2 + $0x28] sm:$0xff]
          %v1463 = vld [vmem:[%s2 + $0x30] sm:$0xff]
          %v1464 = vld [vmem:[%s2 + $0x38] sm:$0xff]
          %v1465 = vld [vmem:[%s2 + $0x40] sm:$0xff]
          %v1466 = vld [vmem:[%s2 + $0x48] sm:$0xff]
          %v1467 = vld [vmem:[%s2 + $0x50] sm:$0xff]
          %v1468 = vld [vmem:[%s2 + $0x58] sm:$0xff]
          %v1469 = vld [vmem:[%s2 + $0x60] sm:$0xff]
          %v1470 = vld [vmem:[%s2 + $0x68] sm:$0xff]
          %v1471 = vld [vmem:[%s2 + $0x70] sm:$0xff]
          %v1472 = vld [vmem:[%s2 + $0x78] sm:$0xff]
          %v1473 = vld [vmem:[%s2 + $0x80] sm:$0xff]
          %v1474 = vld [vmem:[%s2 + $0x88] sm:$0xff]
          %v1475 = vld [vmem:[%s2 + $0x90] sm:$0xff]
          %v1476 = vld [vmem:[%s2 + $0x98] sm:$0xff]
          %v1477 = vld [vmem:[%s2 + $0xa0] sm:$0xff]
          %v1478 = vld [vmem:[%s2 + $0xa8] sm:$0xf]
          %v1479 = vld [vmem:[%s2 + $0xb0] sm:$0xf]
          %v1480 = vld [vmem:[%s2 + $0xb8] sm:$0xf]
          %v1481 = vld [vmem:[%s2 + $0xc0] sm:$0xf]
          %v1482 = vld [vmem:[%s2 + $0xc8] sm:$0xf]
          %v1483 = vld [vmem:[%s2 + $0xd0] sm:$0xf]
          %v1484 = vld [vmem:[%s2 + $0xd8] sm:$0xf]
          %v1485 = vld [vmem:[%s1183] sm:$0x3]
          %v1486 = vld [vmem:[%s822] sm:$0xff]
          %v1487 = vld [vmem:[%s822 + $0x8] sm:$0xff]
          %v1488 = vld [vmem:[%s822 + $0x10] sm:$0xff]
          %v1489 = vld [vmem:[%s822 + $0x18] sm:$0xff]
          %v1490 = vld [vmem:[%s822 + $0x20] sm:$0xff]
          %v1491 = vld [vmem:[%s822 + $0x28] sm:$0xff]
          %v1492 = vld [vmem:[%s822 + $0x30] sm:$0xff]
          %v1493 = vld [vmem:[%s822 + $0x38] sm:$0xff]
          %v1494 = vld [vmem:[%s822 + $0x40] sm:$0xff]
          %v1495 = vld [vmem:[%s822 + $0x48] sm:$0xff]
          %v1496 = vld [vmem:[%s822 + $0x50] sm:$0xff]
          %v1497 = vld [vmem:[%s822 + $0x58] sm:$0xff]
          %v1498 = vld [vmem:[%s822 + $0x60] sm:$0xff]
          %v1499 = vld [vmem:[%s822 + $0x68] sm:$0xff]
          %v1500 = vld [vmem:[%s822 + $0x70] sm:$0xff]
          %v1501 = vld [vmem:[%s822 + $0x78] sm:$0xff]
          %v1502 = vld [vmem:[%s822 + $0x80] sm:$0xff]
          %v1503 = vld [vmem:[%s822 + $0x88] sm:$0xff]
          %v1504 = vld [vmem:[%s822 + $0x90] sm:$0xff]
          %v1505 = vld [vmem:[%s822 + $0x98] sm:$0xff]
          %v1506 = vld [vmem:[%s822 + $0xa0] sm:$0xff]
          %v1507 = vld [vmem:[%s822 + $0xa8] sm:$0xf]
          %v1508 = vld [vmem:[%s822 + $0xb0] sm:$0xf]
          %v1509 = vld [vmem:[%s822 + $0xb8] sm:$0xf]
          %v1510 = vld [vmem:[%s822 + $0xc0] sm:$0xf]
          %v1511 = vld [vmem:[%s822 + $0xc8] sm:$0xf]
          %v1512 = vld [vmem:[%s822 + $0xd0] sm:$0xf]
          %v1513 = vld [vmem:[%s822 + $0xd8] sm:$0xf]
          %v1515 = vsel %vm851, %v1485, 0
          %v1518 = vsel %vm855, %v1507, 0
          %v1521 = vsel %vm855, %v1508, 0
          %v1524 = vsel %vm855, %v1509, 0
          %v1527 = vsel %vm855, %v1510, 0
          %v1530 = vsel %vm855, %v1511, 0
          %v1533 = vsel %vm855, %v1512, 0
          %v1536 = vsel %vm855, %v1513, 0
          %1538 = vmatpush.msra.mxu0 0.0
          %1539 = vmatpush.msra.mxu0 0.0
          %1540 = vmatpush.msra.mxu0 0.0
          %1541 = vmatpush.msra.mxu0 0.0
          %1542 = vmatpush.msra.mxu0 0.0
          %1543 = vmatpush.msra.mxu0 0.0
          %1544 = vmatpush.msra.mxu0 0.0
          %1545 = vmatpush.msra.mxu0 0.0
          %1546 = vmatpush.msra.mxu0 0.0
          %1547 = vmatpush.msra.mxu0 0.0
          %1548 = vmatpush.msra.mxu0 0.0
          %1549 = vmatpush.msra.mxu0 0.0
          %1550 = vmatpush.msra.mxu0 %v1518
          %1551 = vmatpush.msra.mxu0 %v1500
          %1552 = vmatpush.msra.mxu0 %v1493
          %1553 = vmatpush.msra.mxu0 %v1486
          %1554 = vmatmul.f32.gmra.mxu0 %v1515
          %v1555 = vpop.f32.mrf.mxu0
          %v1556 = vadd.f32 0.0, %v1555
          %1557 = vdwg.mxu0
          %1558 = vmatpush.msra.mxu0 0.0
          %1559 = vmatpush.msra.mxu0 0.0
          %1560 = vmatpush.msra.mxu0 0.0
          %1561 = vmatpush.msra.mxu0 0.0
          %1562 = vmatpush.msra.mxu0 0.0
          %1563 = vmatpush.msra.mxu0 0.0
          %1564 = vmatpush.msra.mxu0 0.0
          %1565 = vmatpush.msra.mxu0 0.0
          %1566 = vmatpush.msra.mxu0 0.0
          %1567 = vmatpush.msra.mxu0 0.0
          %1568 = vmatpush.msra.mxu0 0.0
          %1569 = vmatpush.msra.mxu0 0.0
          %1570 = vmatpush.msra.mxu0 %v1521
          %1571 = vmatpush.msra.mxu0 %v1501
          %1572 = vmatpush.msra.mxu0 %v1494
          %1573 = vmatpush.msra.mxu0 %v1487
          %1574 = vmatmul.f32.gmra.mxu0 %v1515
          %v1575 = vpop.f32.mrf.mxu0
          %v1576 = vadd.f32 0.0, %v1575
          %1577 = vdwg.mxu0
          %1578 = vmatpush.msra.mxu0 0.0
          %1579 = vmatpush.msra.mxu0 0.0
          %1580 = vmatpush.msra.mxu0 0.0
          %1581 = vmatpush.msra.mxu0 0.0
          %1582 = vmatpush.msra.mxu0 0.0
          %1583 = vmatpush.msra.mxu0 0.0
          %1584 = vmatpush.msra.mxu0 0.0
          %1585 = vmatpush.msra.mxu0 0.0
          %1586 = vmatpush.msra.mxu0 0.0
          %1587 = vmatpush.msra.mxu0 0.0
          %1588 = vmatpush.msra.mxu0 0.0
          %1589 = vmatpush.msra.mxu0 0.0
          %1590 = vmatpush.msra.mxu0 %v1524
          %1591 = vmatpush.msra.mxu0 %v1502
          %1592 = vmatpush.msra.mxu0 %v1495
          %1593 = vmatpush.msra.mxu0 %v1488
          %1594 = vmatmul.f32.gmra.mxu0 %v1515
          %v1595 = vpop.f32.mrf.mxu0
          %v1596 = vadd.f32 0.0, %v1595
          %1597 = vdwg.mxu0
          %1598 = vmatpush.msra.mxu0 0.0
          %1599 = vmatpush.msra.mxu0 0.0
          %1600 = vmatpush.msra.mxu0 0.0
          %1601 = vmatpush.msra.mxu0 0.0
          %1602 = vmatpush.msra.mxu0 0.0
          %1603 = vmatpush.msra.mxu0 0.0
          %1604 = vmatpush.msra.mxu0 0.0
          %1605 = vmatpush.msra.mxu0 0.0
          %1606 = vmatpush.msra.mxu0 0.0
          %1607 = vmatpush.msra.mxu0 0.0
          %1608 = vmatpush.msra.mxu0 0.0
          %1609 = vmatpush.msra.mxu0 0.0
          %1610 = vmatpush.msra.mxu0 %v1527
          %1611 = vmatpush.msra.mxu0 %v1503
          %1612 = vmatpush.msra.mxu0 %v1496
          %1613 = vmatpush.msra.mxu0 %v1489
          %1614 = vmatmul.f32.gmra.mxu0 %v1515
          %v1615 = vpop.f32.mrf.mxu0
          %v1616 = vadd.f32 0.0, %v1615
          %1617 = vdwg.mxu0
          %1618 = vmatpush.msra.mxu0 0.0
          %1619 = vmatpush.msra.mxu0 0.0
          %1620 = vmatpush.msra.mxu0 0.0
          %1621 = vmatpush.msra.mxu0 0.0
          %1622 = vmatpush.msra.mxu0 0.0
          %1623 = vmatpush.msra.mxu0 0.0
          %1624 = vmatpush.msra.mxu0 0.0
          %1625 = vmatpush.msra.mxu0 0.0
          %1626 = vmatpush.msra.mxu0 0.0
          %1627 = vmatpush.msra.mxu0 0.0
          %1628 = vmatpush.msra.mxu0 0.0
          %1629 = vmatpush.msra.mxu0 0.0
          %1630 = vmatpush.msra.mxu0 %v1530
          %1631 = vmatpush.msra.mxu0 %v1504
          %1632 = vmatpush.msra.mxu0 %v1497
          %1633 = vmatpush.msra.mxu0 %v1490
          %1634 = vmatmul.f32.gmra.mxu0 %v1515
          %v1635 = vpop.f32.mrf.mxu0
          %v1636 = vadd.f32 0.0, %v1635
          %1637 = vdwg.mxu0
          %1638 = vmatpush.msra.mxu0 0.0
          %1639 = vmatpush.msra.mxu0 0.0
          %1640 = vmatpush.msra.mxu0 0.0
          %1641 = vmatpush.msra.mxu0 0.0
          %1642 = vmatpush.msra.mxu0 0.0
          %1643 = vmatpush.msra.mxu0 0.0
          %1644 = vmatpush.msra.mxu0 0.0
          %1645 = vmatpush.msra.mxu0 0.0
          %1646 = vmatpush.msra.mxu0 0.0
          %1647 = vmatpush.msra.mxu0 0.0
          %1648 = vmatpush.msra.mxu0 0.0
          %1649 = vmatpush.msra.mxu0 0.0
          %1650 = vmatpush.msra.mxu0 %v1533
          %1651 = vmatpush.msra.mxu0 %v1505
          %1652 = vmatpush.msra.mxu0 %v1498
          %1653 = vmatpush.msra.mxu0 %v1491
          %1654 = vmatmul.f32.gmra.mxu0 %v1515
          %v1655 = vpop.f32.mrf.mxu0
          %v1656 = vadd.f32 0.0, %v1655
          %1657 = vdwg.mxu0
          %1658 = vmatpush.msra.mxu0 0.0
          %1659 = vmatpush.msra.mxu0 0.0
          %1660 = vmatpush.msra.mxu0 0.0
          %1661 = vmatpush.msra.mxu0 0.0
          %1662 = vmatpush.msra.mxu0 0.0
          %1663 = vmatpush.msra.mxu0 0.0
          %1664 = vmatpush.msra.mxu0 0.0
          %1665 = vmatpush.msra.mxu0 0.0
          %1666 = vmatpush.msra.mxu0 0.0
          %1667 = vmatpush.msra.mxu0 0.0
          %1668 = vmatpush.msra.mxu0 0.0
          %1669 = vmatpush.msra.mxu0 0.0
          %1670 = vmatpush.msra.mxu0 %v1536
          %1671 = vmatpush.msra.mxu0 %v1506
          %1672 = vmatpush.msra.mxu0 %v1499
          %1673 = vmatpush.msra.mxu0 %v1492
          %1674 = vmatmul.f32.gmra.mxu0 %v1515
          %v1675 = vpop.f32.mrf.mxu0
          %v1676 = vadd.f32 0.0, %v1675
          %1677 = vdwg.mxu0
          %v1679 = vsel %vm851, %v1456, 0
          %v1682 = vsel %vm855, %v1478, 0
          %v1685 = vsel %vm855, %v1479, 0
          %v1688 = vsel %vm855, %v1480, 0
          %v1691 = vsel %vm855, %v1481, 0
          %v1694 = vsel %vm855, %v1482, 0
          %v1697 = vsel %vm855, %v1483, 0
          %v1700 = vsel %vm855, %v1484, 0
          %1702 = vmatpush.msra.mxu0 0.0
          %1703 = vmatpush.msra.mxu0 0.0
          %1704 = vmatpush.msra.mxu0 0.0
          %1705 = vmatpush.msra.mxu0 0.0
          %1706 = vmatpush.msra.mxu0 0.0
          %1707 = vmatpush.msra.mxu0 0.0
          %1708 = vmatpush.msra.mxu0 0.0
          %1709 = vmatpush.msra.mxu0 0.0
          %1710 = vmatpush.msra.mxu0 0.0
          %1711 = vmatpush.msra.mxu0 0.0
          %1712 = vmatpush.msra.mxu0 0.0
          %1713 = vmatpush.msra.mxu0 0.0
          %1714 = vmatpush.msra.mxu0 %v1682
          %1715 = vmatpush.msra.mxu0 %v1471
          %1716 = vmatpush.msra.mxu0 %v1464
          %1717 = vmatpush.msra.mxu0 %v1457
          %1718 = vmatmul.f32.gmra.mxu0 %v1679
          %v1719 = vpop.f32.mrf.mxu0
          %v1720 = vadd.f32 %v1556, %v1719
          %1721 = vdwg.mxu0
          %1722 = vmatpush.msra.mxu0 0.0
          %1723 = vmatpush.msra.mxu0 0.0
          %1724 = vmatpush.msra.mxu0 0.0
          %1725 = vmatpush.msra.mxu0 0.0
          %1726 = vmatpush.msra.mxu0 0.0
          %1727 = vmatpush.msra.mxu0 0.0
          %1728 = vmatpush.msra.mxu0 0.0
          %1729 = vmatpush.msra.mxu0 0.0
          %1730 = vmatpush.msra.mxu0 0.0
          %1731 = vmatpush.msra.mxu0 0.0
          %1732 = vmatpush.msra.mxu0 0.0
          %1733 = vmatpush.msra.mxu0 0.0
          %1734 = vmatpush.msra.mxu0 %v1685
          %1735 = vmatpush.msra.mxu0 %v1472
          %1736 = vmatpush.msra.mxu0 %v1465
          %1737 = vmatpush.msra.mxu0 %v1458
          %1738 = vmatmul.f32.gmra.mxu0 %v1679
          %v1739 = vpop.f32.mrf.mxu0
          %v1740 = vadd.f32 %v1576, %v1739
          %1741 = vdwg.mxu0
          %1742 = vmatpush.msra.mxu0 0.0
          %1743 = vmatpush.msra.mxu0 0.0
          %1744 = vmatpush.msra.mxu0 0.0
          %1745 = vmatpush.msra.mxu0 0.0
          %1746 = vmatpush.msra.mxu0 0.0
          %1747 = vmatpush.msra.mxu0 0.0
          %1748 = vmatpush.msra.mxu0 0.0
          %1749 = vmatpush.msra.mxu0 0.0
          %1750 = vmatpush.msra.mxu0 0.0
          %1751 = vmatpush.msra.mxu0 0.0
          %1752 = vmatpush.msra.mxu0 0.0
          %1753 = vmatpush.msra.mxu0 0.0
          %1754 = vmatpush.msra.mxu0 %v1688
          %1755 = vmatpush.msra.mxu0 %v1473
          %1756 = vmatpush.msra.mxu0 %v1466
          %1757 = vmatpush.msra.mxu0 %v1459
          %1758 = vmatmul.f32.gmra.mxu0 %v1679
          %v1759 = vpop.f32.mrf.mxu0
          %v1760 = vadd.f32 %v1596, %v1759
          %1761 = vdwg.mxu0
          %1762 = vmatpush.msra.mxu0 0.0
          %1763 = vmatpush.msra.mxu0 0.0
          %1764 = vmatpush.msra.mxu0 0.0
          %1765 = vmatpush.msra.mxu0 0.0
          %1766 = vmatpush.msra.mxu0 0.0
          %1767 = vmatpush.msra.mxu0 0.0
          %1768 = vmatpush.msra.mxu0 0.0
          %1769 = vmatpush.msra.mxu0 0.0
          %1770 = vmatpush.msra.mxu0 0.0
          %1771 = vmatpush.msra.mxu0 0.0
          %1772 = vmatpush.msra.mxu0 0.0
          %1773 = vmatpush.msra.mxu0 0.0
          %1774 = vmatpush.msra.mxu0 %v1691
          %1775 = vmatpush.msra.mxu0 %v1474
          %1776 = vmatpush.msra.mxu0 %v1467
          %1777 = vmatpush.msra.mxu0 %v1460
          %1778 = vmatmul.f32.gmra.mxu0 %v1679
          %v1779 = vpop.f32.mrf.mxu0
          %v1780 = vadd.f32 %v1616, %v1779
          %1781 = vdwg.mxu0
          %1782 = vmatpush.msra.mxu0 0.0
          %1783 = vmatpush.msra.mxu0 0.0
          %1784 = vmatpush.msra.mxu0 0.0
          %1785 = vmatpush.msra.mxu0 0.0
          %1786 = vmatpush.msra.mxu0 0.0
          %1787 = vmatpush.msra.mxu0 0.0
          %1788 = vmatpush.msra.mxu0 0.0
          %1789 = vmatpush.msra.mxu0 0.0
          %1790 = vmatpush.msra.mxu0 0.0
          %1791 = vmatpush.msra.mxu0 0.0
          %1792 = vmatpush.msra.mxu0 0.0
          %1793 = vmatpush.msra.mxu0 0.0
          %1794 = vmatpush.msra.mxu0 %v1694
          %1795 = vmatpush.msra.mxu0 %v1475
          %1796 = vmatpush.msra.mxu0 %v1468
          %1797 = vmatpush.msra.mxu0 %v1461
          %1798 = vmatmul.f32.gmra.mxu0 %v1679
          %v1799 = vpop.f32.mrf.mxu0
          %v1800 = vadd.f32 %v1636, %v1799
          %1801 = vdwg.mxu0
          %1802 = vmatpush.msra.mxu0 0.0
          %1803 = vmatpush.msra.mxu0 0.0
          %1804 = vmatpush.msra.mxu0 0.0
          %1805 = vmatpush.msra.mxu0 0.0
          %1806 = vmatpush.msra.mxu0 0.0
          %1807 = vmatpush.msra.mxu0 0.0
          %1808 = vmatpush.msra.mxu0 0.0
          %1809 = vmatpush.msra.mxu0 0.0
          %1810 = vmatpush.msra.mxu0 0.0
          %1811 = vmatpush.msra.mxu0 0.0
          %1812 = vmatpush.msra.mxu0 0.0
          %1813 = vmatpush.msra.mxu0 0.0
          %1814 = vmatpush.msra.mxu0 %v1697
          %1815 = vmatpush.msra.mxu0 %v1476
          %1816 = vmatpush.msra.mxu0 %v1469
          %1817 = vmatpush.msra.mxu0 %v1462
          %1818 = vmatmul.f32.gmra.mxu0 %v1679
          %v1819 = vpop.f32.mrf.mxu0
          %v1820 = vadd.f32 %v1656, %v1819
          %1821 = vdwg.mxu0
          %1822 = vmatpush.msra.mxu0 0.0
          %1823 = vmatpush.msra.mxu0 0.0
          %1824 = vmatpush.msra.mxu0 0.0
          %1825 = vmatpush.msra.mxu0 0.0
          %1826 = vmatpush.msra.mxu0 0.0
          %1827 = vmatpush.msra.mxu0 0.0
          %1828 = vmatpush.msra.mxu0 0.0
          %1829 = vmatpush.msra.mxu0 0.0
          %1830 = vmatpush.msra.mxu0 0.0
          %1831 = vmatpush.msra.mxu0 0.0
          %1832 = vmatpush.msra.mxu0 0.0
          %1833 = vmatpush.msra.mxu0 0.0
          %1834 = vmatpush.msra.mxu0 %v1700
          %1835 = vmatpush.msra.mxu0 %v1477
          %1836 = vmatpush.msra.mxu0 %v1470
          %1837 = vmatpush.msra.mxu0 %v1463
          %1838 = vmatmul.f32.gmra.mxu0 %v1679
          %v1839 = vpop.f32.mrf.mxu0
          %v1840 = vadd.f32 %v1676, %v1839
          %1841 = vdwg.mxu0
          %s1842 = sadd.s32 %s786, 3
          %s1843 = smul.u32 %s1842, 2
          %s1844 = scalar_lea.vmem [#allocation2], %s1843
          %v1845 = vld [vmem:[%s1844] sm:$0x3]
          %v1846 = vld [vmem:[%s1185] sm:$0xff]
          %v1847 = vld [vmem:[%s1185 + $0x8] sm:$0xff]
          %v1848 = vld [vmem:[%s1185 + $0x10] sm:$0xff]
          %v1849 = vld [vmem:[%s1185 + $0x18] sm:$0xff]
          %v1850 = vld [vmem:[%s1185 + $0x20] sm:$0xff]
          %v1851 = vld [vmem:[%s1185 + $0x28] sm:$0xff]
          %v1852 = vld [vmem:[%s1185 + $0x30] sm:$0xff]
          %v1853 = vld [vmem:[%s1185 + $0x38] sm:$0xff]
          %v1854 = vld [vmem:[%s1185 + $0x40] sm:$0xff]
          %v1855 = vld [vmem:[%s1185 + $0x48] sm:$0xff]
          %v1856 = vld [vmem:[%s1185 + $0x50] sm:$0xff]
          %v1857 = vld [vmem:[%s1185 + $0x58] sm:$0xff]
          %v1858 = vld [vmem:[%s1185 + $0x60] sm:$0xff]
          %v1859 = vld [vmem:[%s1185 + $0x68] sm:$0xff]
          %v1860 = vld [vmem:[%s1185 + $0x70] sm:$0xff]
          %v1861 = vld [vmem:[%s1185 + $0x78] sm:$0xff]
          %v1862 = vld [vmem:[%s1185 + $0x80] sm:$0xff]
          %v1863 = vld [vmem:[%s1185 + $0x88] sm:$0xff]
          %v1864 = vld [vmem:[%s1185 + $0x90] sm:$0xff]
          %v1865 = vld [vmem:[%s1185 + $0x98] sm:$0xff]
          %v1866 = vld [vmem:[%s1185 + $0xa0] sm:$0xff]
          %v1867 = vld [vmem:[%s1185 + $0xa8] sm:$0xf]
          %v1868 = vld [vmem:[%s1185 + $0xb0] sm:$0xf]
          %v1869 = vld [vmem:[%s1185 + $0xb8] sm:$0xf]
          %v1870 = vld [vmem:[%s1185 + $0xc0] sm:$0xf]
          %v1871 = vld [vmem:[%s1185 + $0xc8] sm:$0xf]
          %v1872 = vld [vmem:[%s1185 + $0xd0] sm:$0xf]
          %v1873 = vld [vmem:[%s1185 + $0xd8] sm:$0xf]
          %v1875 = vsel %vm851, %v1845, 0
          %v1878 = vsel %vm855, %v1867, 0
          %v1881 = vsel %vm855, %v1868, 0
          %v1884 = vsel %vm855, %v1869, 0
          %v1887 = vsel %vm855, %v1870, 0
          %v1890 = vsel %vm855, %v1871, 0
          %v1893 = vsel %vm855, %v1872, 0
          %v1896 = vsel %vm855, %v1873, 0
          %1898 = vmatpush.msra.mxu0 0.0
          %1899 = vmatpush.msra.mxu0 0.0
          %1900 = vmatpush.msra.mxu0 0.0
          %1901 = vmatpush.msra.mxu0 0.0
          %1902 = vmatpush.msra.mxu0 0.0
          %1903 = vmatpush.msra.mxu0 0.0
          %1904 = vmatpush.msra.mxu0 0.0
          %1905 = vmatpush.msra.mxu0 0.0
          %1906 = vmatpush.msra.mxu0 0.0
          %1907 = vmatpush.msra.mxu0 0.0
          %1908 = vmatpush.msra.mxu0 0.0
          %1909 = vmatpush.msra.mxu0 0.0
          %1910 = vmatpush.msra.mxu0 %v1878
          %1911 = vmatpush.msra.mxu0 %v1860
          %1912 = vmatpush.msra.mxu0 %v1853
          %1913 = vmatpush.msra.mxu0 %v1846
          %1914 = vmatmul.f32.gmra.mxu0 %v1875
          %v1915 = vpop.f32.mrf.mxu0
          %v1916 = vadd.f32 0.0, %v1915
          %1917 = vdwg.mxu0
          %1918 = vmatpush.msra.mxu0 0.0
          %1919 = vmatpush.msra.mxu0 0.0
          %1920 = vmatpush.msra.mxu0 0.0
          %1921 = vmatpush.msra.mxu0 0.0
          %1922 = vmatpush.msra.mxu0 0.0
          %1923 = vmatpush.msra.mxu0 0.0
          %1924 = vmatpush.msra.mxu0 0.0
          %1925 = vmatpush.msra.mxu0 0.0
          %1926 = vmatpush.msra.mxu0 0.0
          %1927 = vmatpush.msra.mxu0 0.0
          %1928 = vmatpush.msra.mxu0 0.0
          %1929 = vmatpush.msra.mxu0 0.0
          %1930 = vmatpush.msra.mxu0 %v1881
          %1931 = vmatpush.msra.mxu0 %v1861
          %1932 = vmatpush.msra.mxu0 %v1854
          %1933 = vmatpush.msra.mxu0 %v1847
          %1934 = vmatmul.f32.gmra.mxu0 %v1875
          %v1935 = vpop.f32.mrf.mxu0
          %v1936 = vadd.f32 0.0, %v1935
          %1937 = vdwg.mxu0
          %1938 = vmatpush.msra.mxu0 0.0
          %1939 = vmatpush.msra.mxu0 0.0
          %1940 = vmatpush.msra.mxu0 0.0
          %1941 = vmatpush.msra.mxu0 0.0
          %1942 = vmatpush.msra.mxu0 0.0
          %1943 = vmatpush.msra.mxu0 0.0
          %1944 = vmatpush.msra.mxu0 0.0
          %1945 = vmatpush.msra.mxu0 0.0
          %1946 = vmatpush.msra.mxu0 0.0
          %1947 = vmatpush.msra.mxu0 0.0
          %1948 = vmatpush.msra.mxu0 0.0
          %1949 = vmatpush.msra.mxu0 0.0
          %1950 = vmatpush.msra.mxu0 %v1884
          %1951 = vmatpush.msra.mxu0 %v1862
          %1952 = vmatpush.msra.mxu0 %v1855
          %1953 = vmatpush.msra.mxu0 %v1848
          %1954 = vmatmul.f32.gmra.mxu0 %v1875
          %v1955 = vpop.f32.mrf.mxu0
          %v1956 = vadd.f32 0.0, %v1955
          %1957 = vdwg.mxu0
          %1958 = vmatpush.msra.mxu0 0.0
          %1959 = vmatpush.msra.mxu0 0.0
          %1960 = vmatpush.msra.mxu0 0.0
          %1961 = vmatpush.msra.mxu0 0.0
          %1962 = vmatpush.msra.mxu0 0.0
          %1963 = vmatpush.msra.mxu0 0.0
          %1964 = vmatpush.msra.mxu0 0.0
          %1965 = vmatpush.msra.mxu0 0.0
          %1966 = vmatpush.msra.mxu0 0.0
          %1967 = vmatpush.msra.mxu0 0.0
          %1968 = vmatpush.msra.mxu0 0.0
          %1969 = vmatpush.msra.mxu0 0.0
          %1970 = vmatpush.msra.mxu0 %v1887
          %1971 = vmatpush.msra.mxu0 %v1863
          %1972 = vmatpush.msra.mxu0 %v1856
          %1973 = vmatpush.msra.mxu0 %v1849
          %1974 = vmatmul.f32.gmra.mxu0 %v1875
          %v1975 = vpop.f32.mrf.mxu0
          %v1976 = vadd.f32 0.0, %v1975
          %1977 = vdwg.mxu0
          %1978 = vmatpush.msra.mxu0 0.0
          %1979 = vmatpush.msra.mxu0 0.0
          %1980 = vmatpush.msra.mxu0 0.0
          %1981 = vmatpush.msra.mxu0 0.0
          %1982 = vmatpush.msra.mxu0 0.0
          %1983 = vmatpush.msra.mxu0 0.0
          %1984 = vmatpush.msra.mxu0 0.0
          %1985 = vmatpush.msra.mxu0 0.0
          %1986 = vmatpush.msra.mxu0 0.0
          %1987 = vmatpush.msra.mxu0 0.0
          %1988 = vmatpush.msra.mxu0 0.0
          %1989 = vmatpush.msra.mxu0 0.0
          %1990 = vmatpush.msra.mxu0 %v1890
          %1991 = vmatpush.msra.mxu0 %v1864
          %1992 = vmatpush.msra.mxu0 %v1857
          %1993 = vmatpush.msra.mxu0 %v1850
          %1994 = vmatmul.f32.gmra.mxu0 %v1875
          %v1995 = vpop.f32.mrf.mxu0
          %v1996 = vadd.f32 0.0, %v1995
          %1997 = vdwg.mxu0
          %1998 = vmatpush.msra.mxu0 0.0
          %1999 = vmatpush.msra.mxu0 0.0
          %2000 = vmatpush.msra.mxu0 0.0
          %2001 = vmatpush.msra.mxu0 0.0
          %2002 = vmatpush.msra.mxu0 0.0
          %2003 = vmatpush.msra.mxu0 0.0
          %2004 = vmatpush.msra.mxu0 0.0
          %2005 = vmatpush.msra.mxu0 0.0
          %2006 = vmatpush.msra.mxu0 0.0
          %2007 = vmatpush.msra.mxu0 0.0
          %2008 = vmatpush.msra.mxu0 0.0
          %2009 = vmatpush.msra.mxu0 0.0
          %2010 = vmatpush.msra.mxu0 %v1893
          %2011 = vmatpush.msra.mxu0 %v1865
          %2012 = vmatpush.msra.mxu0 %v1858
          %2013 = vmatpush.msra.mxu0 %v1851
          %2014 = vmatmul.f32.gmra.mxu0 %v1875
          %v2015 = vpop.f32.mrf.mxu0
          %v2016 = vadd.f32 0.0, %v2015
          %2017 = vdwg.mxu0
          %2018 = vmatpush.msra.mxu0 0.0
          %2019 = vmatpush.msra.mxu0 0.0
          %2020 = vmatpush.msra.mxu0 0.0
          %2021 = vmatpush.msra.mxu0 0.0
          %2022 = vmatpush.msra.mxu0 0.0
          %2023 = vmatpush.msra.mxu0 0.0
          %2024 = vmatpush.msra.mxu0 0.0
          %2025 = vmatpush.msra.mxu0 0.0
          %2026 = vmatpush.msra.mxu0 0.0
          %2027 = vmatpush.msra.mxu0 0.0
          %2028 = vmatpush.msra.mxu0 0.0
          %2029 = vmatpush.msra.mxu0 0.0
          %2030 = vmatpush.msra.mxu0 %v1896
          %2031 = vmatpush.msra.mxu0 %v1866
          %2032 = vmatpush.msra.mxu0 %v1859
          %2033 = vmatpush.msra.mxu0 %v1852
          %2034 = vmatmul.f32.gmra.mxu0 %v1875
          %v2035 = vpop.f32.mrf.mxu0
          %v2036 = vadd.f32 0.0, %v2035
          %2037 = vdwg.mxu0
          %v2038 = vadd.f32 %v1720, %v1916
          %v2039 = vadd.f32 %v1740, %v1936
          %v2040 = vadd.f32 %v1760, %v1956
          %v2041 = vadd.f32 %v1780, %v1976
          %v2042 = vadd.f32 %v1800, %v1996
          %v2043 = vadd.f32 %v1820, %v2016
          %v2044 = vadd.f32 %v1840, %v2036
          %v2045 = vld [vmem:[%s3] sm:$0xff]
          %v2047 = vperm.slane %v2045, 0
          %v2048 = vperm.slane %v2045, 1
          %v2049 = vperm.slane %v2045, 2
          %v2050 = vperm.slane %v2045, 3
          %v2051 = vperm.slane %v2045, 4
          %v2052 = vperm.slane %v2045, 5
          %v2053 = vperm.slane %v2045, 6
          %v2061 = vadd.f32 %v2038, %v2047
          %v2062 = vadd.f32 %v2039, %v2048
          %v2063 = vadd.f32 %v2040, %v2049
          %v2064 = vadd.f32 %v2041, %v2050
          %v2065 = vadd.f32 %v2042, %v2051
          %v2066 = vadd.f32 %v2043, %v2052
          %v2067 = vadd.f32 %v2044, %v2053
          %s2068 = smul.u32 %s818, 7
          %s2069 = smul.addr %s2068, 2
          %s2070 = scalar_lea.vmem [#allocation3], %s2069
          %v2071 = vld [vmem:[%s2070] sm:$0xff]
          %v2072 = vld [vmem:[%s2070 + $0x8] sm:$0x3f]
          %v2073 = vmul.f32 %v2071, 0.2
          %v2074 = vmul.f32 %v2072, 0.2
          %s2075 = smul.addr %s2068, 2
          %s2076 = scalar_lea.vmem [#allocation4], %s2075
          %v2077 = vld [vmem:[%s2076] sm:$0xff]
          %v2078 = vld [vmem:[%s2076 + $0x8] sm:$0x3f]
          %v2079 = vsub.f32 1.0, %v2077
          %v2080 = vsub.f32 1.0, %v2078
          %v2081 = vmul.f32 %v2073, %v2079
          %v2082 = vmul.f32 %v2074, %v2080
          %v2090 = vrot.slane %v2062, 6
          %v2091 = vrot.slane %v2063, 4
          %v2092 = vrot.slane %v2064, 2
          %v2093 = vrot.slane %v2066, 6
          %v2094 = vrot.slane %v2067, 4
          %v2095 = vsel %vm1435, %v2061, %v2090
          %v2096 = vsel %vm1437, %v2091, %v2092
          %v2097 = vsel %vm855, %v2095, %v2096
          %v2098 = vsel %vm1435, %v2065, %v2093
          %v2099 = vsel %vm855, %v2098, %v2094
          %v2102 = vadd.f32 %v2081, %v2097
          %v2103 = vadd.f32 %v2082, %v2099
          %vm2104 = vcmp.gt.f32.partialorder %v2102, 0.5
          %vm2105 = vcmp.gt.f32.partialorder %v2103, 0.5
          %v2106 = vsel %vm2104, 1, 0
          %v2107 = vsel %vm2105, 1, 0
          %v2108 = vcvt.s32.f32 %v2106
          %v2109 = vcvt.s32.f32 %v2107
          %2110 = vst [vmem:[%s2070] sm:$0xff] %v2102
          %2111 = vst [vmem:[%s2070 + $0x8] sm:$0x3f] %v2103
          %2112 = vst [vmem:[%s2076] sm:$0xff] %v2108
          %2113 = vst [vmem:[%s2076 + $0x8] sm:$0x3f] %v2109
          %v2114 = vadd.f32 %v1450, %v2108
          %v2115 = vadd.f32 %v1451, %v2109
          %s2116 = sadd.s32 %s781, 1
          %s2117 = smul.u32 %s2116, 7
          %s2118 = smul.addr %s2117, 2
          %s2119 = scalar_lea.vmem [#allocation5], %s2118
          %2120 = vst [vmem:[%s2119] sm:$0xff] %v2114
          %2121 = vst [vmem:[%s2119 + $0x8] sm:$0x3f] %v2115
        $region69: #{scnn_forward.1} parent=59 // loop_footer
          %s785 = sadd.s32 1, %s781
        $region70: #{scnn_forward.1} parent=59 // loop_footer_branch
          %780 = sbr.rel target = $region66
        $region71: #{scnn_forward.1} parent=59 // loop_exit
          _
        loop: start=0, step=1, limit=14
        $region72: #{scnn_forward.1} parent=59 // loop_pre_header
          _
        $region73: #{scnn_forward.1} parent=59 // loop_header
          %s2123 = sphi 0, %s2127
          %p2124 = scmp.ge.s32.totalorder %s2123, 14
          %v2128 = vphi 0.0, %v5432
        $region74: #{scnn_forward.1} parent=59 // loop_header_branch
          %2126 = sbr.rel (%p2124) target = $region78
        $region75: #{scnn_forward.1} parent=59 // loop_body
          %s2129 = smul.u32 %s2123, 7
          %s2130 = smul.addr %s2129, 2
          %s2131 = scalar_lea.vmem [#allocation5], %s2130
          %v2132 = vld [vmem:[%s2131] sm:$0xff]
          %v2133 = vld [vmem:[%s2131 + $0x8] sm:$0x3f]
          %v2134 = vld [vmem:[%s4] sm:$0xff]
          %v2135 = vld [vmem:[%s4 + $0x8] sm:$0xff]
          %v2136 = vld [vmem:[%s4 + $0x10] sm:$0xff]
          %v2137 = vld [vmem:[%s4 + $0x18] sm:$0xff]
          %v2138 = vld [vmem:[%s4 + $0x20] sm:$0xff]
          %v2139 = vld [vmem:[%s4 + $0x28] sm:$0xff]
          %v2140 = vld [vmem:[%s4 + $0x30] sm:$0xff]
          %v2141 = vld [vmem:[%s4 + $0x38] sm:$0xff]
          %v2142 = vld [vmem:[%s4 + $0x40] sm:$0xff]
          %v2143 = vld [vmem:[%s4 + $0x48] sm:$0xff]
          %v2144 = vld [vmem:[%s4 + $0x50] sm:$0xff]
          %v2145 = vld [vmem:[%s4 + $0x58] sm:$0xff]
          %v2146 = vld [vmem:[%s4 + $0x60] sm:$0xff]
          %v2147 = vld [vmem:[%s4 + $0x68] sm:$0xff]
          %v2148 = vld [vmem:[%s4 + $0x70] sm:$0xff]
          %v2149 = vld [vmem:[%s4 + $0x78] sm:$0xff]
          %v2150 = vld [vmem:[%s4 + $0x80] sm:$0xff]
          %v2151 = vld [vmem:[%s4 + $0x88] sm:$0xff]
          %v2152 = vld [vmem:[%s4 + $0x90] sm:$0xff]
          %v2153 = vld [vmem:[%s4 + $0x98] sm:$0xff]
          %v2154 = vld [vmem:[%s4 + $0xa0] sm:$0xff]
          %v2155 = vld [vmem:[%s4 + $0xa8] sm:$0xff]
          %v2156 = vld [vmem:[%s4 + $0xb0] sm:$0xff]
          %v2157 = vld [vmem:[%s4 + $0xb8] sm:$0xff]
          %v2158 = vld [vmem:[%s4 + $0xc0] sm:$0xff]
          %v2159 = vld [vmem:[%s4 + $0xc8] sm:$0xff]
          %v2160 = vld [vmem:[%s4 + $0xd0] sm:$0xff]
          %v2161 = vld [vmem:[%s4 + $0xd8] sm:$0xff]
          %v2162 = vld [vmem:[%s4 + $0xe0] sm:$0xff]
          %v2163 = vld [vmem:[%s4 + $0xe8] sm:$0xff]
          %v2164 = vld [vmem:[%s4 + $0xf0] sm:$0xff]
          %v2165 = vld [vmem:[%s4 + $0xf8] sm:$0xff]
          %v2166 = vld [vmem:[%s4 + $0x100] sm:$0xff]
          %v2167 = vld [vmem:[%s4 + $0x108] sm:$0xff]
          %v2168 = vld [vmem:[%s4 + $0x110] sm:$0xff]
          %v2169 = vld [vmem:[%s4 + $0x118] sm:$0xff]
          %v2170 = vld [vmem:[%s4 + $0x120] sm:$0xff]
          %v2171 = vld [vmem:[%s4 + $0x128] sm:$0xff]
          %v2172 = vld [vmem:[%s4 + $0x130] sm:$0xff]
          %v2173 = vld [vmem:[%s4 + $0x138] sm:$0xff]
          %v2174 = vld [vmem:[%s4 + $0x140] sm:$0xff]
          %v2175 = vld [vmem:[%s4 + $0x148] sm:$0xff]
          %v2176 = vld [vmem:[%s4 + $0x150] sm:$0xff]
          %v2177 = vld [vmem:[%s4 + $0x158] sm:$0xff]
          %v2178 = vld [vmem:[%s4 + $0x160] sm:$0xff]
          %v2179 = vld [vmem:[%s4 + $0x168] sm:$0xff]
          %v2180 = vld [vmem:[%s4 + $0x170] sm:$0xff]
          %v2181 = vld [vmem:[%s4 + $0x178] sm:$0xff]
          %v2182 = vld [vmem:[%s4 + $0x180] sm:$0xff]
          %v2183 = vld [vmem:[%s4 + $0x188] sm:$0xff]
          %v2184 = vld [vmem:[%s4 + $0x190] sm:$0xff]
          %v2185 = vld [vmem:[%s4 + $0x198] sm:$0xff]
          %v2186 = vld [vmem:[%s4 + $0x1a0] sm:$0xff]
          %v2187 = vld [vmem:[%s4 + $0x1a8] sm:$0xff]
          %v2188 = vld [vmem:[%s4 + $0x1b0] sm:$0xff]
          %v2189 = vld [vmem:[%s4 + $0x1b8] sm:$0xff]
          %v2190 = vld [vmem:[%s4 + $0x1c0] sm:$0xff]
          %v2191 = vld [vmem:[%s4 + $0x1c8] sm:$0xff]
          %v2192 = vld [vmem:[%s4 + $0x1d0] sm:$0xff]
          %v2193 = vld [vmem:[%s4 + $0x1d8] sm:$0xff]
          %v2194 = vld [vmem:[%s4 + $0x1e0] sm:$0xff]
          %v2195 = vld [vmem:[%s4 + $0x1e8] sm:$0xff]
          %v2196 = vld [vmem:[%s4 + $0x1f0] sm:$0xff]
          %v2197 = vld [vmem:[%s4 + $0x1f8] sm:$0xff]
          %v2198 = vld [vmem:[%s4 + $0x200] sm:$0xff]
          %v2199 = vld [vmem:[%s4 + $0x208] sm:$0xff]
          %v2200 = vld [vmem:[%s4 + $0x210] sm:$0xff]
          %v2201 = vld [vmem:[%s4 + $0x218] sm:$0xff]
          %v2202 = vld [vmem:[%s4 + $0x220] sm:$0xff]
          %v2203 = vld [vmem:[%s4 + $0x228] sm:$0xff]
          %v2204 = vld [vmem:[%s4 + $0x230] sm:$0xff]
          %v2205 = vld [vmem:[%s4 + $0x238] sm:$0xff]
          %v2206 = vld [vmem:[%s4 + $0x240] sm:$0xff]
          %v2207 = vld [vmem:[%s4 + $0x248] sm:$0xff]
          %v2208 = vld [vmem:[%s4 + $0x250] sm:$0xff]
          %v2209 = vld [vmem:[%s4 + $0x258] sm:$0xff]
          %v2210 = vld [vmem:[%s4 + $0x260] sm:$0xff]
          %v2211 = vld [vmem:[%s4 + $0x268] sm:$0xff]
          %v2212 = vld [vmem:[%s4 + $0x270] sm:$0xff]
          %v2213 = vld [vmem:[%s4 + $0x278] sm:$0xff]
          %v2214 = vld [vmem:[%s4 + $0x280] sm:$0xff]
          %v2215 = vld [vmem:[%s4 + $0x288] sm:$0xff]
          %v2216 = vld [vmem:[%s4 + $0x290] sm:$0xff]
          %v2217 = vld [vmem:[%s4 + $0x298] sm:$0xff]
          %v2218 = vld [vmem:[%s4 + $0x2a0] sm:$0xff]
          %v2219 = vld [vmem:[%s4 + $0x2a8] sm:$0xff]
          %v2220 = vld [vmem:[%s4 + $0x2b0] sm:$0xff]
          %v2221 = vld [vmem:[%s4 + $0x2b8] sm:$0xff]
          %v2222 = vld [vmem:[%s4 + $0x2c0] sm:$0xff]
          %v2223 = vld [vmem:[%s4 + $0x2c8] sm:$0xff]
          %v2224 = vld [vmem:[%s4 + $0x2d0] sm:$0xff]
          %v2225 = vld [vmem:[%s4 + $0x2d8] sm:$0xff]
          %v2226 = vld [vmem:[%s4 + $0x2e0] sm:$0xff]
          %v2227 = vld [vmem:[%s4 + $0x2e8] sm:$0xff]
          %v2228 = vld [vmem:[%s4 + $0x2f0] sm:$0xff]
          %v2229 = vld [vmem:[%s4 + $0x2f8] sm:$0xff]
          %v2230 = vld [vmem:[%s4 + $0x300] sm:$0xff]
          %v2231 = vld [vmem:[%s4 + $0x308] sm:$0xff]
          %v2232 = vld [vmem:[%s4 + $0x310] sm:$0xff]
          %v2233 = vld [vmem:[%s4 + $0x318] sm:$0xff]
          %v2234 = vld [vmem:[%s4 + $0x320] sm:$0xff]
          %v2235 = vld [vmem:[%s4 + $0x328] sm:$0xff]
          %v2236 = vld [vmem:[%s4 + $0x330] sm:$0xff]
          %v2237 = vld [vmem:[%s4 + $0x338] sm:$0xff]
          %v2238 = vld [vmem:[%s4 + $0x340] sm:$0xff]
          %v2239 = vld [vmem:[%s4 + $0x348] sm:$0xff]
          %v2240 = vld [vmem:[%s4 + $0x350] sm:$0xff]
          %v2241 = vld [vmem:[%s4 + $0x358] sm:$0xff]
          %v2242 = vld [vmem:[%s4 + $0x360] sm:$0xff]
          %v2243 = vld [vmem:[%s4 + $0x368] sm:$0xff]
          %v2244 = vld [vmem:[%s4 + $0x370] sm:$0xff]
          %v2245 = vld [vmem:[%s4 + $0x378] sm:$0xff]
          %v2246 = vld [vmem:[%s4 + $0x380] sm:$0xff]
          %v2247 = vld [vmem:[%s4 + $0x388] sm:$0xff]
          %v2248 = vld [vmem:[%s4 + $0x390] sm:$0xff]
          %v2249 = vld [vmem:[%s4 + $0x398] sm:$0xff]
          %v2250 = vld [vmem:[%s4 + $0x3a0] sm:$0xff]
          %v2251 = vld [vmem:[%s4 + $0x3a8] sm:$0xff]
          %v2252 = vld [vmem:[%s4 + $0x3b0] sm:$0xff]
          %v2253 = vld [vmem:[%s4 + $0x3b8] sm:$0xff]
          %v2254 = vld [vmem:[%s4 + $0x3c0] sm:$0xff]
          %v2255 = vld [vmem:[%s4 + $0x3c8] sm:$0xff]
          %v2256 = vld [vmem:[%s4 + $0x3d0] sm:$0xff]
          %v2257 = vld [vmem:[%s4 + $0x3d8] sm:$0xff]
          %v2258 = vld [vmem:[%s4 + $0x3e0] sm:$0xff]
          %v2259 = vld [vmem:[%s4 + $0x3e8] sm:$0xff]
          %v2260 = vld [vmem:[%s4 + $0x3f0] sm:$0xff]
          %v2261 = vld [vmem:[%s4 + $0x3f8] sm:$0xff]
          %v2262 = vld [vmem:[%s4 + $0x400] sm:$0xff]
          %v2263 = vld [vmem:[%s4 + $0x408] sm:$0xff]
          %v2264 = vld [vmem:[%s4 + $0x410] sm:$0xff]
          %v2265 = vld [vmem:[%s4 + $0x418] sm:$0xff]
          %v2266 = vld [vmem:[%s4 + $0x420] sm:$0xff]
          %v2267 = vld [vmem:[%s4 + $0x428] sm:$0xff]
          %v2268 = vld [vmem:[%s4 + $0x430] sm:$0xff]
          %v2269 = vld [vmem:[%s4 + $0x438] sm:$0xff]
          %v2270 = vld [vmem:[%s4 + $0x440] sm:$0xff]
          %v2271 = vld [vmem:[%s4 + $0x448] sm:$0xff]
          %v2272 = vld [vmem:[%s4 + $0x450] sm:$0xff]
          %v2273 = vld [vmem:[%s4 + $0x458] sm:$0xff]
          %v2274 = vld [vmem:[%s4 + $0x460] sm:$0xff]
          %v2275 = vld [vmem:[%s4 + $0x468] sm:$0xff]
          %v2276 = vld [vmem:[%s4 + $0x470] sm:$0xff]
          %v2277 = vld [vmem:[%s4 + $0x478] sm:$0xff]
          %v2278 = vld [vmem:[%s4 + $0x480] sm:$0xff]
          %v2279 = vld [vmem:[%s4 + $0x488] sm:$0xff]
          %v2280 = vld [vmem:[%s4 + $0x490] sm:$0xff]
          %v2281 = vld [vmem:[%s4 + $0x498] sm:$0xff]
          %v2282 = vld [vmem:[%s4 + $0x4a0] sm:$0xff]
          %v2283 = vld [vmem:[%s4 + $0x4a8] sm:$0xff]
          %v2284 = vld [vmem:[%s4 + $0x4b0] sm:$0xff]
          %v2285 = vld [vmem:[%s4 + $0x4b8] sm:$0xff]
          %v2286 = vld [vmem:[%s4 + $0x4c0] sm:$0xff]
          %v2287 = vld [vmem:[%s4 + $0x4c8] sm:$0xff]
          %v2288 = vld [vmem:[%s4 + $0x4d0] sm:$0xff]
          %v2289 = vld [vmem:[%s4 + $0x4d8] sm:$0xff]
          %v2290 = vld [vmem:[%s4 + $0x4e0] sm:$0xff]
          %v2291 = vld [vmem:[%s4 + $0x4e8] sm:$0xff]
          %v2292 = vld [vmem:[%s4 + $0x4f0] sm:$0xff]
          %v2293 = vld [vmem:[%s4 + $0x4f8] sm:$0xff]
          %v2294 = vld [vmem:[%s4 + $0x500] sm:$0xff]
          %v2295 = vld [vmem:[%s4 + $0x508] sm:$0xff]
          %v2296 = vld [vmem:[%s4 + $0x510] sm:$0xff]
          %v2297 = vld [vmem:[%s4 + $0x518] sm:$0xff]
          %v2298 = vld [vmem:[%s4 + $0x520] sm:$0xff]
          %v2299 = vld [vmem:[%s4 + $0x528] sm:$0xff]
          %v2300 = vld [vmem:[%s4 + $0x530] sm:$0xff]
          %v2301 = vld [vmem:[%s4 + $0x538] sm:$0xff]
          %v2302 = vld [vmem:[%s4 + $0x540] sm:$0xff]
          %v2303 = vld [vmem:[%s4 + $0x548] sm:$0xff]
          %v2304 = vld [vmem:[%s4 + $0x550] sm:$0xff]
          %v2305 = vld [vmem:[%s4 + $0x558] sm:$0xff]
          %v2306 = vld [vmem:[%s4 + $0x560] sm:$0xff]
          %v2307 = vld [vmem:[%s4 + $0x568] sm:$0xff]
          %v2308 = vld [vmem:[%s4 + $0x570] sm:$0xff]
          %v2309 = vld [vmem:[%s4 + $0x578] sm:$0xff]
          %v2310 = vld [vmem:[%s4 + $0x580] sm:$0xff]
          %v2311 = vld [vmem:[%s4 + $0x588] sm:$0xff]
          %v2312 = vld [vmem:[%s4 + $0x590] sm:$0xff]
          %v2313 = vld [vmem:[%s4 + $0x598] sm:$0xff]
          %v2314 = vld [vmem:[%s4 + $0x5a0] sm:$0xff]
          %v2315 = vld [vmem:[%s4 + $0x5a8] sm:$0xff]
          %v2316 = vld [vmem:[%s4 + $0x5b0] sm:$0xff]
          %v2317 = vld [vmem:[%s4 + $0x5b8] sm:$0xff]
          %v2318 = vld [vmem:[%s4 + $0x5c0] sm:$0xff]
          %v2319 = vld [vmem:[%s4 + $0x5c8] sm:$0xff]
          %v2320 = vld [vmem:[%s4 + $0x5d0] sm:$0xff]
          %v2321 = vld [vmem:[%s4 + $0x5d8] sm:$0xff]
          %v2322 = vld [vmem:[%s4 + $0x5e0] sm:$0xff]
          %v2323 = vld [vmem:[%s4 + $0x5e8] sm:$0xff]
          %v2324 = vld [vmem:[%s4 + $0x5f0] sm:$0xff]
          %v2325 = vld [vmem:[%s4 + $0x5f8] sm:$0xff]
          %v2326 = vld [vmem:[%s4 + $0x600] sm:$0xff]
          %v2327 = vld [vmem:[%s4 + $0x608] sm:$0xff]
          %v2328 = vld [vmem:[%s4 + $0x610] sm:$0xff]
          %v2329 = vld [vmem:[%s4 + $0x618] sm:$0xff]
          %v2330 = vld [vmem:[%s4 + $0x620] sm:$0xff]
          %v2331 = vld [vmem:[%s4 + $0x628] sm:$0xff]
          %v2332 = vld [vmem:[%s4 + $0x630] sm:$0xff]
          %v2333 = vld [vmem:[%s4 + $0x638] sm:$0xff]
          %v2334 = vld [vmem:[%s4 + $0x640] sm:$0xff]
          %v2335 = vld [vmem:[%s4 + $0x648] sm:$0xff]
          %v2336 = vld [vmem:[%s4 + $0x650] sm:$0xff]
          %v2337 = vld [vmem:[%s4 + $0x658] sm:$0xff]
          %v2338 = vld [vmem:[%s4 + $0x660] sm:$0xff]
          %v2339 = vld [vmem:[%s4 + $0x668] sm:$0xff]
          %v2340 = vld [vmem:[%s4 + $0x670] sm:$0xff]
          %v2341 = vld [vmem:[%s4 + $0x678] sm:$0xff]
          %v2342 = vld [vmem:[%s4 + $0x680] sm:$0xff]
          %v2343 = vld [vmem:[%s4 + $0x688] sm:$0xff]
          %v2344 = vld [vmem:[%s4 + $0x690] sm:$0xff]
          %v2345 = vld [vmem:[%s4 + $0x698] sm:$0xff]
          %v2346 = vld [vmem:[%s4 + $0x6a0] sm:$0xff]
          %v2347 = vld [vmem:[%s4 + $0x6a8] sm:$0xff]
          %v2348 = vld [vmem:[%s4 + $0x6b0] sm:$0xff]
          %v2349 = vld [vmem:[%s4 + $0x6b8] sm:$0xff]
          %v2350 = vld [vmem:[%s4 + $0x6c0] sm:$0xff]
          %v2351 = vld [vmem:[%s4 + $0x6c8] sm:$0xff]
          %v2352 = vld [vmem:[%s4 + $0x6d0] sm:$0xff]
          %v2353 = vld [vmem:[%s4 + $0x6d8] sm:$0xff]
          %v2354 = vld [vmem:[%s4 + $0x6e0] sm:$0xff]
          %v2355 = vld [vmem:[%s4 + $0x6e8] sm:$0xff]
          %v2356 = vld [vmem:[%s4 + $0x6f0] sm:$0xff]
          %v2357 = vld [vmem:[%s4 + $0x6f8] sm:$0xff]
          %v2358 = vld [vmem:[%s4 + $0x700] sm:$0xff]
          %v2359 = vld [vmem:[%s4 + $0x708] sm:$0xff]
          %v2360 = vld [vmem:[%s4 + $0x710] sm:$0xff]
          %v2361 = vld [vmem:[%s4 + $0x718] sm:$0xff]
          %v2362 = vld [vmem:[%s4 + $0x720] sm:$0xff]
          %v2363 = vld [vmem:[%s4 + $0x728] sm:$0xff]
          %v2364 = vld [vmem:[%s4 + $0x730] sm:$0xff]
          %v2365 = vld [vmem:[%s4 + $0x738] sm:$0xff]
          %v2366 = vld [vmem:[%s4 + $0x740] sm:$0xff]
          %v2367 = vld [vmem:[%s4 + $0x748] sm:$0xff]
          %v2368 = vld [vmem:[%s4 + $0x750] sm:$0xff]
          %v2369 = vld [vmem:[%s4 + $0x758] sm:$0xff]
          %v2370 = vld [vmem:[%s4 + $0x760] sm:$0xff]
          %v2371 = vld [vmem:[%s4 + $0x768] sm:$0xff]
          %v2372 = vld [vmem:[%s4 + $0x770] sm:$0xff]
          %v2373 = vld [vmem:[%s4 + $0x778] sm:$0xff]
          %v2374 = vld [vmem:[%s4 + $0x780] sm:$0xff]
          %v2375 = vld [vmem:[%s4 + $0x788] sm:$0xff]
          %v2376 = vld [vmem:[%s4 + $0x790] sm:$0xff]
          %v2377 = vld [vmem:[%s4 + $0x798] sm:$0xff]
          %v2378 = vld [vmem:[%s4 + $0x7a0] sm:$0xff]
          %v2379 = vld [vmem:[%s4 + $0x7a8] sm:$0xff]
          %v2380 = vld [vmem:[%s4 + $0x7b0] sm:$0xff]
          %v2381 = vld [vmem:[%s4 + $0x7b8] sm:$0xff]
          %v2382 = vld [vmem:[%s4 + $0x7c0] sm:$0xff]
          %v2383 = vld [vmem:[%s4 + $0x7c8] sm:$0xff]
          %v2384 = vld [vmem:[%s4 + $0x7d0] sm:$0xff]
          %v2385 = vld [vmem:[%s4 + $0x7d8] sm:$0xff]
          %v2386 = vld [vmem:[%s4 + $0x7e0] sm:$0xff]
          %v2387 = vld [vmem:[%s4 + $0x7e8] sm:$0xff]
          %v2388 = vld [vmem:[%s4 + $0x7f0] sm:$0xff]
          %v2389 = vld [vmem:[%s4 + $0x7f8] sm:$0xff]
          %v2390 = vld [vmem:[%s4 + $0x800] sm:$0xff]
          %v2391 = vld [vmem:[%s4 + $0x808] sm:$0xff]
          %v2392 = vld [vmem:[%s4 + $0x810] sm:$0xff]
          %v2393 = vld [vmem:[%s4 + $0x818] sm:$0xff]
          %v2394 = vld [vmem:[%s4 + $0x820] sm:$0xff]
          %v2395 = vld [vmem:[%s4 + $0x828] sm:$0xff]
          %v2396 = vld [vmem:[%s4 + $0x830] sm:$0xff]
          %v2397 = vld [vmem:[%s4 + $0x838] sm:$0xff]
          %v2398 = vld [vmem:[%s4 + $0x840] sm:$0xff]
          %v2399 = vld [vmem:[%s4 + $0x848] sm:$0xff]
          %v2400 = vld [vmem:[%s4 + $0x850] sm:$0xff]
          %v2401 = vld [vmem:[%s4 + $0x858] sm:$0xff]
          %v2402 = vld [vmem:[%s4 + $0x860] sm:$0xff]
          %v2403 = vld [vmem:[%s4 + $0x868] sm:$0xff]
          %v2404 = vld [vmem:[%s4 + $0x870] sm:$0xff]
          %v2405 = vld [vmem:[%s4 + $0x878] sm:$0xff]
          %v2406 = vld [vmem:[%s4 + $0x880] sm:$0xff]
          %v2407 = vld [vmem:[%s4 + $0x888] sm:$0xff]
          %v2408 = vld [vmem:[%s4 + $0x890] sm:$0xff]
          %v2409 = vld [vmem:[%s4 + $0x898] sm:$0xff]
          %v2410 = vld [vmem:[%s4 + $0x8a0] sm:$0xff]
          %v2411 = vld [vmem:[%s4 + $0x8a8] sm:$0xff]
          %v2412 = vld [vmem:[%s4 + $0x8b0] sm:$0xff]
          %v2413 = vld [vmem:[%s4 + $0x8b8] sm:$0xff]
          %v2414 = vld [vmem:[%s4 + $0x8c0] sm:$0xff]
          %v2415 = vld [vmem:[%s4 + $0x8c8] sm:$0xff]
          %v2416 = vld [vmem:[%s4 + $0x8d0] sm:$0xff]
          %v2417 = vld [vmem:[%s4 + $0x8d8] sm:$0xff]
          %v2418 = vld [vmem:[%s4 + $0x8e0] sm:$0xff]
          %v2419 = vld [vmem:[%s4 + $0x8e8] sm:$0xff]
          %v2420 = vld [vmem:[%s4 + $0x8f0] sm:$0xff]
          %v2421 = vld [vmem:[%s4 + $0x8f8] sm:$0xff]
          %v2422 = vld [vmem:[%s4 + $0x900] sm:$0xff]
          %v2423 = vld [vmem:[%s4 + $0x908] sm:$0xff]
          %v2424 = vld [vmem:[%s4 + $0x910] sm:$0xff]
          %v2425 = vld [vmem:[%s4 + $0x918] sm:$0xff]
          %v2426 = vld [vmem:[%s4 + $0x920] sm:$0xff]
          %v2427 = vld [vmem:[%s4 + $0x928] sm:$0xff]
          %v2428 = vld [vmem:[%s4 + $0x930] sm:$0xff]
          %v2429 = vld [vmem:[%s4 + $0x938] sm:$0xff]
          %v2430 = vld [vmem:[%s4 + $0x940] sm:$0xff]
          %v2431 = vld [vmem:[%s4 + $0x948] sm:$0xff]
          %v2432 = vld [vmem:[%s4 + $0x950] sm:$0xff]
          %v2433 = vld [vmem:[%s4 + $0x958] sm:$0xff]
          %v2434 = vld [vmem:[%s4 + $0x960] sm:$0xff]
          %v2435 = vld [vmem:[%s4 + $0x968] sm:$0xff]
          %v2436 = vld [vmem:[%s4 + $0x970] sm:$0xff]
          %v2437 = vld [vmem:[%s4 + $0x978] sm:$0xff]
          %v2438 = vld [vmem:[%s4 + $0x980] sm:$0xff]
          %v2439 = vld [vmem:[%s4 + $0x988] sm:$0xff]
          %v2440 = vld [vmem:[%s4 + $0x990] sm:$0xff]
          %v2441 = vld [vmem:[%s4 + $0x998] sm:$0xff]
          %v2442 = vld [vmem:[%s4 + $0x9a0] sm:$0xff]
          %v2443 = vld [vmem:[%s4 + $0x9a8] sm:$0xff]
          %v2444 = vld [vmem:[%s4 + $0x9b0] sm:$0xff]
          %v2445 = vld [vmem:[%s4 + $0x9b8] sm:$0xff]
          %v2446 = vld [vmem:[%s4 + $0x9c0] sm:$0xff]
          %v2447 = vld [vmem:[%s4 + $0x9c8] sm:$0xff]
          %v2448 = vld [vmem:[%s4 + $0x9d0] sm:$0xff]
          %v2449 = vld [vmem:[%s4 + $0x9d8] sm:$0xff]
          %v2450 = vld [vmem:[%s4 + $0x9e0] sm:$0xff]
          %v2451 = vld [vmem:[%s4 + $0x9e8] sm:$0xff]
          %v2452 = vld [vmem:[%s4 + $0x9f0] sm:$0xff]
          %v2453 = vld [vmem:[%s4 + $0x9f8] sm:$0xff]
          %v2454 = vld [vmem:[%s4 + $0xa00] sm:$0xff]
          %v2455 = vld [vmem:[%s4 + $0xa08] sm:$0xff]
          %v2456 = vld [vmem:[%s4 + $0xa10] sm:$0xff]
          %v2457 = vld [vmem:[%s4 + $0xa18] sm:$0xff]
          %v2458 = vld [vmem:[%s4 + $0xa20] sm:$0xff]
          %v2459 = vld [vmem:[%s4 + $0xa28] sm:$0xff]
          %v2460 = vld [vmem:[%s4 + $0xa30] sm:$0xff]
          %v2461 = vld [vmem:[%s4 + $0xa38] sm:$0xff]
          %v2462 = vld [vmem:[%s4 + $0xa40] sm:$0xff]
          %v2463 = vld [vmem:[%s4 + $0xa48] sm:$0xff]
          %v2464 = vld [vmem:[%s4 + $0xa50] sm:$0xff]
          %v2465 = vld [vmem:[%s4 + $0xa58] sm:$0xff]
          %v2466 = vld [vmem:[%s4 + $0xa60] sm:$0xff]
          %v2467 = vld [vmem:[%s4 + $0xa68] sm:$0xff]
          %v2468 = vld [vmem:[%s4 + $0xa70] sm:$0xff]
          %v2469 = vld [vmem:[%s4 + $0xa78] sm:$0xff]
          %v2470 = vld [vmem:[%s4 + $0xa80] sm:$0xff]
          %v2471 = vld [vmem:[%s4 + $0xa88] sm:$0xff]
          %v2472 = vld [vmem:[%s4 + $0xa90] sm:$0xff]
          %v2473 = vld [vmem:[%s4 + $0xa98] sm:$0xff]
          %v2474 = vld [vmem:[%s4 + $0xaa0] sm:$0xff]
          %v2475 = vld [vmem:[%s4 + $0xaa8] sm:$0xff]
          %v2476 = vld [vmem:[%s4 + $0xab0] sm:$0xff]
          %v2477 = vld [vmem:[%s4 + $0xab8] sm:$0xff]
          %v2478 = vld [vmem:[%s4 + $0xac0] sm:$0xff]
          %v2479 = vld [vmem:[%s4 + $0xac8] sm:$0xff]
          %v2480 = vld [vmem:[%s4 + $0xad0] sm:$0xff]
          %v2481 = vld [vmem:[%s4 + $0xad8] sm:$0xff]
          %v2482 = vld [vmem:[%s4 + $0xae0] sm:$0xff]
          %v2483 = vld [vmem:[%s4 + $0xae8] sm:$0xff]
          %v2484 = vld [vmem:[%s4 + $0xaf0] sm:$0xff]
          %v2485 = vld [vmem:[%s4 + $0xaf8] sm:$0xff]
          %v2486 = vld [vmem:[%s4 + $0xb00] sm:$0xff]
          %v2487 = vld [vmem:[%s4 + $0xb08] sm:$0xff]
          %v2488 = vld [vmem:[%s4 + $0xb10] sm:$0xff]
          %v2489 = vld [vmem:[%s4 + $0xb18] sm:$0xff]
          %v2490 = vld [vmem:[%s4 + $0xb20] sm:$0xff]
          %v2491 = vld [vmem:[%s4 + $0xb28] sm:$0xff]
          %v2492 = vld [vmem:[%s4 + $0xb30] sm:$0xff]
          %v2493 = vld [vmem:[%s4 + $0xb38] sm:$0xff]
          %v2494 = vld [vmem:[%s4 + $0xb40] sm:$0xff]
          %v2495 = vld [vmem:[%s4 + $0xb48] sm:$0xff]
          %v2496 = vld [vmem:[%s4 + $0xb50] sm:$0xff]
          %v2497 = vld [vmem:[%s4 + $0xb58] sm:$0xff]
          %v2498 = vld [vmem:[%s4 + $0xb60] sm:$0xff]
          %v2499 = vld [vmem:[%s4 + $0xb68] sm:$0xff]
          %v2500 = vld [vmem:[%s4 + $0xb70] sm:$0xff]
          %v2501 = vld [vmem:[%s4 + $0xb78] sm:$0xff]
          %v2502 = vld [vmem:[%s4 + $0xb80] sm:$0xff]
          %v2503 = vld [vmem:[%s4 + $0xb88] sm:$0xff]
          %v2504 = vld [vmem:[%s4 + $0xb90] sm:$0xff]
          %v2505 = vld [vmem:[%s4 + $0xb98] sm:$0xff]
          %v2506 = vld [vmem:[%s4 + $0xba0] sm:$0xff]
          %v2507 = vld [vmem:[%s4 + $0xba8] sm:$0xff]
          %v2508 = vld [vmem:[%s4 + $0xbb0] sm:$0xff]
          %v2509 = vld [vmem:[%s4 + $0xbb8] sm:$0xff]
          %v2510 = vld [vmem:[%s4 + $0xbc0] sm:$0xff]
          %v2511 = vld [vmem:[%s4 + $0xbc8] sm:$0xff]
          %v2512 = vld [vmem:[%s4 + $0xbd0] sm:$0xff]
          %v2513 = vld [vmem:[%s4 + $0xbd8] sm:$0xff]
          %v2514 = vld [vmem:[%s4 + $0xbe0] sm:$0xff]
          %v2515 = vld [vmem:[%s4 + $0xbe8] sm:$0xff]
          %v2516 = vld [vmem:[%s4 + $0xbf0] sm:$0xff]
          %v2517 = vld [vmem:[%s4 + $0xbf8] sm:$0xff]
          %v2518 = vld [vmem:[%s4 + $0xc00] sm:$0xff]
          %v2519 = vld [vmem:[%s4 + $0xc08] sm:$0xff]
          %v2520 = vld [vmem:[%s4 + $0xc10] sm:$0xff]
          %v2521 = vld [vmem:[%s4 + $0xc18] sm:$0xff]
          %v2522 = vld [vmem:[%s4 + $0xc20] sm:$0xff]
          %v2523 = vld [vmem:[%s4 + $0xc28] sm:$0xff]
          %v2524 = vld [vmem:[%s4 + $0xc30] sm:$0xff]
          %v2525 = vld [vmem:[%s4 + $0xc38] sm:$0xff]
          %v2526 = vld [vmem:[%s4 + $0xc40] sm:$0xff]
          %v2527 = vld [vmem:[%s4 + $0xc48] sm:$0xff]
          %v2528 = vld [vmem:[%s4 + $0xc50] sm:$0xff]
          %v2529 = vld [vmem:[%s4 + $0xc58] sm:$0xff]
          %v2530 = vld [vmem:[%s4 + $0xc60] sm:$0xff]
          %v2531 = vld [vmem:[%s4 + $0xc68] sm:$0xff]
          %v2532 = vld [vmem:[%s4 + $0xc70] sm:$0xff]
          %v2533 = vld [vmem:[%s4 + $0xc78] sm:$0xff]
          %v2534 = vld [vmem:[%s4 + $0xc80] sm:$0xff]
          %v2535 = vld [vmem:[%s4 + $0xc88] sm:$0xff]
          %v2536 = vld [vmem:[%s4 + $0xc90] sm:$0xff]
          %v2537 = vld [vmem:[%s4 + $0xc98] sm:$0xff]
          %v2538 = vld [vmem:[%s4 + $0xca0] sm:$0xff]
          %v2539 = vld [vmem:[%s4 + $0xca8] sm:$0xff]
          %v2540 = vld [vmem:[%s4 + $0xcb0] sm:$0xff]
          %v2541 = vld [vmem:[%s4 + $0xcb8] sm:$0xff]
          %v2542 = vld [vmem:[%s4 + $0xcc0] sm:$0xff]
          %v2543 = vld [vmem:[%s4 + $0xcc8] sm:$0xff]
          %v2544 = vld [vmem:[%s4 + $0xcd0] sm:$0xff]
          %v2545 = vld [vmem:[%s4 + $0xcd8] sm:$0xff]
          %v2546 = vld [vmem:[%s4 + $0xce0] sm:$0xff]
          %v2547 = vld [vmem:[%s4 + $0xce8] sm:$0xff]
          %v2548 = vld [vmem:[%s4 + $0xcf0] sm:$0xff]
          %v2549 = vld [vmem:[%s4 + $0xcf8] sm:$0xff]
          %v2550 = vld [vmem:[%s4 + $0xd00] sm:$0xff]
          %v2551 = vld [vmem:[%s4 + $0xd08] sm:$0xff]
          %v2552 = vld [vmem:[%s4 + $0xd10] sm:$0xff]
          %v2553 = vld [vmem:[%s4 + $0xd18] sm:$0xff]
          %v2554 = vld [vmem:[%s4 + $0xd20] sm:$0xff]
          %v2555 = vld [vmem:[%s4 + $0xd28] sm:$0xff]
          %v2556 = vld [vmem:[%s4 + $0xd30] sm:$0xff]
          %v2557 = vld [vmem:[%s4 + $0xd38] sm:$0xff]
          %v2558 = vld [vmem:[%s4 + $0xd40] sm:$0xff]
          %v2559 = vld [vmem:[%s4 + $0xd48] sm:$0xff]
          %v2560 = vld [vmem:[%s4 + $0xd50] sm:$0xff]
          %v2561 = vld [vmem:[%s4 + $0xd58] sm:$0xff]
          %v2562 = vld [vmem:[%s4 + $0xd60] sm:$0xff]
          %v2563 = vld [vmem:[%s4 + $0xd68] sm:$0xff]
          %v2564 = vld [vmem:[%s4 + $0xd70] sm:$0xff]
          %v2565 = vld [vmem:[%s4 + $0xd78] sm:$0xff]
          %v2566 = vld [vmem:[%s4 + $0xd80] sm:$0xff]
          %v2567 = vld [vmem:[%s4 + $0xd88] sm:$0xff]
          %v2568 = vld [vmem:[%s4 + $0xd90] sm:$0xff]
          %v2569 = vld [vmem:[%s4 + $0xd98] sm:$0xff]
          %v2570 = vld [vmem:[%s4 + $0xda0] sm:$0xff]
          %v2571 = vld [vmem:[%s4 + $0xda8] sm:$0xff]
          %v2572 = vld [vmem:[%s4 + $0xdb0] sm:$0xff]
          %v2573 = vld [vmem:[%s4 + $0xdb8] sm:$0xff]
          %v2574 = vld [vmem:[%s4 + $0xdc0] sm:$0xff]
          %v2575 = vld [vmem:[%s4 + $0xdc8] sm:$0xff]
          %v2576 = vld [vmem:[%s4 + $0xdd0] sm:$0xff]
          %v2577 = vld [vmem:[%s4 + $0xdd8] sm:$0xff]
          %v2578 = vld [vmem:[%s4 + $0xde0] sm:$0xff]
          %v2579 = vld [vmem:[%s4 + $0xde8] sm:$0xff]
          %v2580 = vld [vmem:[%s4 + $0xdf0] sm:$0xff]
          %v2581 = vld [vmem:[%s4 + $0xdf8] sm:$0xff]
          %s2582 = sadd.s32 %s2123, 1
          %s2583 = smul.u32 %s2582, 7
          %s2584 = smul.addr %s2583, 2
          %s2585 = scalar_lea.vmem [#allocation5], %s2584
          %v2586 = vld [vmem:[%s2585] sm:$0xff]
          %v2587 = vld [vmem:[%s2585 + $0x8] sm:$0x3f]
          %s2588 = scalar_lea.vmem %s4, 3584
          %v2589 = vld [vmem:[%s2588] sm:$0xff]
          %v2590 = vld [vmem:[%s2588 + $0x8] sm:$0xff]
          %v2591 = vld [vmem:[%s2588 + $0x10] sm:$0xff]
          %v2592 = vld [vmem:[%s2588 + $0x18] sm:$0xff]
          %v2593 = vld [vmem:[%s2588 + $0x20] sm:$0xff]
          %v2594 = vld [vmem:[%s2588 + $0x28] sm:$0xff]
          %v2595 = vld [vmem:[%s2588 + $0x30] sm:$0xff]
          %v2596 = vld [vmem:[%s2588 + $0x38] sm:$0xff]
          %v2597 = vld [vmem:[%s2588 + $0x40] sm:$0xff]
          %v2598 = vld [vmem:[%s2588 + $0x48] sm:$0xff]
          %v2599 = vld [vmem:[%s2588 + $0x50] sm:$0xff]
          %v2600 = vld [vmem:[%s2588 + $0x58] sm:$0xff]
          %v2601 = vld [vmem:[%s2588 + $0x60] sm:$0xff]
          %v2602 = vld [vmem:[%s2588 + $0x68] sm:$0xff]
          %v2603 = vld [vmem:[%s2588 + $0x70] sm:$0xff]
          %v2604 = vld [vmem:[%s2588 + $0x78] sm:$0xff]
          %v2605 = vld [vmem:[%s2588 + $0x80] sm:$0xff]
          %v2606 = vld [vmem:[%s2588 + $0x88] sm:$0xff]
          %v2607 = vld [vmem:[%s2588 + $0x90] sm:$0xff]
          %v2608 = vld [vmem:[%s2588 + $0x98] sm:$0xff]
          %v2609 = vld [vmem:[%s2588 + $0xa0] sm:$0xff]
          %v2610 = vld [vmem:[%s2588 + $0xa8] sm:$0xff]
          %v2611 = vld [vmem:[%s2588 + $0xb0] sm:$0xff]
          %v2612 = vld [vmem:[%s2588 + $0xb8] sm:$0xff]
          %v2613 = vld [vmem:[%s2588 + $0xc0] sm:$0xff]
          %v2614 = vld [vmem:[%s2588 + $0xc8] sm:$0xff]
          %v2615 = vld [vmem:[%s2588 + $0xd0] sm:$0xff]
          %v2616 = vld [vmem:[%s2588 + $0xd8] sm:$0xff]
          %v2617 = vld [vmem:[%s2588 + $0xe0] sm:$0xff]
          %v2618 = vld [vmem:[%s2588 + $0xe8] sm:$0xff]
          %v2619 = vld [vmem:[%s2588 + $0xf0] sm:$0xff]
          %v2620 = vld [vmem:[%s2588 + $0xf8] sm:$0xff]
          %v2621 = vld [vmem:[%s2588 + $0x100] sm:$0xff]
          %v2622 = vld [vmem:[%s2588 + $0x108] sm:$0xff]
          %v2623 = vld [vmem:[%s2588 + $0x110] sm:$0xff]
          %v2624 = vld [vmem:[%s2588 + $0x118] sm:$0xff]
          %v2625 = vld [vmem:[%s2588 + $0x120] sm:$0xff]
          %v2626 = vld [vmem:[%s2588 + $0x128] sm:$0xff]
          %v2627 = vld [vmem:[%s2588 + $0x130] sm:$0xff]
          %v2628 = vld [vmem:[%s2588 + $0x138] sm:$0xff]
          %v2629 = vld [vmem:[%s2588 + $0x140] sm:$0xff]
          %v2630 = vld [vmem:[%s2588 + $0x148] sm:$0xff]
          %v2631 = vld [vmem:[%s2588 + $0x150] sm:$0xff]
          %v2632 = vld [vmem:[%s2588 + $0x158] sm:$0xff]
          %v2633 = vld [vmem:[%s2588 + $0x160] sm:$0xff]
          %v2634 = vld [vmem:[%s2588 + $0x168] sm:$0xff]
          %v2635 = vld [vmem:[%s2588 + $0x170] sm:$0xff]
          %v2636 = vld [vmem:[%s2588 + $0x178] sm:$0xff]
          %v2637 = vld [vmem:[%s2588 + $0x180] sm:$0xff]
          %v2638 = vld [vmem:[%s2588 + $0x188] sm:$0xff]
          %v2639 = vld [vmem:[%s2588 + $0x190] sm:$0xff]
          %v2640 = vld [vmem:[%s2588 + $0x198] sm:$0xff]
          %v2641 = vld [vmem:[%s2588 + $0x1a0] sm:$0xff]
          %v2642 = vld [vmem:[%s2588 + $0x1a8] sm:$0xff]
          %v2643 = vld [vmem:[%s2588 + $0x1b0] sm:$0xff]
          %v2644 = vld [vmem:[%s2588 + $0x1b8] sm:$0xff]
          %v2645 = vld [vmem:[%s2588 + $0x1c0] sm:$0xff]
          %v2646 = vld [vmem:[%s2588 + $0x1c8] sm:$0xff]
          %v2647 = vld [vmem:[%s2588 + $0x1d0] sm:$0xff]
          %v2648 = vld [vmem:[%s2588 + $0x1d8] sm:$0xff]
          %v2649 = vld [vmem:[%s2588 + $0x1e0] sm:$0xff]
          %v2650 = vld [vmem:[%s2588 + $0x1e8] sm:$0xff]
          %v2651 = vld [vmem:[%s2588 + $0x1f0] sm:$0xff]
          %v2652 = vld [vmem:[%s2588 + $0x1f8] sm:$0xff]
          %v2653 = vld [vmem:[%s2588 + $0x200] sm:$0xff]
          %v2654 = vld [vmem:[%s2588 + $0x208] sm:$0xff]
          %v2655 = vld [vmem:[%s2588 + $0x210] sm:$0xff]
          %v2656 = vld [vmem:[%s2588 + $0x218] sm:$0xff]
          %v2657 = vld [vmem:[%s2588 + $0x220] sm:$0xff]
          %v2658 = vld [vmem:[%s2588 + $0x228] sm:$0xff]
          %v2659 = vld [vmem:[%s2588 + $0x230] sm:$0xff]
          %v2660 = vld [vmem:[%s2588 + $0x238] sm:$0xff]
          %v2661 = vld [vmem:[%s2588 + $0x240] sm:$0xff]
          %v2662 = vld [vmem:[%s2588 + $0x248] sm:$0xff]
          %v2663 = vld [vmem:[%s2588 + $0x250] sm:$0xff]
          %v2664 = vld [vmem:[%s2588 + $0x258] sm:$0xff]
          %v2665 = vld [vmem:[%s2588 + $0x260] sm:$0xff]
          %v2666 = vld [vmem:[%s2588 + $0x268] sm:$0xff]
          %v2667 = vld [vmem:[%s2588 + $0x270] sm:$0xff]
          %v2668 = vld [vmem:[%s2588 + $0x278] sm:$0xff]
          %v2669 = vld [vmem:[%s2588 + $0x280] sm:$0xff]
          %v2670 = vld [vmem:[%s2588 + $0x288] sm:$0xff]
          %v2671 = vld [vmem:[%s2588 + $0x290] sm:$0xff]
          %v2672 = vld [vmem:[%s2588 + $0x298] sm:$0xff]
          %v2673 = vld [vmem:[%s2588 + $0x2a0] sm:$0xff]
          %v2674 = vld [vmem:[%s2588 + $0x2a8] sm:$0xff]
          %v2675 = vld [vmem:[%s2588 + $0x2b0] sm:$0xff]
          %v2676 = vld [vmem:[%s2588 + $0x2b8] sm:$0xff]
          %v2677 = vld [vmem:[%s2588 + $0x2c0] sm:$0xff]
          %v2678 = vld [vmem:[%s2588 + $0x2c8] sm:$0xff]
          %v2679 = vld [vmem:[%s2588 + $0x2d0] sm:$0xff]
          %v2680 = vld [vmem:[%s2588 + $0x2d8] sm:$0xff]
          %v2681 = vld [vmem:[%s2588 + $0x2e0] sm:$0xff]
          %v2682 = vld [vmem:[%s2588 + $0x2e8] sm:$0xff]
          %v2683 = vld [vmem:[%s2588 + $0x2f0] sm:$0xff]
          %v2684 = vld [vmem:[%s2588 + $0x2f8] sm:$0xff]
          %v2685 = vld [vmem:[%s2588 + $0x300] sm:$0xff]
          %v2686 = vld [vmem:[%s2588 + $0x308] sm:$0xff]
          %v2687 = vld [vmem:[%s2588 + $0x310] sm:$0xff]
          %v2688 = vld [vmem:[%s2588 + $0x318] sm:$0xff]
          %v2689 = vld [vmem:[%s2588 + $0x320] sm:$0xff]
          %v2690 = vld [vmem:[%s2588 + $0x328] sm:$0xff]
          %v2691 = vld [vmem:[%s2588 + $0x330] sm:$0xff]
          %v2692 = vld [vmem:[%s2588 + $0x338] sm:$0xff]
          %v2693 = vld [vmem:[%s2588 + $0x340] sm:$0xff]
          %v2694 = vld [vmem:[%s2588 + $0x348] sm:$0xff]
          %v2695 = vld [vmem:[%s2588 + $0x350] sm:$0xff]
          %v2696 = vld [vmem:[%s2588 + $0x358] sm:$0xff]
          %v2697 = vld [vmem:[%s2588 + $0x360] sm:$0xff]
          %v2698 = vld [vmem:[%s2588 + $0x368] sm:$0xff]
          %v2699 = vld [vmem:[%s2588 + $0x370] sm:$0xff]
          %v2700 = vld [vmem:[%s2588 + $0x378] sm:$0xff]
          %v2701 = vld [vmem:[%s2588 + $0x380] sm:$0xff]
          %v2702 = vld [vmem:[%s2588 + $0x388] sm:$0xff]
          %v2703 = vld [vmem:[%s2588 + $0x390] sm:$0xff]
          %v2704 = vld [vmem:[%s2588 + $0x398] sm:$0xff]
          %v2705 = vld [vmem:[%s2588 + $0x3a0] sm:$0xff]
          %v2706 = vld [vmem:[%s2588 + $0x3a8] sm:$0xff]
          %v2707 = vld [vmem:[%s2588 + $0x3b0] sm:$0xff]
          %v2708 = vld [vmem:[%s2588 + $0x3b8] sm:$0xff]
          %v2709 = vld [vmem:[%s2588 + $0x3c0] sm:$0xff]
          %v2710 = vld [vmem:[%s2588 + $0x3c8] sm:$0xff]
          %v2711 = vld [vmem:[%s2588 + $0x3d0] sm:$0xff]
          %v2712 = vld [vmem:[%s2588 + $0x3d8] sm:$0xff]
          %v2713 = vld [vmem:[%s2588 + $0x3e0] sm:$0xff]
          %v2714 = vld [vmem:[%s2588 + $0x3e8] sm:$0xff]
          %v2715 = vld [vmem:[%s2588 + $0x3f0] sm:$0xff]
          %v2716 = vld [vmem:[%s2588 + $0x3f8] sm:$0xff]
          %v2717 = vld [vmem:[%s2588 + $0x400] sm:$0xff]
          %v2718 = vld [vmem:[%s2588 + $0x408] sm:$0xff]
          %v2719 = vld [vmem:[%s2588 + $0x410] sm:$0xff]
          %v2720 = vld [vmem:[%s2588 + $0x418] sm:$0xff]
          %v2721 = vld [vmem:[%s2588 + $0x420] sm:$0xff]
          %v2722 = vld [vmem:[%s2588 + $0x428] sm:$0xff]
          %v2723 = vld [vmem:[%s2588 + $0x430] sm:$0xff]
          %v2724 = vld [vmem:[%s2588 + $0x438] sm:$0xff]
          %v2725 = vld [vmem:[%s2588 + $0x440] sm:$0xff]
          %v2726 = vld [vmem:[%s2588 + $0x448] sm:$0xff]
          %v2727 = vld [vmem:[%s2588 + $0x450] sm:$0xff]
          %v2728 = vld [vmem:[%s2588 + $0x458] sm:$0xff]
          %v2729 = vld [vmem:[%s2588 + $0x460] sm:$0xff]
          %v2730 = vld [vmem:[%s2588 + $0x468] sm:$0xff]
          %v2731 = vld [vmem:[%s2588 + $0x470] sm:$0xff]
          %v2732 = vld [vmem:[%s2588 + $0x478] sm:$0xff]
          %v2733 = vld [vmem:[%s2588 + $0x480] sm:$0xff]
          %v2734 = vld [vmem:[%s2588 + $0x488] sm:$0xff]
          %v2735 = vld [vmem:[%s2588 + $0x490] sm:$0xff]
          %v2736 = vld [vmem:[%s2588 + $0x498] sm:$0xff]
          %v2737 = vld [vmem:[%s2588 + $0x4a0] sm:$0xff]
          %v2738 = vld [vmem:[%s2588 + $0x4a8] sm:$0xff]
          %v2739 = vld [vmem:[%s2588 + $0x4b0] sm:$0xff]
          %v2740 = vld [vmem:[%s2588 + $0x4b8] sm:$0xff]
          %v2741 = vld [vmem:[%s2588 + $0x4c0] sm:$0xff]
          %v2742 = vld [vmem:[%s2588 + $0x4c8] sm:$0xff]
          %v2743 = vld [vmem:[%s2588 + $0x4d0] sm:$0xff]
          %v2744 = vld [vmem:[%s2588 + $0x4d8] sm:$0xff]
          %v2745 = vld [vmem:[%s2588 + $0x4e0] sm:$0xff]
          %v2746 = vld [vmem:[%s2588 + $0x4e8] sm:$0xff]
          %v2747 = vld [vmem:[%s2588 + $0x4f0] sm:$0xff]
          %v2748 = vld [vmem:[%s2588 + $0x4f8] sm:$0xff]
          %v2749 = vld [vmem:[%s2588 + $0x500] sm:$0xff]
          %v2750 = vld [vmem:[%s2588 + $0x508] sm:$0xff]
          %v2751 = vld [vmem:[%s2588 + $0x510] sm:$0xff]
          %v2752 = vld [vmem:[%s2588 + $0x518] sm:$0xff]
          %v2753 = vld [vmem:[%s2588 + $0x520] sm:$0xff]
          %v2754 = vld [vmem:[%s2588 + $0x528] sm:$0xff]
          %v2755 = vld [vmem:[%s2588 + $0x530] sm:$0xff]
          %v2756 = vld [vmem:[%s2588 + $0x538] sm:$0xff]
          %v2757 = vld [vmem:[%s2588 + $0x540] sm:$0xff]
          %v2758 = vld [vmem:[%s2588 + $0x548] sm:$0xff]
          %v2759 = vld [vmem:[%s2588 + $0x550] sm:$0xff]
          %v2760 = vld [vmem:[%s2588 + $0x558] sm:$0xff]
          %v2761 = vld [vmem:[%s2588 + $0x560] sm:$0xff]
          %v2762 = vld [vmem:[%s2588 + $0x568] sm:$0xff]
          %v2763 = vld [vmem:[%s2588 + $0x570] sm:$0xff]
          %v2764 = vld [vmem:[%s2588 + $0x578] sm:$0xff]
          %v2765 = vld [vmem:[%s2588 + $0x580] sm:$0xff]
          %v2766 = vld [vmem:[%s2588 + $0x588] sm:$0xff]
          %v2767 = vld [vmem:[%s2588 + $0x590] sm:$0xff]
          %v2768 = vld [vmem:[%s2588 + $0x598] sm:$0xff]
          %v2769 = vld [vmem:[%s2588 + $0x5a0] sm:$0xff]
          %v2770 = vld [vmem:[%s2588 + $0x5a8] sm:$0xff]
          %v2771 = vld [vmem:[%s2588 + $0x5b0] sm:$0xff]
          %v2772 = vld [vmem:[%s2588 + $0x5b8] sm:$0xff]
          %v2773 = vld [vmem:[%s2588 + $0x5c0] sm:$0xff]
          %v2774 = vld [vmem:[%s2588 + $0x5c8] sm:$0xff]
          %v2775 = vld [vmem:[%s2588 + $0x5d0] sm:$0xff]
          %v2776 = vld [vmem:[%s2588 + $0x5d8] sm:$0xff]
          %v2777 = vld [vmem:[%s2588 + $0x5e0] sm:$0xff]
          %v2778 = vld [vmem:[%s2588 + $0x5e8] sm:$0xff]
          %v2779 = vld [vmem:[%s2588 + $0x5f0] sm:$0xff]
          %v2780 = vld [vmem:[%s2588 + $0x5f8] sm:$0xff]
          %v2781 = vld [vmem:[%s2588 + $0x600] sm:$0xff]
          %v2782 = vld [vmem:[%s2588 + $0x608] sm:$0xff]
          %v2783 = vld [vmem:[%s2588 + $0x610] sm:$0xff]
          %v2784 = vld [vmem:[%s2588 + $0x618] sm:$0xff]
          %v2785 = vld [vmem:[%s2588 + $0x620] sm:$0xff]
          %v2786 = vld [vmem:[%s2588 + $0x628] sm:$0xff]
          %v2787 = vld [vmem:[%s2588 + $0x630] sm:$0xff]
          %v2788 = vld [vmem:[%s2588 + $0x638] sm:$0xff]
          %v2789 = vld [vmem:[%s2588 + $0x640] sm:$0xff]
          %v2790 = vld [vmem:[%s2588 + $0x648] sm:$0xff]
          %v2791 = vld [vmem:[%s2588 + $0x650] sm:$0xff]
          %v2792 = vld [vmem:[%s2588 + $0x658] sm:$0xff]
          %v2793 = vld [vmem:[%s2588 + $0x660] sm:$0xff]
          %v2794 = vld [vmem:[%s2588 + $0x668] sm:$0xff]
          %v2795 = vld [vmem:[%s2588 + $0x670] sm:$0xff]
          %v2796 = vld [vmem:[%s2588 + $0x678] sm:$0xff]
          %v2797 = vld [vmem:[%s2588 + $0x680] sm:$0xff]
          %v2798 = vld [vmem:[%s2588 + $0x688] sm:$0xff]
          %v2799 = vld [vmem:[%s2588 + $0x690] sm:$0xff]
          %v2800 = vld [vmem:[%s2588 + $0x698] sm:$0xff]
          %v2801 = vld [vmem:[%s2588 + $0x6a0] sm:$0xff]
          %v2802 = vld [vmem:[%s2588 + $0x6a8] sm:$0xff]
          %v2803 = vld [vmem:[%s2588 + $0x6b0] sm:$0xff]
          %v2804 = vld [vmem:[%s2588 + $0x6b8] sm:$0xff]
          %v2805 = vld [vmem:[%s2588 + $0x6c0] sm:$0xff]
          %v2806 = vld [vmem:[%s2588 + $0x6c8] sm:$0xff]
          %v2807 = vld [vmem:[%s2588 + $0x6d0] sm:$0xff]
          %v2808 = vld [vmem:[%s2588 + $0x6d8] sm:$0xff]
          %v2809 = vld [vmem:[%s2588 + $0x6e0] sm:$0xff]
          %v2810 = vld [vmem:[%s2588 + $0x6e8] sm:$0xff]
          %v2811 = vld [vmem:[%s2588 + $0x6f0] sm:$0xff]
          %v2812 = vld [vmem:[%s2588 + $0x6f8] sm:$0xff]
          %v2813 = vld [vmem:[%s2588 + $0x700] sm:$0xff]
          %v2814 = vld [vmem:[%s2588 + $0x708] sm:$0xff]
          %v2815 = vld [vmem:[%s2588 + $0x710] sm:$0xff]
          %v2816 = vld [vmem:[%s2588 + $0x718] sm:$0xff]
          %v2817 = vld [vmem:[%s2588 + $0x720] sm:$0xff]
          %v2818 = vld [vmem:[%s2588 + $0x728] sm:$0xff]
          %v2819 = vld [vmem:[%s2588 + $0x730] sm:$0xff]
          %v2820 = vld [vmem:[%s2588 + $0x738] sm:$0xff]
          %v2821 = vld [vmem:[%s2588 + $0x740] sm:$0xff]
          %v2822 = vld [vmem:[%s2588 + $0x748] sm:$0xff]
          %v2823 = vld [vmem:[%s2588 + $0x750] sm:$0xff]
          %v2824 = vld [vmem:[%s2588 + $0x758] sm:$0xff]
          %v2825 = vld [vmem:[%s2588 + $0x760] sm:$0xff]
          %v2826 = vld [vmem:[%s2588 + $0x768] sm:$0xff]
          %v2827 = vld [vmem:[%s2588 + $0x770] sm:$0xff]
          %v2828 = vld [vmem:[%s2588 + $0x778] sm:$0xff]
          %v2829 = vld [vmem:[%s2588 + $0x780] sm:$0xff]
          %v2830 = vld [vmem:[%s2588 + $0x788] sm:$0xff]
          %v2831 = vld [vmem:[%s2588 + $0x790] sm:$0xff]
          %v2832 = vld [vmem:[%s2588 + $0x798] sm:$0xff]
          %v2833 = vld [vmem:[%s2588 + $0x7a0] sm:$0xff]
          %v2834 = vld [vmem:[%s2588 + $0x7a8] sm:$0xff]
          %v2835 = vld [vmem:[%s2588 + $0x7b0] sm:$0xff]
          %v2836 = vld [vmem:[%s2588 + $0x7b8] sm:$0xff]
          %v2837 = vld [vmem:[%s2588 + $0x7c0] sm:$0xff]
          %v2838 = vld [vmem:[%s2588 + $0x7c8] sm:$0xff]
          %v2839 = vld [vmem:[%s2588 + $0x7d0] sm:$0xff]
          %v2840 = vld [vmem:[%s2588 + $0x7d8] sm:$0xff]
          %v2841 = vld [vmem:[%s2588 + $0x7e0] sm:$0xff]
          %v2842 = vld [vmem:[%s2588 + $0x7e8] sm:$0xff]
          %v2843 = vld [vmem:[%s2588 + $0x7f0] sm:$0xff]
          %v2844 = vld [vmem:[%s2588 + $0x7f8] sm:$0xff]
          %v2845 = vld [vmem:[%s2588 + $0x800] sm:$0xff]
          %v2846 = vld [vmem:[%s2588 + $0x808] sm:$0xff]
          %v2847 = vld [vmem:[%s2588 + $0x810] sm:$0xff]
          %v2848 = vld [vmem:[%s2588 + $0x818] sm:$0xff]
          %v2849 = vld [vmem:[%s2588 + $0x820] sm:$0xff]
          %v2850 = vld [vmem:[%s2588 + $0x828] sm:$0xff]
          %v2851 = vld [vmem:[%s2588 + $0x830] sm:$0xff]
          %v2852 = vld [vmem:[%s2588 + $0x838] sm:$0xff]
          %v2853 = vld [vmem:[%s2588 + $0x840] sm:$0xff]
          %v2854 = vld [vmem:[%s2588 + $0x848] sm:$0xff]
          %v2855 = vld [vmem:[%s2588 + $0x850] sm:$0xff]
          %v2856 = vld [vmem:[%s2588 + $0x858] sm:$0xff]
          %v2857 = vld [vmem:[%s2588 + $0x860] sm:$0xff]
          %v2858 = vld [vmem:[%s2588 + $0x868] sm:$0xff]
          %v2859 = vld [vmem:[%s2588 + $0x870] sm:$0xff]
          %v2860 = vld [vmem:[%s2588 + $0x878] sm:$0xff]
          %v2861 = vld [vmem:[%s2588 + $0x880] sm:$0xff]
          %v2862 = vld [vmem:[%s2588 + $0x888] sm:$0xff]
          %v2863 = vld [vmem:[%s2588 + $0x890] sm:$0xff]
          %v2864 = vld [vmem:[%s2588 + $0x898] sm:$0xff]
          %v2865 = vld [vmem:[%s2588 + $0x8a0] sm:$0xff]
          %v2866 = vld [vmem:[%s2588 + $0x8a8] sm:$0xff]
          %v2867 = vld [vmem:[%s2588 + $0x8b0] sm:$0xff]
          %v2868 = vld [vmem:[%s2588 + $0x8b8] sm:$0xff]
          %v2869 = vld [vmem:[%s2588 + $0x8c0] sm:$0xff]
          %v2870 = vld [vmem:[%s2588 + $0x8c8] sm:$0xff]
          %v2871 = vld [vmem:[%s2588 + $0x8d0] sm:$0xff]
          %v2872 = vld [vmem:[%s2588 + $0x8d8] sm:$0xff]
          %v2873 = vld [vmem:[%s2588 + $0x8e0] sm:$0xff]
          %v2874 = vld [vmem:[%s2588 + $0x8e8] sm:$0xff]
          %v2875 = vld [vmem:[%s2588 + $0x8f0] sm:$0xff]
          %v2876 = vld [vmem:[%s2588 + $0x8f8] sm:$0xff]
          %v2877 = vld [vmem:[%s2588 + $0x900] sm:$0xff]
          %v2878 = vld [vmem:[%s2588 + $0x908] sm:$0xff]
          %v2879 = vld [vmem:[%s2588 + $0x910] sm:$0xff]
          %v2880 = vld [vmem:[%s2588 + $0x918] sm:$0xff]
          %v2881 = vld [vmem:[%s2588 + $0x920] sm:$0xff]
          %v2882 = vld [vmem:[%s2588 + $0x928] sm:$0xff]
          %v2883 = vld [vmem:[%s2588 + $0x930] sm:$0xff]
          %v2884 = vld [vmem:[%s2588 + $0x938] sm:$0xff]
          %v2885 = vld [vmem:[%s2588 + $0x940] sm:$0xff]
          %v2886 = vld [vmem:[%s2588 + $0x948] sm:$0xff]
          %v2887 = vld [vmem:[%s2588 + $0x950] sm:$0xff]
          %v2888 = vld [vmem:[%s2588 + $0x958] sm:$0xff]
          %v2889 = vld [vmem:[%s2588 + $0x960] sm:$0xff]
          %v2890 = vld [vmem:[%s2588 + $0x968] sm:$0xff]
          %v2891 = vld [vmem:[%s2588 + $0x970] sm:$0xff]
          %v2892 = vld [vmem:[%s2588 + $0x978] sm:$0xff]
          %v2893 = vld [vmem:[%s2588 + $0x980] sm:$0xff]
          %v2894 = vld [vmem:[%s2588 + $0x988] sm:$0xff]
          %v2895 = vld [vmem:[%s2588 + $0x990] sm:$0xff]
          %v2896 = vld [vmem:[%s2588 + $0x998] sm:$0xff]
          %v2897 = vld [vmem:[%s2588 + $0x9a0] sm:$0xff]
          %v2898 = vld [vmem:[%s2588 + $0x9a8] sm:$0xff]
          %v2899 = vld [vmem:[%s2588 + $0x9b0] sm:$0xff]
          %v2900 = vld [vmem:[%s2588 + $0x9b8] sm:$0xff]
          %v2901 = vld [vmem:[%s2588 + $0x9c0] sm:$0xff]
          %v2902 = vld [vmem:[%s2588 + $0x9c8] sm:$0xff]
          %v2903 = vld [vmem:[%s2588 + $0x9d0] sm:$0xff]
          %v2904 = vld [vmem:[%s2588 + $0x9d8] sm:$0xff]
          %v2905 = vld [vmem:[%s2588 + $0x9e0] sm:$0xff]
          %v2906 = vld [vmem:[%s2588 + $0x9e8] sm:$0xff]
          %v2907 = vld [vmem:[%s2588 + $0x9f0] sm:$0xff]
          %v2908 = vld [vmem:[%s2588 + $0x9f8] sm:$0xff]
          %v2909 = vld [vmem:[%s2588 + $0xa00] sm:$0xff]
          %v2910 = vld [vmem:[%s2588 + $0xa08] sm:$0xff]
          %v2911 = vld [vmem:[%s2588 + $0xa10] sm:$0xff]
          %v2912 = vld [vmem:[%s2588 + $0xa18] sm:$0xff]
          %v2913 = vld [vmem:[%s2588 + $0xa20] sm:$0xff]
          %v2914 = vld [vmem:[%s2588 + $0xa28] sm:$0xff]
          %v2915 = vld [vmem:[%s2588 + $0xa30] sm:$0xff]
          %v2916 = vld [vmem:[%s2588 + $0xa38] sm:$0xff]
          %v2917 = vld [vmem:[%s2588 + $0xa40] sm:$0xff]
          %v2918 = vld [vmem:[%s2588 + $0xa48] sm:$0xff]
          %v2919 = vld [vmem:[%s2588 + $0xa50] sm:$0xff]
          %v2920 = vld [vmem:[%s2588 + $0xa58] sm:$0xff]
          %v2921 = vld [vmem:[%s2588 + $0xa60] sm:$0xff]
          %v2922 = vld [vmem:[%s2588 + $0xa68] sm:$0xff]
          %v2923 = vld [vmem:[%s2588 + $0xa70] sm:$0xff]
          %v2924 = vld [vmem:[%s2588 + $0xa78] sm:$0xff]
          %v2925 = vld [vmem:[%s2588 + $0xa80] sm:$0xff]
          %v2926 = vld [vmem:[%s2588 + $0xa88] sm:$0xff]
          %v2927 = vld [vmem:[%s2588 + $0xa90] sm:$0xff]
          %v2928 = vld [vmem:[%s2588 + $0xa98] sm:$0xff]
          %v2929 = vld [vmem:[%s2588 + $0xaa0] sm:$0xff]
          %v2930 = vld [vmem:[%s2588 + $0xaa8] sm:$0xff]
          %v2931 = vld [vmem:[%s2588 + $0xab0] sm:$0xff]
          %v2932 = vld [vmem:[%s2588 + $0xab8] sm:$0xff]
          %v2933 = vld [vmem:[%s2588 + $0xac0] sm:$0xff]
          %v2934 = vld [vmem:[%s2588 + $0xac8] sm:$0xff]
          %v2935 = vld [vmem:[%s2588 + $0xad0] sm:$0xff]
          %v2936 = vld [vmem:[%s2588 + $0xad8] sm:$0xff]
          %v2937 = vld [vmem:[%s2588 + $0xae0] sm:$0xff]
          %v2938 = vld [vmem:[%s2588 + $0xae8] sm:$0xff]
          %v2939 = vld [vmem:[%s2588 + $0xaf0] sm:$0xff]
          %v2940 = vld [vmem:[%s2588 + $0xaf8] sm:$0xff]
          %v2941 = vld [vmem:[%s2588 + $0xb00] sm:$0xff]
          %v2942 = vld [vmem:[%s2588 + $0xb08] sm:$0xff]
          %v2943 = vld [vmem:[%s2588 + $0xb10] sm:$0xff]
          %v2944 = vld [vmem:[%s2588 + $0xb18] sm:$0xff]
          %v2945 = vld [vmem:[%s2588 + $0xb20] sm:$0xff]
          %v2946 = vld [vmem:[%s2588 + $0xb28] sm:$0xff]
          %v2947 = vld [vmem:[%s2588 + $0xb30] sm:$0xff]
          %v2948 = vld [vmem:[%s2588 + $0xb38] sm:$0xff]
          %v2949 = vld [vmem:[%s2588 + $0xb40] sm:$0xff]
          %v2950 = vld [vmem:[%s2588 + $0xb48] sm:$0xff]
          %v2951 = vld [vmem:[%s2588 + $0xb50] sm:$0xff]
          %v2952 = vld [vmem:[%s2588 + $0xb58] sm:$0xff]
          %v2953 = vld [vmem:[%s2588 + $0xb60] sm:$0xff]
          %v2954 = vld [vmem:[%s2588 + $0xb68] sm:$0xff]
          %v2955 = vld [vmem:[%s2588 + $0xb70] sm:$0xff]
          %v2956 = vld [vmem:[%s2588 + $0xb78] sm:$0xff]
          %v2957 = vld [vmem:[%s2588 + $0xb80] sm:$0xff]
          %v2958 = vld [vmem:[%s2588 + $0xb88] sm:$0xff]
          %v2959 = vld [vmem:[%s2588 + $0xb90] sm:$0xff]
          %v2960 = vld [vmem:[%s2588 + $0xb98] sm:$0xff]
          %v2961 = vld [vmem:[%s2588 + $0xba0] sm:$0xff]
          %v2962 = vld [vmem:[%s2588 + $0xba8] sm:$0xff]
          %v2963 = vld [vmem:[%s2588 + $0xbb0] sm:$0xff]
          %v2964 = vld [vmem:[%s2588 + $0xbb8] sm:$0xff]
          %v2965 = vld [vmem:[%s2588 + $0xbc0] sm:$0xff]
          %v2966 = vld [vmem:[%s2588 + $0xbc8] sm:$0xff]
          %v2967 = vld [vmem:[%s2588 + $0xbd0] sm:$0xff]
          %v2968 = vld [vmem:[%s2588 + $0xbd8] sm:$0xff]
          %v2969 = vld [vmem:[%s2588 + $0xbe0] sm:$0xff]
          %v2970 = vld [vmem:[%s2588 + $0xbe8] sm:$0xff]
          %v2971 = vld [vmem:[%s2588 + $0xbf0] sm:$0xff]
          %v2972 = vld [vmem:[%s2588 + $0xbf8] sm:$0xff]
          %v2973 = vld [vmem:[%s2588 + $0xc00] sm:$0xff]
          %v2974 = vld [vmem:[%s2588 + $0xc08] sm:$0xff]
          %v2975 = vld [vmem:[%s2588 + $0xc10] sm:$0xff]
          %v2976 = vld [vmem:[%s2588 + $0xc18] sm:$0xff]
          %v2977 = vld [vmem:[%s2588 + $0xc20] sm:$0xff]
          %v2978 = vld [vmem:[%s2588 + $0xc28] sm:$0xff]
          %v2979 = vld [vmem:[%s2588 + $0xc30] sm:$0xff]
          %v2980 = vld [vmem:[%s2588 + $0xc38] sm:$0xff]
          %v2981 = vld [vmem:[%s2588 + $0xc40] sm:$0xff]
          %v2982 = vld [vmem:[%s2588 + $0xc48] sm:$0xff]
          %v2983 = vld [vmem:[%s2588 + $0xc50] sm:$0xff]
          %v2984 = vld [vmem:[%s2588 + $0xc58] sm:$0xff]
          %v2985 = vld [vmem:[%s2588 + $0xc60] sm:$0xff]
          %v2986 = vld [vmem:[%s2588 + $0xc68] sm:$0xff]
          %v2987 = vld [vmem:[%s2588 + $0xc70] sm:$0xff]
          %v2988 = vld [vmem:[%s2588 + $0xc78] sm:$0xff]
          %v2989 = vld [vmem:[%s2588 + $0xc80] sm:$0xff]
          %v2990 = vld [vmem:[%s2588 + $0xc88] sm:$0xff]
          %v2991 = vld [vmem:[%s2588 + $0xc90] sm:$0xff]
          %v2992 = vld [vmem:[%s2588 + $0xc98] sm:$0xff]
          %v2993 = vld [vmem:[%s2588 + $0xca0] sm:$0xff]
          %v2994 = vld [vmem:[%s2588 + $0xca8] sm:$0xff]
          %v2995 = vld [vmem:[%s2588 + $0xcb0] sm:$0xff]
          %v2996 = vld [vmem:[%s2588 + $0xcb8] sm:$0xff]
          %v2997 = vld [vmem:[%s2588 + $0xcc0] sm:$0xff]
          %v2998 = vld [vmem:[%s2588 + $0xcc8] sm:$0xff]
          %v2999 = vld [vmem:[%s2588 + $0xcd0] sm:$0xff]
          %v3000 = vld [vmem:[%s2588 + $0xcd8] sm:$0xff]
          %v3001 = vld [vmem:[%s2588 + $0xce0] sm:$0xff]
          %v3002 = vld [vmem:[%s2588 + $0xce8] sm:$0xff]
          %v3003 = vld [vmem:[%s2588 + $0xcf0] sm:$0xff]
          %v3004 = vld [vmem:[%s2588 + $0xcf8] sm:$0xff]
          %v3005 = vld [vmem:[%s2588 + $0xd00] sm:$0xff]
          %v3006 = vld [vmem:[%s2588 + $0xd08] sm:$0xff]
          %v3007 = vld [vmem:[%s2588 + $0xd10] sm:$0xff]
          %v3008 = vld [vmem:[%s2588 + $0xd18] sm:$0xff]
          %v3009 = vld [vmem:[%s2588 + $0xd20] sm:$0xff]
          %v3010 = vld [vmem:[%s2588 + $0xd28] sm:$0xff]
          %v3011 = vld [vmem:[%s2588 + $0xd30] sm:$0xff]
          %v3012 = vld [vmem:[%s2588 + $0xd38] sm:$0xff]
          %v3013 = vld [vmem:[%s2588 + $0xd40] sm:$0xff]
          %v3014 = vld [vmem:[%s2588 + $0xd48] sm:$0xff]
          %v3015 = vld [vmem:[%s2588 + $0xd50] sm:$0xff]
          %v3016 = vld [vmem:[%s2588 + $0xd58] sm:$0xff]
          %v3017 = vld [vmem:[%s2588 + $0xd60] sm:$0xff]
          %v3018 = vld [vmem:[%s2588 + $0xd68] sm:$0xff]
          %v3019 = vld [vmem:[%s2588 + $0xd70] sm:$0xff]
          %v3020 = vld [vmem:[%s2588 + $0xd78] sm:$0xff]
          %v3021 = vld [vmem:[%s2588 + $0xd80] sm:$0xff]
          %v3022 = vld [vmem:[%s2588 + $0xd88] sm:$0xff]
          %v3023 = vld [vmem:[%s2588 + $0xd90] sm:$0xff]
          %v3024 = vld [vmem:[%s2588 + $0xd98] sm:$0xff]
          %v3025 = vld [vmem:[%s2588 + $0xda0] sm:$0xff]
          %v3026 = vld [vmem:[%s2588 + $0xda8] sm:$0xff]
          %v3027 = vld [vmem:[%s2588 + $0xdb0] sm:$0xff]
          %v3028 = vld [vmem:[%s2588 + $0xdb8] sm:$0xff]
          %v3029 = vld [vmem:[%s2588 + $0xdc0] sm:$0xff]
          %v3030 = vld [vmem:[%s2588 + $0xdc8] sm:$0xff]
          %v3031 = vld [vmem:[%s2588 + $0xdd0] sm:$0xff]
          %v3032 = vld [vmem:[%s2588 + $0xdd8] sm:$0xff]
          %v3033 = vld [vmem:[%s2588 + $0xde0] sm:$0xff]
          %v3034 = vld [vmem:[%s2588 + $0xde8] sm:$0xff]
          %v3035 = vld [vmem:[%s2588 + $0xdf0] sm:$0xff]
          %v3036 = vld [vmem:[%s2588 + $0xdf8] sm:$0xff]
          %3039 = vst [vmem:[#allocation1] ss:$4 sm:$0xff] %v2586
          %s3040 = scalar_lea.vmem [#allocation1], 32
          %3041 = vst [vmem:[%s3040] ss:$4 sm:$0xff] %v2587
          %v3042 = vld.sshfl [vmem:[#allocation1] sm:$0xff pattern:$0x73625140]
          %v3043 = vld.sshfl [vmem:[#allocation1 + $0x8] sm:$0xff pattern:$0x73625140]
          %v3044 = vld.sshfl [vmem:[#allocation1 + $0x10] sm:$0xff pattern:$0x73625140]
          %v3045 = vld.sshfl [vmem:[#allocation1 + $0x18] sm:$0xff pattern:$0x73625140]
          %v3046 = vld.sshfl [vmem:[#allocation1 + $0x20] sm:$0xff pattern:$0x73625140]
          %v3047 = vld.sshfl [vmem:[#allocation1 + $0x28] sm:$0xff pattern:$0x73625140]
          %v3048 = vld.sshfl [vmem:[#allocation1 + $0x30] sm:$0xff pattern:$0x73625140]
          %3056 = vmatpush.msra.mxu0 %v2649
          %3057 = vmatpush.msra.mxu0 %v2645
          %3058 = vmatpush.msra.mxu0 %v2641
          %3059 = vmatpush.msra.mxu0 %v2637
          %3060 = vmatpush.msra.mxu0 %v2633
          %3061 = vmatpush.msra.mxu0 %v2629
          %3062 = vmatpush.msra.mxu0 %v2625
          %3063 = vmatpush.msra.mxu0 %v2621
          %3064 = vmatpush.msra.mxu0 %v2617
          %3065 = vmatpush.msra.mxu0 %v2613
          %3066 = vmatpush.msra.mxu0 %v2609
          %3067 = vmatpush.msra.mxu0 %v2605
          %3068 = vmatpush.msra.mxu0 %v2601
          %3069 = vmatpush.msra.mxu0 %v2597
          %3070 = vmatpush.msra.mxu0 %v2593
          %3071 = vmatpush.msra.mxu0 %v2589
          %3072 = vmatmul.f32.gmra.mxu0 %v3042
          %v3073 = vpop.f32.mrf.mxu0
          %v3074 = vadd.f32 0.0, %v3073
          %3075 = vdwg.mxu0
          %3076 = vmatpush.msra.mxu0 %v2713
          %3077 = vmatpush.msra.mxu0 %v2709
          %3078 = vmatpush.msra.mxu0 %v2705
          %3079 = vmatpush.msra.mxu0 %v2701
          %3080 = vmatpush.msra.mxu0 %v2697
          %3081 = vmatpush.msra.mxu0 %v2693
          %3082 = vmatpush.msra.mxu0 %v2689
          %3083 = vmatpush.msra.mxu0 %v2685
          %3084 = vmatpush.msra.mxu0 %v2681
          %3085 = vmatpush.msra.mxu0 %v2677
          %3086 = vmatpush.msra.mxu0 %v2673
          %3087 = vmatpush.msra.mxu0 %v2669
          %3088 = vmatpush.msra.mxu0 %v2665
          %3089 = vmatpush.msra.mxu0 %v2661
          %3090 = vmatpush.msra.mxu0 %v2657
          %3091 = vmatpush.msra.mxu0 %v2653
          %3092 = vmatmul.f32.gmra.mxu0 %v3043
          %v3093 = vpop.f32.mrf.mxu0
          %v3094 = vadd.f32 %v3074, %v3093
          %3095 = vdwg.mxu0
          %3096 = vmatpush.msra.mxu0 %v2777
          %3097 = vmatpush.msra.mxu0 %v2773
          %3098 = vmatpush.msra.mxu0 %v2769
          %3099 = vmatpush.msra.mxu0 %v2765
          %3100 = vmatpush.msra.mxu0 %v2761
          %3101 = vmatpush.msra.mxu0 %v2757
          %3102 = vmatpush.msra.mxu0 %v2753
          %3103 = vmatpush.msra.mxu0 %v2749
          %3104 = vmatpush.msra.mxu0 %v2745
          %3105 = vmatpush.msra.mxu0 %v2741
          %3106 = vmatpush.msra.mxu0 %v2737
          %3107 = vmatpush.msra.mxu0 %v2733
          %3108 = vmatpush.msra.mxu0 %v2729
          %3109 = vmatpush.msra.mxu0 %v2725
          %3110 = vmatpush.msra.mxu0 %v2721
          %3111 = vmatpush.msra.mxu0 %v2717
          %3112 = vmatmul.f32.gmra.mxu0 %v3044
          %v3113 = vpop.f32.mrf.mxu0
          %v3114 = vadd.f32 %v3094, %v3113
          %3115 = vdwg.mxu0
          %3116 = vmatpush.msra.mxu0 %v2841
          %3117 = vmatpush.msra.mxu0 %v2837
          %3118 = vmatpush.msra.mxu0 %v2833
          %3119 = vmatpush.msra.mxu0 %v2829
          %3120 = vmatpush.msra.mxu0 %v2825
          %3121 = vmatpush.msra.mxu0 %v2821
          %3122 = vmatpush.msra.mxu0 %v2817
          %3123 = vmatpush.msra.mxu0 %v2813
          %3124 = vmatpush.msra.mxu0 %v2809
          %3125 = vmatpush.msra.mxu0 %v2805
          %3126 = vmatpush.msra.mxu0 %v2801
          %3127 = vmatpush.msra.mxu0 %v2797
          %3128 = vmatpush.msra.mxu0 %v2793
          %3129 = vmatpush.msra.mxu0 %v2789
          %3130 = vmatpush.msra.mxu0 %v2785
          %3131 = vmatpush.msra.mxu0 %v2781
          %3132 = vmatmul.f32.gmra.mxu0 %v3045
          %v3133 = vpop.f32.mrf.mxu0
          %v3134 = vadd.f32 %v3114, %v3133
          %3135 = vdwg.mxu0
          %3136 = vmatpush.msra.mxu0 %v2905
          %3137 = vmatpush.msra.mxu0 %v2901
          %3138 = vmatpush.msra.mxu0 %v2897
          %3139 = vmatpush.msra.mxu0 %v2893
          %3140 = vmatpush.msra.mxu0 %v2889
          %3141 = vmatpush.msra.mxu0 %v2885
          %3142 = vmatpush.msra.mxu0 %v2881
          %3143 = vmatpush.msra.mxu0 %v2877
          %3144 = vmatpush.msra.mxu0 %v2873
          %3145 = vmatpush.msra.mxu0 %v2869
          %3146 = vmatpush.msra.mxu0 %v2865
          %3147 = vmatpush.msra.mxu0 %v2861
          %3148 = vmatpush.msra.mxu0 %v2857
          %3149 = vmatpush.msra.mxu0 %v2853
          %3150 = vmatpush.msra.mxu0 %v2849
          %3151 = vmatpush.msra.mxu0 %v2845
          %3152 = vmatmul.f32.gmra.mxu0 %v3046
          %v3153 = vpop.f32.mrf.mxu0
          %v3154 = vadd.f32 %v3134, %v3153
          %3155 = vdwg.mxu0
          %3156 = vmatpush.msra.mxu0 %v2969
          %3157 = vmatpush.msra.mxu0 %v2965
          %3158 = vmatpush.msra.mxu0 %v2961
          %3159 = vmatpush.msra.mxu0 %v2957
          %3160 = vmatpush.msra.mxu0 %v2953
          %3161 = vmatpush.msra.mxu0 %v2949
          %3162 = vmatpush.msra.mxu0 %v2945
          %3163 = vmatpush.msra.mxu0 %v2941
          %3164 = vmatpush.msra.mxu0 %v2937
          %3165 = vmatpush.msra.mxu0 %v2933
          %3166 = vmatpush.msra.mxu0 %v2929
          %3167 = vmatpush.msra.mxu0 %v2925
          %3168 = vmatpush.msra.mxu0 %v2921
          %3169 = vmatpush.msra.mxu0 %v2917
          %3170 = vmatpush.msra.mxu0 %v2913
          %3171 = vmatpush.msra.mxu0 %v2909
          %3172 = vmatmul.f32.gmra.mxu0 %v3047
          %v3173 = vpop.f32.mrf.mxu0
          %v3174 = vadd.f32 %v3154, %v3173
          %3175 = vdwg.mxu0
          %3176 = vmatpush.msra.mxu0 %v3033
          %3177 = vmatpush.msra.mxu0 %v3029
          %3178 = vmatpush.msra.mxu0 %v3025
          %3179 = vmatpush.msra.mxu0 %v3021
          %3180 = vmatpush.msra.mxu0 %v3017
          %3181 = vmatpush.msra.mxu0 %v3013
          %3182 = vmatpush.msra.mxu0 %v3009
          %3183 = vmatpush.msra.mxu0 %v3005
          %3184 = vmatpush.msra.mxu0 %v3001
          %3185 = vmatpush.msra.mxu0 %v2997
          %3186 = vmatpush.msra.mxu0 %v2993
          %3187 = vmatpush.msra.mxu0 %v2989
          %3188 = vmatpush.msra.mxu0 %v2985
          %3189 = vmatpush.msra.mxu0 %v2981
          %3190 = vmatpush.msra.mxu0 %v2977
          %3191 = vmatpush.msra.mxu0 %v2973
          %3192 = vmatmul.f32.gmra.mxu0 %v3048
          %v3193 = vpop.f32.mrf.mxu0
          %v3194 = vadd.f32 %v3174, %v3193
          %3195 = vdwg.mxu0
          %3196 = vmatpush.msra.mxu0 %v2650
          %3197 = vmatpush.msra.mxu0 %v2646
          %3198 = vmatpush.msra.mxu0 %v2642
          %3199 = vmatpush.msra.mxu0 %v2638
          %3200 = vmatpush.msra.mxu0 %v2634
          %3201 = vmatpush.msra.mxu0 %v2630
          %3202 = vmatpush.msra.mxu0 %v2626
          %3203 = vmatpush.msra.mxu0 %v2622
          %3204 = vmatpush.msra.mxu0 %v2618
          %3205 = vmatpush.msra.mxu0 %v2614
          %3206 = vmatpush.msra.mxu0 %v2610
          %3207 = vmatpush.msra.mxu0 %v2606
          %3208 = vmatpush.msra.mxu0 %v2602
          %3209 = vmatpush.msra.mxu0 %v2598
          %3210 = vmatpush.msra.mxu0 %v2594
          %3211 = vmatpush.msra.mxu0 %v2590
          %3212 = vmatmul.f32.gmra.mxu0 %v3042
          %v3213 = vpop.f32.mrf.mxu0
          %v3214 = vadd.f32 0.0, %v3213
          %3215 = vdwg.mxu0
          %3216 = vmatpush.msra.mxu0 %v2714
          %3217 = vmatpush.msra.mxu0 %v2710
          %3218 = vmatpush.msra.mxu0 %v2706
          %3219 = vmatpush.msra.mxu0 %v2702
          %3220 = vmatpush.msra.mxu0 %v2698
          %3221 = vmatpush.msra.mxu0 %v2694
          %3222 = vmatpush.msra.mxu0 %v2690
          %3223 = vmatpush.msra.mxu0 %v2686
          %3224 = vmatpush.msra.mxu0 %v2682
          %3225 = vmatpush.msra.mxu0 %v2678
          %3226 = vmatpush.msra.mxu0 %v2674
          %3227 = vmatpush.msra.mxu0 %v2670
          %3228 = vmatpush.msra.mxu0 %v2666
          %3229 = vmatpush.msra.mxu0 %v2662
          %3230 = vmatpush.msra.mxu0 %v2658
          %3231 = vmatpush.msra.mxu0 %v2654
          %3232 = vmatmul.f32.gmra.mxu0 %v3043
          %v3233 = vpop.f32.mrf.mxu0
          %v3234 = vadd.f32 %v3214, %v3233
          %3235 = vdwg.mxu0
          %3236 = vmatpush.msra.mxu0 %v2778
          %3237 = vmatpush.msra.mxu0 %v2774
          %3238 = vmatpush.msra.mxu0 %v2770
          %3239 = vmatpush.msra.mxu0 %v2766
          %3240 = vmatpush.msra.mxu0 %v2762
          %3241 = vmatpush.msra.mxu0 %v2758
          %3242 = vmatpush.msra.mxu0 %v2754
          %3243 = vmatpush.msra.mxu0 %v2750
          %3244 = vmatpush.msra.mxu0 %v2746
          %3245 = vmatpush.msra.mxu0 %v2742
          %3246 = vmatpush.msra.mxu0 %v2738
          %3247 = vmatpush.msra.mxu0 %v2734
          %3248 = vmatpush.msra.mxu0 %v2730
          %3249 = vmatpush.msra.mxu0 %v2726
          %3250 = vmatpush.msra.mxu0 %v2722
          %3251 = vmatpush.msra.mxu0 %v2718
          %3252 = vmatmul.f32.gmra.mxu0 %v3044
          %v3253 = vpop.f32.mrf.mxu0
          %v3254 = vadd.f32 %v3234, %v3253
          %3255 = vdwg.mxu0
          %3256 = vmatpush.msra.mxu0 %v2842
          %3257 = vmatpush.msra.mxu0 %v2838
          %3258 = vmatpush.msra.mxu0 %v2834
          %3259 = vmatpush.msra.mxu0 %v2830
          %3260 = vmatpush.msra.mxu0 %v2826
          %3261 = vmatpush.msra.mxu0 %v2822
          %3262 = vmatpush.msra.mxu0 %v2818
          %3263 = vmatpush.msra.mxu0 %v2814
          %3264 = vmatpush.msra.mxu0 %v2810
          %3265 = vmatpush.msra.mxu0 %v2806
          %3266 = vmatpush.msra.mxu0 %v2802
          %3267 = vmatpush.msra.mxu0 %v2798
          %3268 = vmatpush.msra.mxu0 %v2794
          %3269 = vmatpush.msra.mxu0 %v2790
          %3270 = vmatpush.msra.mxu0 %v2786
          %3271 = vmatpush.msra.mxu0 %v2782
          %3272 = vmatmul.f32.gmra.mxu0 %v3045
          %v3273 = vpop.f32.mrf.mxu0
          %v3274 = vadd.f32 %v3254, %v3273
          %3275 = vdwg.mxu0
          %3276 = vmatpush.msra.mxu0 %v2906
          %3277 = vmatpush.msra.mxu0 %v2902
          %3278 = vmatpush.msra.mxu0 %v2898
          %3279 = vmatpush.msra.mxu0 %v2894
          %3280 = vmatpush.msra.mxu0 %v2890
          %3281 = vmatpush.msra.mxu0 %v2886
          %3282 = vmatpush.msra.mxu0 %v2882
          %3283 = vmatpush.msra.mxu0 %v2878
          %3284 = vmatpush.msra.mxu0 %v2874
          %3285 = vmatpush.msra.mxu0 %v2870
          %3286 = vmatpush.msra.mxu0 %v2866
          %3287 = vmatpush.msra.mxu0 %v2862
          %3288 = vmatpush.msra.mxu0 %v2858
          %3289 = vmatpush.msra.mxu0 %v2854
          %3290 = vmatpush.msra.mxu0 %v2850
          %3291 = vmatpush.msra.mxu0 %v2846
          %3292 = vmatmul.f32.gmra.mxu0 %v3046
          %v3293 = vpop.f32.mrf.mxu0
          %v3294 = vadd.f32 %v3274, %v3293
          %3295 = vdwg.mxu0
          %3296 = vmatpush.msra.mxu0 %v2970
          %3297 = vmatpush.msra.mxu0 %v2966
          %3298 = vmatpush.msra.mxu0 %v2962
          %3299 = vmatpush.msra.mxu0 %v2958
          %3300 = vmatpush.msra.mxu0 %v2954
          %3301 = vmatpush.msra.mxu0 %v2950
          %3302 = vmatpush.msra.mxu0 %v2946
          %3303 = vmatpush.msra.mxu0 %v2942
          %3304 = vmatpush.msra.mxu0 %v2938
          %3305 = vmatpush.msra.mxu0 %v2934
          %3306 = vmatpush.msra.mxu0 %v2930
          %3307 = vmatpush.msra.mxu0 %v2926
          %3308 = vmatpush.msra.mxu0 %v2922
          %3309 = vmatpush.msra.mxu0 %v2918
          %3310 = vmatpush.msra.mxu0 %v2914
          %3311 = vmatpush.msra.mxu0 %v2910
          %3312 = vmatmul.f32.gmra.mxu0 %v3047
          %v3313 = vpop.f32.mrf.mxu0
          %v3314 = vadd.f32 %v3294, %v3313
          %3315 = vdwg.mxu0
          %3316 = vmatpush.msra.mxu0 %v3034
          %3317 = vmatpush.msra.mxu0 %v3030
          %3318 = vmatpush.msra.mxu0 %v3026
          %3319 = vmatpush.msra.mxu0 %v3022
          %3320 = vmatpush.msra.mxu0 %v3018
          %3321 = vmatpush.msra.mxu0 %v3014
          %3322 = vmatpush.msra.mxu0 %v3010
          %3323 = vmatpush.msra.mxu0 %v3006
          %3324 = vmatpush.msra.mxu0 %v3002
          %3325 = vmatpush.msra.mxu0 %v2998
          %3326 = vmatpush.msra.mxu0 %v2994
          %3327 = vmatpush.msra.mxu0 %v2990
          %3328 = vmatpush.msra.mxu0 %v2986
          %3329 = vmatpush.msra.mxu0 %v2982
          %3330 = vmatpush.msra.mxu0 %v2978
          %3331 = vmatpush.msra.mxu0 %v2974
          %3332 = vmatmul.f32.gmra.mxu0 %v3048
          %v3333 = vpop.f32.mrf.mxu0
          %v3334 = vadd.f32 %v3314, %v3333
          %3335 = vdwg.mxu0
          %3336 = vmatpush.msra.mxu0 %v2651
          %3337 = vmatpush.msra.mxu0 %v2647
          %3338 = vmatpush.msra.mxu0 %v2643
          %3339 = vmatpush.msra.mxu0 %v2639
          %3340 = vmatpush.msra.mxu0 %v2635
          %3341 = vmatpush.msra.mxu0 %v2631
          %3342 = vmatpush.msra.mxu0 %v2627
          %3343 = vmatpush.msra.mxu0 %v2623
          %3344 = vmatpush.msra.mxu0 %v2619
          %3345 = vmatpush.msra.mxu0 %v2615
          %3346 = vmatpush.msra.mxu0 %v2611
          %3347 = vmatpush.msra.mxu0 %v2607
          %3348 = vmatpush.msra.mxu0 %v2603
          %3349 = vmatpush.msra.mxu0 %v2599
          %3350 = vmatpush.msra.mxu0 %v2595
          %3351 = vmatpush.msra.mxu0 %v2591
          %3352 = vmatmul.f32.gmra.mxu0 %v3042
          %v3353 = vpop.f32.mrf.mxu0
          %v3354 = vadd.f32 0.0, %v3353
          %3355 = vdwg.mxu0
          %3356 = vmatpush.msra.mxu0 %v2715
          %3357 = vmatpush.msra.mxu0 %v2711
          %3358 = vmatpush.msra.mxu0 %v2707
          %3359 = vmatpush.msra.mxu0 %v2703
          %3360 = vmatpush.msra.mxu0 %v2699
          %3361 = vmatpush.msra.mxu0 %v2695
          %3362 = vmatpush.msra.mxu0 %v2691
          %3363 = vmatpush.msra.mxu0 %v2687
          %3364 = vmatpush.msra.mxu0 %v2683
          %3365 = vmatpush.msra.mxu0 %v2679
          %3366 = vmatpush.msra.mxu0 %v2675
          %3367 = vmatpush.msra.mxu0 %v2671
          %3368 = vmatpush.msra.mxu0 %v2667
          %3369 = vmatpush.msra.mxu0 %v2663
          %3370 = vmatpush.msra.mxu0 %v2659
          %3371 = vmatpush.msra.mxu0 %v2655
          %3372 = vmatmul.f32.gmra.mxu0 %v3043
          %v3373 = vpop.f32.mrf.mxu0
          %v3374 = vadd.f32 %v3354, %v3373
          %3375 = vdwg.mxu0
          %3376 = vmatpush.msra.mxu0 %v2779
          %3377 = vmatpush.msra.mxu0 %v2775
          %3378 = vmatpush.msra.mxu0 %v2771
          %3379 = vmatpush.msra.mxu0 %v2767
          %3380 = vmatpush.msra.mxu0 %v2763
          %3381 = vmatpush.msra.mxu0 %v2759
          %3382 = vmatpush.msra.mxu0 %v2755
          %3383 = vmatpush.msra.mxu0 %v2751
          %3384 = vmatpush.msra.mxu0 %v2747
          %3385 = vmatpush.msra.mxu0 %v2743
          %3386 = vmatpush.msra.mxu0 %v2739
          %3387 = vmatpush.msra.mxu0 %v2735
          %3388 = vmatpush.msra.mxu0 %v2731
          %3389 = vmatpush.msra.mxu0 %v2727
          %3390 = vmatpush.msra.mxu0 %v2723
          %3391 = vmatpush.msra.mxu0 %v2719
          %3392 = vmatmul.f32.gmra.mxu0 %v3044
          %v3393 = vpop.f32.mrf.mxu0
          %v3394 = vadd.f32 %v3374, %v3393
          %3395 = vdwg.mxu0
          %3396 = vmatpush.msra.mxu0 %v2843
          %3397 = vmatpush.msra.mxu0 %v2839
          %3398 = vmatpush.msra.mxu0 %v2835
          %3399 = vmatpush.msra.mxu0 %v2831
          %3400 = vmatpush.msra.mxu0 %v2827
          %3401 = vmatpush.msra.mxu0 %v2823
          %3402 = vmatpush.msra.mxu0 %v2819
          %3403 = vmatpush.msra.mxu0 %v2815
          %3404 = vmatpush.msra.mxu0 %v2811
          %3405 = vmatpush.msra.mxu0 %v2807
          %3406 = vmatpush.msra.mxu0 %v2803
          %3407 = vmatpush.msra.mxu0 %v2799
          %3408 = vmatpush.msra.mxu0 %v2795
          %3409 = vmatpush.msra.mxu0 %v2791
          %3410 = vmatpush.msra.mxu0 %v2787
          %3411 = vmatpush.msra.mxu0 %v2783
          %3412 = vmatmul.f32.gmra.mxu0 %v3045
          %v3413 = vpop.f32.mrf.mxu0
          %v3414 = vadd.f32 %v3394, %v3413
          %3415 = vdwg.mxu0
          %3416 = vmatpush.msra.mxu0 %v2907
          %3417 = vmatpush.msra.mxu0 %v2903
          %3418 = vmatpush.msra.mxu0 %v2899
          %3419 = vmatpush.msra.mxu0 %v2895
          %3420 = vmatpush.msra.mxu0 %v2891
          %3421 = vmatpush.msra.mxu0 %v2887
          %3422 = vmatpush.msra.mxu0 %v2883
          %3423 = vmatpush.msra.mxu0 %v2879
          %3424 = vmatpush.msra.mxu0 %v2875
          %3425 = vmatpush.msra.mxu0 %v2871
          %3426 = vmatpush.msra.mxu0 %v2867
          %3427 = vmatpush.msra.mxu0 %v2863
          %3428 = vmatpush.msra.mxu0 %v2859
          %3429 = vmatpush.msra.mxu0 %v2855
          %3430 = vmatpush.msra.mxu0 %v2851
          %3431 = vmatpush.msra.mxu0 %v2847
          %3432 = vmatmul.f32.gmra.mxu0 %v3046
          %v3433 = vpop.f32.mrf.mxu0
          %v3434 = vadd.f32 %v3414, %v3433
          %3435 = vdwg.mxu0
          %3436 = vmatpush.msra.mxu0 %v2971
          %3437 = vmatpush.msra.mxu0 %v2967
          %3438 = vmatpush.msra.mxu0 %v2963
          %3439 = vmatpush.msra.mxu0 %v2959
          %3440 = vmatpush.msra.mxu0 %v2955
          %3441 = vmatpush.msra.mxu0 %v2951
          %3442 = vmatpush.msra.mxu0 %v2947
          %3443 = vmatpush.msra.mxu0 %v2943
          %3444 = vmatpush.msra.mxu0 %v2939
          %3445 = vmatpush.msra.mxu0 %v2935
          %3446 = vmatpush.msra.mxu0 %v2931
          %3447 = vmatpush.msra.mxu0 %v2927
          %3448 = vmatpush.msra.mxu0 %v2923
          %3449 = vmatpush.msra.mxu0 %v2919
          %3450 = vmatpush.msra.mxu0 %v2915
          %3451 = vmatpush.msra.mxu0 %v2911
          %3452 = vmatmul.f32.gmra.mxu0 %v3047
          %v3453 = vpop.f32.mrf.mxu0
          %v3454 = vadd.f32 %v3434, %v3453
          %3455 = vdwg.mxu0
          %3456 = vmatpush.msra.mxu0 %v3035
          %3457 = vmatpush.msra.mxu0 %v3031
          %3458 = vmatpush.msra.mxu0 %v3027
          %3459 = vmatpush.msra.mxu0 %v3023
          %3460 = vmatpush.msra.mxu0 %v3019
          %3461 = vmatpush.msra.mxu0 %v3015
          %3462 = vmatpush.msra.mxu0 %v3011
          %3463 = vmatpush.msra.mxu0 %v3007
          %3464 = vmatpush.msra.mxu0 %v3003
          %3465 = vmatpush.msra.mxu0 %v2999
          %3466 = vmatpush.msra.mxu0 %v2995
          %3467 = vmatpush.msra.mxu0 %v2991
          %3468 = vmatpush.msra.mxu0 %v2987
          %3469 = vmatpush.msra.mxu0 %v2983
          %3470 = vmatpush.msra.mxu0 %v2979
          %3471 = vmatpush.msra.mxu0 %v2975
          %3472 = vmatmul.f32.gmra.mxu0 %v3048
          %v3473 = vpop.f32.mrf.mxu0
          %v3474 = vadd.f32 %v3454, %v3473
          %3475 = vdwg.mxu0
          %3476 = vmatpush.msra.mxu0 %v2652
          %3477 = vmatpush.msra.mxu0 %v2648
          %3478 = vmatpush.msra.mxu0 %v2644
          %3479 = vmatpush.msra.mxu0 %v2640
          %3480 = vmatpush.msra.mxu0 %v2636
          %3481 = vmatpush.msra.mxu0 %v2632
          %3482 = vmatpush.msra.mxu0 %v2628
          %3483 = vmatpush.msra.mxu0 %v2624
          %3484 = vmatpush.msra.mxu0 %v2620
          %3485 = vmatpush.msra.mxu0 %v2616
          %3486 = vmatpush.msra.mxu0 %v2612
          %3487 = vmatpush.msra.mxu0 %v2608
          %3488 = vmatpush.msra.mxu0 %v2604
          %3489 = vmatpush.msra.mxu0 %v2600
          %3490 = vmatpush.msra.mxu0 %v2596
          %3491 = vmatpush.msra.mxu0 %v2592
          %3492 = vmatmul.f32.gmra.mxu0 %v3042
          %v3493 = vpop.f32.mrf.mxu0
          %v3494 = vadd.f32 0.0, %v3493
          %3495 = vdwg.mxu0
          %3496 = vmatpush.msra.mxu0 %v2716
          %3497 = vmatpush.msra.mxu0 %v2712
          %3498 = vmatpush.msra.mxu0 %v2708
          %3499 = vmatpush.msra.mxu0 %v2704
          %3500 = vmatpush.msra.mxu0 %v2700
          %3501 = vmatpush.msra.mxu0 %v2696
          %3502 = vmatpush.msra.mxu0 %v2692
          %3503 = vmatpush.msra.mxu0 %v2688
          %3504 = vmatpush.msra.mxu0 %v2684
          %3505 = vmatpush.msra.mxu0 %v2680
          %3506 = vmatpush.msra.mxu0 %v2676
          %3507 = vmatpush.msra.mxu0 %v2672
          %3508 = vmatpush.msra.mxu0 %v2668
          %3509 = vmatpush.msra.mxu0 %v2664
          %3510 = vmatpush.msra.mxu0 %v2660
          %3511 = vmatpush.msra.mxu0 %v2656
          %3512 = vmatmul.f32.gmra.mxu0 %v3043
          %v3513 = vpop.f32.mrf.mxu0
          %v3514 = vadd.f32 %v3494, %v3513
          %3515 = vdwg.mxu0
          %3516 = vmatpush.msra.mxu0 %v2780
          %3517 = vmatpush.msra.mxu0 %v2776
          %3518 = vmatpush.msra.mxu0 %v2772
          %3519 = vmatpush.msra.mxu0 %v2768
          %3520 = vmatpush.msra.mxu0 %v2764
          %3521 = vmatpush.msra.mxu0 %v2760
          %3522 = vmatpush.msra.mxu0 %v2756
          %3523 = vmatpush.msra.mxu0 %v2752
          %3524 = vmatpush.msra.mxu0 %v2748
          %3525 = vmatpush.msra.mxu0 %v2744
          %3526 = vmatpush.msra.mxu0 %v2740
          %3527 = vmatpush.msra.mxu0 %v2736
          %3528 = vmatpush.msra.mxu0 %v2732
          %3529 = vmatpush.msra.mxu0 %v2728
          %3530 = vmatpush.msra.mxu0 %v2724
          %3531 = vmatpush.msra.mxu0 %v2720
          %3532 = vmatmul.f32.gmra.mxu0 %v3044
          %v3533 = vpop.f32.mrf.mxu0
          %v3534 = vadd.f32 %v3514, %v3533
          %3535 = vdwg.mxu0
          %3536 = vmatpush.msra.mxu0 %v2844
          %3537 = vmatpush.msra.mxu0 %v2840
          %3538 = vmatpush.msra.mxu0 %v2836
          %3539 = vmatpush.msra.mxu0 %v2832
          %3540 = vmatpush.msra.mxu0 %v2828
          %3541 = vmatpush.msra.mxu0 %v2824
          %3542 = vmatpush.msra.mxu0 %v2820
          %3543 = vmatpush.msra.mxu0 %v2816
          %3544 = vmatpush.msra.mxu0 %v2812
          %3545 = vmatpush.msra.mxu0 %v2808
          %3546 = vmatpush.msra.mxu0 %v2804
          %3547 = vmatpush.msra.mxu0 %v2800
          %3548 = vmatpush.msra.mxu0 %v2796
          %3549 = vmatpush.msra.mxu0 %v2792
          %3550 = vmatpush.msra.mxu0 %v2788
          %3551 = vmatpush.msra.mxu0 %v2784
          %3552 = vmatmul.f32.gmra.mxu0 %v3045
          %v3553 = vpop.f32.mrf.mxu0
          %v3554 = vadd.f32 %v3534, %v3553
          %3555 = vdwg.mxu0
          %3556 = vmatpush.msra.mxu0 %v2908
          %3557 = vmatpush.msra.mxu0 %v2904
          %3558 = vmatpush.msra.mxu0 %v2900
          %3559 = vmatpush.msra.mxu0 %v2896
          %3560 = vmatpush.msra.mxu0 %v2892
          %3561 = vmatpush.msra.mxu0 %v2888
          %3562 = vmatpush.msra.mxu0 %v2884
          %3563 = vmatpush.msra.mxu0 %v2880
          %3564 = vmatpush.msra.mxu0 %v2876
          %3565 = vmatpush.msra.mxu0 %v2872
          %3566 = vmatpush.msra.mxu0 %v2868
          %3567 = vmatpush.msra.mxu0 %v2864
          %3568 = vmatpush.msra.mxu0 %v2860
          %3569 = vmatpush.msra.mxu0 %v2856
          %3570 = vmatpush.msra.mxu0 %v2852
          %3571 = vmatpush.msra.mxu0 %v2848
          %3572 = vmatmul.f32.gmra.mxu0 %v3046
          %v3573 = vpop.f32.mrf.mxu0
          %v3574 = vadd.f32 %v3554, %v3573
          %3575 = vdwg.mxu0
          %3576 = vmatpush.msra.mxu0 %v2972
          %3577 = vmatpush.msra.mxu0 %v2968
          %3578 = vmatpush.msra.mxu0 %v2964
          %3579 = vmatpush.msra.mxu0 %v2960
          %3580 = vmatpush.msra.mxu0 %v2956
          %3581 = vmatpush.msra.mxu0 %v2952
          %3582 = vmatpush.msra.mxu0 %v2948
          %3583 = vmatpush.msra.mxu0 %v2944
          %3584 = vmatpush.msra.mxu0 %v2940
          %3585 = vmatpush.msra.mxu0 %v2936
          %3586 = vmatpush.msra.mxu0 %v2932
          %3587 = vmatpush.msra.mxu0 %v2928
          %3588 = vmatpush.msra.mxu0 %v2924
          %3589 = vmatpush.msra.mxu0 %v2920
          %3590 = vmatpush.msra.mxu0 %v2916
          %3591 = vmatpush.msra.mxu0 %v2912
          %3592 = vmatmul.f32.gmra.mxu0 %v3047
          %v3593 = vpop.f32.mrf.mxu0
          %v3594 = vadd.f32 %v3574, %v3593
          %3595 = vdwg.mxu0
          %3596 = vmatpush.msra.mxu0 %v3036
          %3597 = vmatpush.msra.mxu0 %v3032
          %3598 = vmatpush.msra.mxu0 %v3028
          %3599 = vmatpush.msra.mxu0 %v3024
          %3600 = vmatpush.msra.mxu0 %v3020
          %3601 = vmatpush.msra.mxu0 %v3016
          %3602 = vmatpush.msra.mxu0 %v3012
          %3603 = vmatpush.msra.mxu0 %v3008
          %3604 = vmatpush.msra.mxu0 %v3004
          %3605 = vmatpush.msra.mxu0 %v3000
          %3606 = vmatpush.msra.mxu0 %v2996
          %3607 = vmatpush.msra.mxu0 %v2992
          %3608 = vmatpush.msra.mxu0 %v2988
          %3609 = vmatpush.msra.mxu0 %v2984
          %3610 = vmatpush.msra.mxu0 %v2980
          %3611 = vmatpush.msra.mxu0 %v2976
          %3612 = vmatmul.f32.gmra.mxu0 %v3048
          %v3613 = vpop.f32.mrf.mxu0
          %v3614 = vadd.f32 %v3594, %v3613
          %3615 = vdwg.mxu0
          %3618 = vst [vmem:[#allocation1] ss:$4 sm:$0xff] %v2132
          %s3619 = scalar_lea.vmem [#allocation1], 32
          %3620 = vst [vmem:[%s3619] ss:$4 sm:$0xff] %v2133
          %v3621 = vld.sshfl [vmem:[#allocation1] sm:$0xff pattern:$0x73625140]
          %v3622 = vld.sshfl [vmem:[#allocation1 + $0x8] sm:$0xff pattern:$0x73625140]
          %v3623 = vld.sshfl [vmem:[#allocation1 + $0x10] sm:$0xff pattern:$0x73625140]
          %v3624 = vld.sshfl [vmem:[#allocation1 + $0x18] sm:$0xff pattern:$0x73625140]
          %v3625 = vld.sshfl [vmem:[#allocation1 + $0x20] sm:$0xff pattern:$0x73625140]
          %v3626 = vld.sshfl [vmem:[#allocation1 + $0x28] sm:$0xff pattern:$0x73625140]
          %v3627 = vld.sshfl [vmem:[#allocation1 + $0x30] sm:$0xff pattern:$0x73625140]
          %3635 = vmatpush.msra.mxu0 %v2194
          %3636 = vmatpush.msra.mxu0 %v2190
          %3637 = vmatpush.msra.mxu0 %v2186
          %3638 = vmatpush.msra.mxu0 %v2182
          %3639 = vmatpush.msra.mxu0 %v2178
          %3640 = vmatpush.msra.mxu0 %v2174
          %3641 = vmatpush.msra.mxu0 %v2170
          %3642 = vmatpush.msra.mxu0 %v2166
          %3643 = vmatpush.msra.mxu0 %v2162
          %3644 = vmatpush.msra.mxu0 %v2158
          %3645 = vmatpush.msra.mxu0 %v2154
          %3646 = vmatpush.msra.mxu0 %v2150
          %3647 = vmatpush.msra.mxu0 %v2146
          %3648 = vmatpush.msra.mxu0 %v2142
          %3649 = vmatpush.msra.mxu0 %v2138
          %3650 = vmatpush.msra.mxu0 %v2134
          %3651 = vmatmul.f32.gmra.mxu0 %v3621
          %v3652 = vpop.f32.mrf.mxu0
          %v3653 = vadd.f32 %v3194, %v3652
          %3654 = vdwg.mxu0
          %3655 = vmatpush.msra.mxu0 %v2258
          %3656 = vmatpush.msra.mxu0 %v2254
          %3657 = vmatpush.msra.mxu0 %v2250
          %3658 = vmatpush.msra.mxu0 %v2246
          %3659 = vmatpush.msra.mxu0 %v2242
          %3660 = vmatpush.msra.mxu0 %v2238
          %3661 = vmatpush.msra.mxu0 %v2234
          %3662 = vmatpush.msra.mxu0 %v2230
          %3663 = vmatpush.msra.mxu0 %v2226
          %3664 = vmatpush.msra.mxu0 %v2222
          %3665 = vmatpush.msra.mxu0 %v2218
          %3666 = vmatpush.msra.mxu0 %v2214
          %3667 = vmatpush.msra.mxu0 %v2210
          %3668 = vmatpush.msra.mxu0 %v2206
          %3669 = vmatpush.msra.mxu0 %v2202
          %3670 = vmatpush.msra.mxu0 %v2198
          %3671 = vmatmul.f32.gmra.mxu0 %v3622
          %v3672 = vpop.f32.mrf.mxu0
          %v3673 = vadd.f32 %v3653, %v3672
          %3674 = vdwg.mxu0
          %3675 = vmatpush.msra.mxu0 %v2322
          %3676 = vmatpush.msra.mxu0 %v2318
          %3677 = vmatpush.msra.mxu0 %v2314
          %3678 = vmatpush.msra.mxu0 %v2310
          %3679 = vmatpush.msra.mxu0 %v2306
          %3680 = vmatpush.msra.mxu0 %v2302
          %3681 = vmatpush.msra.mxu0 %v2298
          %3682 = vmatpush.msra.mxu0 %v2294
          %3683 = vmatpush.msra.mxu0 %v2290
          %3684 = vmatpush.msra.mxu0 %v2286
          %3685 = vmatpush.msra.mxu0 %v2282
          %3686 = vmatpush.msra.mxu0 %v2278
          %3687 = vmatpush.msra.mxu0 %v2274
          %3688 = vmatpush.msra.mxu0 %v2270
          %3689 = vmatpush.msra.mxu0 %v2266
          %3690 = vmatpush.msra.mxu0 %v2262
          %3691 = vmatmul.f32.gmra.mxu0 %v3623
          %v3692 = vpop.f32.mrf.mxu0
          %v3693 = vadd.f32 %v3673, %v3692
          %3694 = vdwg.mxu0
          %3695 = vmatpush.msra.mxu0 %v2386
          %3696 = vmatpush.msra.mxu0 %v2382
          %3697 = vmatpush.msra.mxu0 %v2378
          %3698 = vmatpush.msra.mxu0 %v2374
          %3699 = vmatpush.msra.mxu0 %v2370
          %3700 = vmatpush.msra.mxu0 %v2366
          %3701 = vmatpush.msra.mxu0 %v2362
          %3702 = vmatpush.msra.mxu0 %v2358
          %3703 = vmatpush.msra.mxu0 %v2354
          %3704 = vmatpush.msra.mxu0 %v2350
          %3705 = vmatpush.msra.mxu0 %v2346
          %3706 = vmatpush.msra.mxu0 %v2342
          %3707 = vmatpush.msra.mxu0 %v2338
          %3708 = vmatpush.msra.mxu0 %v2334
          %3709 = vmatpush.msra.mxu0 %v2330
          %3710 = vmatpush.msra.mxu0 %v2326
          %3711 = vmatmul.f32.gmra.mxu0 %v3624
          %v3712 = vpop.f32.mrf.mxu0
          %v3713 = vadd.f32 %v3693, %v3712
          %3714 = vdwg.mxu0
          %3715 = vmatpush.msra.mxu0 %v2450
          %3716 = vmatpush.msra.mxu0 %v2446
          %3717 = vmatpush.msra.mxu0 %v2442
          %3718 = vmatpush.msra.mxu0 %v2438
          %3719 = vmatpush.msra.mxu0 %v2434
          %3720 = vmatpush.msra.mxu0 %v2430
          %3721 = vmatpush.msra.mxu0 %v2426
          %3722 = vmatpush.msra.mxu0 %v2422
          %3723 = vmatpush.msra.mxu0 %v2418
          %3724 = vmatpush.msra.mxu0 %v2414
          %3725 = vmatpush.msra.mxu0 %v2410
          %3726 = vmatpush.msra.mxu0 %v2406
          %3727 = vmatpush.msra.mxu0 %v2402
          %3728 = vmatpush.msra.mxu0 %v2398
          %3729 = vmatpush.msra.mxu0 %v2394
          %3730 = vmatpush.msra.mxu0 %v2390
          %3731 = vmatmul.f32.gmra.mxu0 %v3625
          %v3732 = vpop.f32.mrf.mxu0
          %v3733 = vadd.f32 %v3713, %v3732
          %3734 = vdwg.mxu0
          %3735 = vmatpush.msra.mxu0 %v2514
          %3736 = vmatpush.msra.mxu0 %v2510
          %3737 = vmatpush.msra.mxu0 %v2506
          %3738 = vmatpush.msra.mxu0 %v2502
          %3739 = vmatpush.msra.mxu0 %v2498
          %3740 = vmatpush.msra.mxu0 %v2494
          %3741 = vmatpush.msra.mxu0 %v2490
          %3742 = vmatpush.msra.mxu0 %v2486
          %3743 = vmatpush.msra.mxu0 %v2482
          %3744 = vmatpush.msra.mxu0 %v2478
          %3745 = vmatpush.msra.mxu0 %v2474
          %3746 = vmatpush.msra.mxu0 %v2470
          %3747 = vmatpush.msra.mxu0 %v2466
          %3748 = vmatpush.msra.mxu0 %v2462
          %3749 = vmatpush.msra.mxu0 %v2458
          %3750 = vmatpush.msra.mxu0 %v2454
          %3751 = vmatmul.f32.gmra.mxu0 %v3626
          %v3752 = vpop.f32.mrf.mxu0
          %v3753 = vadd.f32 %v3733, %v3752
          %3754 = vdwg.mxu0
          %3755 = vmatpush.msra.mxu0 %v2578
          %3756 = vmatpush.msra.mxu0 %v2574
          %3757 = vmatpush.msra.mxu0 %v2570
          %3758 = vmatpush.msra.mxu0 %v2566
          %3759 = vmatpush.msra.mxu0 %v2562
          %3760 = vmatpush.msra.mxu0 %v2558
          %3761 = vmatpush.msra.mxu0 %v2554
          %3762 = vmatpush.msra.mxu0 %v2550
          %3763 = vmatpush.msra.mxu0 %v2546
          %3764 = vmatpush.msra.mxu0 %v2542
          %3765 = vmatpush.msra.mxu0 %v2538
          %3766 = vmatpush.msra.mxu0 %v2534
          %3767 = vmatpush.msra.mxu0 %v2530
          %3768 = vmatpush.msra.mxu0 %v2526
          %3769 = vmatpush.msra.mxu0 %v2522
          %3770 = vmatpush.msra.mxu0 %v2518
          %3771 = vmatmul.f32.gmra.mxu0 %v3627
          %v3772 = vpop.f32.mrf.mxu0
          %v3773 = vadd.f32 %v3753, %v3772
          %3774 = vdwg.mxu0
          %3775 = vmatpush.msra.mxu0 %v2195
          %3776 = vmatpush.msra.mxu0 %v2191
          %3777 = vmatpush.msra.mxu0 %v2187
          %3778 = vmatpush.msra.mxu0 %v2183
          %3779 = vmatpush.msra.mxu0 %v2179
          %3780 = vmatpush.msra.mxu0 %v2175
          %3781 = vmatpush.msra.mxu0 %v2171
          %3782 = vmatpush.msra.mxu0 %v2167
          %3783 = vmatpush.msra.mxu0 %v2163
          %3784 = vmatpush.msra.mxu0 %v2159
          %3785 = vmatpush.msra.mxu0 %v2155
          %3786 = vmatpush.msra.mxu0 %v2151
          %3787 = vmatpush.msra.mxu0 %v2147
          %3788 = vmatpush.msra.mxu0 %v2143
          %3789 = vmatpush.msra.mxu0 %v2139
          %3790 = vmatpush.msra.mxu0 %v2135
          %3791 = vmatmul.f32.gmra.mxu0 %v3621
          %v3792 = vpop.f32.mrf.mxu0
          %v3793 = vadd.f32 %v3334, %v3792
          %3794 = vdwg.mxu0
          %3795 = vmatpush.msra.mxu0 %v2259
          %3796 = vmatpush.msra.mxu0 %v2255
          %3797 = vmatpush.msra.mxu0 %v2251
          %3798 = vmatpush.msra.mxu0 %v2247
          %3799 = vmatpush.msra.mxu0 %v2243
          %3800 = vmatpush.msra.mxu0 %v2239
          %3801 = vmatpush.msra.mxu0 %v2235
          %3802 = vmatpush.msra.mxu0 %v2231
          %3803 = vmatpush.msra.mxu0 %v2227
          %3804 = vmatpush.msra.mxu0 %v2223
          %3805 = vmatpush.msra.mxu0 %v2219
          %3806 = vmatpush.msra.mxu0 %v2215
          %3807 = vmatpush.msra.mxu0 %v2211
          %3808 = vmatpush.msra.mxu0 %v2207
          %3809 = vmatpush.msra.mxu0 %v2203
          %3810 = vmatpush.msra.mxu0 %v2199
          %3811 = vmatmul.f32.gmra.mxu0 %v3622
          %v3812 = vpop.f32.mrf.mxu0
          %v3813 = vadd.f32 %v3793, %v3812
          %3814 = vdwg.mxu0
          %3815 = vmatpush.msra.mxu0 %v2323
          %3816 = vmatpush.msra.mxu0 %v2319
          %3817 = vmatpush.msra.mxu0 %v2315
          %3818 = vmatpush.msra.mxu0 %v2311
          %3819 = vmatpush.msra.mxu0 %v2307
          %3820 = vmatpush.msra.mxu0 %v2303
          %3821 = vmatpush.msra.mxu0 %v2299
          %3822 = vmatpush.msra.mxu0 %v2295
          %3823 = vmatpush.msra.mxu0 %v2291
          %3824 = vmatpush.msra.mxu0 %v2287
          %3825 = vmatpush.msra.mxu0 %v2283
          %3826 = vmatpush.msra.mxu0 %v2279
          %3827 = vmatpush.msra.mxu0 %v2275
          %3828 = vmatpush.msra.mxu0 %v2271
          %3829 = vmatpush.msra.mxu0 %v2267
          %3830 = vmatpush.msra.mxu0 %v2263
          %3831 = vmatmul.f32.gmra.mxu0 %v3623
          %v3832 = vpop.f32.mrf.mxu0
          %v3833 = vadd.f32 %v3813, %v3832
          %3834 = vdwg.mxu0
          %3835 = vmatpush.msra.mxu0 %v2387
          %3836 = vmatpush.msra.mxu0 %v2383
          %3837 = vmatpush.msra.mxu0 %v2379
          %3838 = vmatpush.msra.mxu0 %v2375
          %3839 = vmatpush.msra.mxu0 %v2371
          %3840 = vmatpush.msra.mxu0 %v2367
          %3841 = vmatpush.msra.mxu0 %v2363
          %3842 = vmatpush.msra.mxu0 %v2359
          %3843 = vmatpush.msra.mxu0 %v2355
          %3844 = vmatpush.msra.mxu0 %v2351
          %3845 = vmatpush.msra.mxu0 %v2347
          %3846 = vmatpush.msra.mxu0 %v2343
          %3847 = vmatpush.msra.mxu0 %v2339
          %3848 = vmatpush.msra.mxu0 %v2335
          %3849 = vmatpush.msra.mxu0 %v2331
          %3850 = vmatpush.msra.mxu0 %v2327
          %3851 = vmatmul.f32.gmra.mxu0 %v3624
          %v3852 = vpop.f32.mrf.mxu0
          %v3853 = vadd.f32 %v3833, %v3852
          %3854 = vdwg.mxu0
          %3855 = vmatpush.msra.mxu0 %v2451
          %3856 = vmatpush.msra.mxu0 %v2447
          %3857 = vmatpush.msra.mxu0 %v2443
          %3858 = vmatpush.msra.mxu0 %v2439
          %3859 = vmatpush.msra.mxu0 %v2435
          %3860 = vmatpush.msra.mxu0 %v2431
          %3861 = vmatpush.msra.mxu0 %v2427
          %3862 = vmatpush.msra.mxu0 %v2423
          %3863 = vmatpush.msra.mxu0 %v2419
          %3864 = vmatpush.msra.mxu0 %v2415
          %3865 = vmatpush.msra.mxu0 %v2411
          %3866 = vmatpush.msra.mxu0 %v2407
          %3867 = vmatpush.msra.mxu0 %v2403
          %3868 = vmatpush.msra.mxu0 %v2399
          %3869 = vmatpush.msra.mxu0 %v2395
          %3870 = vmatpush.msra.mxu0 %v2391
          %3871 = vmatmul.f32.gmra.mxu0 %v3625
          %v3872 = vpop.f32.mrf.mxu0
          %v3873 = vadd.f32 %v3853, %v3872
          %3874 = vdwg.mxu0
          %3875 = vmatpush.msra.mxu0 %v2515
          %3876 = vmatpush.msra.mxu0 %v2511
          %3877 = vmatpush.msra.mxu0 %v2507
          %3878 = vmatpush.msra.mxu0 %v2503
          %3879 = vmatpush.msra.mxu0 %v2499
          %3880 = vmatpush.msra.mxu0 %v2495
          %3881 = vmatpush.msra.mxu0 %v2491
          %3882 = vmatpush.msra.mxu0 %v2487
          %3883 = vmatpush.msra.mxu0 %v2483
          %3884 = vmatpush.msra.mxu0 %v2479
          %3885 = vmatpush.msra.mxu0 %v2475
          %3886 = vmatpush.msra.mxu0 %v2471
          %3887 = vmatpush.msra.mxu0 %v2467
          %3888 = vmatpush.msra.mxu0 %v2463
          %3889 = vmatpush.msra.mxu0 %v2459
          %3890 = vmatpush.msra.mxu0 %v2455
          %3891 = vmatmul.f32.gmra.mxu0 %v3626
          %v3892 = vpop.f32.mrf.mxu0
          %v3893 = vadd.f32 %v3873, %v3892
          %3894 = vdwg.mxu0
          %3895 = vmatpush.msra.mxu0 %v2579
          %3896 = vmatpush.msra.mxu0 %v2575
          %3897 = vmatpush.msra.mxu0 %v2571
          %3898 = vmatpush.msra.mxu0 %v2567
          %3899 = vmatpush.msra.mxu0 %v2563
          %3900 = vmatpush.msra.mxu0 %v2559
          %3901 = vmatpush.msra.mxu0 %v2555
          %3902 = vmatpush.msra.mxu0 %v2551
          %3903 = vmatpush.msra.mxu0 %v2547
          %3904 = vmatpush.msra.mxu0 %v2543
          %3905 = vmatpush.msra.mxu0 %v2539
          %3906 = vmatpush.msra.mxu0 %v2535
          %3907 = vmatpush.msra.mxu0 %v2531
          %3908 = vmatpush.msra.mxu0 %v2527
          %3909 = vmatpush.msra.mxu0 %v2523
          %3910 = vmatpush.msra.mxu0 %v2519
          %3911 = vmatmul.f32.gmra.mxu0 %v3627
          %v3912 = vpop.f32.mrf.mxu0
          %v3913 = vadd.f32 %v3893, %v3912
          %3914 = vdwg.mxu0
          %3915 = vmatpush.msra.mxu0 %v2196
          %3916 = vmatpush.msra.mxu0 %v2192
          %3917 = vmatpush.msra.mxu0 %v2188
          %3918 = vmatpush.msra.mxu0 %v2184
          %3919 = vmatpush.msra.mxu0 %v2180
          %3920 = vmatpush.msra.mxu0 %v2176
          %3921 = vmatpush.msra.mxu0 %v2172
          %3922 = vmatpush.msra.mxu0 %v2168
          %3923 = vmatpush.msra.mxu0 %v2164
          %3924 = vmatpush.msra.mxu0 %v2160
          %3925 = vmatpush.msra.mxu0 %v2156
          %3926 = vmatpush.msra.mxu0 %v2152
          %3927 = vmatpush.msra.mxu0 %v2148
          %3928 = vmatpush.msra.mxu0 %v2144
          %3929 = vmatpush.msra.mxu0 %v2140
          %3930 = vmatpush.msra.mxu0 %v2136
          %3931 = vmatmul.f32.gmra.mxu0 %v3621
          %v3932 = vpop.f32.mrf.mxu0
          %v3933 = vadd.f32 %v3474, %v3932
          %3934 = vdwg.mxu0
          %3935 = vmatpush.msra.mxu0 %v2260
          %3936 = vmatpush.msra.mxu0 %v2256
          %3937 = vmatpush.msra.mxu0 %v2252
          %3938 = vmatpush.msra.mxu0 %v2248
          %3939 = vmatpush.msra.mxu0 %v2244
          %3940 = vmatpush.msra.mxu0 %v2240
          %3941 = vmatpush.msra.mxu0 %v2236
          %3942 = vmatpush.msra.mxu0 %v2232
          %3943 = vmatpush.msra.mxu0 %v2228
          %3944 = vmatpush.msra.mxu0 %v2224
          %3945 = vmatpush.msra.mxu0 %v2220
          %3946 = vmatpush.msra.mxu0 %v2216
          %3947 = vmatpush.msra.mxu0 %v2212
          %3948 = vmatpush.msra.mxu0 %v2208
          %3949 = vmatpush.msra.mxu0 %v2204
          %3950 = vmatpush.msra.mxu0 %v2200
          %3951 = vmatmul.f32.gmra.mxu0 %v3622
          %v3952 = vpop.f32.mrf.mxu0
          %v3953 = vadd.f32 %v3933, %v3952
          %3954 = vdwg.mxu0
          %3955 = vmatpush.msra.mxu0 %v2324
          %3956 = vmatpush.msra.mxu0 %v2320
          %3957 = vmatpush.msra.mxu0 %v2316
          %3958 = vmatpush.msra.mxu0 %v2312
          %3959 = vmatpush.msra.mxu0 %v2308
          %3960 = vmatpush.msra.mxu0 %v2304
          %3961 = vmatpush.msra.mxu0 %v2300
          %3962 = vmatpush.msra.mxu0 %v2296
          %3963 = vmatpush.msra.mxu0 %v2292
          %3964 = vmatpush.msra.mxu0 %v2288
          %3965 = vmatpush.msra.mxu0 %v2284
          %3966 = vmatpush.msra.mxu0 %v2280
          %3967 = vmatpush.msra.mxu0 %v2276
          %3968 = vmatpush.msra.mxu0 %v2272
          %3969 = vmatpush.msra.mxu0 %v2268
          %3970 = vmatpush.msra.mxu0 %v2264
          %3971 = vmatmul.f32.gmra.mxu0 %v3623
          %v3972 = vpop.f32.mrf.mxu0
          %v3973 = vadd.f32 %v3953, %v3972
          %3974 = vdwg.mxu0
          %3975 = vmatpush.msra.mxu0 %v2388
          %3976 = vmatpush.msra.mxu0 %v2384
          %3977 = vmatpush.msra.mxu0 %v2380
          %3978 = vmatpush.msra.mxu0 %v2376
          %3979 = vmatpush.msra.mxu0 %v2372
          %3980 = vmatpush.msra.mxu0 %v2368
          %3981 = vmatpush.msra.mxu0 %v2364
          %3982 = vmatpush.msra.mxu0 %v2360
          %3983 = vmatpush.msra.mxu0 %v2356
          %3984 = vmatpush.msra.mxu0 %v2352
          %3985 = vmatpush.msra.mxu0 %v2348
          %3986 = vmatpush.msra.mxu0 %v2344
          %3987 = vmatpush.msra.mxu0 %v2340
          %3988 = vmatpush.msra.mxu0 %v2336
          %3989 = vmatpush.msra.mxu0 %v2332
          %3990 = vmatpush.msra.mxu0 %v2328
          %3991 = vmatmul.f32.gmra.mxu0 %v3624
          %v3992 = vpop.f32.mrf.mxu0
          %v3993 = vadd.f32 %v3973, %v3992
          %3994 = vdwg.mxu0
          %3995 = vmatpush.msra.mxu0 %v2452
          %3996 = vmatpush.msra.mxu0 %v2448
          %3997 = vmatpush.msra.mxu0 %v2444
          %3998 = vmatpush.msra.mxu0 %v2440
          %3999 = vmatpush.msra.mxu0 %v2436
          %4000 = vmatpush.msra.mxu0 %v2432
          %4001 = vmatpush.msra.mxu0 %v2428
          %4002 = vmatpush.msra.mxu0 %v2424
          %4003 = vmatpush.msra.mxu0 %v2420
          %4004 = vmatpush.msra.mxu0 %v2416
          %4005 = vmatpush.msra.mxu0 %v2412
          %4006 = vmatpush.msra.mxu0 %v2408
          %4007 = vmatpush.msra.mxu0 %v2404
          %4008 = vmatpush.msra.mxu0 %v2400
          %4009 = vmatpush.msra.mxu0 %v2396
          %4010 = vmatpush.msra.mxu0 %v2392
          %4011 = vmatmul.f32.gmra.mxu0 %v3625
          %v4012 = vpop.f32.mrf.mxu0
          %v4013 = vadd.f32 %v3993, %v4012
          %4014 = vdwg.mxu0
          %4015 = vmatpush.msra.mxu0 %v2516
          %4016 = vmatpush.msra.mxu0 %v2512
          %4017 = vmatpush.msra.mxu0 %v2508
          %4018 = vmatpush.msra.mxu0 %v2504
          %4019 = vmatpush.msra.mxu0 %v2500
          %4020 = vmatpush.msra.mxu0 %v2496
          %4021 = vmatpush.msra.mxu0 %v2492
          %4022 = vmatpush.msra.mxu0 %v2488
          %4023 = vmatpush.msra.mxu0 %v2484
          %4024 = vmatpush.msra.mxu0 %v2480
          %4025 = vmatpush.msra.mxu0 %v2476
          %4026 = vmatpush.msra.mxu0 %v2472
          %4027 = vmatpush.msra.mxu0 %v2468
          %4028 = vmatpush.msra.mxu0 %v2464
          %4029 = vmatpush.msra.mxu0 %v2460
          %4030 = vmatpush.msra.mxu0 %v2456
          %4031 = vmatmul.f32.gmra.mxu0 %v3626
          %v4032 = vpop.f32.mrf.mxu0
          %v4033 = vadd.f32 %v4013, %v4032
          %4034 = vdwg.mxu0
          %4035 = vmatpush.msra.mxu0 %v2580
          %4036 = vmatpush.msra.mxu0 %v2576
          %4037 = vmatpush.msra.mxu0 %v2572
          %4038 = vmatpush.msra.mxu0 %v2568
          %4039 = vmatpush.msra.mxu0 %v2564
          %4040 = vmatpush.msra.mxu0 %v2560
          %4041 = vmatpush.msra.mxu0 %v2556
          %4042 = vmatpush.msra.mxu0 %v2552
          %4043 = vmatpush.msra.mxu0 %v2548
          %4044 = vmatpush.msra.mxu0 %v2544
          %4045 = vmatpush.msra.mxu0 %v2540
          %4046 = vmatpush.msra.mxu0 %v2536
          %4047 = vmatpush.msra.mxu0 %v2532
          %4048 = vmatpush.msra.mxu0 %v2528
          %4049 = vmatpush.msra.mxu0 %v2524
          %4050 = vmatpush.msra.mxu0 %v2520
          %4051 = vmatmul.f32.gmra.mxu0 %v3627
          %v4052 = vpop.f32.mrf.mxu0
          %v4053 = vadd.f32 %v4033, %v4052
          %4054 = vdwg.mxu0
          %4055 = vmatpush.msra.mxu0 %v2197
          %4056 = vmatpush.msra.mxu0 %v2193
          %4057 = vmatpush.msra.mxu0 %v2189
          %4058 = vmatpush.msra.mxu0 %v2185
          %4059 = vmatpush.msra.mxu0 %v2181
          %4060 = vmatpush.msra.mxu0 %v2177
          %4061 = vmatpush.msra.mxu0 %v2173
          %4062 = vmatpush.msra.mxu0 %v2169
          %4063 = vmatpush.msra.mxu0 %v2165
          %4064 = vmatpush.msra.mxu0 %v2161
          %4065 = vmatpush.msra.mxu0 %v2157
          %4066 = vmatpush.msra.mxu0 %v2153
          %4067 = vmatpush.msra.mxu0 %v2149
          %4068 = vmatpush.msra.mxu0 %v2145
          %4069 = vmatpush.msra.mxu0 %v2141
          %4070 = vmatpush.msra.mxu0 %v2137
          %4071 = vmatmul.f32.gmra.mxu0 %v3621
          %v4072 = vpop.f32.mrf.mxu0
          %v4073 = vadd.f32 %v3614, %v4072
          %4074 = vdwg.mxu0
          %4075 = vmatpush.msra.mxu0 %v2261
          %4076 = vmatpush.msra.mxu0 %v2257
          %4077 = vmatpush.msra.mxu0 %v2253
          %4078 = vmatpush.msra.mxu0 %v2249
          %4079 = vmatpush.msra.mxu0 %v2245
          %4080 = vmatpush.msra.mxu0 %v2241
          %4081 = vmatpush.msra.mxu0 %v2237
          %4082 = vmatpush.msra.mxu0 %v2233
          %4083 = vmatpush.msra.mxu0 %v2229
          %4084 = vmatpush.msra.mxu0 %v2225
          %4085 = vmatpush.msra.mxu0 %v2221
          %4086 = vmatpush.msra.mxu0 %v2217
          %4087 = vmatpush.msra.mxu0 %v2213
          %4088 = vmatpush.msra.mxu0 %v2209
          %4089 = vmatpush.msra.mxu0 %v2205
          %4090 = vmatpush.msra.mxu0 %v2201
          %4091 = vmatmul.f32.gmra.mxu0 %v3622
          %v4092 = vpop.f32.mrf.mxu0
          %v4093 = vadd.f32 %v4073, %v4092
          %4094 = vdwg.mxu0
          %4095 = vmatpush.msra.mxu0 %v2325
          %4096 = vmatpush.msra.mxu0 %v2321
          %4097 = vmatpush.msra.mxu0 %v2317
          %4098 = vmatpush.msra.mxu0 %v2313
          %4099 = vmatpush.msra.mxu0 %v2309
          %4100 = vmatpush.msra.mxu0 %v2305
          %4101 = vmatpush.msra.mxu0 %v2301
          %4102 = vmatpush.msra.mxu0 %v2297
          %4103 = vmatpush.msra.mxu0 %v2293
          %4104 = vmatpush.msra.mxu0 %v2289
          %4105 = vmatpush.msra.mxu0 %v2285
          %4106 = vmatpush.msra.mxu0 %v2281
          %4107 = vmatpush.msra.mxu0 %v2277
          %4108 = vmatpush.msra.mxu0 %v2273
          %4109 = vmatpush.msra.mxu0 %v2269
          %4110 = vmatpush.msra.mxu0 %v2265
          %4111 = vmatmul.f32.gmra.mxu0 %v3623
          %v4112 = vpop.f32.mrf.mxu0
          %v4113 = vadd.f32 %v4093, %v4112
          %4114 = vdwg.mxu0
          %4115 = vmatpush.msra.mxu0 %v2389
          %4116 = vmatpush.msra.mxu0 %v2385
          %4117 = vmatpush.msra.mxu0 %v2381
          %4118 = vmatpush.msra.mxu0 %v2377
          %4119 = vmatpush.msra.mxu0 %v2373
          %4120 = vmatpush.msra.mxu0 %v2369
          %4121 = vmatpush.msra.mxu0 %v2365
          %4122 = vmatpush.msra.mxu0 %v2361
          %4123 = vmatpush.msra.mxu0 %v2357
          %4124 = vmatpush.msra.mxu0 %v2353
          %4125 = vmatpush.msra.mxu0 %v2349
          %4126 = vmatpush.msra.mxu0 %v2345
          %4127 = vmatpush.msra.mxu0 %v2341
          %4128 = vmatpush.msra.mxu0 %v2337
          %4129 = vmatpush.msra.mxu0 %v2333
          %4130 = vmatpush.msra.mxu0 %v2329
          %4131 = vmatmul.f32.gmra.mxu0 %v3624
          %v4132 = vpop.f32.mrf.mxu0
          %v4133 = vadd.f32 %v4113, %v4132
          %4134 = vdwg.mxu0
          %4135 = vmatpush.msra.mxu0 %v2453
          %4136 = vmatpush.msra.mxu0 %v2449
          %4137 = vmatpush.msra.mxu0 %v2445
          %4138 = vmatpush.msra.mxu0 %v2441
          %4139 = vmatpush.msra.mxu0 %v2437
          %4140 = vmatpush.msra.mxu0 %v2433
          %4141 = vmatpush.msra.mxu0 %v2429
          %4142 = vmatpush.msra.mxu0 %v2425
          %4143 = vmatpush.msra.mxu0 %v2421
          %4144 = vmatpush.msra.mxu0 %v2417
          %4145 = vmatpush.msra.mxu0 %v2413
          %4146 = vmatpush.msra.mxu0 %v2409
          %4147 = vmatpush.msra.mxu0 %v2405
          %4148 = vmatpush.msra.mxu0 %v2401
          %4149 = vmatpush.msra.mxu0 %v2397
          %4150 = vmatpush.msra.mxu0 %v2393
          %4151 = vmatmul.f32.gmra.mxu0 %v3625
          %v4152 = vpop.f32.mrf.mxu0
          %v4153 = vadd.f32 %v4133, %v4152
          %4154 = vdwg.mxu0
          %4155 = vmatpush.msra.mxu0 %v2517
          %4156 = vmatpush.msra.mxu0 %v2513
          %4157 = vmatpush.msra.mxu0 %v2509
          %4158 = vmatpush.msra.mxu0 %v2505
          %4159 = vmatpush.msra.mxu0 %v2501
          %4160 = vmatpush.msra.mxu0 %v2497
          %4161 = vmatpush.msra.mxu0 %v2493
          %4162 = vmatpush.msra.mxu0 %v2489
          %4163 = vmatpush.msra.mxu0 %v2485
          %4164 = vmatpush.msra.mxu0 %v2481
          %4165 = vmatpush.msra.mxu0 %v2477
          %4166 = vmatpush.msra.mxu0 %v2473
          %4167 = vmatpush.msra.mxu0 %v2469
          %4168 = vmatpush.msra.mxu0 %v2465
          %4169 = vmatpush.msra.mxu0 %v2461
          %4170 = vmatpush.msra.mxu0 %v2457
          %4171 = vmatmul.f32.gmra.mxu0 %v3626
          %v4172 = vpop.f32.mrf.mxu0
          %v4173 = vadd.f32 %v4153, %v4172
          %4174 = vdwg.mxu0
          %4175 = vmatpush.msra.mxu0 %v2581
          %4176 = vmatpush.msra.mxu0 %v2577
          %4177 = vmatpush.msra.mxu0 %v2573
          %4178 = vmatpush.msra.mxu0 %v2569
          %4179 = vmatpush.msra.mxu0 %v2565
          %4180 = vmatpush.msra.mxu0 %v2561
          %4181 = vmatpush.msra.mxu0 %v2557
          %4182 = vmatpush.msra.mxu0 %v2553
          %4183 = vmatpush.msra.mxu0 %v2549
          %4184 = vmatpush.msra.mxu0 %v2545
          %4185 = vmatpush.msra.mxu0 %v2541
          %4186 = vmatpush.msra.mxu0 %v2537
          %4187 = vmatpush.msra.mxu0 %v2533
          %4188 = vmatpush.msra.mxu0 %v2529
          %4189 = vmatpush.msra.mxu0 %v2525
          %4190 = vmatpush.msra.mxu0 %v2521
          %4191 = vmatmul.f32.gmra.mxu0 %v3627
          %v4192 = vpop.f32.mrf.mxu0
          %v4193 = vadd.f32 %v4173, %v4192
          %4194 = vdwg.mxu0
          %s4195 = sadd.s32 %s2123, 2
          %s4196 = smul.u32 %s4195, 7
          %s4197 = smul.addr %s4196, 2
          %s4198 = scalar_lea.vmem [#allocation5], %s4197
          %v4199 = vld [vmem:[%s4198] sm:$0xff]
          %v4200 = vld [vmem:[%s4198 + $0x8] sm:$0x3f]
          %s4201 = scalar_lea.vmem %s4, 7168
          %v4202 = vld [vmem:[%s4201] sm:$0xff]
          %v4203 = vld [vmem:[%s4201 + $0x8] sm:$0xff]
          %v4204 = vld [vmem:[%s4201 + $0x10] sm:$0xff]
          %v4205 = vld [vmem:[%s4201 + $0x18] sm:$0xff]
          %v4206 = vld [vmem:[%s4201 + $0x20] sm:$0xff]
          %v4207 = vld [vmem:[%s4201 + $0x28] sm:$0xff]
          %v4208 = vld [vmem:[%s4201 + $0x30] sm:$0xff]
          %v4209 = vld [vmem:[%s4201 + $0x38] sm:$0xff]
          %v4210 = vld [vmem:[%s4201 + $0x40] sm:$0xff]
          %v4211 = vld [vmem:[%s4201 + $0x48] sm:$0xff]
          %v4212 = vld [vmem:[%s4201 + $0x50] sm:$0xff]
          %v4213 = vld [vmem:[%s4201 + $0x58] sm:$0xff]
          %v4214 = vld [vmem:[%s4201 + $0x60] sm:$0xff]
          %v4215 = vld [vmem:[%s4201 + $0x68] sm:$0xff]
          %v4216 = vld [vmem:[%s4201 + $0x70] sm:$0xff]
          %v4217 = vld [vmem:[%s4201 + $0x78] sm:$0xff]
          %v4218 = vld [vmem:[%s4201 + $0x80] sm:$0xff]
          %v4219 = vld [vmem:[%s4201 + $0x88] sm:$0xff]
          %v4220 = vld [vmem:[%s4201 + $0x90] sm:$0xff]
          %v4221 = vld [vmem:[%s4201 + $0x98] sm:$0xff]
          %v4222 = vld [vmem:[%s4201 + $0xa0] sm:$0xff]
          %v4223 = vld [vmem:[%s4201 + $0xa8] sm:$0xff]
          %v4224 = vld [vmem:[%s4201 + $0xb0] sm:$0xff]
          %v4225 = vld [vmem:[%s4201 + $0xb8] sm:$0xff]
          %v4226 = vld [vmem:[%s4201 + $0xc0] sm:$0xff]
          %v4227 = vld [vmem:[%s4201 + $0xc8] sm:$0xff]
          %v4228 = vld [vmem:[%s4201 + $0xd0] sm:$0xff]
          %v4229 = vld [vmem:[%s4201 + $0xd8] sm:$0xff]
          %v4230 = vld [vmem:[%s4201 + $0xe0] sm:$0xff]
          %v4231 = vld [vmem:[%s4201 + $0xe8] sm:$0xff]
          %v4232 = vld [vmem:[%s4201 + $0xf0] sm:$0xff]
          %v4233 = vld [vmem:[%s4201 + $0xf8] sm:$0xff]
          %v4234 = vld [vmem:[%s4201 + $0x100] sm:$0xff]
          %v4235 = vld [vmem:[%s4201 + $0x108] sm:$0xff]
          %v4236 = vld [vmem:[%s4201 + $0x110] sm:$0xff]
          %v4237 = vld [vmem:[%s4201 + $0x118] sm:$0xff]
          %v4238 = vld [vmem:[%s4201 + $0x120] sm:$0xff]
          %v4239 = vld [vmem:[%s4201 + $0x128] sm:$0xff]
          %v4240 = vld [vmem:[%s4201 + $0x130] sm:$0xff]
          %v4241 = vld [vmem:[%s4201 + $0x138] sm:$0xff]
          %v4242 = vld [vmem:[%s4201 + $0x140] sm:$0xff]
          %v4243 = vld [vmem:[%s4201 + $0x148] sm:$0xff]
          %v4244 = vld [vmem:[%s4201 + $0x150] sm:$0xff]
          %v4245 = vld [vmem:[%s4201 + $0x158] sm:$0xff]
          %v4246 = vld [vmem:[%s4201 + $0x160] sm:$0xff]
          %v4247 = vld [vmem:[%s4201 + $0x168] sm:$0xff]
          %v4248 = vld [vmem:[%s4201 + $0x170] sm:$0xff]
          %v4249 = vld [vmem:[%s4201 + $0x178] sm:$0xff]
          %v4250 = vld [vmem:[%s4201 + $0x180] sm:$0xff]
          %v4251 = vld [vmem:[%s4201 + $0x188] sm:$0xff]
          %v4252 = vld [vmem:[%s4201 + $0x190] sm:$0xff]
          %v4253 = vld [vmem:[%s4201 + $0x198] sm:$0xff]
          %v4254 = vld [vmem:[%s4201 + $0x1a0] sm:$0xff]
          %v4255 = vld [vmem:[%s4201 + $0x1a8] sm:$0xff]
          %v4256 = vld [vmem:[%s4201 + $0x1b0] sm:$0xff]
          %v4257 = vld [vmem:[%s4201 + $0x1b8] sm:$0xff]
          %v4258 = vld [vmem:[%s4201 + $0x1c0] sm:$0xff]
          %v4259 = vld [vmem:[%s4201 + $0x1c8] sm:$0xff]
          %v4260 = vld [vmem:[%s4201 + $0x1d0] sm:$0xff]
          %v4261 = vld [vmem:[%s4201 + $0x1d8] sm:$0xff]
          %v4262 = vld [vmem:[%s4201 + $0x1e0] sm:$0xff]
          %v4263 = vld [vmem:[%s4201 + $0x1e8] sm:$0xff]
          %v4264 = vld [vmem:[%s4201 + $0x1f0] sm:$0xff]
          %v4265 = vld [vmem:[%s4201 + $0x1f8] sm:$0xff]
          %v4266 = vld [vmem:[%s4201 + $0x200] sm:$0xff]
          %v4267 = vld [vmem:[%s4201 + $0x208] sm:$0xff]
          %v4268 = vld [vmem:[%s4201 + $0x210] sm:$0xff]
          %v4269 = vld [vmem:[%s4201 + $0x218] sm:$0xff]
          %v4270 = vld [vmem:[%s4201 + $0x220] sm:$0xff]
          %v4271 = vld [vmem:[%s4201 + $0x228] sm:$0xff]
          %v4272 = vld [vmem:[%s4201 + $0x230] sm:$0xff]
          %v4273 = vld [vmem:[%s4201 + $0x238] sm:$0xff]
          %v4274 = vld [vmem:[%s4201 + $0x240] sm:$0xff]
          %v4275 = vld [vmem:[%s4201 + $0x248] sm:$0xff]
          %v4276 = vld [vmem:[%s4201 + $0x250] sm:$0xff]
          %v4277 = vld [vmem:[%s4201 + $0x258] sm:$0xff]
          %v4278 = vld [vmem:[%s4201 + $0x260] sm:$0xff]
          %v4279 = vld [vmem:[%s4201 + $0x268] sm:$0xff]
          %v4280 = vld [vmem:[%s4201 + $0x270] sm:$0xff]
          %v4281 = vld [vmem:[%s4201 + $0x278] sm:$0xff]
          %v4282 = vld [vmem:[%s4201 + $0x280] sm:$0xff]
          %v4283 = vld [vmem:[%s4201 + $0x288] sm:$0xff]
          %v4284 = vld [vmem:[%s4201 + $0x290] sm:$0xff]
          %v4285 = vld [vmem:[%s4201 + $0x298] sm:$0xff]
          %v4286 = vld [vmem:[%s4201 + $0x2a0] sm:$0xff]
          %v4287 = vld [vmem:[%s4201 + $0x2a8] sm:$0xff]
          %v4288 = vld [vmem:[%s4201 + $0x2b0] sm:$0xff]
          %v4289 = vld [vmem:[%s4201 + $0x2b8] sm:$0xff]
          %v4290 = vld [vmem:[%s4201 + $0x2c0] sm:$0xff]
          %v4291 = vld [vmem:[%s4201 + $0x2c8] sm:$0xff]
          %v4292 = vld [vmem:[%s4201 + $0x2d0] sm:$0xff]
          %v4293 = vld [vmem:[%s4201 + $0x2d8] sm:$0xff]
          %v4294 = vld [vmem:[%s4201 + $0x2e0] sm:$0xff]
          %v4295 = vld [vmem:[%s4201 + $0x2e8] sm:$0xff]
          %v4296 = vld [vmem:[%s4201 + $0x2f0] sm:$0xff]
          %v4297 = vld [vmem:[%s4201 + $0x2f8] sm:$0xff]
          %v4298 = vld [vmem:[%s4201 + $0x300] sm:$0xff]
          %v4299 = vld [vmem:[%s4201 + $0x308] sm:$0xff]
          %v4300 = vld [vmem:[%s4201 + $0x310] sm:$0xff]
          %v4301 = vld [vmem:[%s4201 + $0x318] sm:$0xff]
          %v4302 = vld [vmem:[%s4201 + $0x320] sm:$0xff]
          %v4303 = vld [vmem:[%s4201 + $0x328] sm:$0xff]
          %v4304 = vld [vmem:[%s4201 + $0x330] sm:$0xff]
          %v4305 = vld [vmem:[%s4201 + $0x338] sm:$0xff]
          %v4306 = vld [vmem:[%s4201 + $0x340] sm:$0xff]
          %v4307 = vld [vmem:[%s4201 + $0x348] sm:$0xff]
          %v4308 = vld [vmem:[%s4201 + $0x350] sm:$0xff]
          %v4309 = vld [vmem:[%s4201 + $0x358] sm:$0xff]
          %v4310 = vld [vmem:[%s4201 + $0x360] sm:$0xff]
          %v4311 = vld [vmem:[%s4201 + $0x368] sm:$0xff]
          %v4312 = vld [vmem:[%s4201 + $0x370] sm:$0xff]
          %v4313 = vld [vmem:[%s4201 + $0x378] sm:$0xff]
          %v4314 = vld [vmem:[%s4201 + $0x380] sm:$0xff]
          %v4315 = vld [vmem:[%s4201 + $0x388] sm:$0xff]
          %v4316 = vld [vmem:[%s4201 + $0x390] sm:$0xff]
          %v4317 = vld [vmem:[%s4201 + $0x398] sm:$0xff]
          %v4318 = vld [vmem:[%s4201 + $0x3a0] sm:$0xff]
          %v4319 = vld [vmem:[%s4201 + $0x3a8] sm:$0xff]
          %v4320 = vld [vmem:[%s4201 + $0x3b0] sm:$0xff]
          %v4321 = vld [vmem:[%s4201 + $0x3b8] sm:$0xff]
          %v4322 = vld [vmem:[%s4201 + $0x3c0] sm:$0xff]
          %v4323 = vld [vmem:[%s4201 + $0x3c8] sm:$0xff]
          %v4324 = vld [vmem:[%s4201 + $0x3d0] sm:$0xff]
          %v4325 = vld [vmem:[%s4201 + $0x3d8] sm:$0xff]
          %v4326 = vld [vmem:[%s4201 + $0x3e0] sm:$0xff]
          %v4327 = vld [vmem:[%s4201 + $0x3e8] sm:$0xff]
          %v4328 = vld [vmem:[%s4201 + $0x3f0] sm:$0xff]
          %v4329 = vld [vmem:[%s4201 + $0x3f8] sm:$0xff]
          %v4330 = vld [vmem:[%s4201 + $0x400] sm:$0xff]
          %v4331 = vld [vmem:[%s4201 + $0x408] sm:$0xff]
          %v4332 = vld [vmem:[%s4201 + $0x410] sm:$0xff]
          %v4333 = vld [vmem:[%s4201 + $0x418] sm:$0xff]
          %v4334 = vld [vmem:[%s4201 + $0x420] sm:$0xff]
          %v4335 = vld [vmem:[%s4201 + $0x428] sm:$0xff]
          %v4336 = vld [vmem:[%s4201 + $0x430] sm:$0xff]
          %v4337 = vld [vmem:[%s4201 + $0x438] sm:$0xff]
          %v4338 = vld [vmem:[%s4201 + $0x440] sm:$0xff]
          %v4339 = vld [vmem:[%s4201 + $0x448] sm:$0xff]
          %v4340 = vld [vmem:[%s4201 + $0x450] sm:$0xff]
          %v4341 = vld [vmem:[%s4201 + $0x458] sm:$0xff]
          %v4342 = vld [vmem:[%s4201 + $0x460] sm:$0xff]
          %v4343 = vld [vmem:[%s4201 + $0x468] sm:$0xff]
          %v4344 = vld [vmem:[%s4201 + $0x470] sm:$0xff]
          %v4345 = vld [vmem:[%s4201 + $0x478] sm:$0xff]
          %v4346 = vld [vmem:[%s4201 + $0x480] sm:$0xff]
          %v4347 = vld [vmem:[%s4201 + $0x488] sm:$0xff]
          %v4348 = vld [vmem:[%s4201 + $0x490] sm:$0xff]
          %v4349 = vld [vmem:[%s4201 + $0x498] sm:$0xff]
          %v4350 = vld [vmem:[%s4201 + $0x4a0] sm:$0xff]
          %v4351 = vld [vmem:[%s4201 + $0x4a8] sm:$0xff]
          %v4352 = vld [vmem:[%s4201 + $0x4b0] sm:$0xff]
          %v4353 = vld [vmem:[%s4201 + $0x4b8] sm:$0xff]
          %v4354 = vld [vmem:[%s4201 + $0x4c0] sm:$0xff]
          %v4355 = vld [vmem:[%s4201 + $0x4c8] sm:$0xff]
          %v4356 = vld [vmem:[%s4201 + $0x4d0] sm:$0xff]
          %v4357 = vld [vmem:[%s4201 + $0x4d8] sm:$0xff]
          %v4358 = vld [vmem:[%s4201 + $0x4e0] sm:$0xff]
          %v4359 = vld [vmem:[%s4201 + $0x4e8] sm:$0xff]
          %v4360 = vld [vmem:[%s4201 + $0x4f0] sm:$0xff]
          %v4361 = vld [vmem:[%s4201 + $0x4f8] sm:$0xff]
          %v4362 = vld [vmem:[%s4201 + $0x500] sm:$0xff]
          %v4363 = vld [vmem:[%s4201 + $0x508] sm:$0xff]
          %v4364 = vld [vmem:[%s4201 + $0x510] sm:$0xff]
          %v4365 = vld [vmem:[%s4201 + $0x518] sm:$0xff]
          %v4366 = vld [vmem:[%s4201 + $0x520] sm:$0xff]
          %v4367 = vld [vmem:[%s4201 + $0x528] sm:$0xff]
          %v4368 = vld [vmem:[%s4201 + $0x530] sm:$0xff]
          %v4369 = vld [vmem:[%s4201 + $0x538] sm:$0xff]
          %v4370 = vld [vmem:[%s4201 + $0x540] sm:$0xff]
          %v4371 = vld [vmem:[%s4201 + $0x548] sm:$0xff]
          %v4372 = vld [vmem:[%s4201 + $0x550] sm:$0xff]
          %v4373 = vld [vmem:[%s4201 + $0x558] sm:$0xff]
          %v4374 = vld [vmem:[%s4201 + $0x560] sm:$0xff]
          %v4375 = vld [vmem:[%s4201 + $0x568] sm:$0xff]
          %v4376 = vld [vmem:[%s4201 + $0x570] sm:$0xff]
          %v4377 = vld [vmem:[%s4201 + $0x578] sm:$0xff]
          %v4378 = vld [vmem:[%s4201 + $0x580] sm:$0xff]
          %v4379 = vld [vmem:[%s4201 + $0x588] sm:$0xff]
          %v4380 = vld [vmem:[%s4201 + $0x590] sm:$0xff]
          %v4381 = vld [vmem:[%s4201 + $0x598] sm:$0xff]
          %v4382 = vld [vmem:[%s4201 + $0x5a0] sm:$0xff]
          %v4383 = vld [vmem:[%s4201 + $0x5a8] sm:$0xff]
          %v4384 = vld [vmem:[%s4201 + $0x5b0] sm:$0xff]
          %v4385 = vld [vmem:[%s4201 + $0x5b8] sm:$0xff]
          %v4386 = vld [vmem:[%s4201 + $0x5c0] sm:$0xff]
          %v4387 = vld [vmem:[%s4201 + $0x5c8] sm:$0xff]
          %v4388 = vld [vmem:[%s4201 + $0x5d0] sm:$0xff]
          %v4389 = vld [vmem:[%s4201 + $0x5d8] sm:$0xff]
          %v4390 = vld [vmem:[%s4201 + $0x5e0] sm:$0xff]
          %v4391 = vld [vmem:[%s4201 + $0x5e8] sm:$0xff]
          %v4392 = vld [vmem:[%s4201 + $0x5f0] sm:$0xff]
          %v4393 = vld [vmem:[%s4201 + $0x5f8] sm:$0xff]
          %v4394 = vld [vmem:[%s4201 + $0x600] sm:$0xff]
          %v4395 = vld [vmem:[%s4201 + $0x608] sm:$0xff]
          %v4396 = vld [vmem:[%s4201 + $0x610] sm:$0xff]
          %v4397 = vld [vmem:[%s4201 + $0x618] sm:$0xff]
          %v4398 = vld [vmem:[%s4201 + $0x620] sm:$0xff]
          %v4399 = vld [vmem:[%s4201 + $0x628] sm:$0xff]
          %v4400 = vld [vmem:[%s4201 + $0x630] sm:$0xff]
          %v4401 = vld [vmem:[%s4201 + $0x638] sm:$0xff]
          %v4402 = vld [vmem:[%s4201 + $0x640] sm:$0xff]
          %v4403 = vld [vmem:[%s4201 + $0x648] sm:$0xff]
          %v4404 = vld [vmem:[%s4201 + $0x650] sm:$0xff]
          %v4405 = vld [vmem:[%s4201 + $0x658] sm:$0xff]
          %v4406 = vld [vmem:[%s4201 + $0x660] sm:$0xff]
          %v4407 = vld [vmem:[%s4201 + $0x668] sm:$0xff]
          %v4408 = vld [vmem:[%s4201 + $0x670] sm:$0xff]
          %v4409 = vld [vmem:[%s4201 + $0x678] sm:$0xff]
          %v4410 = vld [vmem:[%s4201 + $0x680] sm:$0xff]
          %v4411 = vld [vmem:[%s4201 + $0x688] sm:$0xff]
          %v4412 = vld [vmem:[%s4201 + $0x690] sm:$0xff]
          %v4413 = vld [vmem:[%s4201 + $0x698] sm:$0xff]
          %v4414 = vld [vmem:[%s4201 + $0x6a0] sm:$0xff]
          %v4415 = vld [vmem:[%s4201 + $0x6a8] sm:$0xff]
          %v4416 = vld [vmem:[%s4201 + $0x6b0] sm:$0xff]
          %v4417 = vld [vmem:[%s4201 + $0x6b8] sm:$0xff]
          %v4418 = vld [vmem:[%s4201 + $0x6c0] sm:$0xff]
          %v4419 = vld [vmem:[%s4201 + $0x6c8] sm:$0xff]
          %v4420 = vld [vmem:[%s4201 + $0x6d0] sm:$0xff]
          %v4421 = vld [vmem:[%s4201 + $0x6d8] sm:$0xff]
          %v4422 = vld [vmem:[%s4201 + $0x6e0] sm:$0xff]
          %v4423 = vld [vmem:[%s4201 + $0x6e8] sm:$0xff]
          %v4424 = vld [vmem:[%s4201 + $0x6f0] sm:$0xff]
          %v4425 = vld [vmem:[%s4201 + $0x6f8] sm:$0xff]
          %v4426 = vld [vmem:[%s4201 + $0x700] sm:$0xff]
          %v4427 = vld [vmem:[%s4201 + $0x708] sm:$0xff]
          %v4428 = vld [vmem:[%s4201 + $0x710] sm:$0xff]
          %v4429 = vld [vmem:[%s4201 + $0x718] sm:$0xff]
          %v4430 = vld [vmem:[%s4201 + $0x720] sm:$0xff]
          %v4431 = vld [vmem:[%s4201 + $0x728] sm:$0xff]
          %v4432 = vld [vmem:[%s4201 + $0x730] sm:$0xff]
          %v4433 = vld [vmem:[%s4201 + $0x738] sm:$0xff]
          %v4434 = vld [vmem:[%s4201 + $0x740] sm:$0xff]
          %v4435 = vld [vmem:[%s4201 + $0x748] sm:$0xff]
          %v4436 = vld [vmem:[%s4201 + $0x750] sm:$0xff]
          %v4437 = vld [vmem:[%s4201 + $0x758] sm:$0xff]
          %v4438 = vld [vmem:[%s4201 + $0x760] sm:$0xff]
          %v4439 = vld [vmem:[%s4201 + $0x768] sm:$0xff]
          %v4440 = vld [vmem:[%s4201 + $0x770] sm:$0xff]
          %v4441 = vld [vmem:[%s4201 + $0x778] sm:$0xff]
          %v4442 = vld [vmem:[%s4201 + $0x780] sm:$0xff]
          %v4443 = vld [vmem:[%s4201 + $0x788] sm:$0xff]
          %v4444 = vld [vmem:[%s4201 + $0x790] sm:$0xff]
          %v4445 = vld [vmem:[%s4201 + $0x798] sm:$0xff]
          %v4446 = vld [vmem:[%s4201 + $0x7a0] sm:$0xff]
          %v4447 = vld [vmem:[%s4201 + $0x7a8] sm:$0xff]
          %v4448 = vld [vmem:[%s4201 + $0x7b0] sm:$0xff]
          %v4449 = vld [vmem:[%s4201 + $0x7b8] sm:$0xff]
          %v4450 = vld [vmem:[%s4201 + $0x7c0] sm:$0xff]
          %v4451 = vld [vmem:[%s4201 + $0x7c8] sm:$0xff]
          %v4452 = vld [vmem:[%s4201 + $0x7d0] sm:$0xff]
          %v4453 = vld [vmem:[%s4201 + $0x7d8] sm:$0xff]
          %v4454 = vld [vmem:[%s4201 + $0x7e0] sm:$0xff]
          %v4455 = vld [vmem:[%s4201 + $0x7e8] sm:$0xff]
          %v4456 = vld [vmem:[%s4201 + $0x7f0] sm:$0xff]
          %v4457 = vld [vmem:[%s4201 + $0x7f8] sm:$0xff]
          %v4458 = vld [vmem:[%s4201 + $0x800] sm:$0xff]
          %v4459 = vld [vmem:[%s4201 + $0x808] sm:$0xff]
          %v4460 = vld [vmem:[%s4201 + $0x810] sm:$0xff]
          %v4461 = vld [vmem:[%s4201 + $0x818] sm:$0xff]
          %v4462 = vld [vmem:[%s4201 + $0x820] sm:$0xff]
          %v4463 = vld [vmem:[%s4201 + $0x828] sm:$0xff]
          %v4464 = vld [vmem:[%s4201 + $0x830] sm:$0xff]
          %v4465 = vld [vmem:[%s4201 + $0x838] sm:$0xff]
          %v4466 = vld [vmem:[%s4201 + $0x840] sm:$0xff]
          %v4467 = vld [vmem:[%s4201 + $0x848] sm:$0xff]
          %v4468 = vld [vmem:[%s4201 + $0x850] sm:$0xff]
          %v4469 = vld [vmem:[%s4201 + $0x858] sm:$0xff]
          %v4470 = vld [vmem:[%s4201 + $0x860] sm:$0xff]
          %v4471 = vld [vmem:[%s4201 + $0x868] sm:$0xff]
          %v4472 = vld [vmem:[%s4201 + $0x870] sm:$0xff]
          %v4473 = vld [vmem:[%s4201 + $0x878] sm:$0xff]
          %v4474 = vld [vmem:[%s4201 + $0x880] sm:$0xff]
          %v4475 = vld [vmem:[%s4201 + $0x888] sm:$0xff]
          %v4476 = vld [vmem:[%s4201 + $0x890] sm:$0xff]
          %v4477 = vld [vmem:[%s4201 + $0x898] sm:$0xff]
          %v4478 = vld [vmem:[%s4201 + $0x8a0] sm:$0xff]
          %v4479 = vld [vmem:[%s4201 + $0x8a8] sm:$0xff]
          %v4480 = vld [vmem:[%s4201 + $0x8b0] sm:$0xff]
          %v4481 = vld [vmem:[%s4201 + $0x8b8] sm:$0xff]
          %v4482 = vld [vmem:[%s4201 + $0x8c0] sm:$0xff]
          %v4483 = vld [vmem:[%s4201 + $0x8c8] sm:$0xff]
          %v4484 = vld [vmem:[%s4201 + $0x8d0] sm:$0xff]
          %v4485 = vld [vmem:[%s4201 + $0x8d8] sm:$0xff]
          %v4486 = vld [vmem:[%s4201 + $0x8e0] sm:$0xff]
          %v4487 = vld [vmem:[%s4201 + $0x8e8] sm:$0xff]
          %v4488 = vld [vmem:[%s4201 + $0x8f0] sm:$0xff]
          %v4489 = vld [vmem:[%s4201 + $0x8f8] sm:$0xff]
          %v4490 = vld [vmem:[%s4201 + $0x900] sm:$0xff]
          %v4491 = vld [vmem:[%s4201 + $0x908] sm:$0xff]
          %v4492 = vld [vmem:[%s4201 + $0x910] sm:$0xff]
          %v4493 = vld [vmem:[%s4201 + $0x918] sm:$0xff]
          %v4494 = vld [vmem:[%s4201 + $0x920] sm:$0xff]
          %v4495 = vld [vmem:[%s4201 + $0x928] sm:$0xff]
          %v4496 = vld [vmem:[%s4201 + $0x930] sm:$0xff]
          %v4497 = vld [vmem:[%s4201 + $0x938] sm:$0xff]
          %v4498 = vld [vmem:[%s4201 + $0x940] sm:$0xff]
          %v4499 = vld [vmem:[%s4201 + $0x948] sm:$0xff]
          %v4500 = vld [vmem:[%s4201 + $0x950] sm:$0xff]
          %v4501 = vld [vmem:[%s4201 + $0x958] sm:$0xff]
          %v4502 = vld [vmem:[%s4201 + $0x960] sm:$0xff]
          %v4503 = vld [vmem:[%s4201 + $0x968] sm:$0xff]
          %v4504 = vld [vmem:[%s4201 + $0x970] sm:$0xff]
          %v4505 = vld [vmem:[%s4201 + $0x978] sm:$0xff]
          %v4506 = vld [vmem:[%s4201 + $0x980] sm:$0xff]
          %v4507 = vld [vmem:[%s4201 + $0x988] sm:$0xff]
          %v4508 = vld [vmem:[%s4201 + $0x990] sm:$0xff]
          %v4509 = vld [vmem:[%s4201 + $0x998] sm:$0xff]
          %v4510 = vld [vmem:[%s4201 + $0x9a0] sm:$0xff]
          %v4511 = vld [vmem:[%s4201 + $0x9a8] sm:$0xff]
          %v4512 = vld [vmem:[%s4201 + $0x9b0] sm:$0xff]
          %v4513 = vld [vmem:[%s4201 + $0x9b8] sm:$0xff]
          %v4514 = vld [vmem:[%s4201 + $0x9c0] sm:$0xff]
          %v4515 = vld [vmem:[%s4201 + $0x9c8] sm:$0xff]
          %v4516 = vld [vmem:[%s4201 + $0x9d0] sm:$0xff]
          %v4517 = vld [vmem:[%s4201 + $0x9d8] sm:$0xff]
          %v4518 = vld [vmem:[%s4201 + $0x9e0] sm:$0xff]
          %v4519 = vld [vmem:[%s4201 + $0x9e8] sm:$0xff]
          %v4520 = vld [vmem:[%s4201 + $0x9f0] sm:$0xff]
          %v4521 = vld [vmem:[%s4201 + $0x9f8] sm:$0xff]
          %v4522 = vld [vmem:[%s4201 + $0xa00] sm:$0xff]
          %v4523 = vld [vmem:[%s4201 + $0xa08] sm:$0xff]
          %v4524 = vld [vmem:[%s4201 + $0xa10] sm:$0xff]
          %v4525 = vld [vmem:[%s4201 + $0xa18] sm:$0xff]
          %v4526 = vld [vmem:[%s4201 + $0xa20] sm:$0xff]
          %v4527 = vld [vmem:[%s4201 + $0xa28] sm:$0xff]
          %v4528 = vld [vmem:[%s4201 + $0xa30] sm:$0xff]
          %v4529 = vld [vmem:[%s4201 + $0xa38] sm:$0xff]
          %v4530 = vld [vmem:[%s4201 + $0xa40] sm:$0xff]
          %v4531 = vld [vmem:[%s4201 + $0xa48] sm:$0xff]
          %v4532 = vld [vmem:[%s4201 + $0xa50] sm:$0xff]
          %v4533 = vld [vmem:[%s4201 + $0xa58] sm:$0xff]
          %v4534 = vld [vmem:[%s4201 + $0xa60] sm:$0xff]
          %v4535 = vld [vmem:[%s4201 + $0xa68] sm:$0xff]
          %v4536 = vld [vmem:[%s4201 + $0xa70] sm:$0xff]
          %v4537 = vld [vmem:[%s4201 + $0xa78] sm:$0xff]
          %v4538 = vld [vmem:[%s4201 + $0xa80] sm:$0xff]
          %v4539 = vld [vmem:[%s4201 + $0xa88] sm:$0xff]
          %v4540 = vld [vmem:[%s4201 + $0xa90] sm:$0xff]
          %v4541 = vld [vmem:[%s4201 + $0xa98] sm:$0xff]
          %v4542 = vld [vmem:[%s4201 + $0xaa0] sm:$0xff]
          %v4543 = vld [vmem:[%s4201 + $0xaa8] sm:$0xff]
          %v4544 = vld [vmem:[%s4201 + $0xab0] sm:$0xff]
          %v4545 = vld [vmem:[%s4201 + $0xab8] sm:$0xff]
          %v4546 = vld [vmem:[%s4201 + $0xac0] sm:$0xff]
          %v4547 = vld [vmem:[%s4201 + $0xac8] sm:$0xff]
          %v4548 = vld [vmem:[%s4201 + $0xad0] sm:$0xff]
          %v4549 = vld [vmem:[%s4201 + $0xad8] sm:$0xff]
          %v4550 = vld [vmem:[%s4201 + $0xae0] sm:$0xff]
          %v4551 = vld [vmem:[%s4201 + $0xae8] sm:$0xff]
          %v4552 = vld [vmem:[%s4201 + $0xaf0] sm:$0xff]
          %v4553 = vld [vmem:[%s4201 + $0xaf8] sm:$0xff]
          %v4554 = vld [vmem:[%s4201 + $0xb00] sm:$0xff]
          %v4555 = vld [vmem:[%s4201 + $0xb08] sm:$0xff]
          %v4556 = vld [vmem:[%s4201 + $0xb10] sm:$0xff]
          %v4557 = vld [vmem:[%s4201 + $0xb18] sm:$0xff]
          %v4558 = vld [vmem:[%s4201 + $0xb20] sm:$0xff]
          %v4559 = vld [vmem:[%s4201 + $0xb28] sm:$0xff]
          %v4560 = vld [vmem:[%s4201 + $0xb30] sm:$0xff]
          %v4561 = vld [vmem:[%s4201 + $0xb38] sm:$0xff]
          %v4562 = vld [vmem:[%s4201 + $0xb40] sm:$0xff]
          %v4563 = vld [vmem:[%s4201 + $0xb48] sm:$0xff]
          %v4564 = vld [vmem:[%s4201 + $0xb50] sm:$0xff]
          %v4565 = vld [vmem:[%s4201 + $0xb58] sm:$0xff]
          %v4566 = vld [vmem:[%s4201 + $0xb60] sm:$0xff]
          %v4567 = vld [vmem:[%s4201 + $0xb68] sm:$0xff]
          %v4568 = vld [vmem:[%s4201 + $0xb70] sm:$0xff]
          %v4569 = vld [vmem:[%s4201 + $0xb78] sm:$0xff]
          %v4570 = vld [vmem:[%s4201 + $0xb80] sm:$0xff]
          %v4571 = vld [vmem:[%s4201 + $0xb88] sm:$0xff]
          %v4572 = vld [vmem:[%s4201 + $0xb90] sm:$0xff]
          %v4573 = vld [vmem:[%s4201 + $0xb98] sm:$0xff]
          %v4574 = vld [vmem:[%s4201 + $0xba0] sm:$0xff]
          %v4575 = vld [vmem:[%s4201 + $0xba8] sm:$0xff]
          %v4576 = vld [vmem:[%s4201 + $0xbb0] sm:$0xff]
          %v4577 = vld [vmem:[%s4201 + $0xbb8] sm:$0xff]
          %v4578 = vld [vmem:[%s4201 + $0xbc0] sm:$0xff]
          %v4579 = vld [vmem:[%s4201 + $0xbc8] sm:$0xff]
          %v4580 = vld [vmem:[%s4201 + $0xbd0] sm:$0xff]
          %v4581 = vld [vmem:[%s4201 + $0xbd8] sm:$0xff]
          %v4582 = vld [vmem:[%s4201 + $0xbe0] sm:$0xff]
          %v4583 = vld [vmem:[%s4201 + $0xbe8] sm:$0xff]
          %v4584 = vld [vmem:[%s4201 + $0xbf0] sm:$0xff]
          %v4585 = vld [vmem:[%s4201 + $0xbf8] sm:$0xff]
          %v4586 = vld [vmem:[%s4201 + $0xc00] sm:$0xff]
          %v4587 = vld [vmem:[%s4201 + $0xc08] sm:$0xff]
          %v4588 = vld [vmem:[%s4201 + $0xc10] sm:$0xff]
          %v4589 = vld [vmem:[%s4201 + $0xc18] sm:$0xff]
          %v4590 = vld [vmem:[%s4201 + $0xc20] sm:$0xff]
          %v4591 = vld [vmem:[%s4201 + $0xc28] sm:$0xff]
          %v4592 = vld [vmem:[%s4201 + $0xc30] sm:$0xff]
          %v4593 = vld [vmem:[%s4201 + $0xc38] sm:$0xff]
          %v4594 = vld [vmem:[%s4201 + $0xc40] sm:$0xff]
          %v4595 = vld [vmem:[%s4201 + $0xc48] sm:$0xff]
          %v4596 = vld [vmem:[%s4201 + $0xc50] sm:$0xff]
          %v4597 = vld [vmem:[%s4201 + $0xc58] sm:$0xff]
          %v4598 = vld [vmem:[%s4201 + $0xc60] sm:$0xff]
          %v4599 = vld [vmem:[%s4201 + $0xc68] sm:$0xff]
          %v4600 = vld [vmem:[%s4201 + $0xc70] sm:$0xff]
          %v4601 = vld [vmem:[%s4201 + $0xc78] sm:$0xff]
          %v4602 = vld [vmem:[%s4201 + $0xc80] sm:$0xff]
          %v4603 = vld [vmem:[%s4201 + $0xc88] sm:$0xff]
          %v4604 = vld [vmem:[%s4201 + $0xc90] sm:$0xff]
          %v4605 = vld [vmem:[%s4201 + $0xc98] sm:$0xff]
          %v4606 = vld [vmem:[%s4201 + $0xca0] sm:$0xff]
          %v4607 = vld [vmem:[%s4201 + $0xca8] sm:$0xff]
          %v4608 = vld [vmem:[%s4201 + $0xcb0] sm:$0xff]
          %v4609 = vld [vmem:[%s4201 + $0xcb8] sm:$0xff]
          %v4610 = vld [vmem:[%s4201 + $0xcc0] sm:$0xff]
          %v4611 = vld [vmem:[%s4201 + $0xcc8] sm:$0xff]
          %v4612 = vld [vmem:[%s4201 + $0xcd0] sm:$0xff]
          %v4613 = vld [vmem:[%s4201 + $0xcd8] sm:$0xff]
          %v4614 = vld [vmem:[%s4201 + $0xce0] sm:$0xff]
          %v4615 = vld [vmem:[%s4201 + $0xce8] sm:$0xff]
          %v4616 = vld [vmem:[%s4201 + $0xcf0] sm:$0xff]
          %v4617 = vld [vmem:[%s4201 + $0xcf8] sm:$0xff]
          %v4618 = vld [vmem:[%s4201 + $0xd00] sm:$0xff]
          %v4619 = vld [vmem:[%s4201 + $0xd08] sm:$0xff]
          %v4620 = vld [vmem:[%s4201 + $0xd10] sm:$0xff]
          %v4621 = vld [vmem:[%s4201 + $0xd18] sm:$0xff]
          %v4622 = vld [vmem:[%s4201 + $0xd20] sm:$0xff]
          %v4623 = vld [vmem:[%s4201 + $0xd28] sm:$0xff]
          %v4624 = vld [vmem:[%s4201 + $0xd30] sm:$0xff]
          %v4625 = vld [vmem:[%s4201 + $0xd38] sm:$0xff]
          %v4626 = vld [vmem:[%s4201 + $0xd40] sm:$0xff]
          %v4627 = vld [vmem:[%s4201 + $0xd48] sm:$0xff]
          %v4628 = vld [vmem:[%s4201 + $0xd50] sm:$0xff]
          %v4629 = vld [vmem:[%s4201 + $0xd58] sm:$0xff]
          %v4630 = vld [vmem:[%s4201 + $0xd60] sm:$0xff]
          %v4631 = vld [vmem:[%s4201 + $0xd68] sm:$0xff]
          %v4632 = vld [vmem:[%s4201 + $0xd70] sm:$0xff]
          %v4633 = vld [vmem:[%s4201 + $0xd78] sm:$0xff]
          %v4634 = vld [vmem:[%s4201 + $0xd80] sm:$0xff]
          %v4635 = vld [vmem:[%s4201 + $0xd88] sm:$0xff]
          %v4636 = vld [vmem:[%s4201 + $0xd90] sm:$0xff]
          %v4637 = vld [vmem:[%s4201 + $0xd98] sm:$0xff]
          %v4638 = vld [vmem:[%s4201 + $0xda0] sm:$0xff]
          %v4639 = vld [vmem:[%s4201 + $0xda8] sm:$0xff]
          %v4640 = vld [vmem:[%s4201 + $0xdb0] sm:$0xff]
          %v4641 = vld [vmem:[%s4201 + $0xdb8] sm:$0xff]
          %v4642 = vld [vmem:[%s4201 + $0xdc0] sm:$0xff]
          %v4643 = vld [vmem:[%s4201 + $0xdc8] sm:$0xff]
          %v4644 = vld [vmem:[%s4201 + $0xdd0] sm:$0xff]
          %v4645 = vld [vmem:[%s4201 + $0xdd8] sm:$0xff]
          %v4646 = vld [vmem:[%s4201 + $0xde0] sm:$0xff]
          %v4647 = vld [vmem:[%s4201 + $0xde8] sm:$0xff]
          %v4648 = vld [vmem:[%s4201 + $0xdf0] sm:$0xff]
          %v4649 = vld [vmem:[%s4201 + $0xdf8] sm:$0xff]
          %4652 = vst [vmem:[#allocation1] ss:$4 sm:$0xff] %v4199
          %s4653 = scalar_lea.vmem [#allocation1], 32
          %4654 = vst [vmem:[%s4653] ss:$4 sm:$0xff] %v4200
          %v4655 = vld.sshfl [vmem:[#allocation1] sm:$0xff pattern:$0x73625140]
          %v4656 = vld.sshfl [vmem:[#allocation1 + $0x8] sm:$0xff pattern:$0x73625140]
          %v4657 = vld.sshfl [vmem:[#allocation1 + $0x10] sm:$0xff pattern:$0x73625140]
          %v4658 = vld.sshfl [vmem:[#allocation1 + $0x18] sm:$0xff pattern:$0x73625140]
          %v4659 = vld.sshfl [vmem:[#allocation1 + $0x20] sm:$0xff pattern:$0x73625140]
          %v4660 = vld.sshfl [vmem:[#allocation1 + $0x28] sm:$0xff pattern:$0x73625140]
          %v4661 = vld.sshfl [vmem:[#allocation1 + $0x30] sm:$0xff pattern:$0x73625140]
          %4669 = vmatpush.msra.mxu0 %v4262
          %4670 = vmatpush.msra.mxu0 %v4258
          %4671 = vmatpush.msra.mxu0 %v4254
          %4672 = vmatpush.msra.mxu0 %v4250
          %4673 = vmatpush.msra.mxu0 %v4246
          %4674 = vmatpush.msra.mxu0 %v4242
          %4675 = vmatpush.msra.mxu0 %v4238
          %4676 = vmatpush.msra.mxu0 %v4234
          %4677 = vmatpush.msra.mxu0 %v4230
          %4678 = vmatpush.msra.mxu0 %v4226
          %4679 = vmatpush.msra.mxu0 %v4222
          %4680 = vmatpush.msra.mxu0 %v4218
          %4681 = vmatpush.msra.mxu0 %v4214
          %4682 = vmatpush.msra.mxu0 %v4210
          %4683 = vmatpush.msra.mxu0 %v4206
          %4684 = vmatpush.msra.mxu0 %v4202
          %4685 = vmatmul.f32.gmra.mxu0 %v4655
          %v4686 = vpop.f32.mrf.mxu0
          %v4687 = vadd.f32 0.0, %v4686
          %4688 = vdwg.mxu0
          %4689 = vmatpush.msra.mxu0 %v4326
          %4690 = vmatpush.msra.mxu0 %v4322
          %4691 = vmatpush.msra.mxu0 %v4318
          %4692 = vmatpush.msra.mxu0 %v4314
          %4693 = vmatpush.msra.mxu0 %v4310
          %4694 = vmatpush.msra.mxu0 %v4306
          %4695 = vmatpush.msra.mxu0 %v4302
          %4696 = vmatpush.msra.mxu0 %v4298
          %4697 = vmatpush.msra.mxu0 %v4294
          %4698 = vmatpush.msra.mxu0 %v4290
          %4699 = vmatpush.msra.mxu0 %v4286
          %4700 = vmatpush.msra.mxu0 %v4282
          %4701 = vmatpush.msra.mxu0 %v4278
          %4702 = vmatpush.msra.mxu0 %v4274
          %4703 = vmatpush.msra.mxu0 %v4270
          %4704 = vmatpush.msra.mxu0 %v4266
          %4705 = vmatmul.f32.gmra.mxu0 %v4656
          %v4706 = vpop.f32.mrf.mxu0
          %v4707 = vadd.f32 %v4687, %v4706
          %4708 = vdwg.mxu0
          %4709 = vmatpush.msra.mxu0 %v4390
          %4710 = vmatpush.msra.mxu0 %v4386
          %4711 = vmatpush.msra.mxu0 %v4382
          %4712 = vmatpush.msra.mxu0 %v4378
          %4713 = vmatpush.msra.mxu0 %v4374
          %4714 = vmatpush.msra.mxu0 %v4370
          %4715 = vmatpush.msra.mxu0 %v4366
          %4716 = vmatpush.msra.mxu0 %v4362
          %4717 = vmatpush.msra.mxu0 %v4358
          %4718 = vmatpush.msra.mxu0 %v4354
          %4719 = vmatpush.msra.mxu0 %v4350
          %4720 = vmatpush.msra.mxu0 %v4346
          %4721 = vmatpush.msra.mxu0 %v4342
          %4722 = vmatpush.msra.mxu0 %v4338
          %4723 = vmatpush.msra.mxu0 %v4334
          %4724 = vmatpush.msra.mxu0 %v4330
          %4725 = vmatmul.f32.gmra.mxu0 %v4657
          %v4726 = vpop.f32.mrf.mxu0
          %v4727 = vadd.f32 %v4707, %v4726
          %4728 = vdwg.mxu0
          %4729 = vmatpush.msra.mxu0 %v4454
          %4730 = vmatpush.msra.mxu0 %v4450
          %4731 = vmatpush.msra.mxu0 %v4446
          %4732 = vmatpush.msra.mxu0 %v4442
          %4733 = vmatpush.msra.mxu0 %v4438
          %4734 = vmatpush.msra.mxu0 %v4434
          %4735 = vmatpush.msra.mxu0 %v4430
          %4736 = vmatpush.msra.mxu0 %v4426
          %4737 = vmatpush.msra.mxu0 %v4422
          %4738 = vmatpush.msra.mxu0 %v4418
          %4739 = vmatpush.msra.mxu0 %v4414
          %4740 = vmatpush.msra.mxu0 %v4410
          %4741 = vmatpush.msra.mxu0 %v4406
          %4742 = vmatpush.msra.mxu0 %v4402
          %4743 = vmatpush.msra.mxu0 %v4398
          %4744 = vmatpush.msra.mxu0 %v4394
          %4745 = vmatmul.f32.gmra.mxu0 %v4658
          %v4746 = vpop.f32.mrf.mxu0
          %v4747 = vadd.f32 %v4727, %v4746
          %4748 = vdwg.mxu0
          %4749 = vmatpush.msra.mxu0 %v4518
          %4750 = vmatpush.msra.mxu0 %v4514
          %4751 = vmatpush.msra.mxu0 %v4510
          %4752 = vmatpush.msra.mxu0 %v4506
          %4753 = vmatpush.msra.mxu0 %v4502
          %4754 = vmatpush.msra.mxu0 %v4498
          %4755 = vmatpush.msra.mxu0 %v4494
          %4756 = vmatpush.msra.mxu0 %v4490
          %4757 = vmatpush.msra.mxu0 %v4486
          %4758 = vmatpush.msra.mxu0 %v4482
          %4759 = vmatpush.msra.mxu0 %v4478
          %4760 = vmatpush.msra.mxu0 %v4474
          %4761 = vmatpush.msra.mxu0 %v4470
          %4762 = vmatpush.msra.mxu0 %v4466
          %4763 = vmatpush.msra.mxu0 %v4462
          %4764 = vmatpush.msra.mxu0 %v4458
          %4765 = vmatmul.f32.gmra.mxu0 %v4659
          %v4766 = vpop.f32.mrf.mxu0
          %v4767 = vadd.f32 %v4747, %v4766
          %4768 = vdwg.mxu0
          %4769 = vmatpush.msra.mxu0 %v4582
          %4770 = vmatpush.msra.mxu0 %v4578
          %4771 = vmatpush.msra.mxu0 %v4574
          %4772 = vmatpush.msra.mxu0 %v4570
          %4773 = vmatpush.msra.mxu0 %v4566
          %4774 = vmatpush.msra.mxu0 %v4562
          %4775 = vmatpush.msra.mxu0 %v4558
          %4776 = vmatpush.msra.mxu0 %v4554
          %4777 = vmatpush.msra.mxu0 %v4550
          %4778 = vmatpush.msra.mxu0 %v4546
          %4779 = vmatpush.msra.mxu0 %v4542
          %4780 = vmatpush.msra.mxu0 %v4538
          %4781 = vmatpush.msra.mxu0 %v4534
          %4782 = vmatpush.msra.mxu0 %v4530
          %4783 = vmatpush.msra.mxu0 %v4526
          %4784 = vmatpush.msra.mxu0 %v4522
          %4785 = vmatmul.f32.gmra.mxu0 %v4660
          %v4786 = vpop.f32.mrf.mxu0
          %v4787 = vadd.f32 %v4767, %v4786
          %4788 = vdwg.mxu0
          %4789 = vmatpush.msra.mxu0 %v4646
          %4790 = vmatpush.msra.mxu0 %v4642
          %4791 = vmatpush.msra.mxu0 %v4638
          %4792 = vmatpush.msra.mxu0 %v4634
          %4793 = vmatpush.msra.mxu0 %v4630
          %4794 = vmatpush.msra.mxu0 %v4626
          %4795 = vmatpush.msra.mxu0 %v4622
          %4796 = vmatpush.msra.mxu0 %v4618
          %4797 = vmatpush.msra.mxu0 %v4614
          %4798 = vmatpush.msra.mxu0 %v4610
          %4799 = vmatpush.msra.mxu0 %v4606
          %4800 = vmatpush.msra.mxu0 %v4602
          %4801 = vmatpush.msra.mxu0 %v4598
          %4802 = vmatpush.msra.mxu0 %v4594
          %4803 = vmatpush.msra.mxu0 %v4590
          %4804 = vmatpush.msra.mxu0 %v4586
          %4805 = vmatmul.f32.gmra.mxu0 %v4661
          %v4806 = vpop.f32.mrf.mxu0
          %v4807 = vadd.f32 %v4787, %v4806
          %4808 = vdwg.mxu0
          %4809 = vmatpush.msra.mxu0 %v4263
          %4810 = vmatpush.msra.mxu0 %v4259
          %4811 = vmatpush.msra.mxu0 %v4255
          %4812 = vmatpush.msra.mxu0 %v4251
          %4813 = vmatpush.msra.mxu0 %v4247
          %4814 = vmatpush.msra.mxu0 %v4243
          %4815 = vmatpush.msra.mxu0 %v4239
          %4816 = vmatpush.msra.mxu0 %v4235
          %4817 = vmatpush.msra.mxu0 %v4231
          %4818 = vmatpush.msra.mxu0 %v4227
          %4819 = vmatpush.msra.mxu0 %v4223
          %4820 = vmatpush.msra.mxu0 %v4219
          %4821 = vmatpush.msra.mxu0 %v4215
          %4822 = vmatpush.msra.mxu0 %v4211
          %4823 = vmatpush.msra.mxu0 %v4207
          %4824 = vmatpush.msra.mxu0 %v4203
          %4825 = vmatmul.f32.gmra.mxu0 %v4655
          %v4826 = vpop.f32.mrf.mxu0
          %v4827 = vadd.f32 0.0, %v4826
          %4828 = vdwg.mxu0
          %4829 = vmatpush.msra.mxu0 %v4327
          %4830 = vmatpush.msra.mxu0 %v4323
          %4831 = vmatpush.msra.mxu0 %v4319
          %4832 = vmatpush.msra.mxu0 %v4315
          %4833 = vmatpush.msra.mxu0 %v4311
          %4834 = vmatpush.msra.mxu0 %v4307
          %4835 = vmatpush.msra.mxu0 %v4303
          %4836 = vmatpush.msra.mxu0 %v4299
          %4837 = vmatpush.msra.mxu0 %v4295
          %4838 = vmatpush.msra.mxu0 %v4291
          %4839 = vmatpush.msra.mxu0 %v4287
          %4840 = vmatpush.msra.mxu0 %v4283
          %4841 = vmatpush.msra.mxu0 %v4279
          %4842 = vmatpush.msra.mxu0 %v4275
          %4843 = vmatpush.msra.mxu0 %v4271
          %4844 = vmatpush.msra.mxu0 %v4267
          %4845 = vmatmul.f32.gmra.mxu0 %v4656
          %v4846 = vpop.f32.mrf.mxu0
          %v4847 = vadd.f32 %v4827, %v4846
          %4848 = vdwg.mxu0
          %4849 = vmatpush.msra.mxu0 %v4391
          %4850 = vmatpush.msra.mxu0 %v4387
          %4851 = vmatpush.msra.mxu0 %v4383
          %4852 = vmatpush.msra.mxu0 %v4379
          %4853 = vmatpush.msra.mxu0 %v4375
          %4854 = vmatpush.msra.mxu0 %v4371
          %4855 = vmatpush.msra.mxu0 %v4367
          %4856 = vmatpush.msra.mxu0 %v4363
          %4857 = vmatpush.msra.mxu0 %v4359
          %4858 = vmatpush.msra.mxu0 %v4355
          %4859 = vmatpush.msra.mxu0 %v4351
          %4860 = vmatpush.msra.mxu0 %v4347
          %4861 = vmatpush.msra.mxu0 %v4343
          %4862 = vmatpush.msra.mxu0 %v4339
          %4863 = vmatpush.msra.mxu0 %v4335
          %4864 = vmatpush.msra.mxu0 %v4331
          %4865 = vmatmul.f32.gmra.mxu0 %v4657
          %v4866 = vpop.f32.mrf.mxu0
          %v4867 = vadd.f32 %v4847, %v4866
          %4868 = vdwg.mxu0
          %4869 = vmatpush.msra.mxu0 %v4455
          %4870 = vmatpush.msra.mxu0 %v4451
          %4871 = vmatpush.msra.mxu0 %v4447
          %4872 = vmatpush.msra.mxu0 %v4443
          %4873 = vmatpush.msra.mxu0 %v4439
          %4874 = vmatpush.msra.mxu0 %v4435
          %4875 = vmatpush.msra.mxu0 %v4431
          %4876 = vmatpush.msra.mxu0 %v4427
          %4877 = vmatpush.msra.mxu0 %v4423
          %4878 = vmatpush.msra.mxu0 %v4419
          %4879 = vmatpush.msra.mxu0 %v4415
          %4880 = vmatpush.msra.mxu0 %v4411
          %4881 = vmatpush.msra.mxu0 %v4407
          %4882 = vmatpush.msra.mxu0 %v4403
          %4883 = vmatpush.msra.mxu0 %v4399
          %4884 = vmatpush.msra.mxu0 %v4395
          %4885 = vmatmul.f32.gmra.mxu0 %v4658
          %v4886 = vpop.f32.mrf.mxu0
          %v4887 = vadd.f32 %v4867, %v4886
          %4888 = vdwg.mxu0
          %4889 = vmatpush.msra.mxu0 %v4519
          %4890 = vmatpush.msra.mxu0 %v4515
          %4891 = vmatpush.msra.mxu0 %v4511
          %4892 = vmatpush.msra.mxu0 %v4507
          %4893 = vmatpush.msra.mxu0 %v4503
          %4894 = vmatpush.msra.mxu0 %v4499
          %4895 = vmatpush.msra.mxu0 %v4495
          %4896 = vmatpush.msra.mxu0 %v4491
          %4897 = vmatpush.msra.mxu0 %v4487
          %4898 = vmatpush.msra.mxu0 %v4483
          %4899 = vmatpush.msra.mxu0 %v4479
          %4900 = vmatpush.msra.mxu0 %v4475
          %4901 = vmatpush.msra.mxu0 %v4471
          %4902 = vmatpush.msra.mxu0 %v4467
          %4903 = vmatpush.msra.mxu0 %v4463
          %4904 = vmatpush.msra.mxu0 %v4459
          %4905 = vmatmul.f32.gmra.mxu0 %v4659
          %v4906 = vpop.f32.mrf.mxu0
          %v4907 = vadd.f32 %v4887, %v4906
          %4908 = vdwg.mxu0
          %4909 = vmatpush.msra.mxu0 %v4583
          %4910 = vmatpush.msra.mxu0 %v4579
          %4911 = vmatpush.msra.mxu0 %v4575
          %4912 = vmatpush.msra.mxu0 %v4571
          %4913 = vmatpush.msra.mxu0 %v4567
          %4914 = vmatpush.msra.mxu0 %v4563
          %4915 = vmatpush.msra.mxu0 %v4559
          %4916 = vmatpush.msra.mxu0 %v4555
          %4917 = vmatpush.msra.mxu0 %v4551
          %4918 = vmatpush.msra.mxu0 %v4547
          %4919 = vmatpush.msra.mxu0 %v4543
          %4920 = vmatpush.msra.mxu0 %v4539
          %4921 = vmatpush.msra.mxu0 %v4535
          %4922 = vmatpush.msra.mxu0 %v4531
          %4923 = vmatpush.msra.mxu0 %v4527
          %4924 = vmatpush.msra.mxu0 %v4523
          %4925 = vmatmul.f32.gmra.mxu0 %v4660
          %v4926 = vpop.f32.mrf.mxu0
          %v4927 = vadd.f32 %v4907, %v4926
          %4928 = vdwg.mxu0
          %4929 = vmatpush.msra.mxu0 %v4647
          %4930 = vmatpush.msra.mxu0 %v4643
          %4931 = vmatpush.msra.mxu0 %v4639
          %4932 = vmatpush.msra.mxu0 %v4635
          %4933 = vmatpush.msra.mxu0 %v4631
          %4934 = vmatpush.msra.mxu0 %v4627
          %4935 = vmatpush.msra.mxu0 %v4623
          %4936 = vmatpush.msra.mxu0 %v4619
          %4937 = vmatpush.msra.mxu0 %v4615
          %4938 = vmatpush.msra.mxu0 %v4611
          %4939 = vmatpush.msra.mxu0 %v4607
          %4940 = vmatpush.msra.mxu0 %v4603
          %4941 = vmatpush.msra.mxu0 %v4599
          %4942 = vmatpush.msra.mxu0 %v4595
          %4943 = vmatpush.msra.mxu0 %v4591
          %4944 = vmatpush.msra.mxu0 %v4587
          %4945 = vmatmul.f32.gmra.mxu0 %v4661
          %v4946 = vpop.f32.mrf.mxu0
          %v4947 = vadd.f32 %v4927, %v4946
          %4948 = vdwg.mxu0
          %4949 = vmatpush.msra.mxu0 %v4264
          %4950 = vmatpush.msra.mxu0 %v4260
          %4951 = vmatpush.msra.mxu0 %v4256
          %4952 = vmatpush.msra.mxu0 %v4252
          %4953 = vmatpush.msra.mxu0 %v4248
          %4954 = vmatpush.msra.mxu0 %v4244
          %4955 = vmatpush.msra.mxu0 %v4240
          %4956 = vmatpush.msra.mxu0 %v4236
          %4957 = vmatpush.msra.mxu0 %v4232
          %4958 = vmatpush.msra.mxu0 %v4228
          %4959 = vmatpush.msra.mxu0 %v4224
          %4960 = vmatpush.msra.mxu0 %v4220
          %4961 = vmatpush.msra.mxu0 %v4216
          %4962 = vmatpush.msra.mxu0 %v4212
          %4963 = vmatpush.msra.mxu0 %v4208
          %4964 = vmatpush.msra.mxu0 %v4204
          %4965 = vmatmul.f32.gmra.mxu0 %v4655
          %v4966 = vpop.f32.mrf.mxu0
          %v4967 = vadd.f32 0.0, %v4966
          %4968 = vdwg.mxu0
          %4969 = vmatpush.msra.mxu0 %v4328
          %4970 = vmatpush.msra.mxu0 %v4324
          %4971 = vmatpush.msra.mxu0 %v4320
          %4972 = vmatpush.msra.mxu0 %v4316
          %4973 = vmatpush.msra.mxu0 %v4312
          %4974 = vmatpush.msra.mxu0 %v4308
          %4975 = vmatpush.msra.mxu0 %v4304
          %4976 = vmatpush.msra.mxu0 %v4300
          %4977 = vmatpush.msra.mxu0 %v4296
          %4978 = vmatpush.msra.mxu0 %v4292
          %4979 = vmatpush.msra.mxu0 %v4288
          %4980 = vmatpush.msra.mxu0 %v4284
          %4981 = vmatpush.msra.mxu0 %v4280
          %4982 = vmatpush.msra.mxu0 %v4276
          %4983 = vmatpush.msra.mxu0 %v4272
          %4984 = vmatpush.msra.mxu0 %v4268
          %4985 = vmatmul.f32.gmra.mxu0 %v4656
          %v4986 = vpop.f32.mrf.mxu0
          %v4987 = vadd.f32 %v4967, %v4986
          %4988 = vdwg.mxu0
          %4989 = vmatpush.msra.mxu0 %v4392
          %4990 = vmatpush.msra.mxu0 %v4388
          %4991 = vmatpush.msra.mxu0 %v4384
          %4992 = vmatpush.msra.mxu0 %v4380
          %4993 = vmatpush.msra.mxu0 %v4376
          %4994 = vmatpush.msra.mxu0 %v4372
          %4995 = vmatpush.msra.mxu0 %v4368
          %4996 = vmatpush.msra.mxu0 %v4364
          %4997 = vmatpush.msra.mxu0 %v4360
          %4998 = vmatpush.msra.mxu0 %v4356
          %4999 = vmatpush.msra.mxu0 %v4352
          %5000 = vmatpush.msra.mxu0 %v4348
          %5001 = vmatpush.msra.mxu0 %v4344
          %5002 = vmatpush.msra.mxu0 %v4340
          %5003 = vmatpush.msra.mxu0 %v4336
          %5004 = vmatpush.msra.mxu0 %v4332
          %5005 = vmatmul.f32.gmra.mxu0 %v4657
          %v5006 = vpop.f32.mrf.mxu0
          %v5007 = vadd.f32 %v4987, %v5006
          %5008 = vdwg.mxu0
          %5009 = vmatpush.msra.mxu0 %v4456
          %5010 = vmatpush.msra.mxu0 %v4452
          %5011 = vmatpush.msra.mxu0 %v4448
          %5012 = vmatpush.msra.mxu0 %v4444
          %5013 = vmatpush.msra.mxu0 %v4440
          %5014 = vmatpush.msra.mxu0 %v4436
          %5015 = vmatpush.msra.mxu0 %v4432
          %5016 = vmatpush.msra.mxu0 %v4428
          %5017 = vmatpush.msra.mxu0 %v4424
          %5018 = vmatpush.msra.mxu0 %v4420
          %5019 = vmatpush.msra.mxu0 %v4416
          %5020 = vmatpush.msra.mxu0 %v4412
          %5021 = vmatpush.msra.mxu0 %v4408
          %5022 = vmatpush.msra.mxu0 %v4404
          %5023 = vmatpush.msra.mxu0 %v4400
          %5024 = vmatpush.msra.mxu0 %v4396
          %5025 = vmatmul.f32.gmra.mxu0 %v4658
          %v5026 = vpop.f32.mrf.mxu0
          %v5027 = vadd.f32 %v5007, %v5026
          %5028 = vdwg.mxu0
          %5029 = vmatpush.msra.mxu0 %v4520
          %5030 = vmatpush.msra.mxu0 %v4516
          %5031 = vmatpush.msra.mxu0 %v4512
          %5032 = vmatpush.msra.mxu0 %v4508
          %5033 = vmatpush.msra.mxu0 %v4504
          %5034 = vmatpush.msra.mxu0 %v4500
          %5035 = vmatpush.msra.mxu0 %v4496
          %5036 = vmatpush.msra.mxu0 %v4492
          %5037 = vmatpush.msra.mxu0 %v4488
          %5038 = vmatpush.msra.mxu0 %v4484
          %5039 = vmatpush.msra.mxu0 %v4480
          %5040 = vmatpush.msra.mxu0 %v4476
          %5041 = vmatpush.msra.mxu0 %v4472
          %5042 = vmatpush.msra.mxu0 %v4468
          %5043 = vmatpush.msra.mxu0 %v4464
          %5044 = vmatpush.msra.mxu0 %v4460
          %5045 = vmatmul.f32.gmra.mxu0 %v4659
          %v5046 = vpop.f32.mrf.mxu0
          %v5047 = vadd.f32 %v5027, %v5046
          %5048 = vdwg.mxu0
          %5049 = vmatpush.msra.mxu0 %v4584
          %5050 = vmatpush.msra.mxu0 %v4580
          %5051 = vmatpush.msra.mxu0 %v4576
          %5052 = vmatpush.msra.mxu0 %v4572
          %5053 = vmatpush.msra.mxu0 %v4568
          %5054 = vmatpush.msra.mxu0 %v4564
          %5055 = vmatpush.msra.mxu0 %v4560
          %5056 = vmatpush.msra.mxu0 %v4556
          %5057 = vmatpush.msra.mxu0 %v4552
          %5058 = vmatpush.msra.mxu0 %v4548
          %5059 = vmatpush.msra.mxu0 %v4544
          %5060 = vmatpush.msra.mxu0 %v4540
          %5061 = vmatpush.msra.mxu0 %v4536
          %5062 = vmatpush.msra.mxu0 %v4532
          %5063 = vmatpush.msra.mxu0 %v4528
          %5064 = vmatpush.msra.mxu0 %v4524
          %5065 = vmatmul.f32.gmra.mxu0 %v4660
          %v5066 = vpop.f32.mrf.mxu0
          %v5067 = vadd.f32 %v5047, %v5066
          %5068 = vdwg.mxu0
          %5069 = vmatpush.msra.mxu0 %v4648
          %5070 = vmatpush.msra.mxu0 %v4644
          %5071 = vmatpush.msra.mxu0 %v4640
          %5072 = vmatpush.msra.mxu0 %v4636
          %5073 = vmatpush.msra.mxu0 %v4632
          %5074 = vmatpush.msra.mxu0 %v4628
          %5075 = vmatpush.msra.mxu0 %v4624
          %5076 = vmatpush.msra.mxu0 %v4620
          %5077 = vmatpush.msra.mxu0 %v4616
          %5078 = vmatpush.msra.mxu0 %v4612
          %5079 = vmatpush.msra.mxu0 %v4608
          %5080 = vmatpush.msra.mxu0 %v4604
          %5081 = vmatpush.msra.mxu0 %v4600
          %5082 = vmatpush.msra.mxu0 %v4596
          %5083 = vmatpush.msra.mxu0 %v4592
          %5084 = vmatpush.msra.mxu0 %v4588
          %5085 = vmatmul.f32.gmra.mxu0 %v4661
          %v5086 = vpop.f32.mrf.mxu0
          %v5087 = vadd.f32 %v5067, %v5086
          %5088 = vdwg.mxu0
          %5089 = vmatpush.msra.mxu0 %v4265
          %5090 = vmatpush.msra.mxu0 %v4261
          %5091 = vmatpush.msra.mxu0 %v4257
          %5092 = vmatpush.msra.mxu0 %v4253
          %5093 = vmatpush.msra.mxu0 %v4249
          %5094 = vmatpush.msra.mxu0 %v4245
          %5095 = vmatpush.msra.mxu0 %v4241
          %5096 = vmatpush.msra.mxu0 %v4237
          %5097 = vmatpush.msra.mxu0 %v4233
          %5098 = vmatpush.msra.mxu0 %v4229
          %5099 = vmatpush.msra.mxu0 %v4225
          %5100 = vmatpush.msra.mxu0 %v4221
          %5101 = vmatpush.msra.mxu0 %v4217
          %5102 = vmatpush.msra.mxu0 %v4213
          %5103 = vmatpush.msra.mxu0 %v4209
          %5104 = vmatpush.msra.mxu0 %v4205
          %5105 = vmatmul.f32.gmra.mxu0 %v4655
          %v5106 = vpop.f32.mrf.mxu0
          %v5107 = vadd.f32 0.0, %v5106
          %5108 = vdwg.mxu0
          %5109 = vmatpush.msra.mxu0 %v4329
          %5110 = vmatpush.msra.mxu0 %v4325
          %5111 = vmatpush.msra.mxu0 %v4321
          %5112 = vmatpush.msra.mxu0 %v4317
          %5113 = vmatpush.msra.mxu0 %v4313
          %5114 = vmatpush.msra.mxu0 %v4309
          %5115 = vmatpush.msra.mxu0 %v4305
          %5116 = vmatpush.msra.mxu0 %v4301
          %5117 = vmatpush.msra.mxu0 %v4297
          %5118 = vmatpush.msra.mxu0 %v4293
          %5119 = vmatpush.msra.mxu0 %v4289
          %5120 = vmatpush.msra.mxu0 %v4285
          %5121 = vmatpush.msra.mxu0 %v4281
          %5122 = vmatpush.msra.mxu0 %v4277
          %5123 = vmatpush.msra.mxu0 %v4273
          %5124 = vmatpush.msra.mxu0 %v4269
          %5125 = vmatmul.f32.gmra.mxu0 %v4656
          %v5126 = vpop.f32.mrf.mxu0
          %v5127 = vadd.f32 %v5107, %v5126
          %5128 = vdwg.mxu0
          %5129 = vmatpush.msra.mxu0 %v4393
          %5130 = vmatpush.msra.mxu0 %v4389
          %5131 = vmatpush.msra.mxu0 %v4385
          %5132 = vmatpush.msra.mxu0 %v4381
          %5133 = vmatpush.msra.mxu0 %v4377
          %5134 = vmatpush.msra.mxu0 %v4373
          %5135 = vmatpush.msra.mxu0 %v4369
          %5136 = vmatpush.msra.mxu0 %v4365
          %5137 = vmatpush.msra.mxu0 %v4361
          %5138 = vmatpush.msra.mxu0 %v4357
          %5139 = vmatpush.msra.mxu0 %v4353
          %5140 = vmatpush.msra.mxu0 %v4349
          %5141 = vmatpush.msra.mxu0 %v4345
          %5142 = vmatpush.msra.mxu0 %v4341
          %5143 = vmatpush.msra.mxu0 %v4337
          %5144 = vmatpush.msra.mxu0 %v4333
          %5145 = vmatmul.f32.gmra.mxu0 %v4657
          %v5146 = vpop.f32.mrf.mxu0
          %v5147 = vadd.f32 %v5127, %v5146
          %5148 = vdwg.mxu0
          %5149 = vmatpush.msra.mxu0 %v4457
          %5150 = vmatpush.msra.mxu0 %v4453
          %5151 = vmatpush.msra.mxu0 %v4449
          %5152 = vmatpush.msra.mxu0 %v4445
          %5153 = vmatpush.msra.mxu0 %v4441
          %5154 = vmatpush.msra.mxu0 %v4437
          %5155 = vmatpush.msra.mxu0 %v4433
          %5156 = vmatpush.msra.mxu0 %v4429
          %5157 = vmatpush.msra.mxu0 %v4425
          %5158 = vmatpush.msra.mxu0 %v4421
          %5159 = vmatpush.msra.mxu0 %v4417
          %5160 = vmatpush.msra.mxu0 %v4413
          %5161 = vmatpush.msra.mxu0 %v4409
          %5162 = vmatpush.msra.mxu0 %v4405
          %5163 = vmatpush.msra.mxu0 %v4401
          %5164 = vmatpush.msra.mxu0 %v4397
          %5165 = vmatmul.f32.gmra.mxu0 %v4658
          %v5166 = vpop.f32.mrf.mxu0
          %v5167 = vadd.f32 %v5147, %v5166
          %5168 = vdwg.mxu0
          %5169 = vmatpush.msra.mxu0 %v4521
          %5170 = vmatpush.msra.mxu0 %v4517
          %5171 = vmatpush.msra.mxu0 %v4513
          %5172 = vmatpush.msra.mxu0 %v4509
          %5173 = vmatpush.msra.mxu0 %v4505
          %5174 = vmatpush.msra.mxu0 %v4501
          %5175 = vmatpush.msra.mxu0 %v4497
          %5176 = vmatpush.msra.mxu0 %v4493
          %5177 = vmatpush.msra.mxu0 %v4489
          %5178 = vmatpush.msra.mxu0 %v4485
          %5179 = vmatpush.msra.mxu0 %v4481
          %5180 = vmatpush.msra.mxu0 %v4477
          %5181 = vmatpush.msra.mxu0 %v4473
          %5182 = vmatpush.msra.mxu0 %v4469
          %5183 = vmatpush.msra.mxu0 %v4465
          %5184 = vmatpush.msra.mxu0 %v4461
          %5185 = vmatmul.f32.gmra.mxu0 %v4659
          %v5186 = vpop.f32.mrf.mxu0
          %v5187 = vadd.f32 %v5167, %v5186
          %5188 = vdwg.mxu0
          %5189 = vmatpush.msra.mxu0 %v4585
          %5190 = vmatpush.msra.mxu0 %v4581
          %5191 = vmatpush.msra.mxu0 %v4577
          %5192 = vmatpush.msra.mxu0 %v4573
          %5193 = vmatpush.msra.mxu0 %v4569
          %5194 = vmatpush.msra.mxu0 %v4565
          %5195 = vmatpush.msra.mxu0 %v4561
          %5196 = vmatpush.msra.mxu0 %v4557
          %5197 = vmatpush.msra.mxu0 %v4553
          %5198 = vmatpush.msra.mxu0 %v4549
          %5199 = vmatpush.msra.mxu0 %v4545
          %5200 = vmatpush.msra.mxu0 %v4541
          %5201 = vmatpush.msra.mxu0 %v4537
          %5202 = vmatpush.msra.mxu0 %v4533
          %5203 = vmatpush.msra.mxu0 %v4529
          %5204 = vmatpush.msra.mxu0 %v4525
          %5205 = vmatmul.f32.gmra.mxu0 %v4660
          %v5206 = vpop.f32.mrf.mxu0
          %v5207 = vadd.f32 %v5187, %v5206
          %5208 = vdwg.mxu0
          %5209 = vmatpush.msra.mxu0 %v4649
          %5210 = vmatpush.msra.mxu0 %v4645
          %5211 = vmatpush.msra.mxu0 %v4641
          %5212 = vmatpush.msra.mxu0 %v4637
          %5213 = vmatpush.msra.mxu0 %v4633
          %5214 = vmatpush.msra.mxu0 %v4629
          %5215 = vmatpush.msra.mxu0 %v4625
          %5216 = vmatpush.msra.mxu0 %v4621
          %5217 = vmatpush.msra.mxu0 %v4617
          %5218 = vmatpush.msra.mxu0 %v4613
          %5219 = vmatpush.msra.mxu0 %v4609
          %5220 = vmatpush.msra.mxu0 %v4605
          %5221 = vmatpush.msra.mxu0 %v4601
          %5222 = vmatpush.msra.mxu0 %v4597
          %5223 = vmatpush.msra.mxu0 %v4593
          %5224 = vmatpush.msra.mxu0 %v4589
          %5225 = vmatmul.f32.gmra.mxu0 %v4661
          %v5226 = vpop.f32.mrf.mxu0
          %v5227 = vadd.f32 %v5207, %v5226
          %5228 = vdwg.mxu0
          %v5229 = vadd.f32 %v3773, %v4807
          %v5230 = vadd.f32 %v3913, %v4947
          %v5231 = vadd.f32 %v4053, %v5087
          %v5232 = vadd.f32 %v4193, %v5227
          %v5233 = vld [vmem:[%s5] sm:$0xf]
          %v5235 = vperm.slane %v5233, 0
          %v5236 = vperm.slane %v5233, 1
          %v5237 = vperm.slane %v5233, 2
          %v5238 = vperm.slane %v5233, 3
          %v5243 = vadd.f32 %v5229, %v5235
          %v5244 = vadd.f32 %v5230, %v5236
          %v5245 = vadd.f32 %v5231, %v5237
          %v5246 = vadd.f32 %v5232, %v5238
          %s5247 = smul.u32 %s2123, 4
          %s5248 = smul.addr %s5247, 2
          %s5249 = scalar_lea.vmem [#allocation6], %s5248
          %v5250 = vld [vmem:[%s5249] sm:$0xff]
          %v5251 = vmul.f32 %v5250, 0.2
          %s5252 = smul.addr %s5247, 2
          %s5253 = scalar_lea.vmem [#allocation7], %s5252
          %v5254 = vld [vmem:[%s5253] sm:$0xff]
          %v5255 = vsub.f32 1.0, %v5254
          %v5256 = vmul.f32 %v5251, %v5255
          %v5261 = vrot.slane %v5244, 6
          %v5262 = vrot.slane %v5245, 4
          %v5263 = vrot.slane %v5246, 2
          %vm5264 = vcmask 1041408
          %v5265 = vsel %vm5264, %v5243, %v5261
          %vm5266 = vcmask 1045508
          %v5267 = vsel %vm5266, %v5262, %v5263
          %vm5268 = vcmask 1043456
          %v5269 = vsel %vm5268, %v5265, %v5267
          %v5271 = vadd.f32 %v5256, %v5269
          %vm5272 = vcmp.gt.f32.partialorder %v5271, 0.5
          %v5273 = vsel %vm5272, 1, 0
          %v5274 = vcvt.s32.f32 %v5273
          %vm5275 = vcmask 1043458
          %vm5276 = vmor %vm5275, %vm5264
          %vm5277 = vmor %vm5266, %vm5276
          %vm5278 = vcmask 523270
          %vm5279 = vmor %vm5278, %vm5277
          %5280 = vst.msk [vmem:[%s5249] sm:$0xff] %vm5279, %v5271
          %5281 = vst.msk [vmem:[%s5253] sm:$0xff] %vm5279, %v5274
          %s5282 = smul.u32 %s2123, 448
          %s5283 = scalar_lea.vmem %s6, %s5282
          %v5284 = vld [vmem:[%s5283] sm:$0xff]
          %v5285 = vld [vmem:[%s5283 + $0x8] sm:$0xff]
          %v5286 = vld [vmem:[%s5283 + $0x10] sm:$0xff]
          %v5287 = vld [vmem:[%s5283 + $0x18] sm:$0xff]
          %v5288 = vld [vmem:[%s5283 + $0x20] sm:$0xff]
          %v5289 = vld [vmem:[%s5283 + $0x28] sm:$0xff]
          %v5290 = vld [vmem:[%s5283 + $0x30] sm:$0xff]
          %v5291 = vld [vmem:[%s5283 + $0x38] sm:$0xff]
          %v5292 = vld [vmem:[%s5283 + $0x40] sm:$0xff]
          %v5293 = vld [vmem:[%s5283 + $0x48] sm:$0xff]
          %v5294 = vld [vmem:[%s5283 + $0x50] sm:$0xff]
          %v5295 = vld [vmem:[%s5283 + $0x58] sm:$0xff]
          %v5296 = vld [vmem:[%s5283 + $0x60] sm:$0xff]
          %v5297 = vld [vmem:[%s5283 + $0x68] sm:$0xff]
          %v5298 = vld [vmem:[%s5283 + $0x70] sm:$0xff]
          %v5299 = vld [vmem:[%s5283 + $0x78] sm:$0xff]
          %v5300 = vld [vmem:[%s5283 + $0x80] sm:$0xff]
          %v5301 = vld [vmem:[%s5283 + $0x88] sm:$0xff]
          %v5302 = vld [vmem:[%s5283 + $0x90] sm:$0xff]
          %v5303 = vld [vmem:[%s5283 + $0x98] sm:$0xff]
          %v5304 = vld [vmem:[%s5283 + $0xa0] sm:$0xff]
          %v5305 = vld [vmem:[%s5283 + $0xa8] sm:$0xff]
          %v5306 = vld [vmem:[%s5283 + $0xb0] sm:$0xff]
          %v5307 = vld [vmem:[%s5283 + $0xb8] sm:$0xff]
          %v5308 = vld [vmem:[%s5283 + $0xc0] sm:$0xff]
          %v5309 = vld [vmem:[%s5283 + $0xc8] sm:$0xff]
          %v5310 = vld [vmem:[%s5283 + $0xd0] sm:$0xff]
          %v5311 = vld [vmem:[%s5283 + $0xd8] sm:$0xff]
          %v5312 = vld [vmem:[%s5283 + $0xe0] sm:$0xff]
          %v5313 = vld [vmem:[%s5283 + $0xe8] sm:$0xff]
          %v5314 = vld [vmem:[%s5283 + $0xf0] sm:$0xff]
          %v5315 = vld [vmem:[%s5283 + $0xf8] sm:$0xff]
          %v5316 = vld [vmem:[%s5283 + $0x100] sm:$0xff]
          %v5317 = vld [vmem:[%s5283 + $0x108] sm:$0xff]
          %v5318 = vld [vmem:[%s5283 + $0x110] sm:$0xff]
          %v5319 = vld [vmem:[%s5283 + $0x118] sm:$0xff]
          %v5320 = vld [vmem:[%s5283 + $0x120] sm:$0xff]
          %v5321 = vld [vmem:[%s5283 + $0x128] sm:$0xff]
          %v5322 = vld [vmem:[%s5283 + $0x130] sm:$0xff]
          %v5323 = vld [vmem:[%s5283 + $0x138] sm:$0xff]
          %v5324 = vld [vmem:[%s5283 + $0x140] sm:$0xff]
          %v5325 = vld [vmem:[%s5283 + $0x148] sm:$0xff]
          %v5326 = vld [vmem:[%s5283 + $0x150] sm:$0xff]
          %v5327 = vld [vmem:[%s5283 + $0x158] sm:$0xff]
          %v5328 = vld [vmem:[%s5283 + $0x160] sm:$0xff]
          %v5329 = vld [vmem:[%s5283 + $0x168] sm:$0xff]
          %v5330 = vld [vmem:[%s5283 + $0x170] sm:$0xff]
          %v5331 = vld [vmem:[%s5283 + $0x178] sm:$0xff]
          %v5332 = vld [vmem:[%s5283 + $0x180] sm:$0xff]
          %v5333 = vld [vmem:[%s5283 + $0x188] sm:$0xff]
          %v5334 = vld [vmem:[%s5283 + $0x190] sm:$0xff]
          %v5335 = vld [vmem:[%s5283 + $0x198] sm:$0xff]
          %v5336 = vld [vmem:[%s5283 + $0x1a0] sm:$0xff]
          %v5337 = vld [vmem:[%s5283 + $0x1a8] sm:$0xff]
          %v5338 = vld [vmem:[%s5283 + $0x1b0] sm:$0xff]
          %v5339 = vld [vmem:[%s5283 + $0x1b8] sm:$0xff]
          %5341 = vst [vmem:[#allocation1] ss:$4 sm:$0xff] %v5274
          %v5342 = vld.sshfl [vmem:[#allocation1] sm:$0xff pattern:$0x73625140]
          %v5343 = vld.sshfl [vmem:[#allocation1 + $0x8] sm:$0xff pattern:$0x73625140]
          %v5344 = vld.sshfl [vmem:[#allocation1 + $0x10] sm:$0xff pattern:$0x73625140]
          %v5345 = vld.sshfl [vmem:[#allocation1 + $0x18] sm:$0xff pattern:$0x73625140]
          %vm5349 = vcmask 523264
          %v5350 = vsel %vm5349, %v5345, 0
          %5352 = vmatpush.msra.mxu0 %v5299
          %5353 = vmatpush.msra.mxu0 %v5298
          %5354 = vmatpush.msra.mxu0 %v5297
          %5355 = vmatpush.msra.mxu0 %v5296
          %5356 = vmatpush.msra.mxu0 %v5295
          %5357 = vmatpush.msra.mxu0 %v5294
          %5358 = vmatpush.msra.mxu0 %v5293
          %5359 = vmatpush.msra.mxu0 %v5292
          %5360 = vmatpush.msra.mxu0 %v5291
          %5361 = vmatpush.msra.mxu0 %v5290
          %5362 = vmatpush.msra.mxu0 %v5289
          %5363 = vmatpush.msra.mxu0 %v5288
          %5364 = vmatpush.msra.mxu0 %v5287
          %5365 = vmatpush.msra.mxu0 %v5286
          %5366 = vmatpush.msra.mxu0 %v5285
          %5367 = vmatpush.msra.mxu0 %v5284
          %5368 = vmatmul.f32.gmra.mxu0 %v5342
          %v5369 = vpop.f32.mrf.mxu0
          %v5370 = vadd.f32 0.0, %v5369
          %5371 = vdwg.mxu0
          %5372 = vmatpush.msra.mxu0 %v5315
          %5373 = vmatpush.msra.mxu0 %v5314
          %5374 = vmatpush.msra.mxu0 %v5313
          %5375 = vmatpush.msra.mxu0 %v5312
          %5376 = vmatpush.msra.mxu0 %v5311
          %5377 = vmatpush.msra.mxu0 %v5310
          %5378 = vmatpush.msra.mxu0 %v5309
          %5379 = vmatpush.msra.mxu0 %v5308
          %5380 = vmatpush.msra.mxu0 %v5307
          %5381 = vmatpush.msra.mxu0 %v5306
          %5382 = vmatpush.msra.mxu0 %v5305
          %5383 = vmatpush.msra.mxu0 %v5304
          %5384 = vmatpush.msra.mxu0 %v5303
          %5385 = vmatpush.msra.mxu0 %v5302
          %5386 = vmatpush.msra.mxu0 %v5301
          %5387 = vmatpush.msra.mxu0 %v5300
          %5388 = vmatmul.f32.gmra.mxu0 %v5343
          %v5389 = vpop.f32.mrf.mxu0
          %v5390 = vadd.f32 %v5370, %v5389
          %5391 = vdwg.mxu0
          %5392 = vmatpush.msra.mxu0 %v5331
          %5393 = vmatpush.msra.mxu0 %v5330
          %5394 = vmatpush.msra.mxu0 %v5329
          %5395 = vmatpush.msra.mxu0 %v5328
          %5396 = vmatpush.msra.mxu0 %v5327
          %5397 = vmatpush.msra.mxu0 %v5326
          %5398 = vmatpush.msra.mxu0 %v5325
          %5399 = vmatpush.msra.mxu0 %v5324
          %5400 = vmatpush.msra.mxu0 %v5323
          %5401 = vmatpush.msra.mxu0 %v5322
          %5402 = vmatpush.msra.mxu0 %v5321
          %5403 = vmatpush.msra.mxu0 %v5320
          %5404 = vmatpush.msra.mxu0 %v5319
          %5405 = vmatpush.msra.mxu0 %v5318
          %5406 = vmatpush.msra.mxu0 %v5317
          %5407 = vmatpush.msra.mxu0 %v5316
          %5408 = vmatmul.f32.gmra.mxu0 %v5344
          %v5409 = vpop.f32.mrf.mxu0
          %v5410 = vadd.f32 %v5390, %v5409
          %5411 = vdwg.mxu0
          %5412 = vmatpush.msra.mxu0 0.0
          %5413 = vmatpush.msra.mxu0 0.0
          %5414 = vmatpush.msra.mxu0 0.0
          %5415 = vmatpush.msra.mxu0 0.0
          %5416 = vmatpush.msra.mxu0 0.0
          %5417 = vmatpush.msra.mxu0 0.0
          %5418 = vmatpush.msra.mxu0 0.0
          %5419 = vmatpush.msra.mxu0 0.0
          %5420 = vmatpush.msra.mxu0 %v5339
          %5421 = vmatpush.msra.mxu0 %v5338
          %5422 = vmatpush.msra.mxu0 %v5337
          %5423 = vmatpush.msra.mxu0 %v5336
          %5424 = vmatpush.msra.mxu0 %v5335
          %5425 = vmatpush.msra.mxu0 %v5334
          %5426 = vmatpush.msra.mxu0 %v5333
          %5427 = vmatpush.msra.mxu0 %v5332
          %5428 = vmatmul.f32.gmra.mxu0 %v5350
          %v5429 = vpop.f32.mrf.mxu0
          %v5430 = vadd.f32 %v5410, %v5429
          %5431 = vdwg.mxu0
          %v5432 = vadd.f32 %v2128, %v5430
        $region76: #{scnn_forward.1} parent=59 // loop_footer
          %s2127 = sadd.s32 1, %s2123
        $region77: #{scnn_forward.1} parent=59 // loop_footer_branch
          %2122 = sbr.rel target = $region73
        $region78: #{scnn_forward.1} parent=59 // loop_exit
          _
        %v5433 = vld [vmem:[%s7] sm:$0x1]
        %v5435 = vperm.slane %v5433, 0
        %v5437 = vadd.f32 %v2128, %v5435
        %v5438 = vld [vmem:[#allocation8] sm:$0x3]
        %v5439 = vmul.f32 %v5438, 0.2
        %v5440 = vld [vmem:[#allocation9] sm:$0x3]
        %v5441 = vsub.f32 1.0, %v5440
        %v5442 = vmul.f32 %v5439, %v5441
        %v5443 = vadd.f32 %v5442, %v5437
        %vm5444 = vcmp.gt.f32.partialorder %v5443, 0.5
        %v5445 = vsel %vm5444, 1, 0
        %v5446 = vcvt.s32.f32 %v5445
        %5447 = vst [vmem:[#allocation8] sm:$0x3] %v5443
        %5448 = vst [vmem:[#allocation9] sm:$0x3] %v5446
        %v5449 = vld [vmem:[%s8] sm:$0xff]
        %v5450 = vld [vmem:[%s8 + $0x8] sm:$0xff]
        %v5451 = vld [vmem:[%s8 + $0x10] sm:$0xff]
        %v5452 = vld [vmem:[%s8 + $0x18] sm:$0xff]
        %v5453 = vld [vmem:[%s8 + $0x20] sm:$0xff]
        %v5454 = vld [vmem:[%s8 + $0x28] sm:$0xff]
        %v5455 = vld [vmem:[%s8 + $0x30] sm:$0xff]
        %v5456 = vld [vmem:[%s8 + $0x38] sm:$0xff]
        %v5457 = vld [vmem:[%s8 + $0x40] sm:$0xff]
        %v5458 = vld [vmem:[%s8 + $0x48] sm:$0xff]
        %v5459 = vld [vmem:[%s8 + $0x50] sm:$0xff]
        %v5460 = vld [vmem:[%s8 + $0x58] sm:$0xff]
        %v5461 = vld [vmem:[%s8 + $0x60] sm:$0xff]
        %v5462 = vld [vmem:[%s8 + $0x68] sm:$0xff]
        %v5463 = vld [vmem:[%s8 + $0x70] sm:$0xff]
        %v5464 = vld [vmem:[%s8 + $0x78] sm:$0xff]
        %v5465 = vld [vmem:[%s9] sm:$0x1]
        %v5467 = vperm.slane %v5465, 0
        %5469 = vmatpush.msra.mxu0 %v5464
        %5470 = vmatpush.msra.mxu0 %v5463
        %5471 = vmatpush.msra.mxu0 %v5462
        %5472 = vmatpush.msra.mxu0 %v5461
        %5473 = vmatpush.msra.mxu0 %v5460
        %5474 = vmatpush.msra.mxu0 %v5459
        %5475 = vmatpush.msra.mxu0 %v5458
        %5476 = vmatpush.msra.mxu0 %v5457
        %5477 = vmatpush.msra.mxu0 %v5456
        %5478 = vmatpush.msra.mxu0 %v5455
        %5479 = vmatpush.msra.mxu0 %v5454
        %5480 = vmatpush.msra.mxu0 %v5453
        %5481 = vmatpush.msra.mxu0 %v5452
        %5482 = vmatpush.msra.mxu0 %v5451
        %5483 = vmatpush.msra.mxu0 %v5450
        %5484 = vmatpush.msra.mxu0 %v5449
        %5485 = vmatmul.f32.gmra.mxu0 %v5446
        %v5486 = vpop.f32.mrf.mxu0
        %v5487 = vadd.f32 %v5467, %v5486
        %5488 = vdwg.mxu0
        %v5489 = vld [vmem:[#allocation10] sm:$0x3]
        %v5490 = vmul.f32 %v5489, 0.2
        %v5491 = vld [vmem:[#allocation11] sm:$0x3]
        %v5492 = vsub.f32 1.0, %v5491
        %v5493 = vmul.f32 %v5490, %v5492
        %v5494 = vadd.f32 %v5493, %v5487
        %vm5495 = vcmp.gt.f32.partialorder %v5494, 0.5
        %v5496 = vsel %vm5495, 1, 0
        %v5497 = vcvt.s32.f32 %v5496
        %5498 = vst [vmem:[#allocation10] sm:$0x3] %v5494
        %5499 = vst [vmem:[#allocation11] sm:$0x3] %v5497
        %v5500 = vld [vmem:[#allocation12] sm:$0x3]
        %v5501 = vadd.f32 %v5500, %v5497
        %5502 = vst [vmem:[#allocation12] sm:$0x3] %v5501
        %p5503 = scmp.eq.s32.totalorder %s27, 19
        // Predicated region
        $region79: #{scnn_forward.1} parent=59 // pred_check
          %p5504 = pneg %p5503
        $region80: #{scnn_forward.1} parent=59 // pred_check_branch
          %5506 = sbr.rel (%p5504) target = $region82
        $region81: #{scnn_forward.1} parent=59 // pred_region
          %v5507 = vld [vmem:[#allocation12] sm:$0x3]
          %v5508 = vmul.f32 %v5507, 0.05
          %5509 = vst [vmem:[#allocation13] sm:$0x3] %v5508
        $region82: #{scnn_forward.1} parent=59 // pred_fallthru
          _
        // Predicated region
        $region83: #{scnn_forward.1} parent=59 // pred_check
          %p5510 = pneg %p274
        $region84: #{scnn_forward.1} parent=59 // pred_check_branch
          %5512 = sbr.rel (%p5510) target = $region86
        $region85: #{scnn_forward.1} parent=59 // pred_region
          %5514 = vsyncadd [#allocation14], 0
          %s5515 = smul.addr %s26, 2
          %s5516 = scalar_lea.hbm %s10, %s5515
          %s5518 = sshll.u32 [#allocation13], 4
          %s5519 = int_to_ptr.vmem [resolvable:$true] %s5518
          %s5520 = sshll.u32 %s5516, 4
          %s5521 = int_to_ptr.hbm [resolvable:$true] %s5520
          %5523 = dma.vmem_to_hbm [thread:$0]  %s5519, 32, %s5521, [#allocation14]
        $region86: #{scnn_forward.1} parent=59 // pred_fallthru
          _
        // Predicated region
        $region87: #{scnn_forward.1} parent=59 // pred_check
          %p5524 = pneg %p274
        $region88: #{scnn_forward.1} parent=59 // pred_check_branch
          %5526 = sbr.rel (%p5524) target = $region90
        $region89: #{scnn_forward.1} parent=59 // pred_region
          %5528 = dma.done [#allocation14], 32
        $region90: #{scnn_forward.1} parent=59 // pred_fallthru
          _
      $region60: #{scnn_forward.1} parent=5 // pred_fallthru
        _
      %p5529 = scmp.le.s32.totalorder 2, %s17
      // Predicated region
      $region91: #{scnn_forward.1} parent=5 // pred_check
        %p5530 = pneg %p5529
      $region92: #{scnn_forward.1} parent=5 // pred_check_branch
        %5532 = sbr.rel (%p5530) target = $region94
      $region93: #{scnn_forward.1} parent=5 // pred_region
        %s5533 = ssub.s32 %s17, 2
      $region94: #{scnn_forward.1} parent=5 // pred_fallthru
        _
    $region6: #{scnn_forward.1} parent=1 // loop_footer
      %s21 = sadd.s32 1, %s17
    $region7: #{scnn_forward.1} parent=1 // loop_footer_branch
      %16 = sbr.rel target = $region3
    $region8: #{scnn_forward.1} parent=1 // loop_exit
      _
    %5534 = vsyncpa [#allocation14], 1
    %s5535 = scalar_lea.sflag [#allocation14], 1
    %5536 = vsyncpa %s5535, 1

</llo_original>
